<compile_context>
chip_gen: v7x
topology: tpu7x:2x2x1
jax: 0.10.0
libtpu: 0.0.40
codegen_flags: <defaults>
</compile_context>

<pallas_src>
import math
import functools

import numpy as np
import jax
import jax.numpy as jnp
from jax import lax
from jax.experimental import pallas as pl
from jax.experimental.pallas import tpu as pltpu

LRELU_SLOPE = 0.1          # nn.LeakyReLU(0.1)
BN_EPS = 1e-5


def _leaky(v):
    return jnp.where(v > 0, v, LRELU_SLOPE * v)


# --------------------------------------------------------------------------------------
# Positional encoding, returned in the "rows" view (channel*T, V) (flat-order identical
# to the module's (channel, T, V) buffer).
# --------------------------------------------------------------------------------------
def build_pe(channel, joint_num, time_len, domain):
    if domain == 'temporal':
        pos = np.repeat(np.arange(time_len), joint_num).astype(np.float32)
    else:
        pos = np.tile(np.arange(joint_num), time_len).astype(np.float32)
    pos = pos[:, None]
    pe = np.zeros((time_len * joint_num, channel), np.float32)
    div = np.exp(np.arange(0, channel, 2, dtype=np.float32) * -(math.log(10000.0) / channel))
    pe[:, 0::2] = np.sin(pos * div)
    pe[:, 1::2] = np.cos(pos * div)
    pe = pe.reshape(time_len, joint_num, channel).transpose(2, 0, 1)        # (C, T, V)
    return pe.reshape(channel * time_len, joint_num).astype(np.float32)     # (C*T, V)


# --------------------------------------------------------------------------------------
# Parameters (deterministic, same tensor shapes as the module's __init__), pre-expanded
# on the host into the kron'd "rows"-layout matrices the kernel consumes.
# --------------------------------------------------------------------------------------
def make_params(key, cfg):
    C = cfg['in_channels']; Co = cfg['out_channels']; Ci = cfg['inter_channels']
    S = cfg['num_subset']; V = cfg['num_node']; T = cfg['num_frame']
    CoT = Co * T
    keys = jax.random.split(key, 16)

    def nrm(k, shape, fan_in):
        return np.asarray(jax.random.normal(k, shape, jnp.float32)) / math.sqrt(fan_in)

    def bias(k, c):
        return 0.05 * np.asarray(jax.random.normal(k, (c, 1), jnp.float32))

    bn_scale = 1.0 / math.sqrt(1.0 + BN_EPS)        # gamma=1, var=1, mean=0, beta=0
    eye_t = np.eye(T, dtype=np.float32)
    ones_t = np.ones((T, 1), np.float32)
    bf16 = jnp.bfloat16

    p = {}
    p['pe_s'] = jnp.asarray(build_pe(C, V, T, 'spatial'))       # (C*T, V)
    p['pe_t'] = jnp.asarray(build_pe(Co, V, T, 'temporal'))     # (Co*T, V)

    # ---- spatial: in_nets (bias, no BN) ----
    w_in_s = nrm(keys[0], (2 * S * Ci, C), C)
    b_in_s = bias(keys[1], 2 * S * Ci)
    p['w_in_s'] = jnp.asarray(np.kron(w_in_s, eye_t)).astype(bf16)          # (2SCi*T, C*T)
    p['b_in_s'] = jnp.asarray(np.kron(b_in_s, ones_t))                      # (2SCi*T, 1)

    alphas = np.ones((S,), np.float32)                                      # alphas = ones
    p['alpha_s'] = jnp.asarray(np.broadcast_to(alphas[:, None, None], (S, V, V)).copy())
    p['att0_s'] = jnp.full((S, V, V), 1.0 / V, jnp.float32)                 # attention0s; atts=0

    # ---- spatial: out_nets / ff_nets (+BN folded) ----
    w_out_s = nrm(keys[2], (Co, S * C), S * C)
    b_out_s = bias(keys[3], Co)
    wup_s = np.stack([np.kron(w_out_s[:, s * C:(s + 1) * C] * bn_scale, eye_t)
                      for s in range(S)])                                   # (S, CoT, CT)
    p['wup_out_s'] = jnp.asarray(wup_s).astype(bf16)
    p['sh_out_s'] = jnp.asarray(np.kron(b_out_s * bn_scale, ones_t))        # (CoT, 1)

    w_ff_s = nrm(keys[4], (Co, Co), Co)
    b_ff_s = bias(keys[5], Co)
    p['w_ff_s'] = jnp.asarray(np.kron(w_ff_s * bn_scale, eye_t)).astype(bf16)
    p['sh_ff_s'] = jnp.asarray(np.kron(b_ff_s * bn_scale, ones_t))

    # ---- temporal: in_nett (bias, no BN), per-(chunk,subset) blocks ----
    w_in_t = nrm(keys[6], (6 * S * Ci, Co), Co).reshape(6 * S, Ci, Co)
    b_in_t = bias(keys[7], 6 * S * Ci).reshape(6 * S, Ci, 1)
    p['w_in_t'] = jnp.asarray(np.stack([np.kron(w_in_t[j], eye_t)
                                        for j in range(6 * S)])).astype(bf16)   # (6S, CiT, CoT)
    p['b_in_t'] = jnp.asarray(np.stack([np.kron(b_in_t[j], ones_t)
                                        for j in range(6 * S)]))                # (6S, CiT, 1)

    # temporal masks in the kernel's A[q, t] orientation (A[q,t] = attention_X[t,q]),
    # with alphat_* and 1/(Ci*V) folded in.  Branch order: forward, backward, center.
    bm = np.triu(np.ones((T, T), np.float32))       # backward_mask[t, q]
    fm = bm.T                                       # forward_mask[t, q]
    inv_civ = 1.0 / (Ci * V)
    alphat_f = np.ones((S,), np.float32)            # alphat_1
    alphat_b = np.ones((S,), np.float32)            # alphat_0
    alphat_c = np.ones((S,), np.float32)            # alphat_2
    mask9 = np.zeros((3 * S, T, T), np.float32)
    for s in range(S):
        mask9[0 * S + s] = fm.T * alphat_f[s] * inv_civ
        mask9[1 * S + s] = bm.T * alphat_b[s] * inv_civ
        mask9[2 * S + s] = np.ones((T, T), np.float32) * alphat_c[s] * inv_civ
    p['mask_t'] = jnp.asarray(mask9)                                        # (3S, T, T)

    # ---- temporal: out_nett (+BN folded), kron(W_block, ones(T,T)) upsampling ----
    w_out_t = nrm(keys[8], (Co, 3 * S * Co), 3 * S * Co)
    b_out_t = bias(keys[9], Co)
    wup_t = np.stack([np.kron(w_out_t[:, j * Co:(j + 1) * Co] * bn_scale,
                              np.ones((T, T), np.float32)) for j in range(3 * S)])
    p['wup_out_t'] = jnp.asarray(wup_t)                                     # (3S, CoT, CoT) f32
    p['sh_out_t'] = jnp.asarray(np.kron(b_out_t * bn_scale, ones_t))

    # selection matrices that upsample a (T,T) score to (CoT, CoT) via two tiny matmuls
    p['p2'] = jnp.asarray(np.kron(np.ones((Co, 1), np.float32), eye_t))     # (CoT, T)
    p['q2'] = jnp.asarray(np.kron(np.ones((1, Co), np.float32), eye_t))     # (T, CoT)

    w_ff_t = nrm(keys[10], (Co, Co), Co)
    b_ff_t = bias(keys[11], Co)
    p['w_ff_t'] = jnp.asarray(np.kron(w_ff_t * bn_scale, eye_t)).astype(bf16)
    p['sh_ff_t'] = jnp.asarray(np.kron(b_ff_t * bn_scale, ones_t))

    # ---- out_nett_extend: (7,1) conv + BN as one banded (CoT, CoT) block matrix ----
    w7 = nrm(keys[12], (7, Co, Co), 7 * Co)
    b_ext = bias(keys[13], Co)
    w7big = np.zeros((CoT, CoT), np.float32)
    for co in range(Co):
        for c in range(Co):
            for t in range(T):
                for dt in range(7):
                    tp = t + dt - 3
                    if 0 <= tp < T:
                        w7big[co * T + t, c * T + tp] = w7[dt, co, c] * bn_scale
    p['w7big'] = jnp.asarray(w7big).astype(bf16)
    p['sh_ext'] = jnp.asarray(np.kron(b_ext * bn_scale, ones_t))
    return p


# --------------------------------------------------------------------------------------
# The fused kernel: everything per batch element.
# Layout convention: "rows" = (channel, t) flattened channel-major, lanes = V joints.
# --------------------------------------------------------------------------------------
def _make_kernel(cfg):
    C = cfg['in_channels']; Co = cfg['out_channels']; Ci = cfg['inter_channels']
    S = cfg['num_subset']; V = cfg['num_node']; T = cfg['num_frame']
    CoT, CiT = Co * T, Ci * T
    inv_cit = 1.0 / (Ci * T)
    f32, bf16 = jnp.float32, jnp.bfloat16

    def kernel(x_ref,
               pe_s_ref, w_in_s_ref, b_in_s_ref, alpha_ref, att0_ref,
               wup_s_ref, sh_out_s_ref, w_ff_s_ref, sh_ff_s_ref,
               pe_t_ref, w_in_t_ref, b_in_t_ref, mask_ref, wup_t_ref,
               p2_ref, q2_ref, sh_out_t_ref, w_ff_t_ref, sh_ff_t_ref,
               w7_ref, sh_ext_ref,
               o_ref):
        x = x_ref[...]                                           # (C*T, V) f32
        x_b = x.astype(bf16)

        # ---------------- spatial attention ----------------
        xpe_b = (x + pe_s_ref[...]).astype(bf16)                 # in_nets input (x + pe_s)
        qk = jnp.dot(w_in_s_ref[...], xpe_b,
                     preferred_element_type=f32) + b_in_s_ref[...]   # (2*S*Ci*T, V)
        proj = jnp.zeros((CoT, V), f32)
        for s in range(S):
            q_s = qk[s * CiT:(s + 1) * CiT].astype(bf16)             # (Ci*T, V)
            k_s = qk[(S + s) * CiT:(S + s + 1) * CiT].astype(bf16)
            raw = lax.dot_general(q_s, k_s, (((0,), (0,)), ((), ())),
                                  preferred_element_type=f32)        # (V, V)
            att = jnp.tanh(raw * inv_cit) * alpha_ref[s] + att0_ref[s]
            # value path + out_nets projection for this subset (BN scale folded in wup)
            t1 = jnp.dot(wup_s_ref[s], x_b, preferred_element_type=f32)   # (Co*T, V)
            proj = proj + jnp.dot(t1.astype(bf16), att.astype(bf16),
                                  preferred_element_type=f32)
        ya = _leaky(proj + sh_out_s_ref[...] + x)                # + downs1(x), LeakyReLU
        y = _leaky(jnp.dot(w_ff_s_ref[...], ya.astype(bf16),
                           preferred_element_type=f32)
                   + sh_ff_s_ref[...] + x)                       # ff_nets + downs2(x)
        y_b = y.astype(bf16)

        # ---------------- temporal attention ----------------
        zpe_b = (y + pe_t_ref[...]).astype(bf16)                 # in_nett input (y + pe_t)
        p2 = p2_ref[...]
        q2 = q2_ref[...]
        projt = jnp.zeros((CoT, V), f32)
        for br in range(3):                                      # forward / backward / center
            for s in range(S):
                qi = br * S + s
                ki = (3 + br) * S + s
                q_rows = jnp.dot(w_in_t_ref[qi], zpe_b,
                                 preferred_element_type=f32) + b_in_t_ref[qi]   # (Ci*T, V)
                k_rows = jnp.dot(w_in_t_ref[ki], zpe_b,
                                 preferred_element_type=f32) + b_in_t_ref[ki]
                # A[q, t] = sum_{c, v} k[c, q, v] * q[c, t, v]
                a = jnp.zeros((T, T), f32)
                for ci in range(Ci):
                    kc = k_rows[ci * T:(ci + 1) * T].astype(bf16)    # (T, V)
                    qc = q_rows[ci * T:(ci + 1) * T].astype(bf16)
                    a = a + lax.dot_general(kc, qc, (((1,), (1,)), ((), ())),
                                            preferred_element_type=f32)
                a = a * mask_ref[qi]                     # causal mask, alphat, 1/(Ci*V)
                # kron(W_out_block, A): value application + out_nett projection in one matmul
                atile = jnp.dot(jnp.dot(p2, a), q2)                  # (CoT, CoT)
                comb = (wup_t_ref[qi] * atile).astype(bf16)
                projt = projt + jnp.dot(comb, y_b, preferred_element_type=f32)
        za = _leaky(projt + sh_out_t_ref[...] + y)               # + downt1(y), LeakyReLU
        z = _leaky(jnp.dot(w_ff_t_ref[...], za.astype(bf16),
                           preferred_element_type=f32)
                   + sh_ff_t_ref[...] + y)                       # ff_nett + downt2(y)

        # ---------------- out_nett_extend: (7,1) conv as one banded matmul ----------------
        conv = jnp.dot(w7_ref[...], z.astype(bf16),
                       preferred_element_type=f32) + sh_ext_ref[...]
        o_ref[...] = _leaky(z + conv)                            # + downt3(z), LeakyReLU

    return kernel


# --------------------------------------------------------------------------------------
# Forward pass (STAttentionBlock.forward) — one pallas_call.
# --------------------------------------------------------------------------------------
def st_attention_block_forward(x, p, cfg):
    N, C, T, V = x.shape
    Co = cfg['out_channels']
    assert C == Co, "identity shortcut paths assume in_channels == out_channels"
    CT, CoT = C * T, Co * T

    x_rows = x.reshape(N, CT, V)                                 # free, flat-order-preserving

    consts = [p['pe_s'], p['w_in_s'], p['b_in_s'], p['alpha_s'], p['att0_s'],
              p['wup_out_s'], p['sh_out_s'], p['w_ff_s'], p['sh_ff_s'],
              p['pe_t'], p['w_in_t'], p['b_in_t'], p['mask_t'], p['wup_out_t'],
              p['p2'], p['q2'], p['sh_out_t'], p['w_ff_t'], p['sh_ff_t'],
              p['w7big'], p['sh_ext']]

    in_specs = [pl.BlockSpec((None, CT, V), lambda n: (n, 0, 0))]
    for c in consts:
        in_specs.append(pl.BlockSpec(c.shape, lambda n, _nd=c.ndim: (0,) * _nd))

    out = pl.pallas_call(
        _make_kernel(cfg),
        out_shape=jax.ShapeDtypeStruct((N, CoT, V), jnp.float32),
        grid=(N,),
        in_specs=in_specs,
        out_specs=pl.BlockSpec((None, CoT, V), lambda n: (n, 0, 0)),
        compiler_params=pltpu.CompilerParams(
            dimension_semantics=("parallel",)),
    )(x_rows, *consts)

    return out.reshape(N, Co, T, V)                              # free reshape back


# --------------------------------------------------------------------------------------
if __name__ == "__main__":
    cfg = dict(in_channels=8, out_channels=8, inter_channels=4,
               num_subset=3, num_node=16, num_frame=8)
    key = jax.random.PRNGKey(0)
    kx, kp = jax.random.split(key)
    N, C, T, V = 2, cfg['in_channels'], cfg['num_frame'], cfg['num_node']

    x = jax.random.normal(kx, (N, C, T, V), jnp.float32)
    params = make_params(kp, cfg)

    fwd = jax.jit(functools.partial(st_attention_block_forward, cfg=cfg))
    out = jax.block_until_ready(fwd(x, params))

    assert out.shape == (N, cfg['out_channels'], T, V), out.shape
    assert bool(jnp.all(jnp.isfinite(out)))
    print("KERNEL_OK")
</pallas_src>

<mosaic_0001>
module attributes {stable_mosaic.version = 11 : i64} {
  func.func @kernel(%arg0: i32, %arg1: memref<1x64x16xf32, #tpu.memory_space<vmem>>, %arg2: memref<64x16xf32, #tpu.memory_space<vmem>>, %arg3: memref<192x64xbf16, #tpu.memory_space<vmem>>, %arg4: memref<192x1xf32, #tpu.memory_space<vmem>>, %arg5: memref<3x16x16xf32, #tpu.memory_space<vmem>>, %arg6: memref<3x16x16xf32, #tpu.memory_space<vmem>>, %arg7: memref<3x64x64xbf16, #tpu.memory_space<vmem>>, %arg8: memref<64x1xf32, #tpu.memory_space<vmem>>, %arg9: memref<64x64xbf16, #tpu.memory_space<vmem>>, %arg10: memref<64x1xf32, #tpu.memory_space<vmem>>, %arg11: memref<64x16xf32, #tpu.memory_space<vmem>>, %arg12: memref<18x32x64xbf16, #tpu.memory_space<vmem>>, %arg13: memref<18x32x1xf32, #tpu.memory_space<vmem>>, %arg14: memref<9x8x8xf32, #tpu.memory_space<vmem>>, %arg15: memref<9x64x64xf32, #tpu.memory_space<vmem>>, %arg16: memref<64x8xf32, #tpu.memory_space<vmem>>, %arg17: memref<8x64xf32, #tpu.memory_space<vmem>>, %arg18: memref<64x1xf32, #tpu.memory_space<vmem>>, %arg19: memref<64x64xbf16, #tpu.memory_space<vmem>>, %arg20: memref<64x1xf32, #tpu.memory_space<vmem>>, %arg21: memref<64x64xbf16, #tpu.memory_space<vmem>>, %arg22: memref<64x1xf32, #tpu.memory_space<vmem>>, %arg23: memref<1x64x16xf32, #tpu.memory_space<vmem>>) attributes {dimension_semantics = [#tpu.dimension_semantics<parallel>], iteration_bounds = array<i64: 2>, scalar_prefetch = 0 : i64, scratch_operands = 0 : i64, tpu.core_type = #tpu.core_type<tc>, window_params = [{transform_indices = @transform_0, window_bounds = array<i64: 1, 64, 16>}, {pipeline_mode = #tpu.pipeline_mode<synchronous>, transform_indices = @transform_1, window_bounds = array<i64: 64, 16>}, {pipeline_mode = #tpu.pipeline_mode<synchronous>, transform_indices = @transform_2, window_bounds = array<i64: 192, 64>}, {pipeline_mode = #tpu.pipeline_mode<synchronous>, transform_indices = @transform_3, window_bounds = array<i64: 192, 1>}, {pipeline_mode = #tpu.pipeline_mode<synchronous>, transform_indices = @transform_4, window_bounds = array<i64: 3, 16, 16>}, {pipeline_mode = #tpu.pipeline_mode<synchronous>, transform_indices = @transform_5, window_bounds = array<i64: 3, 16, 16>}, {pipeline_mode = #tpu.pipeline_mode<synchronous>, transform_indices = @transform_6, window_bounds = array<i64: 3, 64, 64>}, {pipeline_mode = #tpu.pipeline_mode<synchronous>, transform_indices = @transform_7, window_bounds = array<i64: 64, 1>}, {pipeline_mode = #tpu.pipeline_mode<synchronous>, transform_indices = @transform_8, window_bounds = array<i64: 64, 64>}, {pipeline_mode = #tpu.pipeline_mode<synchronous>, transform_indices = @transform_9, window_bounds = array<i64: 64, 1>}, {pipeline_mode = #tpu.pipeline_mode<synchronous>, transform_indices = @transform_10, window_bounds = array<i64: 64, 16>}, {pipeline_mode = #tpu.pipeline_mode<synchronous>, transform_indices = @transform_11, window_bounds = array<i64: 18, 32, 64>}, {pipeline_mode = #tpu.pipeline_mode<synchronous>, transform_indices = @transform_12, window_bounds = array<i64: 18, 32, 1>}, {pipeline_mode = #tpu.pipeline_mode<synchronous>, transform_indices = @transform_13, window_bounds = array<i64: 9, 8, 8>}, {pipeline_mode = #tpu.pipeline_mode<synchronous>, transform_indices = @transform_14, window_bounds = array<i64: 9, 64, 64>}, {pipeline_mode = #tpu.pipeline_mode<synchronous>, transform_indices = @transform_15, window_bounds = array<i64: 64, 8>}, {pipeline_mode = #tpu.pipeline_mode<synchronous>, transform_indices = @transform_16, window_bounds = array<i64: 8, 64>}, {pipeline_mode = #tpu.pipeline_mode<synchronous>, transform_indices = @transform_17, window_bounds = array<i64: 64, 1>}, {pipeline_mode = #tpu.pipeline_mode<synchronous>, transform_indices = @transform_18, window_bounds = array<i64: 64, 64>}, {pipeline_mode = #tpu.pipeline_mode<synchronous>, transform_indices = @transform_19, window_bounds = array<i64: 64, 1>}, {pipeline_mode = #tpu.pipeline_mode<synchronous>, transform_indices = @transform_20, window_bounds = array<i64: 64, 64>}, {pipeline_mode = #tpu.pipeline_mode<synchronous>, transform_indices = @transform_21, window_bounds = array<i64: 64, 1>}, {transform_indices = @transform_22, window_bounds = array<i64: 1, 64, 16>}]} {
    %c0 = arith.constant 0 : index
    %c0_0 = arith.constant 0 : index
    %c0_1 = arith.constant 0 : index
    %0 = vector.load %arg1[%c0, %c0_0, %c0_1] : memref<1x64x16xf32, #tpu.memory_space<vmem>>, vector<1x64x16xf32>
    %1 = vector.shape_cast %0 : vector<1x64x16xf32> to vector<64x16xf32>
    %2 = arith.truncf %1 : vector<64x16xf32> to vector<64x16xbf16>
    %c0_2 = arith.constant 0 : index
    %c0_3 = arith.constant 0 : index
    %3 = vector.load %arg2[%c0_2, %c0_3] : memref<64x16xf32, #tpu.memory_space<vmem>>, vector<64x16xf32>
    %4 = arith.addf %1, %3 : vector<64x16xf32>
    %5 = arith.truncf %4 : vector<64x16xf32> to vector<64x16xbf16>
    %c0_4 = arith.constant 0 : index
    %c0_5 = arith.constant 0 : index
    %6 = vector.load %arg3[%c0_4, %c0_5] : memref<192x64xbf16, #tpu.memory_space<vmem>>, vector<192x64xbf16>
    %cst = arith.constant dense<0.000000e+00> : vector<192x16xf32>
    %7 = tpu.matmul %6, %5, %cst {dimension_numbers = #tpu.dot_dimension_numbers<[1], [0], [0], [1], [0, 0, 1, 1], [], []>} : vector<192x64xbf16>, vector<64x16xbf16>, vector<192x16xf32> -> vector<192x16xf32>
    %c0_6 = arith.constant 0 : index
    %c0_7 = arith.constant 0 : index
    %8 = vector.load %arg4[%c0_6, %c0_7] : memref<192x1xf32, #tpu.memory_space<vmem>>, vector<192x1xf32>
    %9 = vector.broadcast %8 : vector<192x1xf32> to vector<192x16xf32>
    %10 = arith.addf %7, %9 : vector<192x16xf32>
    %cst_8 = arith.constant 0.000000e+00 : f32
    %11 = vector.broadcast %cst_8 : f32 to vector<64x16xf32>
    %12 = vector.extract_strided_slice %10 {offsets = [0, 0], sizes = [32, 16], strides = [1, 1]} : vector<192x16xf32> to vector<32x16xf32>
    %13 = arith.truncf %12 : vector<32x16xf32> to vector<32x16xbf16>
    %14 = vector.extract_strided_slice %10 {offsets = [96, 0], sizes = [32, 16], strides = [1, 1]} : vector<192x16xf32> to vector<32x16xf32>
    %15 = arith.truncf %14 : vector<32x16xf32> to vector<32x16xbf16>
    %cst_9 = arith.constant dense<0.000000e+00> : vector<16x16xf32>
    %16 = tpu.matmul %13, %15, %cst_9 {dimension_numbers = #tpu.dot_dimension_numbers<[0], [0], [1], [1], [0, 1, 1, 1], [], []>} : vector<32x16xbf16>, vector<32x16xbf16>, vector<16x16xf32> -> vector<16x16xf32>
    %cst_10 = arith.constant 3.125000e-02 : f32
    %17 = vector.broadcast %cst_10 : f32 to vector<16x16xf32>
    %18 = arith.mulf %16, %17 : vector<16x16xf32>
    %19 = math.tanh %18 : vector<16x16xf32>
    %c0_11 = arith.constant 0 : index
    %c0_12 = arith.constant 0 : index
    %c0_13 = arith.constant 0 : index
    %20 = vector.load %arg5[%c0_11, %c0_12, %c0_13] : memref<3x16x16xf32, #tpu.memory_space<vmem>>, vector<1x16x16xf32>
    %21 = vector.shape_cast %20 : vector<1x16x16xf32> to vector<16x16xf32>
    %22 = arith.mulf %19, %21 : vector<16x16xf32>
    %c0_14 = arith.constant 0 : index
    %c0_15 = arith.constant 0 : index
    %c0_16 = arith.constant 0 : index
    %23 = vector.load %arg6[%c0_14, %c0_15, %c0_16] : memref<3x16x16xf32, #tpu.memory_space<vmem>>, vector<1x16x16xf32>
    %24 = vector.shape_cast %23 : vector<1x16x16xf32> to vector<16x16xf32>
    %25 = arith.addf %22, %24 : vector<16x16xf32>
    %c0_17 = arith.constant 0 : index
    %c0_18 = arith.constant 0 : index
    %c0_19 = arith.constant 0 : index
    %26 = vector.load %arg7[%c0_17, %c0_18, %c0_19] : memref<3x64x64xbf16, #tpu.memory_space<vmem>>, vector<1x64x64xbf16>
    %27 = vector.shape_cast %26 : vector<1x64x64xbf16> to vector<64x64xbf16>
    %cst_20 = arith.constant dense<0.000000e+00> : vector<64x16xf32>
    %28 = tpu.matmul %27, %2, %cst_20 {dimension_numbers = #tpu.dot_dimension_numbers<[1], [0], [0], [1], [0, 0, 1, 1], [], []>} : vector<64x64xbf16>, vector<64x16xbf16>, vector<64x16xf32> -> vector<64x16xf32>
    %29 = arith.truncf %28 : vector<64x16xf32> to vector<64x16xbf16>
    %30 = arith.truncf %25 : vector<16x16xf32> to vector<16x16xbf16>
    %cst_21 = arith.constant dense<0.000000e+00> : vector<64x16xf32>
    %31 = tpu.matmul %29, %30, %cst_21 {dimension_numbers = #tpu.dot_dimension_numbers<[1], [0], [0], [1], [0, 0, 1, 1], [], []>} : vector<64x16xbf16>, vector<16x16xbf16>, vector<64x16xf32> -> vector<64x16xf32>
    %32 = arith.addf %11, %31 : vector<64x16xf32>
    %33 = vector.extract_strided_slice %10 {offsets = [32, 0], sizes = [32, 16], strides = [1, 1]} : vector<192x16xf32> to vector<32x16xf32>
    %34 = arith.truncf %33 : vector<32x16xf32> to vector<32x16xbf16>
    %35 = vector.extract_strided_slice %10 {offsets = [128, 0], sizes = [32, 16], strides = [1, 1]} : vector<192x16xf32> to vector<32x16xf32>
    %36 = arith.truncf %35 : vector<32x16xf32> to vector<32x16xbf16>
    %cst_22 = arith.constant dense<0.000000e+00> : vector<16x16xf32>
    %37 = tpu.matmul %34, %36, %cst_22 {dimension_numbers = #tpu.dot_dimension_numbers<[0], [0], [1], [1], [0, 1, 1, 1], [], []>} : vector<32x16xbf16>, vector<32x16xbf16>, vector<16x16xf32> -> vector<16x16xf32>
    %cst_23 = arith.constant 3.125000e-02 : f32
    %38 = vector.broadcast %cst_23 : f32 to vector<16x16xf32>
    %39 = arith.mulf %37, %38 : vector<16x16xf32>
    %40 = math.tanh %39 : vector<16x16xf32>
    %c1 = arith.constant 1 : index
    %c0_24 = arith.constant 0 : index
    %c0_25 = arith.constant 0 : index
    %41 = vector.load %arg5[%c1, %c0_24, %c0_25] : memref<3x16x16xf32, #tpu.memory_space<vmem>>, vector<1x16x16xf32>
    %42 = vector.shape_cast %41 : vector<1x16x16xf32> to vector<16x16xf32>
    %43 = arith.mulf %40, %42 : vector<16x16xf32>
    %c1_26 = arith.constant 1 : index
    %c0_27 = arith.constant 0 : index
    %c0_28 = arith.constant 0 : index
    %44 = vector.load %arg6[%c1_26, %c0_27, %c0_28] : memref<3x16x16xf32, #tpu.memory_space<vmem>>, vector<1x16x16xf32>
    %45 = vector.shape_cast %44 : vector<1x16x16xf32> to vector<16x16xf32>
    %46 = arith.addf %43, %45 : vector<16x16xf32>
    %c1_29 = arith.constant 1 : index
    %c0_30 = arith.constant 0 : index
    %c0_31 = arith.constant 0 : index
    %47 = vector.load %arg7[%c1_29, %c0_30, %c0_31] : memref<3x64x64xbf16, #tpu.memory_space<vmem>>, vector<1x64x64xbf16>
    %48 = vector.shape_cast %47 : vector<1x64x64xbf16> to vector<64x64xbf16>
    %cst_32 = arith.constant dense<0.000000e+00> : vector<64x16xf32>
    %49 = tpu.matmul %48, %2, %cst_32 {dimension_numbers = #tpu.dot_dimension_numbers<[1], [0], [0], [1], [0, 0, 1, 1], [], []>} : vector<64x64xbf16>, vector<64x16xbf16>, vector<64x16xf32> -> vector<64x16xf32>
    %50 = arith.truncf %49 : vector<64x16xf32> to vector<64x16xbf16>
    %51 = arith.truncf %46 : vector<16x16xf32> to vector<16x16xbf16>
    %cst_33 = arith.constant dense<0.000000e+00> : vector<64x16xf32>
    %52 = tpu.matmul %50, %51, %cst_33 {dimension_numbers = #tpu.dot_dimension_numbers<[1], [0], [0], [1], [0, 0, 1, 1], [], []>} : vector<64x16xbf16>, vector<16x16xbf16>, vector<64x16xf32> -> vector<64x16xf32>
    %53 = arith.addf %32, %52 : vector<64x16xf32>
    %54 = vector.extract_strided_slice %10 {offsets = [64, 0], sizes = [32, 16], strides = [1, 1]} : vector<192x16xf32> to vector<32x16xf32>
    %55 = arith.truncf %54 : vector<32x16xf32> to vector<32x16xbf16>
    %56 = vector.extract_strided_slice %10 {offsets = [160, 0], sizes = [32, 16], strides = [1, 1]} : vector<192x16xf32> to vector<32x16xf32>
    %57 = arith.truncf %56 : vector<32x16xf32> to vector<32x16xbf16>
    %cst_34 = arith.constant dense<0.000000e+00> : vector<16x16xf32>
    %58 = tpu.matmul %55, %57, %cst_34 {dimension_numbers = #tpu.dot_dimension_numbers<[0], [0], [1], [1], [0, 1, 1, 1], [], []>} : vector<32x16xbf16>, vector<32x16xbf16>, vector<16x16xf32> -> vector<16x16xf32>
    %cst_35 = arith.constant 3.125000e-02 : f32
    %59 = vector.broadcast %cst_35 : f32 to vector<16x16xf32>
    %60 = arith.mulf %58, %59 : vector<16x16xf32>
    %61 = math.tanh %60 : vector<16x16xf32>
    %c2 = arith.constant 2 : index
    %c0_36 = arith.constant 0 : index
    %c0_37 = arith.constant 0 : index
    %62 = vector.load %arg5[%c2, %c0_36, %c0_37] : memref<3x16x16xf32, #tpu.memory_space<vmem>>, vector<1x16x16xf32>
    %63 = vector.shape_cast %62 : vector<1x16x16xf32> to vector<16x16xf32>
    %64 = arith.mulf %61, %63 : vector<16x16xf32>
    %c2_38 = arith.constant 2 : index
    %c0_39 = arith.constant 0 : index
    %c0_40 = arith.constant 0 : index
    %65 = vector.load %arg6[%c2_38, %c0_39, %c0_40] : memref<3x16x16xf32, #tpu.memory_space<vmem>>, vector<1x16x16xf32>
    %66 = vector.shape_cast %65 : vector<1x16x16xf32> to vector<16x16xf32>
    %67 = arith.addf %64, %66 : vector<16x16xf32>
    %c2_41 = arith.constant 2 : index
    %c0_42 = arith.constant 0 : index
    %c0_43 = arith.constant 0 : index
    %68 = vector.load %arg7[%c2_41, %c0_42, %c0_43] : memref<3x64x64xbf16, #tpu.memory_space<vmem>>, vector<1x64x64xbf16>
    %69 = vector.shape_cast %68 : vector<1x64x64xbf16> to vector<64x64xbf16>
    %cst_44 = arith.constant dense<0.000000e+00> : vector<64x16xf32>
    %70 = tpu.matmul %69, %2, %cst_44 {dimension_numbers = #tpu.dot_dimension_numbers<[1], [0], [0], [1], [0, 0, 1, 1], [], []>} : vector<64x64xbf16>, vector<64x16xbf16>, vector<64x16xf32> -> vector<64x16xf32>
    %71 = arith.truncf %70 : vector<64x16xf32> to vector<64x16xbf16>
    %72 = arith.truncf %67 : vector<16x16xf32> to vector<16x16xbf16>
    %cst_45 = arith.constant dense<0.000000e+00> : vector<64x16xf32>
    %73 = tpu.matmul %71, %72, %cst_45 {dimension_numbers = #tpu.dot_dimension_numbers<[1], [0], [0], [1], [0, 0, 1, 1], [], []>} : vector<64x16xbf16>, vector<16x16xbf16>, vector<64x16xf32> -> vector<64x16xf32>
    %74 = arith.addf %53, %73 : vector<64x16xf32>
    %c0_46 = arith.constant 0 : index
    %c0_47 = arith.constant 0 : index
    %75 = vector.load %arg8[%c0_46, %c0_47] : memref<64x1xf32, #tpu.memory_space<vmem>>, vector<64x1xf32>
    %76 = vector.broadcast %75 : vector<64x1xf32> to vector<64x16xf32>
    %77 = arith.addf %74, %76 : vector<64x16xf32>
    %78 = arith.addf %77, %1 : vector<64x16xf32>
    %cst_48 = arith.constant 0.000000e+00 : f32
    %79 = vector.broadcast %cst_48 : f32 to vector<64x16xf32>
    %80 = arith.cmpf ogt, %78, %79 : vector<64x16xf32>
    %cst_49 = arith.constant 1.000000e-01 : f32
    %81 = vector.broadcast %cst_49 : f32 to vector<64x16xf32>
    %82 = arith.mulf %81, %78 : vector<64x16xf32>
    %83 = arith.select %80, %78, %82 : vector<64x16xi1>, vector<64x16xf32>
    %c0_50 = arith.constant 0 : index
    %c0_51 = arith.constant 0 : index
    %84 = vector.load %arg9[%c0_50, %c0_51] : memref<64x64xbf16, #tpu.memory_space<vmem>>, vector<64x64xbf16>
    %85 = arith.truncf %83 : vector<64x16xf32> to vector<64x16xbf16>
    %cst_52 = arith.constant dense<0.000000e+00> : vector<64x16xf32>
    %86 = tpu.matmul %84, %85, %cst_52 {dimension_numbers = #tpu.dot_dimension_numbers<[1], [0], [0], [1], [0, 0, 1, 1], [], []>} : vector<64x64xbf16>, vector<64x16xbf16>, vector<64x16xf32> -> vector<64x16xf32>
    %c0_53 = arith.constant 0 : index
    %c0_54 = arith.constant 0 : index
    %87 = vector.load %arg10[%c0_53, %c0_54] : memref<64x1xf32, #tpu.memory_space<vmem>>, vector<64x1xf32>
    %88 = vector.broadcast %87 : vector<64x1xf32> to vector<64x16xf32>
    %89 = arith.addf %86, %88 : vector<64x16xf32>
    %90 = arith.addf %89, %1 : vector<64x16xf32>
    %cst_55 = arith.constant 0.000000e+00 : f32
    %91 = vector.broadcast %cst_55 : f32 to vector<64x16xf32>
    %92 = arith.cmpf ogt, %90, %91 : vector<64x16xf32>
    %cst_56 = arith.constant 1.000000e-01 : f32
    %93 = vector.broadcast %cst_56 : f32 to vector<64x16xf32>
    %94 = arith.mulf %93, %90 : vector<64x16xf32>
    %95 = arith.select %92, %90, %94 : vector<64x16xi1>, vector<64x16xf32>
    %96 = arith.truncf %95 : vector<64x16xf32> to vector<64x16xbf16>
    %c0_57 = arith.constant 0 : index
    %c0_58 = arith.constant 0 : index
    %97 = vector.load %arg11[%c0_57, %c0_58] : memref<64x16xf32, #tpu.memory_space<vmem>>, vector<64x16xf32>
    %98 = arith.addf %95, %97 : vector<64x16xf32>
    %99 = arith.truncf %98 : vector<64x16xf32> to vector<64x16xbf16>
    %c0_59 = arith.constant 0 : index
    %c0_60 = arith.constant 0 : index
    %100 = vector.load %arg16[%c0_59, %c0_60] : memref<64x8xf32, #tpu.memory_space<vmem>>, vector<64x8xf32>
    %c0_61 = arith.constant 0 : index
    %c0_62 = arith.constant 0 : index
    %101 = vector.load %arg17[%c0_61, %c0_62] : memref<8x64xf32, #tpu.memory_space<vmem>>, vector<8x64xf32>
    %cst_63 = arith.constant 0.000000e+00 : f32
    %102 = vector.broadcast %cst_63 : f32 to vector<64x16xf32>
    %c0_64 = arith.constant 0 : index
    %c0_65 = arith.constant 0 : index
    %c0_66 = arith.constant 0 : index
    %103 = vector.load %arg12[%c0_64, %c0_65, %c0_66] : memref<18x32x64xbf16, #tpu.memory_space<vmem>>, vector<1x32x64xbf16>
    %104 = vector.shape_cast %103 : vector<1x32x64xbf16> to vector<32x64xbf16>
    %cst_67 = arith.constant dense<0.000000e+00> : vector<32x16xf32>
    %105 = tpu.matmul %104, %99, %cst_67 {dimension_numbers = #tpu.dot_dimension_numbers<[1], [0], [0], [1], [0, 0, 1, 1], [], []>} : vector<32x64xbf16>, vector<64x16xbf16>, vector<32x16xf32> -> vector<32x16xf32>
    %c0_68 = arith.constant 0 : index
    %c0_69 = arith.constant 0 : index
    %c0_70 = arith.constant 0 : index
    %106 = vector.load %arg13[%c0_68, %c0_69, %c0_70] : memref<18x32x1xf32, #tpu.memory_space<vmem>>, vector<1x32x1xf32>
    %107 = vector.shape_cast %106 : vector<1x32x1xf32> to vector<32x1xf32>
    %108 = vector.broadcast %107 : vector<32x1xf32> to vector<32x16xf32>
    %109 = arith.addf %105, %108 : vector<32x16xf32>
    %c9 = arith.constant 9 : index
    %c0_71 = arith.constant 0 : index
    %c0_72 = arith.constant 0 : index
    %110 = vector.load %arg12[%c9, %c0_71, %c0_72] : memref<18x32x64xbf16, #tpu.memory_space<vmem>>, vector<1x32x64xbf16>
    %111 = vector.shape_cast %110 : vector<1x32x64xbf16> to vector<32x64xbf16>
    %cst_73 = arith.constant dense<0.000000e+00> : vector<32x16xf32>
    %112 = tpu.matmul %111, %99, %cst_73 {dimension_numbers = #tpu.dot_dimension_numbers<[1], [0], [0], [1], [0, 0, 1, 1], [], []>} : vector<32x64xbf16>, vector<64x16xbf16>, vector<32x16xf32> -> vector<32x16xf32>
    %c9_74 = arith.constant 9 : index
    %c0_75 = arith.constant 0 : index
    %c0_76 = arith.constant 0 : index
    %113 = vector.load %arg13[%c9_74, %c0_75, %c0_76] : memref<18x32x1xf32, #tpu.memory_space<vmem>>, vector<1x32x1xf32>
    %114 = vector.shape_cast %113 : vector<1x32x1xf32> to vector<32x1xf32>
    %115 = vector.broadcast %114 : vector<32x1xf32> to vector<32x16xf32>
    %116 = arith.addf %112, %115 : vector<32x16xf32>
    %cst_77 = arith.constant 0.000000e+00 : f32
    %117 = vector.broadcast %cst_77 : f32 to vector<8x8xf32>
    %118 = vector.extract_strided_slice %116 {offsets = [0, 0], sizes = [8, 16], strides = [1, 1]} : vector<32x16xf32> to vector<8x16xf32>
    %119 = arith.truncf %118 : vector<8x16xf32> to vector<8x16xbf16>
    %120 = vector.extract_strided_slice %109 {offsets = [0, 0], sizes = [8, 16], strides = [1, 1]} : vector<32x16xf32> to vector<8x16xf32>
    %121 = arith.truncf %120 : vector<8x16xf32> to vector<8x16xbf16>
    %cst_78 = arith.constant dense<0.000000e+00> : vector<8x8xf32>
    %122 = tpu.matmul %119, %121, %cst_78 {dimension_numbers = #tpu.dot_dimension_numbers<[1], [1], [0], [0], [0, 0, 1, 0], [], []>} : vector<8x16xbf16>, vector<8x16xbf16>, vector<8x8xf32> -> vector<8x8xf32>
    %123 = arith.addf %117, %122 : vector<8x8xf32>
    %124 = vector.extract_strided_slice %116 {offsets = [8, 0], sizes = [8, 16], strides = [1, 1]} : vector<32x16xf32> to vector<8x16xf32>
    %125 = arith.truncf %124 : vector<8x16xf32> to vector<8x16xbf16>
    %126 = vector.extract_strided_slice %109 {offsets = [8, 0], sizes = [8, 16], strides = [1, 1]} : vector<32x16xf32> to vector<8x16xf32>
    %127 = arith.truncf %126 : vector<8x16xf32> to vector<8x16xbf16>
    %cst_79 = arith.constant dense<0.000000e+00> : vector<8x8xf32>
    %128 = tpu.matmul %125, %127, %cst_79 {dimension_numbers = #tpu.dot_dimension_numbers<[1], [1], [0], [0], [0, 0, 1, 0], [], []>} : vector<8x16xbf16>, vector<8x16xbf16>, vector<8x8xf32> -> vector<8x8xf32>
    %129 = arith.addf %123, %128 : vector<8x8xf32>
    %130 = vector.extract_strided_slice %116 {offsets = [16, 0], sizes = [8, 16], strides = [1, 1]} : vector<32x16xf32> to vector<8x16xf32>
    %131 = arith.truncf %130 : vector<8x16xf32> to vector<8x16xbf16>
    %132 = vector.extract_strided_slice %109 {offsets = [16, 0], sizes = [8, 16], strides = [1, 1]} : vector<32x16xf32> to vector<8x16xf32>
    %133 = arith.truncf %132 : vector<8x16xf32> to vector<8x16xbf16>
    %cst_80 = arith.constant dense<0.000000e+00> : vector<8x8xf32>
    %134 = tpu.matmul %131, %133, %cst_80 {dimension_numbers = #tpu.dot_dimension_numbers<[1], [1], [0], [0], [0, 0, 1, 0], [], []>} : vector<8x16xbf16>, vector<8x16xbf16>, vector<8x8xf32> -> vector<8x8xf32>
    %135 = arith.addf %129, %134 : vector<8x8xf32>
    %136 = vector.extract_strided_slice %116 {offsets = [24, 0], sizes = [8, 16], strides = [1, 1]} : vector<32x16xf32> to vector<8x16xf32>
    %137 = arith.truncf %136 : vector<8x16xf32> to vector<8x16xbf16>
    %138 = vector.extract_strided_slice %109 {offsets = [24, 0], sizes = [8, 16], strides = [1, 1]} : vector<32x16xf32> to vector<8x16xf32>
    %139 = arith.truncf %138 : vector<8x16xf32> to vector<8x16xbf16>
    %cst_81 = arith.constant dense<0.000000e+00> : vector<8x8xf32>
    %140 = tpu.matmul %137, %139, %cst_81 {dimension_numbers = #tpu.dot_dimension_numbers<[1], [1], [0], [0], [0, 0, 1, 0], [], []>} : vector<8x16xbf16>, vector<8x16xbf16>, vector<8x8xf32> -> vector<8x8xf32>
    %141 = arith.addf %135, %140 : vector<8x8xf32>
    %c0_82 = arith.constant 0 : index
    %c0_83 = arith.constant 0 : index
    %c0_84 = arith.constant 0 : index
    %142 = vector.load %arg14[%c0_82, %c0_83, %c0_84] : memref<9x8x8xf32, #tpu.memory_space<vmem>>, vector<1x8x8xf32>
    %143 = vector.shape_cast %142 : vector<1x8x8xf32> to vector<8x8xf32>
    %144 = arith.mulf %141, %143 : vector<8x8xf32>
    %cst_85 = arith.constant dense<0.000000e+00> : vector<64x8xf32>
    %145 = tpu.matmul %100, %144, %cst_85 {dimension_numbers = #tpu.dot_dimension_numbers<[1], [0], [0], [1], [0, 0, 1, 1], [], []>} : vector<64x8xf32>, vector<8x8xf32>, vector<64x8xf32> -> vector<64x8xf32>
    %cst_86 = arith.constant dense<0.000000e+00> : vector<64x64xf32>
    %146 = tpu.matmul %145, %101, %cst_86 {dimension_numbers = #tpu.dot_dimension_numbers<[1], [0], [0], [1], [0, 0, 1, 1], [], []>} : vector<64x8xf32>, vector<8x64xf32>, vector<64x64xf32> -> vector<64x64xf32>
    %c0_87 = arith.constant 0 : index
    %c0_88 = arith.constant 0 : index
    %c0_89 = arith.constant 0 : index
    %147 = vector.load %arg15[%c0_87, %c0_88, %c0_89] : memref<9x64x64xf32, #tpu.memory_space<vmem>>, vector<1x64x64xf32>
    %148 = vector.shape_cast %147 : vector<1x64x64xf32> to vector<64x64xf32>
    %149 = arith.mulf %148, %146 : vector<64x64xf32>
    %150 = arith.truncf %149 : vector<64x64xf32> to vector<64x64xbf16>
    %cst_90 = arith.constant dense<0.000000e+00> : vector<64x16xf32>
    %151 = tpu.matmul %150, %96, %cst_90 {dimension_numbers = #tpu.dot_dimension_numbers<[1], [0], [0], [1], [0, 0, 1, 1], [], []>} : vector<64x64xbf16>, vector<64x16xbf16>, vector<64x16xf32> -> vector<64x16xf32>
    %152 = arith.addf %102, %151 : vector<64x16xf32>
    %c1_91 = arith.constant 1 : index
    %c0_92 = arith.constant 0 : index
    %c0_93 = arith.constant 0 : index
    %153 = vector.load %arg12[%c1_91, %c0_92, %c0_93] : memref<18x32x64xbf16, #tpu.memory_space<vmem>>, vector<1x32x64xbf16>
    %154 = vector.shape_cast %153 : vector<1x32x64xbf16> to vector<32x64xbf16>
    %cst_94 = arith.constant dense<0.000000e+00> : vector<32x16xf32>
    %155 = tpu.matmul %154, %99, %cst_94 {dimension_numbers = #tpu.dot_dimension_numbers<[1], [0], [0], [1], [0, 0, 1, 1], [], []>} : vector<32x64xbf16>, vector<64x16xbf16>, vector<32x16xf32> -> vector<32x16xf32>
    %c1_95 = arith.constant 1 : index
    %c0_96 = arith.constant 0 : index
    %c0_97 = arith.constant 0 : index
    %156 = vector.load %arg13[%c1_95, %c0_96, %c0_97] : memref<18x32x1xf32, #tpu.memory_space<vmem>>, vector<1x32x1xf32>
    %157 = vector.shape_cast %156 : vector<1x32x1xf32> to vector<32x1xf32>
    %158 = vector.broadcast %157 : vector<32x1xf32> to vector<32x16xf32>
    %159 = arith.addf %155, %158 : vector<32x16xf32>
    %c10 = arith.constant 10 : index
    %c0_98 = arith.constant 0 : index
    %c0_99 = arith.constant 0 : index
    %160 = vector.load %arg12[%c10, %c0_98, %c0_99] : memref<18x32x64xbf16, #tpu.memory_space<vmem>>, vector<1x32x64xbf16>
    %161 = vector.shape_cast %160 : vector<1x32x64xbf16> to vector<32x64xbf16>
    %cst_100 = arith.constant dense<0.000000e+00> : vector<32x16xf32>
    %162 = tpu.matmul %161, %99, %cst_100 {dimension_numbers = #tpu.dot_dimension_numbers<[1], [0], [0], [1], [0, 0, 1, 1], [], []>} : vector<32x64xbf16>, vector<64x16xbf16>, vector<32x16xf32> -> vector<32x16xf32>
    %c10_101 = arith.constant 10 : index
    %c0_102 = arith.constant 0 : index
    %c0_103 = arith.constant 0 : index
    %163 = vector.load %arg13[%c10_101, %c0_102, %c0_103] : memref<18x32x1xf32, #tpu.memory_space<vmem>>, vector<1x32x1xf32>
    %164 = vector.shape_cast %163 : vector<1x32x1xf32> to vector<32x1xf32>
    %165 = vector.broadcast %164 : vector<32x1xf32> to vector<32x16xf32>
    %166 = arith.addf %162, %165 : vector<32x16xf32>
    %cst_104 = arith.constant 0.000000e+00 : f32
    %167 = vector.broadcast %cst_104 : f32 to vector<8x8xf32>
    %168 = vector.extract_strided_slice %166 {offsets = [0, 0], sizes = [8, 16], strides = [1, 1]} : vector<32x16xf32> to vector<8x16xf32>
    %169 = arith.truncf %168 : vector<8x16xf32> to vector<8x16xbf16>
    %170 = vector.extract_strided_slice %159 {offsets = [0, 0], sizes = [8, 16], strides = [1, 1]} : vector<32x16xf32> to vector<8x16xf32>
    %171 = arith.truncf %170 : vector<8x16xf32> to vector<8x16xbf16>
    %cst_105 = arith.constant dense<0.000000e+00> : vector<8x8xf32>
    %172 = tpu.matmul %169, %171, %cst_105 {dimension_numbers = #tpu.dot_dimension_numbers<[1], [1], [0], [0], [0, 0, 1, 0], [], []>} : vector<8x16xbf16>, vector<8x16xbf16>, vector<8x8xf32> -> vector<8x8xf32>
    %173 = arith.addf %167, %172 : vector<8x8xf32>
    %174 = vector.extract_strided_slice %166 {offsets = [8, 0], sizes = [8, 16], strides = [1, 1]} : vector<32x16xf32> to vector<8x16xf32>
    %175 = arith.truncf %174 : vector<8x16xf32> to vector<8x16xbf16>
    %176 = vector.extract_strided_slice %159 {offsets = [8, 0], sizes = [8, 16], strides = [1, 1]} : vector<32x16xf32> to vector<8x16xf32>
    %177 = arith.truncf %176 : vector<8x16xf32> to vector<8x16xbf16>
    %cst_106 = arith.constant dense<0.000000e+00> : vector<8x8xf32>
    %178 = tpu.matmul %175, %177, %cst_106 {dimension_numbers = #tpu.dot_dimension_numbers<[1], [1], [0], [0], [0, 0, 1, 0], [], []>} : vector<8x16xbf16>, vector<8x16xbf16>, vector<8x8xf32> -> vector<8x8xf32>
    %179 = arith.addf %173, %178 : vector<8x8xf32>
    %180 = vector.extract_strided_slice %166 {offsets = [16, 0], sizes = [8, 16], strides = [1, 1]} : vector<32x16xf32> to vector<8x16xf32>
    %181 = arith.truncf %180 : vector<8x16xf32> to vector<8x16xbf16>
    %182 = vector.extract_strided_slice %159 {offsets = [16, 0], sizes = [8, 16], strides = [1, 1]} : vector<32x16xf32> to vector<8x16xf32>
    %183 = arith.truncf %182 : vector<8x16xf32> to vector<8x16xbf16>
    %cst_107 = arith.constant dense<0.000000e+00> : vector<8x8xf32>
    %184 = tpu.matmul %181, %183, %cst_107 {dimension_numbers = #tpu.dot_dimension_numbers<[1], [1], [0], [0], [0, 0, 1, 0], [], []>} : vector<8x16xbf16>, vector<8x16xbf16>, vector<8x8xf32> -> vector<8x8xf32>
    %185 = arith.addf %179, %184 : vector<8x8xf32>
    %186 = vector.extract_strided_slice %166 {offsets = [24, 0], sizes = [8, 16], strides = [1, 1]} : vector<32x16xf32> to vector<8x16xf32>
    %187 = arith.truncf %186 : vector<8x16xf32> to vector<8x16xbf16>
    %188 = vector.extract_strided_slice %159 {offsets = [24, 0], sizes = [8, 16], strides = [1, 1]} : vector<32x16xf32> to vector<8x16xf32>
    %189 = arith.truncf %188 : vector<8x16xf32> to vector<8x16xbf16>
    %cst_108 = arith.constant dense<0.000000e+00> : vector<8x8xf32>
    %190 = tpu.matmul %187, %189, %cst_108 {dimension_numbers = #tpu.dot_dimension_numbers<[1], [1], [0], [0], [0, 0, 1, 0], [], []>} : vector<8x16xbf16>, vector<8x16xbf16>, vector<8x8xf32> -> vector<8x8xf32>
    %191 = arith.addf %185, %190 : vector<8x8xf32>
    %c1_109 = arith.constant 1 : index
    %c0_110 = arith.constant 0 : index
    %c0_111 = arith.constant 0 : index
    %192 = vector.load %arg14[%c1_109, %c0_110, %c0_111] : memref<9x8x8xf32, #tpu.memory_space<vmem>>, vector<1x8x8xf32>
    %193 = vector.shape_cast %192 : vector<1x8x8xf32> to vector<8x8xf32>
    %194 = arith.mulf %191, %193 : vector<8x8xf32>
    %cst_112 = arith.constant dense<0.000000e+00> : vector<64x8xf32>
    %195 = tpu.matmul %100, %194, %cst_112 {dimension_numbers = #tpu.dot_dimension_numbers<[1], [0], [0], [1], [0, 0, 1, 1], [], []>} : vector<64x8xf32>, vector<8x8xf32>, vector<64x8xf32> -> vector<64x8xf32>
    %cst_113 = arith.constant dense<0.000000e+00> : vector<64x64xf32>
    %196 = tpu.matmul %195, %101, %cst_113 {dimension_numbers = #tpu.dot_dimension_numbers<[1], [0], [0], [1], [0, 0, 1, 1], [], []>} : vector<64x8xf32>, vector<8x64xf32>, vector<64x64xf32> -> vector<64x64xf32>
    %c1_114 = arith.constant 1 : index
    %c0_115 = arith.constant 0 : index
    %c0_116 = arith.constant 0 : index
    %197 = vector.load %arg15[%c1_114, %c0_115, %c0_116] : memref<9x64x64xf32, #tpu.memory_space<vmem>>, vector<1x64x64xf32>
    %198 = vector.shape_cast %197 : vector<1x64x64xf32> to vector<64x64xf32>
    %199 = arith.mulf %198, %196 : vector<64x64xf32>
    %200 = arith.truncf %199 : vector<64x64xf32> to vector<64x64xbf16>
    %cst_117 = arith.constant dense<0.000000e+00> : vector<64x16xf32>
    %201 = tpu.matmul %200, %96, %cst_117 {dimension_numbers = #tpu.dot_dimension_numbers<[1], [0], [0], [1], [0, 0, 1, 1], [], []>} : vector<64x64xbf16>, vector<64x16xbf16>, vector<64x16xf32> -> vector<64x16xf32>
    %202 = arith.addf %152, %201 : vector<64x16xf32>
    %c2_118 = arith.constant 2 : index
    %c0_119 = arith.constant 0 : index
    %c0_120 = arith.constant 0 : index
    %203 = vector.load %arg12[%c2_118, %c0_119, %c0_120] : memref<18x32x64xbf16, #tpu.memory_space<vmem>>, vector<1x32x64xbf16>
    %204 = vector.shape_cast %203 : vector<1x32x64xbf16> to vector<32x64xbf16>
    %cst_121 = arith.constant dense<0.000000e+00> : vector<32x16xf32>
    %205 = tpu.matmul %204, %99, %cst_121 {dimension_numbers = #tpu.dot_dimension_numbers<[1], [0], [0], [1], [0, 0, 1, 1], [], []>} : vector<32x64xbf16>, vector<64x16xbf16>, vector<32x16xf32> -> vector<32x16xf32>
    %c2_122 = arith.constant 2 : index
    %c0_123 = arith.constant 0 : index
    %c0_124 = arith.constant 0 : index
    %206 = vector.load %arg13[%c2_122, %c0_123, %c0_124] : memref<18x32x1xf32, #tpu.memory_space<vmem>>, vector<1x32x1xf32>
    %207 = vector.shape_cast %206 : vector<1x32x1xf32> to vector<32x1xf32>
    %208 = vector.broadcast %207 : vector<32x1xf32> to vector<32x16xf32>
    %209 = arith.addf %205, %208 : vector<32x16xf32>
    %c11 = arith.constant 11 : index
    %c0_125 = arith.constant 0 : index
    %c0_126 = arith.constant 0 : index
    %210 = vector.load %arg12[%c11, %c0_125, %c0_126] : memref<18x32x64xbf16, #tpu.memory_space<vmem>>, vector<1x32x64xbf16>
    %211 = vector.shape_cast %210 : vector<1x32x64xbf16> to vector<32x64xbf16>
    %cst_127 = arith.constant dense<0.000000e+00> : vector<32x16xf32>
    %212 = tpu.matmul %211, %99, %cst_127 {dimension_numbers = #tpu.dot_dimension_numbers<[1], [0], [0], [1], [0, 0, 1, 1], [], []>} : vector<32x64xbf16>, vector<64x16xbf16>, vector<32x16xf32> -> vector<32x16xf32>
    %c11_128 = arith.constant 11 : index
    %c0_129 = arith.constant 0 : index
    %c0_130 = arith.constant 0 : index
    %213 = vector.load %arg13[%c11_128, %c0_129, %c0_130] : memref<18x32x1xf32, #tpu.memory_space<vmem>>, vector<1x32x1xf32>
    %214 = vector.shape_cast %213 : vector<1x32x1xf32> to vector<32x1xf32>
    %215 = vector.broadcast %214 : vector<32x1xf32> to vector<32x16xf32>
    %216 = arith.addf %212, %215 : vector<32x16xf32>
    %cst_131 = arith.constant 0.000000e+00 : f32
    %217 = vector.broadcast %cst_131 : f32 to vector<8x8xf32>
    %218 = vector.extract_strided_slice %216 {offsets = [0, 0], sizes = [8, 16], strides = [1, 1]} : vector<32x16xf32> to vector<8x16xf32>
    %219 = arith.truncf %218 : vector<8x16xf32> to vector<8x16xbf16>
    %220 = vector.extract_strided_slice %209 {offsets = [0, 0], sizes = [8, 16], strides = [1, 1]} : vector<32x16xf32> to vector<8x16xf32>
    %221 = arith.truncf %220 : vector<8x16xf32> to vector<8x16xbf16>
    %cst_132 = arith.constant dense<0.000000e+00> : vector<8x8xf32>
    %222 = tpu.matmul %219, %221, %cst_132 {dimension_numbers = #tpu.dot_dimension_numbers<[1], [1], [0], [0], [0, 0, 1, 0], [], []>} : vector<8x16xbf16>, vector<8x16xbf16>, vector<8x8xf32> -> vector<8x8xf32>
    %223 = arith.addf %217, %222 : vector<8x8xf32>
    %224 = vector.extract_strided_slice %216 {offsets = [8, 0], sizes = [8, 16], strides = [1, 1]} : vector<32x16xf32> to vector<8x16xf32>
    %225 = arith.truncf %224 : vector<8x16xf32> to vector<8x16xbf16>
    %226 = vector.extract_strided_slice %209 {offsets = [8, 0], sizes = [8, 16], strides = [1, 1]} : vector<32x16xf32> to vector<8x16xf32>
    %227 = arith.truncf %226 : vector<8x16xf32> to vector<8x16xbf16>
    %cst_133 = arith.constant dense<0.000000e+00> : vector<8x8xf32>
    %228 = tpu.matmul %225, %227, %cst_133 {dimension_numbers = #tpu.dot_dimension_numbers<[1], [1], [0], [0], [0, 0, 1, 0], [], []>} : vector<8x16xbf16>, vector<8x16xbf16>, vector<8x8xf32> -> vector<8x8xf32>
    %229 = arith.addf %223, %228 : vector<8x8xf32>
    %230 = vector.extract_strided_slice %216 {offsets = [16, 0], sizes = [8, 16], strides = [1, 1]} : vector<32x16xf32> to vector<8x16xf32>
    %231 = arith.truncf %230 : vector<8x16xf32> to vector<8x16xbf16>
    %232 = vector.extract_strided_slice %209 {offsets = [16, 0], sizes = [8, 16], strides = [1, 1]} : vector<32x16xf32> to vector<8x16xf32>
    %233 = arith.truncf %232 : vector<8x16xf32> to vector<8x16xbf16>
    %cst_134 = arith.constant dense<0.000000e+00> : vector<8x8xf32>
    %234 = tpu.matmul %231, %233, %cst_134 {dimension_numbers = #tpu.dot_dimension_numbers<[1], [1], [0], [0], [0, 0, 1, 0], [], []>} : vector<8x16xbf16>, vector<8x16xbf16>, vector<8x8xf32> -> vector<8x8xf32>
    %235 = arith.addf %229, %234 : vector<8x8xf32>
    %236 = vector.extract_strided_slice %216 {offsets = [24, 0], sizes = [8, 16], strides = [1, 1]} : vector<32x16xf32> to vector<8x16xf32>
    %237 = arith.truncf %236 : vector<8x16xf32> to vector<8x16xbf16>
    %238 = vector.extract_strided_slice %209 {offsets = [24, 0], sizes = [8, 16], strides = [1, 1]} : vector<32x16xf32> to vector<8x16xf32>
    %239 = arith.truncf %238 : vector<8x16xf32> to vector<8x16xbf16>
    %cst_135 = arith.constant dense<0.000000e+00> : vector<8x8xf32>
    %240 = tpu.matmul %237, %239, %cst_135 {dimension_numbers = #tpu.dot_dimension_numbers<[1], [1], [0], [0], [0, 0, 1, 0], [], []>} : vector<8x16xbf16>, vector<8x16xbf16>, vector<8x8xf32> -> vector<8x8xf32>
    %241 = arith.addf %235, %240 : vector<8x8xf32>
    %c2_136 = arith.constant 2 : index
    %c0_137 = arith.constant 0 : index
    %c0_138 = arith.constant 0 : index
    %242 = vector.load %arg14[%c2_136, %c0_137, %c0_138] : memref<9x8x8xf32, #tpu.memory_space<vmem>>, vector<1x8x8xf32>
    %243 = vector.shape_cast %242 : vector<1x8x8xf32> to vector<8x8xf32>
    %244 = arith.mulf %241, %243 : vector<8x8xf32>
    %cst_139 = arith.constant dense<0.000000e+00> : vector<64x8xf32>
    %245 = tpu.matmul %100, %244, %cst_139 {dimension_numbers = #tpu.dot_dimension_numbers<[1], [0], [0], [1], [0, 0, 1, 1], [], []>} : vector<64x8xf32>, vector<8x8xf32>, vector<64x8xf32> -> vector<64x8xf32>
    %cst_140 = arith.constant dense<0.000000e+00> : vector<64x64xf32>
    %246 = tpu.matmul %245, %101, %cst_140 {dimension_numbers = #tpu.dot_dimension_numbers<[1], [0], [0], [1], [0, 0, 1, 1], [], []>} : vector<64x8xf32>, vector<8x64xf32>, vector<64x64xf32> -> vector<64x64xf32>
    %c2_141 = arith.constant 2 : index
    %c0_142 = arith.constant 0 : index
    %c0_143 = arith.constant 0 : index
    %247 = vector.load %arg15[%c2_141, %c0_142, %c0_143] : memref<9x64x64xf32, #tpu.memory_space<vmem>>, vector<1x64x64xf32>
    %248 = vector.shape_cast %247 : vector<1x64x64xf32> to vector<64x64xf32>
    %249 = arith.mulf %248, %246 : vector<64x64xf32>
    %250 = arith.truncf %249 : vector<64x64xf32> to vector<64x64xbf16>
    %cst_144 = arith.constant dense<0.000000e+00> : vector<64x16xf32>
    %251 = tpu.matmul %250, %96, %cst_144 {dimension_numbers = #tpu.dot_dimension_numbers<[1], [0], [0], [1], [0, 0, 1, 1], [], []>} : vector<64x64xbf16>, vector<64x16xbf16>, vector<64x16xf32> -> vector<64x16xf32>
    %252 = arith.addf %202, %251 : vector<64x16xf32>
    %c3 = arith.constant 3 : index
    %c0_145 = arith.constant 0 : index
    %c0_146 = arith.constant 0 : index
    %253 = vector.load %arg12[%c3, %c0_145, %c0_146] : memref<18x32x64xbf16, #tpu.memory_space<vmem>>, vector<1x32x64xbf16>
    %254 = vector.shape_cast %253 : vector<1x32x64xbf16> to vector<32x64xbf16>
    %cst_147 = arith.constant dense<0.000000e+00> : vector<32x16xf32>
    %255 = tpu.matmul %254, %99, %cst_147 {dimension_numbers = #tpu.dot_dimension_numbers<[1], [0], [0], [1], [0, 0, 1, 1], [], []>} : vector<32x64xbf16>, vector<64x16xbf16>, vector<32x16xf32> -> vector<32x16xf32>
    %c3_148 = arith.constant 3 : index
    %c0_149 = arith.constant 0 : index
    %c0_150 = arith.constant 0 : index
    %256 = vector.load %arg13[%c3_148, %c0_149, %c0_150] : memref<18x32x1xf32, #tpu.memory_space<vmem>>, vector<1x32x1xf32>
    %257 = vector.shape_cast %256 : vector<1x32x1xf32> to vector<32x1xf32>
    %258 = vector.broadcast %257 : vector<32x1xf32> to vector<32x16xf32>
    %259 = arith.addf %255, %258 : vector<32x16xf32>
    %c12 = arith.constant 12 : index
    %c0_151 = arith.constant 0 : index
    %c0_152 = arith.constant 0 : index
    %260 = vector.load %arg12[%c12, %c0_151, %c0_152] : memref<18x32x64xbf16, #tpu.memory_space<vmem>>, vector<1x32x64xbf16>
    %261 = vector.shape_cast %260 : vector<1x32x64xbf16> to vector<32x64xbf16>
    %cst_153 = arith.constant dense<0.000000e+00> : vector<32x16xf32>
    %262 = tpu.matmul %261, %99, %cst_153 {dimension_numbers = #tpu.dot_dimension_numbers<[1], [0], [0], [1], [0, 0, 1, 1], [], []>} : vector<32x64xbf16>, vector<64x16xbf16>, vector<32x16xf32> -> vector<32x16xf32>
    %c12_154 = arith.constant 12 : index
    %c0_155 = arith.constant 0 : index
    %c0_156 = arith.constant 0 : index
    %263 = vector.load %arg13[%c12_154, %c0_155, %c0_156] : memref<18x32x1xf32, #tpu.memory_space<vmem>>, vector<1x32x1xf32>
    %264 = vector.shape_cast %263 : vector<1x32x1xf32> to vector<32x1xf32>
    %265 = vector.broadcast %264 : vector<32x1xf32> to vector<32x16xf32>
    %266 = arith.addf %262, %265 : vector<32x16xf32>
    %cst_157 = arith.constant 0.000000e+00 : f32
    %267 = vector.broadcast %cst_157 : f32 to vector<8x8xf32>
    %268 = vector.extract_strided_slice %266 {offsets = [0, 0], sizes = [8, 16], strides = [1, 1]} : vector<32x16xf32> to vector<8x16xf32>
    %269 = arith.truncf %268 : vector<8x16xf32> to vector<8x16xbf16>
    %270 = vector.extract_strided_slice %259 {offsets = [0, 0], sizes = [8, 16], strides = [1, 1]} : vector<32x16xf32> to vector<8x16xf32>
    %271 = arith.truncf %270 : vector<8x16xf32> to vector<8x16xbf16>
    %cst_158 = arith.constant dense<0.000000e+00> : vector<8x8xf32>
    %272 = tpu.matmul %269, %271, %cst_158 {dimension_numbers = #tpu.dot_dimension_numbers<[1], [1], [0], [0], [0, 0, 1, 0], [], []>} : vector<8x16xbf16>, vector<8x16xbf16>, vector<8x8xf32> -> vector<8x8xf32>
    %273 = arith.addf %267, %272 : vector<8x8xf32>
    %274 = vector.extract_strided_slice %266 {offsets = [8, 0], sizes = [8, 16], strides = [1, 1]} : vector<32x16xf32> to vector<8x16xf32>
    %275 = arith.truncf %274 : vector<8x16xf32> to vector<8x16xbf16>
    %276 = vector.extract_strided_slice %259 {offsets = [8, 0], sizes = [8, 16], strides = [1, 1]} : vector<32x16xf32> to vector<8x16xf32>
    %277 = arith.truncf %276 : vector<8x16xf32> to vector<8x16xbf16>
    %cst_159 = arith.constant dense<0.000000e+00> : vector<8x8xf32>
    %278 = tpu.matmul %275, %277, %cst_159 {dimension_numbers = #tpu.dot_dimension_numbers<[1], [1], [0], [0], [0, 0, 1, 0], [], []>} : vector<8x16xbf16>, vector<8x16xbf16>, vector<8x8xf32> -> vector<8x8xf32>
    %279 = arith.addf %273, %278 : vector<8x8xf32>
    %280 = vector.extract_strided_slice %266 {offsets = [16, 0], sizes = [8, 16], strides = [1, 1]} : vector<32x16xf32> to vector<8x16xf32>
    %281 = arith.truncf %280 : vector<8x16xf32> to vector<8x16xbf16>
    %282 = vector.extract_strided_slice %259 {offsets = [16, 0], sizes = [8, 16], strides = [1, 1]} : vector<32x16xf32> to vector<8x16xf32>
    %283 = arith.truncf %282 : vector<8x16xf32> to vector<8x16xbf16>
    %cst_160 = arith.constant dense<0.000000e+00> : vector<8x8xf32>
    %284 = tpu.matmul %281, %283, %cst_160 {dimension_numbers = #tpu.dot_dimension_numbers<[1], [1], [0], [0], [0, 0, 1, 0], [], []>} : vector<8x16xbf16>, vector<8x16xbf16>, vector<8x8xf32> -> vector<8x8xf32>
    %285 = arith.addf %279, %284 : vector<8x8xf32>
    %286 = vector.extract_strided_slice %266 {offsets = [24, 0], sizes = [8, 16], strides = [1, 1]} : vector<32x16xf32> to vector<8x16xf32>
    %287 = arith.truncf %286 : vector<8x16xf32> to vector<8x16xbf16>
    %288 = vector.extract_strided_slice %259 {offsets = [24, 0], sizes = [8, 16], strides = [1, 1]} : vector<32x16xf32> to vector<8x16xf32>
    %289 = arith.truncf %288 : vector<8x16xf32> to vector<8x16xbf16>
    %cst_161 = arith.constant dense<0.000000e+00> : vector<8x8xf32>
    %290 = tpu.matmul %287, %289, %cst_161 {dimension_numbers = #tpu.dot_dimension_numbers<[1], [1], [0], [0], [0, 0, 1, 0], [], []>} : vector<8x16xbf16>, vector<8x16xbf16>, vector<8x8xf32> -> vector<8x8xf32>
    %291 = arith.addf %285, %290 : vector<8x8xf32>
    %c3_162 = arith.constant 3 : index
    %c0_163 = arith.constant 0 : index
    %c0_164 = arith.constant 0 : index
    %292 = vector.load %arg14[%c3_162, %c0_163, %c0_164] : memref<9x8x8xf32, #tpu.memory_space<vmem>>, vector<1x8x8xf32>
    %293 = vector.shape_cast %292 : vector<1x8x8xf32> to vector<8x8xf32>
    %294 = arith.mulf %291, %293 : vector<8x8xf32>
    %cst_165 = arith.constant dense<0.000000e+00> : vector<64x8xf32>
    %295 = tpu.matmul %100, %294, %cst_165 {dimension_numbers = #tpu.dot_dimension_numbers<[1], [0], [0], [1], [0, 0, 1, 1], [], []>} : vector<64x8xf32>, vector<8x8xf32>, vector<64x8xf32> -> vector<64x8xf32>
    %cst_166 = arith.constant dense<0.000000e+00> : vector<64x64xf32>
    %296 = tpu.matmul %295, %101, %cst_166 {dimension_numbers = #tpu.dot_dimension_numbers<[1], [0], [0], [1], [0, 0, 1, 1], [], []>} : vector<64x8xf32>, vector<8x64xf32>, vector<64x64xf32> -> vector<64x64xf32>
    %c3_167 = arith.constant 3 : index
    %c0_168 = arith.constant 0 : index
    %c0_169 = arith.constant 0 : index
    %297 = vector.load %arg15[%c3_167, %c0_168, %c0_169] : memref<9x64x64xf32, #tpu.memory_space<vmem>>, vector<1x64x64xf32>
    %298 = vector.shape_cast %297 : vector<1x64x64xf32> to vector<64x64xf32>
    %299 = arith.mulf %298, %296 : vector<64x64xf32>
    %300 = arith.truncf %299 : vector<64x64xf32> to vector<64x64xbf16>
    %cst_170 = arith.constant dense<0.000000e+00> : vector<64x16xf32>
    %301 = tpu.matmul %300, %96, %cst_170 {dimension_numbers = #tpu.dot_dimension_numbers<[1], [0], [0], [1], [0, 0, 1, 1], [], []>} : vector<64x64xbf16>, vector<64x16xbf16>, vector<64x16xf32> -> vector<64x16xf32>
    %302 = arith.addf %252, %301 : vector<64x16xf32>
    %c4 = arith.constant 4 : index
    %c0_171 = arith.constant 0 : index
    %c0_172 = arith.constant 0 : index
    %303 = vector.load %arg12[%c4, %c0_171, %c0_172] : memref<18x32x64xbf16, #tpu.memory_space<vmem>>, vector<1x32x64xbf16>
    %304 = vector.shape_cast %303 : vector<1x32x64xbf16> to vector<32x64xbf16>
    %cst_173 = arith.constant dense<0.000000e+00> : vector<32x16xf32>
    %305 = tpu.matmul %304, %99, %cst_173 {dimension_numbers = #tpu.dot_dimension_numbers<[1], [0], [0], [1], [0, 0, 1, 1], [], []>} : vector<32x64xbf16>, vector<64x16xbf16>, vector<32x16xf32> -> vector<32x16xf32>
    %c4_174 = arith.constant 4 : index
    %c0_175 = arith.constant 0 : index
    %c0_176 = arith.constant 0 : index
    %306 = vector.load %arg13[%c4_174, %c0_175, %c0_176] : memref<18x32x1xf32, #tpu.memory_space<vmem>>, vector<1x32x1xf32>
    %307 = vector.shape_cast %306 : vector<1x32x1xf32> to vector<32x1xf32>
    %308 = vector.broadcast %307 : vector<32x1xf32> to vector<32x16xf32>
    %309 = arith.addf %305, %308 : vector<32x16xf32>
    %c13 = arith.constant 13 : index
    %c0_177 = arith.constant 0 : index
    %c0_178 = arith.constant 0 : index
    %310 = vector.load %arg12[%c13, %c0_177, %c0_178] : memref<18x32x64xbf16, #tpu.memory_space<vmem>>, vector<1x32x64xbf16>
    %311 = vector.shape_cast %310 : vector<1x32x64xbf16> to vector<32x64xbf16>
    %cst_179 = arith.constant dense<0.000000e+00> : vector<32x16xf32>
    %312 = tpu.matmul %311, %99, %cst_179 {dimension_numbers = #tpu.dot_dimension_numbers<[1], [0], [0], [1], [0, 0, 1, 1], [], []>} : vector<32x64xbf16>, vector<64x16xbf16>, vector<32x16xf32> -> vector<32x16xf32>
    %c13_180 = arith.constant 13 : index
    %c0_181 = arith.constant 0 : index
    %c0_182 = arith.constant 0 : index
    %313 = vector.load %arg13[%c13_180, %c0_181, %c0_182] : memref<18x32x1xf32, #tpu.memory_space<vmem>>, vector<1x32x1xf32>
    %314 = vector.shape_cast %313 : vector<1x32x1xf32> to vector<32x1xf32>
    %315 = vector.broadcast %314 : vector<32x1xf32> to vector<32x16xf32>
    %316 = arith.addf %312, %315 : vector<32x16xf32>
    %cst_183 = arith.constant 0.000000e+00 : f32
    %317 = vector.broadcast %cst_183 : f32 to vector<8x8xf32>
    %318 = vector.extract_strided_slice %316 {offsets = [0, 0], sizes = [8, 16], strides = [1, 1]} : vector<32x16xf32> to vector<8x16xf32>
    %319 = arith.truncf %318 : vector<8x16xf32> to vector<8x16xbf16>
    %320 = vector.extract_strided_slice %309 {offsets = [0, 0], sizes = [8, 16], strides = [1, 1]} : vector<32x16xf32> to vector<8x16xf32>
    %321 = arith.truncf %320 : vector<8x16xf32> to vector<8x16xbf16>
    %cst_184 = arith.constant dense<0.000000e+00> : vector<8x8xf32>
    %322 = tpu.matmul %319, %321, %cst_184 {dimension_numbers = #tpu.dot_dimension_numbers<[1], [1], [0], [0], [0, 0, 1, 0], [], []>} : vector<8x16xbf16>, vector<8x16xbf16>, vector<8x8xf32> -> vector<8x8xf32>
    %323 = arith.addf %317, %322 : vector<8x8xf32>
    %324 = vector.extract_strided_slice %316 {offsets = [8, 0], sizes = [8, 16], strides = [1, 1]} : vector<32x16xf32> to vector<8x16xf32>
    %325 = arith.truncf %324 : vector<8x16xf32> to vector<8x16xbf16>
    %326 = vector.extract_strided_slice %309 {offsets = [8, 0], sizes = [8, 16], strides = [1, 1]} : vector<32x16xf32> to vector<8x16xf32>
    %327 = arith.truncf %326 : vector<8x16xf32> to vector<8x16xbf16>
    %cst_185 = arith.constant dense<0.000000e+00> : vector<8x8xf32>
    %328 = tpu.matmul %325, %327, %cst_185 {dimension_numbers = #tpu.dot_dimension_numbers<[1], [1], [0], [0], [0, 0, 1, 0], [], []>} : vector<8x16xbf16>, vector<8x16xbf16>, vector<8x8xf32> -> vector<8x8xf32>
    %329 = arith.addf %323, %328 : vector<8x8xf32>
    %330 = vector.extract_strided_slice %316 {offsets = [16, 0], sizes = [8, 16], strides = [1, 1]} : vector<32x16xf32> to vector<8x16xf32>
    %331 = arith.truncf %330 : vector<8x16xf32> to vector<8x16xbf16>
    %332 = vector.extract_strided_slice %309 {offsets = [16, 0], sizes = [8, 16], strides = [1, 1]} : vector<32x16xf32> to vector<8x16xf32>
    %333 = arith.truncf %332 : vector<8x16xf32> to vector<8x16xbf16>
    %cst_186 = arith.constant dense<0.000000e+00> : vector<8x8xf32>
    %334 = tpu.matmul %331, %333, %cst_186 {dimension_numbers = #tpu.dot_dimension_numbers<[1], [1], [0], [0], [0, 0, 1, 0], [], []>} : vector<8x16xbf16>, vector<8x16xbf16>, vector<8x8xf32> -> vector<8x8xf32>
    %335 = arith.addf %329, %334 : vector<8x8xf32>
    %336 = vector.extract_strided_slice %316 {offsets = [24, 0], sizes = [8, 16], strides = [1, 1]} : vector<32x16xf32> to vector<8x16xf32>
    %337 = arith.truncf %336 : vector<8x16xf32> to vector<8x16xbf16>
    %338 = vector.extract_strided_slice %309 {offsets = [24, 0], sizes = [8, 16], strides = [1, 1]} : vector<32x16xf32> to vector<8x16xf32>
    %339 = arith.truncf %338 : vector<8x16xf32> to vector<8x16xbf16>
    %cst_187 = arith.constant dense<0.000000e+00> : vector<8x8xf32>
    %340 = tpu.matmul %337, %339, %cst_187 {dimension_numbers = #tpu.dot_dimension_numbers<[1], [1], [0], [0], [0, 0, 1, 0], [], []>} : vector<8x16xbf16>, vector<8x16xbf16>, vector<8x8xf32> -> vector<8x8xf32>
    %341 = arith.addf %335, %340 : vector<8x8xf32>
    %c4_188 = arith.constant 4 : index
    %c0_189 = arith.constant 0 : index
    %c0_190 = arith.constant 0 : index
    %342 = vector.load %arg14[%c4_188, %c0_189, %c0_190] : memref<9x8x8xf32, #tpu.memory_space<vmem>>, vector<1x8x8xf32>
    %343 = vector.shape_cast %342 : vector<1x8x8xf32> to vector<8x8xf32>
    %344 = arith.mulf %341, %343 : vector<8x8xf32>
    %cst_191 = arith.constant dense<0.000000e+00> : vector<64x8xf32>
    %345 = tpu.matmul %100, %344, %cst_191 {dimension_numbers = #tpu.dot_dimension_numbers<[1], [0], [0], [1], [0, 0, 1, 1], [], []>} : vector<64x8xf32>, vector<8x8xf32>, vector<64x8xf32> -> vector<64x8xf32>
    %cst_192 = arith.constant dense<0.000000e+00> : vector<64x64xf32>
    %346 = tpu.matmul %345, %101, %cst_192 {dimension_numbers = #tpu.dot_dimension_numbers<[1], [0], [0], [1], [0, 0, 1, 1], [], []>} : vector<64x8xf32>, vector<8x64xf32>, vector<64x64xf32> -> vector<64x64xf32>
    %c4_193 = arith.constant 4 : index
    %c0_194 = arith.constant 0 : index
    %c0_195 = arith.constant 0 : index
    %347 = vector.load %arg15[%c4_193, %c0_194, %c0_195] : memref<9x64x64xf32, #tpu.memory_space<vmem>>, vector<1x64x64xf32>
    %348 = vector.shape_cast %347 : vector<1x64x64xf32> to vector<64x64xf32>
    %349 = arith.mulf %348, %346 : vector<64x64xf32>
    %350 = arith.truncf %349 : vector<64x64xf32> to vector<64x64xbf16>
    %cst_196 = arith.constant dense<0.000000e+00> : vector<64x16xf32>
    %351 = tpu.matmul %350, %96, %cst_196 {dimension_numbers = #tpu.dot_dimension_numbers<[1], [0], [0], [1], [0, 0, 1, 1], [], []>} : vector<64x64xbf16>, vector<64x16xbf16>, vector<64x16xf32> -> vector<64x16xf32>
    %352 = arith.addf %302, %351 : vector<64x16xf32>
    %c5 = arith.constant 5 : index
    %c0_197 = arith.constant 0 : index
    %c0_198 = arith.constant 0 : index
    %353 = vector.load %arg12[%c5, %c0_197, %c0_198] : memref<18x32x64xbf16, #tpu.memory_space<vmem>>, vector<1x32x64xbf16>
    %354 = vector.shape_cast %353 : vector<1x32x64xbf16> to vector<32x64xbf16>
    %cst_199 = arith.constant dense<0.000000e+00> : vector<32x16xf32>
    %355 = tpu.matmul %354, %99, %cst_199 {dimension_numbers = #tpu.dot_dimension_numbers<[1], [0], [0], [1], [0, 0, 1, 1], [], []>} : vector<32x64xbf16>, vector<64x16xbf16>, vector<32x16xf32> -> vector<32x16xf32>
    %c5_200 = arith.constant 5 : index
    %c0_201 = arith.constant 0 : index
    %c0_202 = arith.constant 0 : index
    %356 = vector.load %arg13[%c5_200, %c0_201, %c0_202] : memref<18x32x1xf32, #tpu.memory_space<vmem>>, vector<1x32x1xf32>
    %357 = vector.shape_cast %356 : vector<1x32x1xf32> to vector<32x1xf32>
    %358 = vector.broadcast %357 : vector<32x1xf32> to vector<32x16xf32>
    %359 = arith.addf %355, %358 : vector<32x16xf32>
    %c14 = arith.constant 14 : index
    %c0_203 = arith.constant 0 : index
    %c0_204 = arith.constant 0 : index
    %360 = vector.load %arg12[%c14, %c0_203, %c0_204] : memref<18x32x64xbf16, #tpu.memory_space<vmem>>, vector<1x32x64xbf16>
    %361 = vector.shape_cast %360 : vector<1x32x64xbf16> to vector<32x64xbf16>
    %cst_205 = arith.constant dense<0.000000e+00> : vector<32x16xf32>
    %362 = tpu.matmul %361, %99, %cst_205 {dimension_numbers = #tpu.dot_dimension_numbers<[1], [0], [0], [1], [0, 0, 1, 1], [], []>} : vector<32x64xbf16>, vector<64x16xbf16>, vector<32x16xf32> -> vector<32x16xf32>
    %c14_206 = arith.constant 14 : index
    %c0_207 = arith.constant 0 : index
    %c0_208 = arith.constant 0 : index
    %363 = vector.load %arg13[%c14_206, %c0_207, %c0_208] : memref<18x32x1xf32, #tpu.memory_space<vmem>>, vector<1x32x1xf32>
    %364 = vector.shape_cast %363 : vector<1x32x1xf32> to vector<32x1xf32>
    %365 = vector.broadcast %364 : vector<32x1xf32> to vector<32x16xf32>
    %366 = arith.addf %362, %365 : vector<32x16xf32>
    %cst_209 = arith.constant 0.000000e+00 : f32
    %367 = vector.broadcast %cst_209 : f32 to vector<8x8xf32>
    %368 = vector.extract_strided_slice %366 {offsets = [0, 0], sizes = [8, 16], strides = [1, 1]} : vector<32x16xf32> to vector<8x16xf32>
    %369 = arith.truncf %368 : vector<8x16xf32> to vector<8x16xbf16>
    %370 = vector.extract_strided_slice %359 {offsets = [0, 0], sizes = [8, 16], strides = [1, 1]} : vector<32x16xf32> to vector<8x16xf32>
    %371 = arith.truncf %370 : vector<8x16xf32> to vector<8x16xbf16>
    %cst_210 = arith.constant dense<0.000000e+00> : vector<8x8xf32>
    %372 = tpu.matmul %369, %371, %cst_210 {dimension_numbers = #tpu.dot_dimension_numbers<[1], [1], [0], [0], [0, 0, 1, 0], [], []>} : vector<8x16xbf16>, vector<8x16xbf16>, vector<8x8xf32> -> vector<8x8xf32>
    %373 = arith.addf %367, %372 : vector<8x8xf32>
    %374 = vector.extract_strided_slice %366 {offsets = [8, 0], sizes = [8, 16], strides = [1, 1]} : vector<32x16xf32> to vector<8x16xf32>
    %375 = arith.truncf %374 : vector<8x16xf32> to vector<8x16xbf16>
    %376 = vector.extract_strided_slice %359 {offsets = [8, 0], sizes = [8, 16], strides = [1, 1]} : vector<32x16xf32> to vector<8x16xf32>
    %377 = arith.truncf %376 : vector<8x16xf32> to vector<8x16xbf16>
    %cst_211 = arith.constant dense<0.000000e+00> : vector<8x8xf32>
    %378 = tpu.matmul %375, %377, %cst_211 {dimension_numbers = #tpu.dot_dimension_numbers<[1], [1], [0], [0], [0, 0, 1, 0], [], []>} : vector<8x16xbf16>, vector<8x16xbf16>, vector<8x8xf32> -> vector<8x8xf32>
    %379 = arith.addf %373, %378 : vector<8x8xf32>
    %380 = vector.extract_strided_slice %366 {offsets = [16, 0], sizes = [8, 16], strides = [1, 1]} : vector<32x16xf32> to vector<8x16xf32>
    %381 = arith.truncf %380 : vector<8x16xf32> to vector<8x16xbf16>
    %382 = vector.extract_strided_slice %359 {offsets = [16, 0], sizes = [8, 16], strides = [1, 1]} : vector<32x16xf32> to vector<8x16xf32>
    %383 = arith.truncf %382 : vector<8x16xf32> to vector<8x16xbf16>
    %cst_212 = arith.constant dense<0.000000e+00> : vector<8x8xf32>
    %384 = tpu.matmul %381, %383, %cst_212 {dimension_numbers = #tpu.dot_dimension_numbers<[1], [1], [0], [0], [0, 0, 1, 0], [], []>} : vector<8x16xbf16>, vector<8x16xbf16>, vector<8x8xf32> -> vector<8x8xf32>
    %385 = arith.addf %379, %384 : vector<8x8xf32>
    %386 = vector.extract_strided_slice %366 {offsets = [24, 0], sizes = [8, 16], strides = [1, 1]} : vector<32x16xf32> to vector<8x16xf32>
    %387 = arith.truncf %386 : vector<8x16xf32> to vector<8x16xbf16>
    %388 = vector.extract_strided_slice %359 {offsets = [24, 0], sizes = [8, 16], strides = [1, 1]} : vector<32x16xf32> to vector<8x16xf32>
    %389 = arith.truncf %388 : vector<8x16xf32> to vector<8x16xbf16>
    %cst_213 = arith.constant dense<0.000000e+00> : vector<8x8xf32>
    %390 = tpu.matmul %387, %389, %cst_213 {dimension_numbers = #tpu.dot_dimension_numbers<[1], [1], [0], [0], [0, 0, 1, 0], [], []>} : vector<8x16xbf16>, vector<8x16xbf16>, vector<8x8xf32> -> vector<8x8xf32>
    %391 = arith.addf %385, %390 : vector<8x8xf32>
    %c5_214 = arith.constant 5 : index
    %c0_215 = arith.constant 0 : index
    %c0_216 = arith.constant 0 : index
    %392 = vector.load %arg14[%c5_214, %c0_215, %c0_216] : memref<9x8x8xf32, #tpu.memory_space<vmem>>, vector<1x8x8xf32>
    %393 = vector.shape_cast %392 : vector<1x8x8xf32> to vector<8x8xf32>
    %394 = arith.mulf %391, %393 : vector<8x8xf32>
    %cst_217 = arith.constant dense<0.000000e+00> : vector<64x8xf32>
    %395 = tpu.matmul %100, %394, %cst_217 {dimension_numbers = #tpu.dot_dimension_numbers<[1], [0], [0], [1], [0, 0, 1, 1], [], []>} : vector<64x8xf32>, vector<8x8xf32>, vector<64x8xf32> -> vector<64x8xf32>
    %cst_218 = arith.constant dense<0.000000e+00> : vector<64x64xf32>
    %396 = tpu.matmul %395, %101, %cst_218 {dimension_numbers = #tpu.dot_dimension_numbers<[1], [0], [0], [1], [0, 0, 1, 1], [], []>} : vector<64x8xf32>, vector<8x64xf32>, vector<64x64xf32> -> vector<64x64xf32>
    %c5_219 = arith.constant 5 : index
    %c0_220 = arith.constant 0 : index
    %c0_221 = arith.constant 0 : index
    %397 = vector.load %arg15[%c5_219, %c0_220, %c0_221] : memref<9x64x64xf32, #tpu.memory_space<vmem>>, vector<1x64x64xf32>
    %398 = vector.shape_cast %397 : vector<1x64x64xf32> to vector<64x64xf32>
    %399 = arith.mulf %398, %396 : vector<64x64xf32>
    %400 = arith.truncf %399 : vector<64x64xf32> to vector<64x64xbf16>
    %cst_222 = arith.constant dense<0.000000e+00> : vector<64x16xf32>
    %401 = tpu.matmul %400, %96, %cst_222 {dimension_numbers = #tpu.dot_dimension_numbers<[1], [0], [0], [1], [0, 0, 1, 1], [], []>} : vector<64x64xbf16>, vector<64x16xbf16>, vector<64x16xf32> -> vector<64x16xf32>
    %402 = arith.addf %352, %401 : vector<64x16xf32>
    %c6 = arith.constant 6 : index
    %c0_223 = arith.constant 0 : index
    %c0_224 = arith.constant 0 : index
    %403 = vector.load %arg12[%c6, %c0_223, %c0_224] : memref<18x32x64xbf16, #tpu.memory_space<vmem>>, vector<1x32x64xbf16>
    %404 = vector.shape_cast %403 : vector<1x32x64xbf16> to vector<32x64xbf16>
    %cst_225 = arith.constant dense<0.000000e+00> : vector<32x16xf32>
    %405 = tpu.matmul %404, %99, %cst_225 {dimension_numbers = #tpu.dot_dimension_numbers<[1], [0], [0], [1], [0, 0, 1, 1], [], []>} : vector<32x64xbf16>, vector<64x16xbf16>, vector<32x16xf32> -> vector<32x16xf32>
    %c6_226 = arith.constant 6 : index
    %c0_227 = arith.constant 0 : index
    %c0_228 = arith.constant 0 : index
    %406 = vector.load %arg13[%c6_226, %c0_227, %c0_228] : memref<18x32x1xf32, #tpu.memory_space<vmem>>, vector<1x32x1xf32>
    %407 = vector.shape_cast %406 : vector<1x32x1xf32> to vector<32x1xf32>
    %408 = vector.broadcast %407 : vector<32x1xf32> to vector<32x16xf32>
    %409 = arith.addf %405, %408 : vector<32x16xf32>
    %c15 = arith.constant 15 : index
    %c0_229 = arith.constant 0 : index
    %c0_230 = arith.constant 0 : index
    %410 = vector.load %arg12[%c15, %c0_229, %c0_230] : memref<18x32x64xbf16, #tpu.memory_space<vmem>>, vector<1x32x64xbf16>
    %411 = vector.shape_cast %410 : vector<1x32x64xbf16> to vector<32x64xbf16>
    %cst_231 = arith.constant dense<0.000000e+00> : vector<32x16xf32>
    %412 = tpu.matmul %411, %99, %cst_231 {dimension_numbers = #tpu.dot_dimension_numbers<[1], [0], [0], [1], [0, 0, 1, 1], [], []>} : vector<32x64xbf16>, vector<64x16xbf16>, vector<32x16xf32> -> vector<32x16xf32>
    %c15_232 = arith.constant 15 : index
    %c0_233 = arith.constant 0 : index
    %c0_234 = arith.constant 0 : index
    %413 = vector.load %arg13[%c15_232, %c0_233, %c0_234] : memref<18x32x1xf32, #tpu.memory_space<vmem>>, vector<1x32x1xf32>
    %414 = vector.shape_cast %413 : vector<1x32x1xf32> to vector<32x1xf32>
    %415 = vector.broadcast %414 : vector<32x1xf32> to vector<32x16xf32>
    %416 = arith.addf %412, %415 : vector<32x16xf32>
    %cst_235 = arith.constant 0.000000e+00 : f32
    %417 = vector.broadcast %cst_235 : f32 to vector<8x8xf32>
    %418 = vector.extract_strided_slice %416 {offsets = [0, 0], sizes = [8, 16], strides = [1, 1]} : vector<32x16xf32> to vector<8x16xf32>
    %419 = arith.truncf %418 : vector<8x16xf32> to vector<8x16xbf16>
    %420 = vector.extract_strided_slice %409 {offsets = [0, 0], sizes = [8, 16], strides = [1, 1]} : vector<32x16xf32> to vector<8x16xf32>
    %421 = arith.truncf %420 : vector<8x16xf32> to vector<8x16xbf16>
    %cst_236 = arith.constant dense<0.000000e+00> : vector<8x8xf32>
    %422 = tpu.matmul %419, %421, %cst_236 {dimension_numbers = #tpu.dot_dimension_numbers<[1], [1], [0], [0], [0, 0, 1, 0], [], []>} : vector<8x16xbf16>, vector<8x16xbf16>, vector<8x8xf32> -> vector<8x8xf32>
    %423 = arith.addf %417, %422 : vector<8x8xf32>
    %424 = vector.extract_strided_slice %416 {offsets = [8, 0], sizes = [8, 16], strides = [1, 1]} : vector<32x16xf32> to vector<8x16xf32>
    %425 = arith.truncf %424 : vector<8x16xf32> to vector<8x16xbf16>
    %426 = vector.extract_strided_slice %409 {offsets = [8, 0], sizes = [8, 16], strides = [1, 1]} : vector<32x16xf32> to vector<8x16xf32>
    %427 = arith.truncf %426 : vector<8x16xf32> to vector<8x16xbf16>
    %cst_237 = arith.constant dense<0.000000e+00> : vector<8x8xf32>
    %428 = tpu.matmul %425, %427, %cst_237 {dimension_numbers = #tpu.dot_dimension_numbers<[1], [1], [0], [0], [0, 0, 1, 0], [], []>} : vector<8x16xbf16>, vector<8x16xbf16>, vector<8x8xf32> -> vector<8x8xf32>
    %429 = arith.addf %423, %428 : vector<8x8xf32>
    %430 = vector.extract_strided_slice %416 {offsets = [16, 0], sizes = [8, 16], strides = [1, 1]} : vector<32x16xf32> to vector<8x16xf32>
    %431 = arith.truncf %430 : vector<8x16xf32> to vector<8x16xbf16>
    %432 = vector.extract_strided_slice %409 {offsets = [16, 0], sizes = [8, 16], strides = [1, 1]} : vector<32x16xf32> to vector<8x16xf32>
    %433 = arith.truncf %432 : vector<8x16xf32> to vector<8x16xbf16>
    %cst_238 = arith.constant dense<0.000000e+00> : vector<8x8xf32>
    %434 = tpu.matmul %431, %433, %cst_238 {dimension_numbers = #tpu.dot_dimension_numbers<[1], [1], [0], [0], [0, 0, 1, 0], [], []>} : vector<8x16xbf16>, vector<8x16xbf16>, vector<8x8xf32> -> vector<8x8xf32>
    %435 = arith.addf %429, %434 : vector<8x8xf32>
    %436 = vector.extract_strided_slice %416 {offsets = [24, 0], sizes = [8, 16], strides = [1, 1]} : vector<32x16xf32> to vector<8x16xf32>
    %437 = arith.truncf %436 : vector<8x16xf32> to vector<8x16xbf16>
    %438 = vector.extract_strided_slice %409 {offsets = [24, 0], sizes = [8, 16], strides = [1, 1]} : vector<32x16xf32> to vector<8x16xf32>
    %439 = arith.truncf %438 : vector<8x16xf32> to vector<8x16xbf16>
    %cst_239 = arith.constant dense<0.000000e+00> : vector<8x8xf32>
    %440 = tpu.matmul %437, %439, %cst_239 {dimension_numbers = #tpu.dot_dimension_numbers<[1], [1], [0], [0], [0, 0, 1, 0], [], []>} : vector<8x16xbf16>, vector<8x16xbf16>, vector<8x8xf32> -> vector<8x8xf32>
    %441 = arith.addf %435, %440 : vector<8x8xf32>
    %c6_240 = arith.constant 6 : index
    %c0_241 = arith.constant 0 : index
    %c0_242 = arith.constant 0 : index
    %442 = vector.load %arg14[%c6_240, %c0_241, %c0_242] : memref<9x8x8xf32, #tpu.memory_space<vmem>>, vector<1x8x8xf32>
    %443 = vector.shape_cast %442 : vector<1x8x8xf32> to vector<8x8xf32>
    %444 = arith.mulf %441, %443 : vector<8x8xf32>
    %cst_243 = arith.constant dense<0.000000e+00> : vector<64x8xf32>
    %445 = tpu.matmul %100, %444, %cst_243 {dimension_numbers = #tpu.dot_dimension_numbers<[1], [0], [0], [1], [0, 0, 1, 1], [], []>} : vector<64x8xf32>, vector<8x8xf32>, vector<64x8xf32> -> vector<64x8xf32>
    %cst_244 = arith.constant dense<0.000000e+00> : vector<64x64xf32>
    %446 = tpu.matmul %445, %101, %cst_244 {dimension_numbers = #tpu.dot_dimension_numbers<[1], [0], [0], [1], [0, 0, 1, 1], [], []>} : vector<64x8xf32>, vector<8x64xf32>, vector<64x64xf32> -> vector<64x64xf32>
    %c6_245 = arith.constant 6 : index
    %c0_246 = arith.constant 0 : index
    %c0_247 = arith.constant 0 : index
    %447 = vector.load %arg15[%c6_245, %c0_246, %c0_247] : memref<9x64x64xf32, #tpu.memory_space<vmem>>, vector<1x64x64xf32>
    %448 = vector.shape_cast %447 : vector<1x64x64xf32> to vector<64x64xf32>
    %449 = arith.mulf %448, %446 : vector<64x64xf32>
    %450 = arith.truncf %449 : vector<64x64xf32> to vector<64x64xbf16>
    %cst_248 = arith.constant dense<0.000000e+00> : vector<64x16xf32>
    %451 = tpu.matmul %450, %96, %cst_248 {dimension_numbers = #tpu.dot_dimension_numbers<[1], [0], [0], [1], [0, 0, 1, 1], [], []>} : vector<64x64xbf16>, vector<64x16xbf16>, vector<64x16xf32> -> vector<64x16xf32>
    %452 = arith.addf %402, %451 : vector<64x16xf32>
    %c7 = arith.constant 7 : index
    %c0_249 = arith.constant 0 : index
    %c0_250 = arith.constant 0 : index
    %453 = vector.load %arg12[%c7, %c0_249, %c0_250] : memref<18x32x64xbf16, #tpu.memory_space<vmem>>, vector<1x32x64xbf16>
    %454 = vector.shape_cast %453 : vector<1x32x64xbf16> to vector<32x64xbf16>
    %cst_251 = arith.constant dense<0.000000e+00> : vector<32x16xf32>
    %455 = tpu.matmul %454, %99, %cst_251 {dimension_numbers = #tpu.dot_dimension_numbers<[1], [0], [0], [1], [0, 0, 1, 1], [], []>} : vector<32x64xbf16>, vector<64x16xbf16>, vector<32x16xf32> -> vector<32x16xf32>
    %c7_252 = arith.constant 7 : index
    %c0_253 = arith.constant 0 : index
    %c0_254 = arith.constant 0 : index
    %456 = vector.load %arg13[%c7_252, %c0_253, %c0_254] : memref<18x32x1xf32, #tpu.memory_space<vmem>>, vector<1x32x1xf32>
    %457 = vector.shape_cast %456 : vector<1x32x1xf32> to vector<32x1xf32>
    %458 = vector.broadcast %457 : vector<32x1xf32> to vector<32x16xf32>
    %459 = arith.addf %455, %458 : vector<32x16xf32>
    %c16 = arith.constant 16 : index
    %c0_255 = arith.constant 0 : index
    %c0_256 = arith.constant 0 : index
    %460 = vector.load %arg12[%c16, %c0_255, %c0_256] : memref<18x32x64xbf16, #tpu.memory_space<vmem>>, vector<1x32x64xbf16>
    %461 = vector.shape_cast %460 : vector<1x32x64xbf16> to vector<32x64xbf16>
    %cst_257 = arith.constant dense<0.000000e+00> : vector<32x16xf32>
    %462 = tpu.matmul %461, %99, %cst_257 {dimension_numbers = #tpu.dot_dimension_numbers<[1], [0], [0], [1], [0, 0, 1, 1], [], []>} : vector<32x64xbf16>, vector<64x16xbf16>, vector<32x16xf32> -> vector<32x16xf32>
    %c16_258 = arith.constant 16 : index
    %c0_259 = arith.constant 0 : index
    %c0_260 = arith.constant 0 : index
    %463 = vector.load %arg13[%c16_258, %c0_259, %c0_260] : memref<18x32x1xf32, #tpu.memory_space<vmem>>, vector<1x32x1xf32>
    %464 = vector.shape_cast %463 : vector<1x32x1xf32> to vector<32x1xf32>
    %465 = vector.broadcast %464 : vector<32x1xf32> to vector<32x16xf32>
    %466 = arith.addf %462, %465 : vector<32x16xf32>
    %cst_261 = arith.constant 0.000000e+00 : f32
    %467 = vector.broadcast %cst_261 : f32 to vector<8x8xf32>
    %468 = vector.extract_strided_slice %466 {offsets = [0, 0], sizes = [8, 16], strides = [1, 1]} : vector<32x16xf32> to vector<8x16xf32>
    %469 = arith.truncf %468 : vector<8x16xf32> to vector<8x16xbf16>
    %470 = vector.extract_strided_slice %459 {offsets = [0, 0], sizes = [8, 16], strides = [1, 1]} : vector<32x16xf32> to vector<8x16xf32>
    %471 = arith.truncf %470 : vector<8x16xf32> to vector<8x16xbf16>
    %cst_262 = arith.constant dense<0.000000e+00> : vector<8x8xf32>
    %472 = tpu.matmul %469, %471, %cst_262 {dimension_numbers = #tpu.dot_dimension_numbers<[1], [1], [0], [0], [0, 0, 1, 0], [], []>} : vector<8x16xbf16>, vector<8x16xbf16>, vector<8x8xf32> -> vector<8x8xf32>
    %473 = arith.addf %467, %472 : vector<8x8xf32>
    %474 = vector.extract_strided_slice %466 {offsets = [8, 0], sizes = [8, 16], strides = [1, 1]} : vector<32x16xf32> to vector<8x16xf32>
    %475 = arith.truncf %474 : vector<8x16xf32> to vector<8x16xbf16>
    %476 = vector.extract_strided_slice %459 {offsets = [8, 0], sizes = [8, 16], strides = [1, 1]} : vector<32x16xf32> to vector<8x16xf32>
    %477 = arith.truncf %476 : vector<8x16xf32> to vector<8x16xbf16>
    %cst_263 = arith.constant dense<0.000000e+00> : vector<8x8xf32>
    %478 = tpu.matmul %475, %477, %cst_263 {dimension_numbers = #tpu.dot_dimension_numbers<[1], [1], [0], [0], [0, 0, 1, 0], [], []>} : vector<8x16xbf16>, vector<8x16xbf16>, vector<8x8xf32> -> vector<8x8xf32>
    %479 = arith.addf %473, %478 : vector<8x8xf32>
    %480 = vector.extract_strided_slice %466 {offsets = [16, 0], sizes = [8, 16], strides = [1, 1]} : vector<32x16xf32> to vector<8x16xf32>
    %481 = arith.truncf %480 : vector<8x16xf32> to vector<8x16xbf16>
    %482 = vector.extract_strided_slice %459 {offsets = [16, 0], sizes = [8, 16], strides = [1, 1]} : vector<32x16xf32> to vector<8x16xf32>
    %483 = arith.truncf %482 : vector<8x16xf32> to vector<8x16xbf16>
    %cst_264 = arith.constant dense<0.000000e+00> : vector<8x8xf32>
    %484 = tpu.matmul %481, %483, %cst_264 {dimension_numbers = #tpu.dot_dimension_numbers<[1], [1], [0], [0], [0, 0, 1, 0], [], []>} : vector<8x16xbf16>, vector<8x16xbf16>, vector<8x8xf32> -> vector<8x8xf32>
    %485 = arith.addf %479, %484 : vector<8x8xf32>
    %486 = vector.extract_strided_slice %466 {offsets = [24, 0], sizes = [8, 16], strides = [1, 1]} : vector<32x16xf32> to vector<8x16xf32>
    %487 = arith.truncf %486 : vector<8x16xf32> to vector<8x16xbf16>
    %488 = vector.extract_strided_slice %459 {offsets = [24, 0], sizes = [8, 16], strides = [1, 1]} : vector<32x16xf32> to vector<8x16xf32>
    %489 = arith.truncf %488 : vector<8x16xf32> to vector<8x16xbf16>
    %cst_265 = arith.constant dense<0.000000e+00> : vector<8x8xf32>
    %490 = tpu.matmul %487, %489, %cst_265 {dimension_numbers = #tpu.dot_dimension_numbers<[1], [1], [0], [0], [0, 0, 1, 0], [], []>} : vector<8x16xbf16>, vector<8x16xbf16>, vector<8x8xf32> -> vector<8x8xf32>
    %491 = arith.addf %485, %490 : vector<8x8xf32>
    %c7_266 = arith.constant 7 : index
    %c0_267 = arith.constant 0 : index
    %c0_268 = arith.constant 0 : index
    %492 = vector.load %arg14[%c7_266, %c0_267, %c0_268] : memref<9x8x8xf32, #tpu.memory_space<vmem>>, vector<1x8x8xf32>
    %493 = vector.shape_cast %492 : vector<1x8x8xf32> to vector<8x8xf32>
    %494 = arith.mulf %491, %493 : vector<8x8xf32>
    %cst_269 = arith.constant dense<0.000000e+00> : vector<64x8xf32>
    %495 = tpu.matmul %100, %494, %cst_269 {dimension_numbers = #tpu.dot_dimension_numbers<[1], [0], [0], [1], [0, 0, 1, 1], [], []>} : vector<64x8xf32>, vector<8x8xf32>, vector<64x8xf32> -> vector<64x8xf32>
    %cst_270 = arith.constant dense<0.000000e+00> : vector<64x64xf32>
    %496 = tpu.matmul %495, %101, %cst_270 {dimension_numbers = #tpu.dot_dimension_numbers<[1], [0], [0], [1], [0, 0, 1, 1], [], []>} : vector<64x8xf32>, vector<8x64xf32>, vector<64x64xf32> -> vector<64x64xf32>
    %c7_271 = arith.constant 7 : index
    %c0_272 = arith.constant 0 : index
    %c0_273 = arith.constant 0 : index
    %497 = vector.load %arg15[%c7_271, %c0_272, %c0_273] : memref<9x64x64xf32, #tpu.memory_space<vmem>>, vector<1x64x64xf32>
    %498 = vector.shape_cast %497 : vector<1x64x64xf32> to vector<64x64xf32>
    %499 = arith.mulf %498, %496 : vector<64x64xf32>
    %500 = arith.truncf %499 : vector<64x64xf32> to vector<64x64xbf16>
    %cst_274 = arith.constant dense<0.000000e+00> : vector<64x16xf32>
    %501 = tpu.matmul %500, %96, %cst_274 {dimension_numbers = #tpu.dot_dimension_numbers<[1], [0], [0], [1], [0, 0, 1, 1], [], []>} : vector<64x64xbf16>, vector<64x16xbf16>, vector<64x16xf32> -> vector<64x16xf32>
    %502 = arith.addf %452, %501 : vector<64x16xf32>
    %c8 = arith.constant 8 : index
    %c0_275 = arith.constant 0 : index
    %c0_276 = arith.constant 0 : index
    %503 = vector.load %arg12[%c8, %c0_275, %c0_276] : memref<18x32x64xbf16, #tpu.memory_space<vmem>>, vector<1x32x64xbf16>
    %504 = vector.shape_cast %503 : vector<1x32x64xbf16> to vector<32x64xbf16>
    %cst_277 = arith.constant dense<0.000000e+00> : vector<32x16xf32>
    %505 = tpu.matmul %504, %99, %cst_277 {dimension_numbers = #tpu.dot_dimension_numbers<[1], [0], [0], [1], [0, 0, 1, 1], [], []>} : vector<32x64xbf16>, vector<64x16xbf16>, vector<32x16xf32> -> vector<32x16xf32>
    %c8_278 = arith.constant 8 : index
    %c0_279 = arith.constant 0 : index
    %c0_280 = arith.constant 0 : index
    %506 = vector.load %arg13[%c8_278, %c0_279, %c0_280] : memref<18x32x1xf32, #tpu.memory_space<vmem>>, vector<1x32x1xf32>
    %507 = vector.shape_cast %506 : vector<1x32x1xf32> to vector<32x1xf32>
    %508 = vector.broadcast %507 : vector<32x1xf32> to vector<32x16xf32>
    %509 = arith.addf %505, %508 : vector<32x16xf32>
    %c17 = arith.constant 17 : index
    %c0_281 = arith.constant 0 : index
    %c0_282 = arith.constant 0 : index
    %510 = vector.load %arg12[%c17, %c0_281, %c0_282] : memref<18x32x64xbf16, #tpu.memory_space<vmem>>, vector<1x32x64xbf16>
    %511 = vector.shape_cast %510 : vector<1x32x64xbf16> to vector<32x64xbf16>
    %cst_283 = arith.constant dense<0.000000e+00> : vector<32x16xf32>
    %512 = tpu.matmul %511, %99, %cst_283 {dimension_numbers = #tpu.dot_dimension_numbers<[1], [0], [0], [1], [0, 0, 1, 1], [], []>} : vector<32x64xbf16>, vector<64x16xbf16>, vector<32x16xf32> -> vector<32x16xf32>
    %c17_284 = arith.constant 17 : index
    %c0_285 = arith.constant 0 : index
    %c0_286 = arith.constant 0 : index
    %513 = vector.load %arg13[%c17_284, %c0_285, %c0_286] : memref<18x32x1xf32, #tpu.memory_space<vmem>>, vector<1x32x1xf32>
    %514 = vector.shape_cast %513 : vector<1x32x1xf32> to vector<32x1xf32>
    %515 = vector.broadcast %514 : vector<32x1xf32> to vector<32x16xf32>
    %516 = arith.addf %512, %515 : vector<32x16xf32>
    %cst_287 = arith.constant 0.000000e+00 : f32
    %517 = vector.broadcast %cst_287 : f32 to vector<8x8xf32>
    %518 = vector.extract_strided_slice %516 {offsets = [0, 0], sizes = [8, 16], strides = [1, 1]} : vector<32x16xf32> to vector<8x16xf32>
    %519 = arith.truncf %518 : vector<8x16xf32> to vector<8x16xbf16>
    %520 = vector.extract_strided_slice %509 {offsets = [0, 0], sizes = [8, 16], strides = [1, 1]} : vector<32x16xf32> to vector<8x16xf32>
    %521 = arith.truncf %520 : vector<8x16xf32> to vector<8x16xbf16>
    %cst_288 = arith.constant dense<0.000000e+00> : vector<8x8xf32>
    %522 = tpu.matmul %519, %521, %cst_288 {dimension_numbers = #tpu.dot_dimension_numbers<[1], [1], [0], [0], [0, 0, 1, 0], [], []>} : vector<8x16xbf16>, vector<8x16xbf16>, vector<8x8xf32> -> vector<8x8xf32>
    %523 = arith.addf %517, %522 : vector<8x8xf32>
    %524 = vector.extract_strided_slice %516 {offsets = [8, 0], sizes = [8, 16], strides = [1, 1]} : vector<32x16xf32> to vector<8x16xf32>
    %525 = arith.truncf %524 : vector<8x16xf32> to vector<8x16xbf16>
    %526 = vector.extract_strided_slice %509 {offsets = [8, 0], sizes = [8, 16], strides = [1, 1]} : vector<32x16xf32> to vector<8x16xf32>
    %527 = arith.truncf %526 : vector<8x16xf32> to vector<8x16xbf16>
    %cst_289 = arith.constant dense<0.000000e+00> : vector<8x8xf32>
    %528 = tpu.matmul %525, %527, %cst_289 {dimension_numbers = #tpu.dot_dimension_numbers<[1], [1], [0], [0], [0, 0, 1, 0], [], []>} : vector<8x16xbf16>, vector<8x16xbf16>, vector<8x8xf32> -> vector<8x8xf32>
    %529 = arith.addf %523, %528 : vector<8x8xf32>
    %530 = vector.extract_strided_slice %516 {offsets = [16, 0], sizes = [8, 16], strides = [1, 1]} : vector<32x16xf32> to vector<8x16xf32>
    %531 = arith.truncf %530 : vector<8x16xf32> to vector<8x16xbf16>
    %532 = vector.extract_strided_slice %509 {offsets = [16, 0], sizes = [8, 16], strides = [1, 1]} : vector<32x16xf32> to vector<8x16xf32>
    %533 = arith.truncf %532 : vector<8x16xf32> to vector<8x16xbf16>
    %cst_290 = arith.constant dense<0.000000e+00> : vector<8x8xf32>
    %534 = tpu.matmul %531, %533, %cst_290 {dimension_numbers = #tpu.dot_dimension_numbers<[1], [1], [0], [0], [0, 0, 1, 0], [], []>} : vector<8x16xbf16>, vector<8x16xbf16>, vector<8x8xf32> -> vector<8x8xf32>
    %535 = arith.addf %529, %534 : vector<8x8xf32>
    %536 = vector.extract_strided_slice %516 {offsets = [24, 0], sizes = [8, 16], strides = [1, 1]} : vector<32x16xf32> to vector<8x16xf32>
    %537 = arith.truncf %536 : vector<8x16xf32> to vector<8x16xbf16>
    %538 = vector.extract_strided_slice %509 {offsets = [24, 0], sizes = [8, 16], strides = [1, 1]} : vector<32x16xf32> to vector<8x16xf32>
    %539 = arith.truncf %538 : vector<8x16xf32> to vector<8x16xbf16>
    %cst_291 = arith.constant dense<0.000000e+00> : vector<8x8xf32>
    %540 = tpu.matmul %537, %539, %cst_291 {dimension_numbers = #tpu.dot_dimension_numbers<[1], [1], [0], [0], [0, 0, 1, 0], [], []>} : vector<8x16xbf16>, vector<8x16xbf16>, vector<8x8xf32> -> vector<8x8xf32>
    %541 = arith.addf %535, %540 : vector<8x8xf32>
    %c8_292 = arith.constant 8 : index
    %c0_293 = arith.constant 0 : index
    %c0_294 = arith.constant 0 : index
    %542 = vector.load %arg14[%c8_292, %c0_293, %c0_294] : memref<9x8x8xf32, #tpu.memory_space<vmem>>, vector<1x8x8xf32>
    %543 = vector.shape_cast %542 : vector<1x8x8xf32> to vector<8x8xf32>
    %544 = arith.mulf %541, %543 : vector<8x8xf32>
    %cst_295 = arith.constant dense<0.000000e+00> : vector<64x8xf32>
    %545 = tpu.matmul %100, %544, %cst_295 {dimension_numbers = #tpu.dot_dimension_numbers<[1], [0], [0], [1], [0, 0, 1, 1], [], []>} : vector<64x8xf32>, vector<8x8xf32>, vector<64x8xf32> -> vector<64x8xf32>
    %cst_296 = arith.constant dense<0.000000e+00> : vector<64x64xf32>
    %546 = tpu.matmul %545, %101, %cst_296 {dimension_numbers = #tpu.dot_dimension_numbers<[1], [0], [0], [1], [0, 0, 1, 1], [], []>} : vector<64x8xf32>, vector<8x64xf32>, vector<64x64xf32> -> vector<64x64xf32>
    %c8_297 = arith.constant 8 : index
    %c0_298 = arith.constant 0 : index
    %c0_299 = arith.constant 0 : index
    %547 = vector.load %arg15[%c8_297, %c0_298, %c0_299] : memref<9x64x64xf32, #tpu.memory_space<vmem>>, vector<1x64x64xf32>
    %548 = vector.shape_cast %547 : vector<1x64x64xf32> to vector<64x64xf32>
    %549 = arith.mulf %548, %546 : vector<64x64xf32>
    %550 = arith.truncf %549 : vector<64x64xf32> to vector<64x64xbf16>
    %cst_300 = arith.constant dense<0.000000e+00> : vector<64x16xf32>
    %551 = tpu.matmul %550, %96, %cst_300 {dimension_numbers = #tpu.dot_dimension_numbers<[1], [0], [0], [1], [0, 0, 1, 1], [], []>} : vector<64x64xbf16>, vector<64x16xbf16>, vector<64x16xf32> -> vector<64x16xf32>
    %552 = arith.addf %502, %551 : vector<64x16xf32>
    %c0_301 = arith.constant 0 : index
    %c0_302 = arith.constant 0 : index
    %553 = vector.load %arg18[%c0_301, %c0_302] : memref<64x1xf32, #tpu.memory_space<vmem>>, vector<64x1xf32>
    %554 = vector.broadcast %553 : vector<64x1xf32> to vector<64x16xf32>
    %555 = arith.addf %552, %554 : vector<64x16xf32>
    %556 = arith.addf %555, %95 : vector<64x16xf32>
    %cst_303 = arith.constant 0.000000e+00 : f32
    %557 = vector.broadcast %cst_303 : f32 to vector<64x16xf32>
    %558 = arith.cmpf ogt, %556, %557 : vector<64x16xf32>
    %cst_304 = arith.constant 1.000000e-01 : f32
    %559 = vector.broadcast %cst_304 : f32 to vector<64x16xf32>
    %560 = arith.mulf %559, %556 : vector<64x16xf32>
    %561 = arith.select %558, %556, %560 : vector<64x16xi1>, vector<64x16xf32>
    %c0_305 = arith.constant 0 : index
    %c0_306 = arith.constant 0 : index
    %562 = vector.load %arg19[%c0_305, %c0_306] : memref<64x64xbf16, #tpu.memory_space<vmem>>, vector<64x64xbf16>
    %563 = arith.truncf %561 : vector<64x16xf32> to vector<64x16xbf16>
    %cst_307 = arith.constant dense<0.000000e+00> : vector<64x16xf32>
    %564 = tpu.matmul %562, %563, %cst_307 {dimension_numbers = #tpu.dot_dimension_numbers<[1], [0], [0], [1], [0, 0, 1, 1], [], []>} : vector<64x64xbf16>, vector<64x16xbf16>, vector<64x16xf32> -> vector<64x16xf32>
    %c0_308 = arith.constant 0 : index
    %c0_309 = arith.constant 0 : index
    %565 = vector.load %arg20[%c0_308, %c0_309] : memref<64x1xf32, #tpu.memory_space<vmem>>, vector<64x1xf32>
    %566 = vector.broadcast %565 : vector<64x1xf32> to vector<64x16xf32>
    %567 = arith.addf %564, %566 : vector<64x16xf32>
    %568 = arith.addf %567, %95 : vector<64x16xf32>
    %cst_310 = arith.constant 0.000000e+00 : f32
    %569 = vector.broadcast %cst_310 : f32 to vector<64x16xf32>
    %570 = arith.cmpf ogt, %568, %569 : vector<64x16xf32>
    %cst_311 = arith.constant 1.000000e-01 : f32
    %571 = vector.broadcast %cst_311 : f32 to vector<64x16xf32>
    %572 = arith.mulf %571, %568 : vector<64x16xf32>
    %573 = arith.select %570, %568, %572 : vector<64x16xi1>, vector<64x16xf32>
    %c0_312 = arith.constant 0 : index
    %c0_313 = arith.constant 0 : index
    %574 = vector.load %arg21[%c0_312, %c0_313] : memref<64x64xbf16, #tpu.memory_space<vmem>>, vector<64x64xbf16>
    %575 = arith.truncf %573 : vector<64x16xf32> to vector<64x16xbf16>
    %cst_314 = arith.constant dense<0.000000e+00> : vector<64x16xf32>
    %576 = tpu.matmul %574, %575, %cst_314 {dimension_numbers = #tpu.dot_dimension_numbers<[1], [0], [0], [1], [0, 0, 1, 1], [], []>} : vector<64x64xbf16>, vector<64x16xbf16>, vector<64x16xf32> -> vector<64x16xf32>
    %c0_315 = arith.constant 0 : index
    %c0_316 = arith.constant 0 : index
    %577 = vector.load %arg22[%c0_315, %c0_316] : memref<64x1xf32, #tpu.memory_space<vmem>>, vector<64x1xf32>
    %578 = vector.broadcast %577 : vector<64x1xf32> to vector<64x16xf32>
    %579 = arith.addf %576, %578 : vector<64x16xf32>
    %580 = arith.addf %573, %579 : vector<64x16xf32>
    %cst_317 = arith.constant 0.000000e+00 : f32
    %581 = vector.broadcast %cst_317 : f32 to vector<64x16xf32>
    %582 = arith.cmpf ogt, %580, %581 : vector<64x16xf32>
    %cst_318 = arith.constant 1.000000e-01 : f32
    %583 = vector.broadcast %cst_318 : f32 to vector<64x16xf32>
    %584 = arith.mulf %583, %580 : vector<64x16xf32>
    %585 = arith.select %582, %580, %584 : vector<64x16xi1>, vector<64x16xf32>
    %c0_319 = arith.constant 0 : index
    %c0_320 = arith.constant 0 : index
    %c0_321 = arith.constant 0 : index
    %586 = vector.load %arg23[%c0_319, %c0_320, %c0_321] : memref<1x64x16xf32, #tpu.memory_space<vmem>>, vector<1x64x16xf32>
    %587 = vector.shape_cast %586 : vector<1x64x16xf32> to vector<64x16xf32>
    %588 = vector.shape_cast %585 : vector<64x16xf32> to vector<1x64x16xf32>
    tpu.vector_store %arg23[%c0_319, %c0_320, %c0_321], %588 {strides = array<i32>} : memref<1x64x16xf32, #tpu.memory_space<vmem>>, vector<1x64x16xf32>,
    return
  }
  func.func @transform_0(%arg0: i32) -> (i32, i32, i32) {
    %c0_i32 = arith.constant 0 : i32
    %c0_i32_0 = arith.constant 0 : i32
    %c0_i32_1 = arith.constant 0 : i32
    return %arg0, %c0_i32, %c0_i32_0 : i32, i32, i32
  }
  func.func @transform_1(%arg0: i32) -> (i32, i32) {
    %c0_i32 = arith.constant 0 : i32
    %c0_i32_0 = arith.constant 0 : i32
    %c0_i32_1 = arith.constant 0 : i32
    return %c0_i32, %c0_i32_0 : i32, i32
  }
  func.func @transform_2(%arg0: i32) -> (i32, i32) {
    %c0_i32 = arith.constant 0 : i32
    %c0_i32_0 = arith.constant 0 : i32
    %c0_i32_1 = arith.constant 0 : i32
    return %c0_i32, %c0_i32_0 : i32, i32
  }
  func.func @transform_3(%arg0: i32) -> (i32, i32) {
    %c0_i32 = arith.constant 0 : i32
    %c0_i32_0 = arith.constant 0 : i32
    %c0_i32_1 = arith.constant 0 : i32
    return %c0_i32, %c0_i32_0 : i32, i32
  }
  func.func @transform_4(%arg0: i32) -> (i32, i32, i32) {
    %c0_i32 = arith.constant 0 : i32
    %c0_i32_0 = arith.constant 0 : i32
    %c0_i32_1 = arith.constant 0 : i32
    %c0_i32_2 = arith.constant 0 : i32
    return %c0_i32, %c0_i32_0, %c0_i32_1 : i32, i32, i32
  }
  func.func @transform_5(%arg0: i32) -> (i32, i32, i32) {
    %c0_i32 = arith.constant 0 : i32
    %c0_i32_0 = arith.constant 0 : i32
    %c0_i32_1 = arith.constant 0 : i32
    %c0_i32_2 = arith.constant 0 : i32
    return %c0_i32, %c0_i32_0, %c0_i32_1 : i32, i32, i32
  }
  func.func @transform_6(%arg0: i32) -> (i32, i32, i32) {
    %c0_i32 = arith.constant 0 : i32
    %c0_i32_0 = arith.constant 0 : i32
    %c0_i32_1 = arith.constant 0 : i32
    %c0_i32_2 = arith.constant 0 : i32
    return %c0_i32, %c0_i32_0, %c0_i32_1 : i32, i32, i32
  }
  func.func @transform_7(%arg0: i32) -> (i32, i32) {
    %c0_i32 = arith.constant 0 : i32
    %c0_i32_0 = arith.constant 0 : i32
    %c0_i32_1 = arith.constant 0 : i32
    return %c0_i32, %c0_i32_0 : i32, i32
  }
  func.func @transform_8(%arg0: i32) -> (i32, i32) {
    %c0_i32 = arith.constant 0 : i32
    %c0_i32_0 = arith.constant 0 : i32
    %c0_i32_1 = arith.constant 0 : i32
    return %c0_i32, %c0_i32_0 : i32, i32
  }
  func.func @transform_9(%arg0: i32) -> (i32, i32) {
    %c0_i32 = arith.constant 0 : i32
    %c0_i32_0 = arith.constant 0 : i32
    %c0_i32_1 = arith.constant 0 : i32
    return %c0_i32, %c0_i32_0 : i32, i32
  }
  func.func @transform_10(%arg0: i32) -> (i32, i32) {
    %c0_i32 = arith.constant 0 : i32
    %c0_i32_0 = arith.constant 0 : i32
    %c0_i32_1 = arith.constant 0 : i32
    return %c0_i32, %c0_i32_0 : i32, i32
  }
  func.func @transform_11(%arg0: i32) -> (i32, i32, i32) {
    %c0_i32 = arith.constant 0 : i32
    %c0_i32_0 = arith.constant 0 : i32
    %c0_i32_1 = arith.constant 0 : i32
    %c0_i32_2 = arith.constant 0 : i32
    return %c0_i32, %c0_i32_0, %c0_i32_1 : i32, i32, i32
  }
  func.func @transform_12(%arg0: i32) -> (i32, i32, i32) {
    %c0_i32 = arith.constant 0 : i32
    %c0_i32_0 = arith.constant 0 : i32
    %c0_i32_1 = arith.constant 0 : i32
    %c0_i32_2 = arith.constant 0 : i32
    return %c0_i32, %c0_i32_0, %c0_i32_1 : i32, i32, i32
  }
  func.func @transform_13(%arg0: i32) -> (i32, i32, i32) {
    %c0_i32 = arith.constant 0 : i32
    %c0_i32_0 = arith.constant 0 : i32
    %c0_i32_1 = arith.constant 0 : i32
    %c0_i32_2 = arith.constant 0 : i32
    return %c0_i32, %c0_i32_0, %c0_i32_1 : i32, i32, i32
  }
  func.func @transform_14(%arg0: i32) -> (i32, i32, i32) {
    %c0_i32 = arith.constant 0 : i32
    %c0_i32_0 = arith.constant 0 : i32
    %c0_i32_1 = arith.constant 0 : i32
    %c0_i32_2 = arith.constant 0 : i32
    return %c0_i32, %c0_i32_0, %c0_i32_1 : i32, i32, i32
  }
  func.func @transform_15(%arg0: i32) -> (i32, i32) {
    %c0_i32 = arith.constant 0 : i32
    %c0_i32_0 = arith.constant 0 : i32
    %c0_i32_1 = arith.constant 0 : i32
    return %c0_i32, %c0_i32_0 : i32, i32
  }
  func.func @transform_16(%arg0: i32) -> (i32, i32) {
    %c0_i32 = arith.constant 0 : i32
    %c0_i32_0 = arith.constant 0 : i32
    %c0_i32_1 = arith.constant 0 : i32
    return %c0_i32, %c0_i32_0 : i32, i32
  }
  func.func @transform_17(%arg0: i32) -> (i32, i32) {
    %c0_i32 = arith.constant 0 : i32
    %c0_i32_0 = arith.constant 0 : i32
    %c0_i32_1 = arith.constant 0 : i32
    return %c0_i32, %c0_i32_0 : i32, i32
  }
  func.func @transform_18(%arg0: i32) -> (i32, i32) {
    %c0_i32 = arith.constant 0 : i32
    %c0_i32_0 = arith.constant 0 : i32
    %c0_i32_1 = arith.constant 0 : i32
    return %c0_i32, %c0_i32_0 : i32, i32
  }
  func.func @transform_19(%arg0: i32) -> (i32, i32) {
    %c0_i32 = arith.constant 0 : i32
    %c0_i32_0 = arith.constant 0 : i32
    %c0_i32_1 = arith.constant 0 : i32
    return %c0_i32, %c0_i32_0 : i32, i32
  }
  func.func @transform_20(%arg0: i32) -> (i32, i32) {
    %c0_i32 = arith.constant 0 : i32
    %c0_i32_0 = arith.constant 0 : i32
    %c0_i32_1 = arith.constant 0 : i32
    return %c0_i32, %c0_i32_0 : i32, i32
  }
  func.func @transform_21(%arg0: i32) -> (i32, i32) {
    %c0_i32 = arith.constant 0 : i32
    %c0_i32_0 = arith.constant 0 : i32
    %c0_i32_1 = arith.constant 0 : i32
    return %c0_i32, %c0_i32_0 : i32, i32
  }
  func.func @transform_22(%arg0: i32) -> (i32, i32, i32) {
    %c0_i32 = arith.constant 0 : i32
    %c0_i32_0 = arith.constant 0 : i32
    %c0_i32_1 = arith.constant 0 : i32
    return %arg0, %c0_i32, %c0_i32_0 : i32, i32, i32
  }
}

</mosaic_0001>

<llo_original>
// kernel: st_attention_block_forward.1
$region0: #{st_attention_block_forward.1}
  #allocation0 [shape = 'u32[]', space=smem, size = 0x4, offset = 0x4, fixed_abs, tag = 'smem constant byte address 0x4 - core index']
  #allocation1 [shape = 'u32[144,128]{1,0:T(1,128)}', space=vmem, size = 0x12000, scoped, tag = 'internal scratch']
  %s0 = inlined_call_operand.vmem [shape: f32[2,64,16], index: 0, kind: input, shape index: {}]
  %s1 = inlined_call_operand.vmem [shape: f32[64,16], index: 1, kind: input, shape index: {}]
  %s2 = inlined_call_operand.vmem [shape: bf16[192,64], index: 2, kind: input, shape index: {}]
  %s3 = inlined_call_operand.vmem [shape: f32[192,1], index: 3, kind: input, shape index: {}]
  %s4 = inlined_call_operand.vmem [shape: f32[3,16,16], index: 4, kind: input, shape index: {}]
  %s5 = inlined_call_operand.vmem [shape: f32[3,16,16], index: 5, kind: input, shape index: {}]
  %s6 = inlined_call_operand.vmem [shape: bf16[3,64,64], index: 6, kind: input, shape index: {}]
  %s7 = inlined_call_operand.vmem [shape: f32[64,1], index: 7, kind: input, shape index: {}]
  %s8 = inlined_call_operand.vmem [shape: bf16[64,64], index: 8, kind: input, shape index: {}]
  %s9 = inlined_call_operand.vmem [shape: f32[64,1], index: 9, kind: input, shape index: {}]
  %s10 = inlined_call_operand.vmem [shape: f32[64,16], index: 10, kind: input, shape index: {}]
  %s11 = inlined_call_operand.vmem [shape: bf16[18,32,64], index: 11, kind: input, shape index: {}]
  %s12 = inlined_call_operand.vmem [shape: f32[18,32,1], index: 12, kind: input, shape index: {}]
  %s13 = inlined_call_operand.vmem [shape: f32[9,8,8], index: 13, kind: input, shape index: {}]
  %s14 = inlined_call_operand.vmem [shape: f32[9,64,64], index: 14, kind: input, shape index: {}]
  %s15 = inlined_call_operand.vmem [shape: f32[64,8], index: 15, kind: input, shape index: {}]
  %s16 = inlined_call_operand.vmem [shape: f32[8,64], index: 16, kind: input, shape index: {}]
  %s17 = inlined_call_operand.vmem [shape: f32[64,1], index: 17, kind: input, shape index: {}]
  %s18 = inlined_call_operand.vmem [shape: bf16[64,64], index: 18, kind: input, shape index: {}]
  %s19 = inlined_call_operand.vmem [shape: f32[64,1], index: 19, kind: input, shape index: {}]
  %s20 = inlined_call_operand.vmem [shape: bf16[64,64], index: 20, kind: input, shape index: {}]
  %s21 = inlined_call_operand.vmem [shape: f32[64,1], index: 21, kind: input, shape index: {}]
  %s22 = inlined_call_operand.hbm [shape: f32[2,64,16], index: 22, kind: output, shape index: {}]
  %s23 = sld [smem:[#allocation0]]
  $region121: #{st_attention_block_forward.1} parent=0
    _
  %s25 = ssub.s32 1, %s23
  %s26 = scalar_select 0, %s25, %s23
  $region1: #{st_attention_block_forward.1} parent=0
    #allocation2 [shape = 'u8[65536]{0}', space=vmem, size = 0x10000, scoped, tag = 'output window, operand 0']
    #allocation3 [shape = 's32[2]{0}', space=sflag, size = 0x8, scoped, tag = 'scoped memory for st_attention_block_forward.1']
    %27 = vsyncpa [#allocation3], 0
    %s28 = scalar_lea.sflag [#allocation3], 1
    %29 = vsyncpa %s28, 0
    loop: start=0, step=1, limit=4
    $region2: #{st_attention_block_forward.1} parent=1 // loop_pre_header
      _
    $region3: #{st_attention_block_forward.1} parent=1 // loop_header
      %s31 = sphi 0, %s35
      %p32 = scmp.ge.s32.totalorder %s31, 4
      %s41 = sphi 0, %s43
      %s44 = sphi 0, %s41
      %s45 = sphi 0, %s44
      %s61 = sphi 0, %s45
      %s65 = sphi 0, %s65
      %s67 = sphi 0, %s65
      %s68 = sphi 0, %s67
      %s82 = sphi 0, %s68
      %s86 = sphi 0, %s86
      %s88 = sphi 0, %s86
      %s89 = sphi 0, %s88
      %s103 = sphi 0, %s89
      %s107 = sphi 0, %s107
      %s109 = sphi 0, %s107
      %s110 = sphi 0, %s109
      %s124 = sphi 0, %s110
      %s128 = sphi 0, %s128
      %s130 = sphi 0, %s128
      %s131 = sphi 0, %s130
      %s145 = sphi 0, %s131
      %s149 = sphi 0, %s149
      %s151 = sphi 0, %s149
      %s152 = sphi 0, %s151
      %s166 = sphi 0, %s152
      %s170 = sphi 0, %s170
      %s172 = sphi 0, %s170
      %s173 = sphi 0, %s172
      %s187 = sphi 0, %s173
      %s191 = sphi 0, %s191
      %s193 = sphi 0, %s191
      %s194 = sphi 0, %s193
      %s208 = sphi 0, %s194
      %s212 = sphi 0, %s212
      %s214 = sphi 0, %s212
      %s215 = sphi 0, %s214
      %s229 = sphi 0, %s215
      %s233 = sphi 0, %s233
      %s235 = sphi 0, %s233
      %s236 = sphi 0, %s235
      %s250 = sphi 0, %s236
      %s254 = sphi 0, %s254
      %s256 = sphi 0, %s254
      %s257 = sphi 0, %s256
      %s271 = sphi 0, %s257
      %s275 = sphi 0, %s275
      %s277 = sphi 0, %s275
      %s278 = sphi 0, %s277
      %s292 = sphi 0, %s278
      %s296 = sphi 0, %s296
      %s298 = sphi 0, %s296
      %s299 = sphi 0, %s298
      %s313 = sphi 0, %s299
      %s317 = sphi 0, %s317
      %s319 = sphi 0, %s317
      %s320 = sphi 0, %s319
      %s334 = sphi 0, %s320
      %s338 = sphi 0, %s338
      %s340 = sphi 0, %s338
      %s341 = sphi 0, %s340
      %s355 = sphi 0, %s341
      %s359 = sphi 0, %s359
      %s361 = sphi 0, %s359
      %s362 = sphi 0, %s361
      %s376 = sphi 0, %s362
      %s380 = sphi 0, %s380
      %s382 = sphi 0, %s380
      %s383 = sphi 0, %s382
      %s397 = sphi 0, %s383
      %s401 = sphi 0, %s401
      %s403 = sphi 0, %s401
      %s404 = sphi 0, %s403
      %s418 = sphi 0, %s404
      %s422 = sphi 0, %s422
      %s424 = sphi 0, %s422
      %s425 = sphi 0, %s424
      %s439 = sphi 0, %s425
      %s443 = sphi 0, %s443
      %s445 = sphi 0, %s443
      %s446 = sphi 0, %s445
      %s460 = sphi 0, %s446
      %s464 = sphi 0, %s464
      %s466 = sphi 0, %s464
      %s467 = sphi 0, %s466
      %s481 = sphi 0, %s467
      %s485 = sphi 0, %s485
      %s487 = sphi 0, %s485
      %s488 = sphi 0, %s487
      %s502 = sphi 0, %s488
      %s508 = sphi 0, %s510
      %s511 = sphi 0, %s508
      %s512 = sphi 0, %s511
      %s528 = sphi 0, %s512
    $region4: #{st_attention_block_forward.1} parent=1 // loop_header_branch
      %34 = sbr.rel (%p32) target = $region8
    $region5: #{st_attention_block_forward.1} parent=1 // loop_body
      %s36 = ssub.s32 %s31, 1
      %s37 = ssub.s32 %s31, 2
      %s38 = sadd.s32 %s31, 1
      %s39 = ssub.s32 %s31, %s38
      %p40 = scmp.eq.s32.totalorder %s39, 0
      %s42 = sadd.s32 %s41, 1
      %s43 = scalar_select %p40, %s41, %s42
      %p46 = pneg %p40
      %p47 = scmp.eq.s32.totalorder %s31, 1
      %p48 = por %p46, %p47
      %p49 = scmp.ne.s32.totalorder %s41, %s44
      %p50 = scmp.eq.s32.totalorder %s31, 0
      %p51 = por %p49, %p50
      %p52 = scmp.ne.s32.totalorder %s41, %s44
      %p53 = scmp.eq.s32.totalorder %s36, 1
      %p54 = por %p52, %p53
      %p55 = scmp.ne.s32.totalorder %s44, %s45
      %p56 = scmp.eq.s32.totalorder %s36, 0
      %p57 = por %p55, %p56
      %p58 = scmp.ne.s32.totalorder %s44, %s45
      %p59 = scmp.eq.s32.totalorder %s37, 1
      %p60 = por %p58, %p59
      %p62 = scmp.ne.s32.totalorder %s45, %s61
      %p63 = scmp.eq.s32.totalorder %s37, 0
      %p64 = por %p62, %p63
      %s66 = sadd.s32 %s65, 1
      %p69 = scmp.eq.s32.totalorder %s31, 1
      %p70 = scmp.ne.s32.totalorder %s65, %s67
      %p71 = scmp.eq.s32.totalorder %s31, 0
      %p72 = por %p70, %p71
      %p73 = scmp.ne.s32.totalorder %s65, %s67
      %p74 = scmp.eq.s32.totalorder %s36, 1
      %p75 = por %p73, %p74
      %p76 = scmp.ne.s32.totalorder %s67, %s68
      %p77 = scmp.eq.s32.totalorder %s36, 0
      %p78 = por %p76, %p77
      %p79 = scmp.ne.s32.totalorder %s67, %s68
      %p80 = scmp.eq.s32.totalorder %s37, 1
      %p81 = por %p79, %p80
      %p83 = scmp.ne.s32.totalorder %s68, %s82
      %p84 = scmp.eq.s32.totalorder %s37, 0
      %p85 = por %p83, %p84
      %s87 = sadd.s32 %s86, 1
      %p90 = scmp.eq.s32.totalorder %s31, 1
      %p91 = scmp.ne.s32.totalorder %s86, %s88
      %p92 = scmp.eq.s32.totalorder %s31, 0
      %p93 = por %p91, %p92
      %p94 = scmp.ne.s32.totalorder %s86, %s88
      %p95 = scmp.eq.s32.totalorder %s36, 1
      %p96 = por %p94, %p95
      %p97 = scmp.ne.s32.totalorder %s88, %s89
      %p98 = scmp.eq.s32.totalorder %s36, 0
      %p99 = por %p97, %p98
      %p100 = scmp.ne.s32.totalorder %s88, %s89
      %p101 = scmp.eq.s32.totalorder %s37, 1
      %p102 = por %p100, %p101
      %p104 = scmp.ne.s32.totalorder %s89, %s103
      %p105 = scmp.eq.s32.totalorder %s37, 0
      %p106 = por %p104, %p105
      %s108 = sadd.s32 %s107, 1
      %p111 = scmp.eq.s32.totalorder %s31, 1
      %p112 = scmp.ne.s32.totalorder %s107, %s109
      %p113 = scmp.eq.s32.totalorder %s31, 0
      %p114 = por %p112, %p113
      %p115 = scmp.ne.s32.totalorder %s107, %s109
      %p116 = scmp.eq.s32.totalorder %s36, 1
      %p117 = por %p115, %p116
      %p118 = scmp.ne.s32.totalorder %s109, %s110
      %p119 = scmp.eq.s32.totalorder %s36, 0
      %p120 = por %p118, %p119
      %p121 = scmp.ne.s32.totalorder %s109, %s110
      %p122 = scmp.eq.s32.totalorder %s37, 1
      %p123 = por %p121, %p122
      %p125 = scmp.ne.s32.totalorder %s110, %s124
      %p126 = scmp.eq.s32.totalorder %s37, 0
      %p127 = por %p125, %p126
      %s129 = sadd.s32 %s128, 1
      %p132 = scmp.eq.s32.totalorder %s31, 1
      %p133 = scmp.ne.s32.totalorder %s128, %s130
      %p134 = scmp.eq.s32.totalorder %s31, 0
      %p135 = por %p133, %p134
      %p136 = scmp.ne.s32.totalorder %s128, %s130
      %p137 = scmp.eq.s32.totalorder %s36, 1
      %p138 = por %p136, %p137
      %p139 = scmp.ne.s32.totalorder %s130, %s131
      %p140 = scmp.eq.s32.totalorder %s36, 0
      %p141 = por %p139, %p140
      %p142 = scmp.ne.s32.totalorder %s130, %s131
      %p143 = scmp.eq.s32.totalorder %s37, 1
      %p144 = por %p142, %p143
      %p146 = scmp.ne.s32.totalorder %s131, %s145
      %p147 = scmp.eq.s32.totalorder %s37, 0
      %p148 = por %p146, %p147
      %s150 = sadd.s32 %s149, 1
      %p153 = scmp.eq.s32.totalorder %s31, 1
      %p154 = scmp.ne.s32.totalorder %s149, %s151
      %p155 = scmp.eq.s32.totalorder %s31, 0
      %p156 = por %p154, %p155
      %p157 = scmp.ne.s32.totalorder %s149, %s151
      %p158 = scmp.eq.s32.totalorder %s36, 1
      %p159 = por %p157, %p158
      %p160 = scmp.ne.s32.totalorder %s151, %s152
      %p161 = scmp.eq.s32.totalorder %s36, 0
      %p162 = por %p160, %p161
      %p163 = scmp.ne.s32.totalorder %s151, %s152
      %p164 = scmp.eq.s32.totalorder %s37, 1
      %p165 = por %p163, %p164
      %p167 = scmp.ne.s32.totalorder %s152, %s166
      %p168 = scmp.eq.s32.totalorder %s37, 0
      %p169 = por %p167, %p168
      %s171 = sadd.s32 %s170, 1
      %p174 = scmp.eq.s32.totalorder %s31, 1
      %p175 = scmp.ne.s32.totalorder %s170, %s172
      %p176 = scmp.eq.s32.totalorder %s31, 0
      %p177 = por %p175, %p176
      %p178 = scmp.ne.s32.totalorder %s170, %s172
      %p179 = scmp.eq.s32.totalorder %s36, 1
      %p180 = por %p178, %p179
      %p181 = scmp.ne.s32.totalorder %s172, %s173
      %p182 = scmp.eq.s32.totalorder %s36, 0
      %p183 = por %p181, %p182
      %p184 = scmp.ne.s32.totalorder %s172, %s173
      %p185 = scmp.eq.s32.totalorder %s37, 1
      %p186 = por %p184, %p185
      %p188 = scmp.ne.s32.totalorder %s173, %s187
      %p189 = scmp.eq.s32.totalorder %s37, 0
      %p190 = por %p188, %p189
      %s192 = sadd.s32 %s191, 1
      %p195 = scmp.eq.s32.totalorder %s31, 1
      %p196 = scmp.ne.s32.totalorder %s191, %s193
      %p197 = scmp.eq.s32.totalorder %s31, 0
      %p198 = por %p196, %p197
      %p199 = scmp.ne.s32.totalorder %s191, %s193
      %p200 = scmp.eq.s32.totalorder %s36, 1
      %p201 = por %p199, %p200
      %p202 = scmp.ne.s32.totalorder %s193, %s194
      %p203 = scmp.eq.s32.totalorder %s36, 0
      %p204 = por %p202, %p203
      %p205 = scmp.ne.s32.totalorder %s193, %s194
      %p206 = scmp.eq.s32.totalorder %s37, 1
      %p207 = por %p205, %p206
      %p209 = scmp.ne.s32.totalorder %s194, %s208
      %p210 = scmp.eq.s32.totalorder %s37, 0
      %p211 = por %p209, %p210
      %s213 = sadd.s32 %s212, 1
      %p216 = scmp.eq.s32.totalorder %s31, 1
      %p217 = scmp.ne.s32.totalorder %s212, %s214
      %p218 = scmp.eq.s32.totalorder %s31, 0
      %p219 = por %p217, %p218
      %p220 = scmp.ne.s32.totalorder %s212, %s214
      %p221 = scmp.eq.s32.totalorder %s36, 1
      %p222 = por %p220, %p221
      %p223 = scmp.ne.s32.totalorder %s214, %s215
      %p224 = scmp.eq.s32.totalorder %s36, 0
      %p225 = por %p223, %p224
      %p226 = scmp.ne.s32.totalorder %s214, %s215
      %p227 = scmp.eq.s32.totalorder %s37, 1
      %p228 = por %p226, %p227
      %p230 = scmp.ne.s32.totalorder %s215, %s229
      %p231 = scmp.eq.s32.totalorder %s37, 0
      %p232 = por %p230, %p231
      %s234 = sadd.s32 %s233, 1
      %p237 = scmp.eq.s32.totalorder %s31, 1
      %p238 = scmp.ne.s32.totalorder %s233, %s235
      %p239 = scmp.eq.s32.totalorder %s31, 0
      %p240 = por %p238, %p239
      %p241 = scmp.ne.s32.totalorder %s233, %s235
      %p242 = scmp.eq.s32.totalorder %s36, 1
      %p243 = por %p241, %p242
      %p244 = scmp.ne.s32.totalorder %s235, %s236
      %p245 = scmp.eq.s32.totalorder %s36, 0
      %p246 = por %p244, %p245
      %p247 = scmp.ne.s32.totalorder %s235, %s236
      %p248 = scmp.eq.s32.totalorder %s37, 1
      %p249 = por %p247, %p248
      %p251 = scmp.ne.s32.totalorder %s236, %s250
      %p252 = scmp.eq.s32.totalorder %s37, 0
      %p253 = por %p251, %p252
      %s255 = sadd.s32 %s254, 1
      %p258 = scmp.eq.s32.totalorder %s31, 1
      %p259 = scmp.ne.s32.totalorder %s254, %s256
      %p260 = scmp.eq.s32.totalorder %s31, 0
      %p261 = por %p259, %p260
      %p262 = scmp.ne.s32.totalorder %s254, %s256
      %p263 = scmp.eq.s32.totalorder %s36, 1
      %p264 = por %p262, %p263
      %p265 = scmp.ne.s32.totalorder %s256, %s257
      %p266 = scmp.eq.s32.totalorder %s36, 0
      %p267 = por %p265, %p266
      %p268 = scmp.ne.s32.totalorder %s256, %s257
      %p269 = scmp.eq.s32.totalorder %s37, 1
      %p270 = por %p268, %p269
      %p272 = scmp.ne.s32.totalorder %s257, %s271
      %p273 = scmp.eq.s32.totalorder %s37, 0
      %p274 = por %p272, %p273
      %s276 = sadd.s32 %s275, 1
      %p279 = scmp.eq.s32.totalorder %s31, 1
      %p280 = scmp.ne.s32.totalorder %s275, %s277
      %p281 = scmp.eq.s32.totalorder %s31, 0
      %p282 = por %p280, %p281
      %p283 = scmp.ne.s32.totalorder %s275, %s277
      %p284 = scmp.eq.s32.totalorder %s36, 1
      %p285 = por %p283, %p284
      %p286 = scmp.ne.s32.totalorder %s277, %s278
      %p287 = scmp.eq.s32.totalorder %s36, 0
      %p288 = por %p286, %p287
      %p289 = scmp.ne.s32.totalorder %s277, %s278
      %p290 = scmp.eq.s32.totalorder %s37, 1
      %p291 = por %p289, %p290
      %p293 = scmp.ne.s32.totalorder %s278, %s292
      %p294 = scmp.eq.s32.totalorder %s37, 0
      %p295 = por %p293, %p294
      %s297 = sadd.s32 %s296, 1
      %p300 = scmp.eq.s32.totalorder %s31, 1
      %p301 = scmp.ne.s32.totalorder %s296, %s298
      %p302 = scmp.eq.s32.totalorder %s31, 0
      %p303 = por %p301, %p302
      %p304 = scmp.ne.s32.totalorder %s296, %s298
      %p305 = scmp.eq.s32.totalorder %s36, 1
      %p306 = por %p304, %p305
      %p307 = scmp.ne.s32.totalorder %s298, %s299
      %p308 = scmp.eq.s32.totalorder %s36, 0
      %p309 = por %p307, %p308
      %p310 = scmp.ne.s32.totalorder %s298, %s299
      %p311 = scmp.eq.s32.totalorder %s37, 1
      %p312 = por %p310, %p311
      %p314 = scmp.ne.s32.totalorder %s299, %s313
      %p315 = scmp.eq.s32.totalorder %s37, 0
      %p316 = por %p314, %p315
      %s318 = sadd.s32 %s317, 1
      %p321 = scmp.eq.s32.totalorder %s31, 1
      %p322 = scmp.ne.s32.totalorder %s317, %s319
      %p323 = scmp.eq.s32.totalorder %s31, 0
      %p324 = por %p322, %p323
      %p325 = scmp.ne.s32.totalorder %s317, %s319
      %p326 = scmp.eq.s32.totalorder %s36, 1
      %p327 = por %p325, %p326
      %p328 = scmp.ne.s32.totalorder %s319, %s320
      %p329 = scmp.eq.s32.totalorder %s36, 0
      %p330 = por %p328, %p329
      %p331 = scmp.ne.s32.totalorder %s319, %s320
      %p332 = scmp.eq.s32.totalorder %s37, 1
      %p333 = por %p331, %p332
      %p335 = scmp.ne.s32.totalorder %s320, %s334
      %p336 = scmp.eq.s32.totalorder %s37, 0
      %p337 = por %p335, %p336
      %s339 = sadd.s32 %s338, 1
      %p342 = scmp.eq.s32.totalorder %s31, 1
      %p343 = scmp.ne.s32.totalorder %s338, %s340
      %p344 = scmp.eq.s32.totalorder %s31, 0
      %p345 = por %p343, %p344
      %p346 = scmp.ne.s32.totalorder %s338, %s340
      %p347 = scmp.eq.s32.totalorder %s36, 1
      %p348 = por %p346, %p347
      %p349 = scmp.ne.s32.totalorder %s340, %s341
      %p350 = scmp.eq.s32.totalorder %s36, 0
      %p351 = por %p349, %p350
      %p352 = scmp.ne.s32.totalorder %s340, %s341
      %p353 = scmp.eq.s32.totalorder %s37, 1
      %p354 = por %p352, %p353
      %p356 = scmp.ne.s32.totalorder %s341, %s355
      %p357 = scmp.eq.s32.totalorder %s37, 0
      %p358 = por %p356, %p357
      %s360 = sadd.s32 %s359, 1
      %p363 = scmp.eq.s32.totalorder %s31, 1
      %p364 = scmp.ne.s32.totalorder %s359, %s361
      %p365 = scmp.eq.s32.totalorder %s31, 0
      %p366 = por %p364, %p365
      %p367 = scmp.ne.s32.totalorder %s359, %s361
      %p368 = scmp.eq.s32.totalorder %s36, 1
      %p369 = por %p367, %p368
      %p370 = scmp.ne.s32.totalorder %s361, %s362
      %p371 = scmp.eq.s32.totalorder %s36, 0
      %p372 = por %p370, %p371
      %p373 = scmp.ne.s32.totalorder %s361, %s362
      %p374 = scmp.eq.s32.totalorder %s37, 1
      %p375 = por %p373, %p374
      %p377 = scmp.ne.s32.totalorder %s362, %s376
      %p378 = scmp.eq.s32.totalorder %s37, 0
      %p379 = por %p377, %p378
      %s381 = sadd.s32 %s380, 1
      %p384 = scmp.eq.s32.totalorder %s31, 1
      %p385 = scmp.ne.s32.totalorder %s380, %s382
      %p386 = scmp.eq.s32.totalorder %s31, 0
      %p387 = por %p385, %p386
      %p388 = scmp.ne.s32.totalorder %s380, %s382
      %p389 = scmp.eq.s32.totalorder %s36, 1
      %p390 = por %p388, %p389
      %p391 = scmp.ne.s32.totalorder %s382, %s383
      %p392 = scmp.eq.s32.totalorder %s36, 0
      %p393 = por %p391, %p392
      %p394 = scmp.ne.s32.totalorder %s382, %s383
      %p395 = scmp.eq.s32.totalorder %s37, 1
      %p396 = por %p394, %p395
      %p398 = scmp.ne.s32.totalorder %s383, %s397
      %p399 = scmp.eq.s32.totalorder %s37, 0
      %p400 = por %p398, %p399
      %s402 = sadd.s32 %s401, 1
      %p405 = scmp.eq.s32.totalorder %s31, 1
      %p406 = scmp.ne.s32.totalorder %s401, %s403
      %p407 = scmp.eq.s32.totalorder %s31, 0
      %p408 = por %p406, %p407
      %p409 = scmp.ne.s32.totalorder %s401, %s403
      %p410 = scmp.eq.s32.totalorder %s36, 1
      %p411 = por %p409, %p410
      %p412 = scmp.ne.s32.totalorder %s403, %s404
      %p413 = scmp.eq.s32.totalorder %s36, 0
      %p414 = por %p412, %p413
      %p415 = scmp.ne.s32.totalorder %s403, %s404
      %p416 = scmp.eq.s32.totalorder %s37, 1
      %p417 = por %p415, %p416
      %p419 = scmp.ne.s32.totalorder %s404, %s418
      %p420 = scmp.eq.s32.totalorder %s37, 0
      %p421 = por %p419, %p420
      %s423 = sadd.s32 %s422, 1
      %p426 = scmp.eq.s32.totalorder %s31, 1
      %p427 = scmp.ne.s32.totalorder %s422, %s424
      %p428 = scmp.eq.s32.totalorder %s31, 0
      %p429 = por %p427, %p428
      %p430 = scmp.ne.s32.totalorder %s422, %s424
      %p431 = scmp.eq.s32.totalorder %s36, 1
      %p432 = por %p430, %p431
      %p433 = scmp.ne.s32.totalorder %s424, %s425
      %p434 = scmp.eq.s32.totalorder %s36, 0
      %p435 = por %p433, %p434
      %p436 = scmp.ne.s32.totalorder %s424, %s425
      %p437 = scmp.eq.s32.totalorder %s37, 1
      %p438 = por %p436, %p437
      %p440 = scmp.ne.s32.totalorder %s425, %s439
      %p441 = scmp.eq.s32.totalorder %s37, 0
      %p442 = por %p440, %p441
      %s444 = sadd.s32 %s443, 1
      %p447 = scmp.eq.s32.totalorder %s31, 1
      %p448 = scmp.ne.s32.totalorder %s443, %s445
      %p449 = scmp.eq.s32.totalorder %s31, 0
      %p450 = por %p448, %p449
      %p451 = scmp.ne.s32.totalorder %s443, %s445
      %p452 = scmp.eq.s32.totalorder %s36, 1
      %p453 = por %p451, %p452
      %p454 = scmp.ne.s32.totalorder %s445, %s446
      %p455 = scmp.eq.s32.totalorder %s36, 0
      %p456 = por %p454, %p455
      %p457 = scmp.ne.s32.totalorder %s445, %s446
      %p458 = scmp.eq.s32.totalorder %s37, 1
      %p459 = por %p457, %p458
      %p461 = scmp.ne.s32.totalorder %s446, %s460
      %p462 = scmp.eq.s32.totalorder %s37, 0
      %p463 = por %p461, %p462
      %s465 = sadd.s32 %s464, 1
      %p468 = scmp.eq.s32.totalorder %s31, 1
      %p469 = scmp.ne.s32.totalorder %s464, %s466
      %p470 = scmp.eq.s32.totalorder %s31, 0
      %p471 = por %p469, %p470
      %p472 = scmp.ne.s32.totalorder %s464, %s466
      %p473 = scmp.eq.s32.totalorder %s36, 1
      %p474 = por %p472, %p473
      %p475 = scmp.ne.s32.totalorder %s466, %s467
      %p476 = scmp.eq.s32.totalorder %s36, 0
      %p477 = por %p475, %p476
      %p478 = scmp.ne.s32.totalorder %s466, %s467
      %p479 = scmp.eq.s32.totalorder %s37, 1
      %p480 = por %p478, %p479
      %p482 = scmp.ne.s32.totalorder %s467, %s481
      %p483 = scmp.eq.s32.totalorder %s37, 0
      %p484 = por %p482, %p483
      %s486 = sadd.s32 %s485, 1
      %p489 = scmp.eq.s32.totalorder %s31, 1
      %p490 = scmp.ne.s32.totalorder %s485, %s487
      %p491 = scmp.eq.s32.totalorder %s31, 0
      %p492 = por %p490, %p491
      %p493 = scmp.ne.s32.totalorder %s485, %s487
      %p494 = scmp.eq.s32.totalorder %s36, 1
      %p495 = por %p493, %p494
      %p496 = scmp.ne.s32.totalorder %s487, %s488
      %p497 = scmp.eq.s32.totalorder %s36, 0
      %p498 = por %p496, %p497
      %p499 = scmp.ne.s32.totalorder %s487, %s488
      %p500 = scmp.eq.s32.totalorder %s37, 1
      %p501 = por %p499, %p500
      %p503 = scmp.ne.s32.totalorder %s488, %s502
      %p504 = scmp.eq.s32.totalorder %s37, 0
      %p505 = por %p503, %p504
      %s506 = ssub.s32 %s31, %s38
      %p507 = scmp.eq.s32.totalorder %s506, 0
      %s509 = sadd.s32 %s508, 1
      %s510 = scalar_select %p507, %s508, %s509
      %p513 = pneg %p507
      %p514 = scmp.eq.s32.totalorder %s31, 1
      %p515 = por %p513, %p514
      %p516 = scmp.ne.s32.totalorder %s508, %s511
      %p517 = scmp.eq.s32.totalorder %s31, 0
      %p518 = por %p516, %p517
      %p519 = scmp.ne.s32.totalorder %s508, %s511
      %p520 = scmp.eq.s32.totalorder %s36, 1
      %p521 = por %p519, %p520
      %p522 = scmp.ne.s32.totalorder %s511, %s512
      %p523 = scmp.eq.s32.totalorder %s36, 0
      %p524 = por %p522, %p523
      %p525 = scmp.ne.s32.totalorder %s511, %s512
      %p526 = scmp.eq.s32.totalorder %s37, 1
      %p527 = por %p525, %p526
      %p529 = scmp.ne.s32.totalorder %s512, %s528
      %p530 = scmp.eq.s32.totalorder %s37, 0
      %p531 = por %p529, %p530
      %p532 = scmp.le.s32.totalorder 1, %s31
      %p533 = scmp.lt.s32.totalorder %s31, 3
      %p534 = pnand %p532, %p533
      %p535 = pneg %p534
      // Predicated region
      $region9: #{st_attention_block_forward.1} parent=5 // pred_check
        _
      $region10: #{st_attention_block_forward.1} parent=5 // pred_check_branch
        %537 = sbr.rel (%p534) target = $region12
      $region11: #{st_attention_block_forward.1} parent=5 // pred_region
        %s538 = ssub.s32 %s31, 1
        // Predicated region
        $region13: #{st_attention_block_forward.1} parent=11 // pred_check
          %p539 = pneg %p78
        $region14: #{st_attention_block_forward.1} parent=11 // pred_check_branch
          %541 = sbr.rel (%p539) target = $region16
        $region15: #{st_attention_block_forward.1} parent=11 // pred_region
          _
        $region16: #{st_attention_block_forward.1} parent=11 // pred_fallthru
          _
        // Predicated region
        $region17: #{st_attention_block_forward.1} parent=11 // pred_check
          %p542 = pneg %p99
        $region18: #{st_attention_block_forward.1} parent=11 // pred_check_branch
          %544 = sbr.rel (%p542) target = $region20
        $region19: #{st_attention_block_forward.1} parent=11 // pred_region
          _
        $region20: #{st_attention_block_forward.1} parent=11 // pred_fallthru
          _
        // Predicated region
        $region21: #{st_attention_block_forward.1} parent=11 // pred_check
          %p545 = pneg %p120
        $region22: #{st_attention_block_forward.1} parent=11 // pred_check_branch
          %547 = sbr.rel (%p545) target = $region24
        $region23: #{st_attention_block_forward.1} parent=11 // pred_region
          _
        $region24: #{st_attention_block_forward.1} parent=11 // pred_fallthru
          _
        // Predicated region
        $region25: #{st_attention_block_forward.1} parent=11 // pred_check
          %p548 = pneg %p141
        $region26: #{st_attention_block_forward.1} parent=11 // pred_check_branch
          %550 = sbr.rel (%p548) target = $region28
        $region27: #{st_attention_block_forward.1} parent=11 // pred_region
          _
        $region28: #{st_attention_block_forward.1} parent=11 // pred_fallthru
          _
        // Predicated region
        $region29: #{st_attention_block_forward.1} parent=11 // pred_check
          %p551 = pneg %p162
        $region30: #{st_attention_block_forward.1} parent=11 // pred_check_branch
          %553 = sbr.rel (%p551) target = $region32
        $region31: #{st_attention_block_forward.1} parent=11 // pred_region
          _
        $region32: #{st_attention_block_forward.1} parent=11 // pred_fallthru
          _
        // Predicated region
        $region33: #{st_attention_block_forward.1} parent=11 // pred_check
          %p554 = pneg %p183
        $region34: #{st_attention_block_forward.1} parent=11 // pred_check_branch
          %556 = sbr.rel (%p554) target = $region36
        $region35: #{st_attention_block_forward.1} parent=11 // pred_region
          _
        $region36: #{st_attention_block_forward.1} parent=11 // pred_fallthru
          _
        // Predicated region
        $region37: #{st_attention_block_forward.1} parent=11 // pred_check
          %p557 = pneg %p204
        $region38: #{st_attention_block_forward.1} parent=11 // pred_check_branch
          %559 = sbr.rel (%p557) target = $region40
        $region39: #{st_attention_block_forward.1} parent=11 // pred_region
          _
        $region40: #{st_attention_block_forward.1} parent=11 // pred_fallthru
          _
        // Predicated region
        $region41: #{st_attention_block_forward.1} parent=11 // pred_check
          %p560 = pneg %p225
        $region42: #{st_attention_block_forward.1} parent=11 // pred_check_branch
          %562 = sbr.rel (%p560) target = $region44
        $region43: #{st_attention_block_forward.1} parent=11 // pred_region
          _
        $region44: #{st_attention_block_forward.1} parent=11 // pred_fallthru
          _
        // Predicated region
        $region45: #{st_attention_block_forward.1} parent=11 // pred_check
          %p563 = pneg %p246
        $region46: #{st_attention_block_forward.1} parent=11 // pred_check_branch
          %565 = sbr.rel (%p563) target = $region48
        $region47: #{st_attention_block_forward.1} parent=11 // pred_region
          _
        $region48: #{st_attention_block_forward.1} parent=11 // pred_fallthru
          _
        // Predicated region
        $region49: #{st_attention_block_forward.1} parent=11 // pred_check
          %p566 = pneg %p267
        $region50: #{st_attention_block_forward.1} parent=11 // pred_check_branch
          %568 = sbr.rel (%p566) target = $region52
        $region51: #{st_attention_block_forward.1} parent=11 // pred_region
          _
        $region52: #{st_attention_block_forward.1} parent=11 // pred_fallthru
          _
        // Predicated region
        $region53: #{st_attention_block_forward.1} parent=11 // pred_check
          %p569 = pneg %p288
        $region54: #{st_attention_block_forward.1} parent=11 // pred_check_branch
          %571 = sbr.rel (%p569) target = $region56
        $region55: #{st_attention_block_forward.1} parent=11 // pred_region
          _
        $region56: #{st_attention_block_forward.1} parent=11 // pred_fallthru
          _
        // Predicated region
        $region57: #{st_attention_block_forward.1} parent=11 // pred_check
          %p572 = pneg %p309
        $region58: #{st_attention_block_forward.1} parent=11 // pred_check_branch
          %574 = sbr.rel (%p572) target = $region60
        $region59: #{st_attention_block_forward.1} parent=11 // pred_region
          _
        $region60: #{st_attention_block_forward.1} parent=11 // pred_fallthru
          _
        // Predicated region
        $region61: #{st_attention_block_forward.1} parent=11 // pred_check
          %p575 = pneg %p330
        $region62: #{st_attention_block_forward.1} parent=11 // pred_check_branch
          %577 = sbr.rel (%p575) target = $region64
        $region63: #{st_attention_block_forward.1} parent=11 // pred_region
          _
        $region64: #{st_attention_block_forward.1} parent=11 // pred_fallthru
          _
        // Predicated region
        $region65: #{st_attention_block_forward.1} parent=11 // pred_check
          %p578 = pneg %p351
        $region66: #{st_attention_block_forward.1} parent=11 // pred_check_branch
          %580 = sbr.rel (%p578) target = $region68
        $region67: #{st_attention_block_forward.1} parent=11 // pred_region
          _
        $region68: #{st_attention_block_forward.1} parent=11 // pred_fallthru
          _
        // Predicated region
        $region69: #{st_attention_block_forward.1} parent=11 // pred_check
          %p581 = pneg %p372
        $region70: #{st_attention_block_forward.1} parent=11 // pred_check_branch
          %583 = sbr.rel (%p581) target = $region72
        $region71: #{st_attention_block_forward.1} parent=11 // pred_region
          _
        $region72: #{st_attention_block_forward.1} parent=11 // pred_fallthru
          _
        // Predicated region
        $region73: #{st_attention_block_forward.1} parent=11 // pred_check
          %p584 = pneg %p393
        $region74: #{st_attention_block_forward.1} parent=11 // pred_check_branch
          %586 = sbr.rel (%p584) target = $region76
        $region75: #{st_attention_block_forward.1} parent=11 // pred_region
          _
        $region76: #{st_attention_block_forward.1} parent=11 // pred_fallthru
          _
        // Predicated region
        $region77: #{st_attention_block_forward.1} parent=11 // pred_check
          %p587 = pneg %p414
        $region78: #{st_attention_block_forward.1} parent=11 // pred_check_branch
          %589 = sbr.rel (%p587) target = $region80
        $region79: #{st_attention_block_forward.1} parent=11 // pred_region
          _
        $region80: #{st_attention_block_forward.1} parent=11 // pred_fallthru
          _
        // Predicated region
        $region81: #{st_attention_block_forward.1} parent=11 // pred_check
          %p590 = pneg %p435
        $region82: #{st_attention_block_forward.1} parent=11 // pred_check_branch
          %592 = sbr.rel (%p590) target = $region84
        $region83: #{st_attention_block_forward.1} parent=11 // pred_region
          _
        $region84: #{st_attention_block_forward.1} parent=11 // pred_fallthru
          _
        // Predicated region
        $region85: #{st_attention_block_forward.1} parent=11 // pred_check
          %p593 = pneg %p456
        $region86: #{st_attention_block_forward.1} parent=11 // pred_check_branch
          %595 = sbr.rel (%p593) target = $region88
        $region87: #{st_attention_block_forward.1} parent=11 // pred_region
          _
        $region88: #{st_attention_block_forward.1} parent=11 // pred_fallthru
          _
        // Predicated region
        $region89: #{st_attention_block_forward.1} parent=11 // pred_check
          %p596 = pneg %p477
        $region90: #{st_attention_block_forward.1} parent=11 // pred_check_branch
          %598 = sbr.rel (%p596) target = $region92
        $region91: #{st_attention_block_forward.1} parent=11 // pred_region
          _
        $region92: #{st_attention_block_forward.1} parent=11 // pred_fallthru
          _
        // Predicated region
        $region93: #{st_attention_block_forward.1} parent=11 // pred_check
          %p599 = pneg %p498
        $region94: #{st_attention_block_forward.1} parent=11 // pred_check_branch
          %601 = sbr.rel (%p599) target = $region96
        $region95: #{st_attention_block_forward.1} parent=11 // pred_region
          _
        $region96: #{st_attention_block_forward.1} parent=11 // pred_fallthru
          _
      $region12: #{st_attention_block_forward.1} parent=5 // pred_fallthru
        _
      %p602 = scmp.lt.s32.totalorder %s31, 2
      // Predicated region
      $region97: #{st_attention_block_forward.1} parent=5 // pred_check
        %p603 = pneg %p602
      $region98: #{st_attention_block_forward.1} parent=5 // pred_check_branch
        %605 = sbr.rel (%p603) target = $region100
      $region99: #{st_attention_block_forward.1} parent=5 // pred_region
        // Predicated region
        $region101: #{st_attention_block_forward.1} parent=99 // pred_check
          %p606 = pneg %p51
        $region102: #{st_attention_block_forward.1} parent=99 // pred_check_branch
          %608 = sbr.rel (%p606) target = $region104
        $region103: #{st_attention_block_forward.1} parent=99 // pred_region
          %p609 = scmp.lt.s32.totalorder %s31, 1
          %s610 = scalar_select %p609, %s31, 1
          %s611 = smul.addr %s610, 8
          %s612 = smul.addr %s611, 8
          %s613 = scalar_lea.vmem %s0, %s612
        $region104: #{st_attention_block_forward.1} parent=99 // pred_fallthru
          _
      $region100: #{st_attention_block_forward.1} parent=5 // pred_fallthru
        _
      %p614 = scmp.le.s32.totalorder 1, %s31
      %p615 = scmp.lt.s32.totalorder %s31, 3
      %p616 = pnand %p614, %p615
      %p617 = pneg %p616
      // Predicated region
      $region105: #{st_attention_block_forward.1} parent=5 // pred_check
        _
      $region106: #{st_attention_block_forward.1} parent=5 // pred_check_branch
        %619 = sbr.rel (%p616) target = $region108
      $region107: #{st_attention_block_forward.1} parent=5 // pred_region
        %s620 = ssub.s32 %s31, 1
        %p621 = scmp.lt.s32.totalorder %s36, 1
        %s622 = scalar_select %p621, %s36, 1
        %s623 = smul.addr %s622, 8
        %s624 = smul.addr %s623, 8
        %s625 = scalar_lea.vmem %s0, %s624
        %p626 = pneg %p57
        %p627 = pneg %p54
        %p628 = pneg %p78
        %p629 = pneg %p75
        %p630 = pneg %p99
        %p631 = pneg %p96
        %p632 = pneg %p120
        %p633 = pneg %p117
        %p634 = pneg %p141
        %p635 = pneg %p138
        %p636 = pneg %p162
        %p637 = pneg %p159
        %p638 = pneg %p183
        %p639 = pneg %p180
        %p640 = pneg %p204
        %p641 = pneg %p201
        %p642 = pneg %p225
        %p643 = pneg %p222
        %p644 = pneg %p246
        %p645 = pneg %p243
        %p646 = pneg %p267
        %p647 = pneg %p264
        %p648 = pneg %p288
        %p649 = pneg %p285
        %p650 = pneg %p309
        %p651 = pneg %p306
        %p652 = pneg %p330
        %p653 = pneg %p327
        %p654 = pneg %p351
        %p655 = pneg %p348
        %p656 = pneg %p372
        %p657 = pneg %p369
        %p658 = pneg %p393
        %p659 = pneg %p390
        %p660 = pneg %p414
        %p661 = pneg %p411
        %p662 = pneg %p435
        %p663 = pneg %p432
        %p664 = pneg %p456
        %p665 = pneg %p453
        %p666 = pneg %p477
        %p667 = pneg %p474
        %p668 = pneg %p498
        %p669 = pneg %p495
        %p670 = pneg %p524
        %p671 = pneg %p521
        %s672 = sand.u32 %s511, 1
        %s673 = scalar_lea.sflag [#allocation3], %s672
        %s674 = sand.u32 %s511, 1
        %s675 = smul.addr %s674, 64
        %s676 = scalar_lea.vmem [#allocation2], %s675
        %p677 = scmp.lt.s32.totalorder %s36, 1
        %s678 = scalar_select %p677, %s36, 1
        %s679 = smul.addr %s678, 8
        %s680 = smul.addr %s679, 8
        %s681 = scalar_lea.vmem %s0, %s680
        %v683 = vld [vmem:[%s681] sm:$0xff]
        %v684 = vld [vmem:[%s681 + $0x8] sm:$0xff]
        %v685 = vld [vmem:[%s681 + $0x10] sm:$0xff]
        %v686 = vld [vmem:[%s681 + $0x18] sm:$0xff]
        %v687 = vld [vmem:[%s681 + $0x20] sm:$0xff]
        %v688 = vld [vmem:[%s681 + $0x28] sm:$0xff]
        %v689 = vld [vmem:[%s681 + $0x30] sm:$0xff]
        %v690 = vld [vmem:[%s681 + $0x38] sm:$0xff]
        %v691 = vpack.c.bf16 %v684, %v683
        %v692 = vpack.c.bf16 %v686, %v685
        %v693 = vpack.c.bf16 %v688, %v687
        %v694 = vpack.c.bf16 %v690, %v689
        %v695 = vld [vmem:[%s1] sm:$0xff]
        %v696 = vld [vmem:[%s1 + $0x8] sm:$0xff]
        %v697 = vld [vmem:[%s1 + $0x10] sm:$0xff]
        %v698 = vld [vmem:[%s1 + $0x18] sm:$0xff]
        %v699 = vld [vmem:[%s1 + $0x20] sm:$0xff]
        %v700 = vld [vmem:[%s1 + $0x28] sm:$0xff]
        %v701 = vld [vmem:[%s1 + $0x30] sm:$0xff]
        %v702 = vld [vmem:[%s1 + $0x38] sm:$0xff]
        %v703 = vadd.f32 %v683, %v695
        %v704 = vadd.f32 %v684, %v696
        %v705 = vadd.f32 %v685, %v697
        %v706 = vadd.f32 %v686, %v698
        %v707 = vadd.f32 %v687, %v699
        %v708 = vadd.f32 %v688, %v700
        %v709 = vadd.f32 %v689, %v701
        %v710 = vadd.f32 %v690, %v702
        %v711 = vpack.c.bf16 %v704, %v703
        %v712 = vpack.c.bf16 %v706, %v705
        %v713 = vpack.c.bf16 %v708, %v707
        %v714 = vpack.c.bf16 %v710, %v709
        %v715 = vld [vmem:[%s2] sm:$0xf]
        %v716 = vld [vmem:[%s2 + $0x4] sm:$0xf]
        %v717 = vld [vmem:[%s2 + $0x8] sm:$0xf]
        %v718 = vld [vmem:[%s2 + $0xc] sm:$0xf]
        %v719 = vld [vmem:[%s2 + $0x10] sm:$0xf]
        %v720 = vld [vmem:[%s2 + $0x14] sm:$0xf]
        %v721 = vld [vmem:[%s2 + $0x18] sm:$0xf]
        %v722 = vld [vmem:[%s2 + $0x1c] sm:$0xf]
        %v723 = vld [vmem:[%s2 + $0x20] sm:$0xf]
        %v724 = vld [vmem:[%s2 + $0x24] sm:$0xf]
        %v725 = vld [vmem:[%s2 + $0x28] sm:$0xf]
        %v726 = vld [vmem:[%s2 + $0x2c] sm:$0xf]
        %v727 = vld [vmem:[%s2 + $0x30] sm:$0xf]
        %v728 = vld [vmem:[%s2 + $0x34] sm:$0xf]
        %v729 = vld [vmem:[%s2 + $0x38] sm:$0xf]
        %v730 = vld [vmem:[%s2 + $0x3c] sm:$0xf]
        %v731 = vld [vmem:[%s2 + $0x40] sm:$0xf]
        %v732 = vld [vmem:[%s2 + $0x44] sm:$0xf]
        %v733 = vld [vmem:[%s2 + $0x48] sm:$0xf]
        %v734 = vld [vmem:[%s2 + $0x4c] sm:$0xf]
        %v735 = vld [vmem:[%s2 + $0x50] sm:$0xf]
        %v736 = vld [vmem:[%s2 + $0x54] sm:$0xf]
        %v737 = vld [vmem:[%s2 + $0x58] sm:$0xf]
        %v738 = vld [vmem:[%s2 + $0x5c] sm:$0xf]
        %v739 = vld [vmem:[%s3] sm:$0xff]
        %v740 = vld [vmem:[%s3 + $0x8] sm:$0xff]
        %v741 = vld [vmem:[%s3 + $0x10] sm:$0xff]
        %v742 = vld [vmem:[%s3 + $0x18] sm:$0xff]
        %v743 = vld [vmem:[%s3 + $0x20] sm:$0xff]
        %v744 = vld [vmem:[%s3 + $0x28] sm:$0xff]
        %v745 = vld [vmem:[%s3 + $0x30] sm:$0xff]
        %v746 = vld [vmem:[%s3 + $0x38] sm:$0xff]
        %v747 = vld [vmem:[%s3 + $0x40] sm:$0xff]
        %v748 = vld [vmem:[%s3 + $0x48] sm:$0xff]
        %v749 = vld [vmem:[%s3 + $0x50] sm:$0xff]
        %v750 = vld [vmem:[%s3 + $0x58] sm:$0xff]
        %v751 = vld [vmem:[%s3 + $0x60] sm:$0xff]
        %v752 = vld [vmem:[%s3 + $0x68] sm:$0xff]
        %v753 = vld [vmem:[%s3 + $0x70] sm:$0xff]
        %v754 = vld [vmem:[%s3 + $0x78] sm:$0xff]
        %v755 = vld [vmem:[%s3 + $0x80] sm:$0xff]
        %v756 = vld [vmem:[%s3 + $0x88] sm:$0xff]
        %v757 = vld [vmem:[%s3 + $0x90] sm:$0xff]
        %v758 = vld [vmem:[%s3 + $0x98] sm:$0xff]
        %v759 = vld [vmem:[%s3 + $0xa0] sm:$0xff]
        %v760 = vld [vmem:[%s3 + $0xa8] sm:$0xff]
        %v761 = vld [vmem:[%s3 + $0xb0] sm:$0xff]
        %v762 = vld [vmem:[%s3 + $0xb8] sm:$0xff]
        %764 = vset.pattern.permute.xlu0 0
        %765 = vperm.xlu0 %764, %v739
        %v766 = vpop.permute.xlu0 %765
        %769 = vset.pattern.permute.xlu0 0
        %770 = vperm.xlu0 %769, %v740
        %v771 = vpop.permute.xlu0 %770
        %774 = vset.pattern.permute.xlu0 0
        %775 = vperm.xlu0 %774, %v741
        %v776 = vpop.permute.xlu0 %775
        %779 = vset.pattern.permute.xlu0 0
        %780 = vperm.xlu0 %779, %v742
        %v781 = vpop.permute.xlu0 %780
        %784 = vset.pattern.permute.xlu0 0
        %785 = vperm.xlu0 %784, %v743
        %v786 = vpop.permute.xlu0 %785
        %789 = vset.pattern.permute.xlu0 0
        %790 = vperm.xlu0 %789, %v744
        %v791 = vpop.permute.xlu0 %790
        %794 = vset.pattern.permute.xlu0 0
        %795 = vperm.xlu0 %794, %v745
        %v796 = vpop.permute.xlu0 %795
        %799 = vset.pattern.permute.xlu0 0
        %800 = vperm.xlu0 %799, %v746
        %v801 = vpop.permute.xlu0 %800
        %804 = vset.pattern.permute.xlu0 0
        %805 = vperm.xlu0 %804, %v747
        %v806 = vpop.permute.xlu0 %805
        %809 = vset.pattern.permute.xlu0 0
        %810 = vperm.xlu0 %809, %v748
        %v811 = vpop.permute.xlu0 %810
        %814 = vset.pattern.permute.xlu0 0
        %815 = vperm.xlu0 %814, %v749
        %v816 = vpop.permute.xlu0 %815
        %819 = vset.pattern.permute.xlu0 0
        %820 = vperm.xlu0 %819, %v750
        %v821 = vpop.permute.xlu0 %820
        %824 = vset.pattern.permute.xlu0 0
        %825 = vperm.xlu0 %824, %v751
        %v826 = vpop.permute.xlu0 %825
        %829 = vset.pattern.permute.xlu0 0
        %830 = vperm.xlu0 %829, %v752
        %v831 = vpop.permute.xlu0 %830
        %834 = vset.pattern.permute.xlu0 0
        %835 = vperm.xlu0 %834, %v753
        %v836 = vpop.permute.xlu0 %835
        %839 = vset.pattern.permute.xlu0 0
        %840 = vperm.xlu0 %839, %v754
        %v841 = vpop.permute.xlu0 %840
        %844 = vset.pattern.permute.xlu0 0
        %845 = vperm.xlu0 %844, %v755
        %v846 = vpop.permute.xlu0 %845
        %849 = vset.pattern.permute.xlu0 0
        %850 = vperm.xlu0 %849, %v756
        %v851 = vpop.permute.xlu0 %850
        %854 = vset.pattern.permute.xlu0 0
        %855 = vperm.xlu0 %854, %v757
        %v856 = vpop.permute.xlu0 %855
        %859 = vset.pattern.permute.xlu0 0
        %860 = vperm.xlu0 %859, %v758
        %v861 = vpop.permute.xlu0 %860
        %864 = vset.pattern.permute.xlu0 0
        %865 = vperm.xlu0 %864, %v759
        %v866 = vpop.permute.xlu0 %865
        %869 = vset.pattern.permute.xlu0 0
        %870 = vperm.xlu0 %869, %v760
        %v871 = vpop.permute.xlu0 %870
        %874 = vset.pattern.permute.xlu0 0
        %875 = vperm.xlu0 %874, %v761
        %v876 = vpop.permute.xlu0 %875
        %879 = vset.pattern.permute.xlu0 0
        %880 = vperm.xlu0 %879, %v762
        %v881 = vpop.permute.xlu0 %880
        %v907 = vunpack.c.l.b16 %v715
        %v908 = vunpack.c.l.b16 %v716
        %v909 = vunpack.c.l.b16 %v717
        %v910 = vunpack.c.l.b16 %v718
        %v911 = vunpack.c.l.b16 %v719
        %v912 = vunpack.c.l.b16 %v720
        %v913 = vunpack.c.l.b16 %v721
        %v914 = vunpack.c.l.b16 %v722
        %v915 = vunpack.c.l.b16 %v723
        %v916 = vunpack.c.l.b16 %v724
        %v917 = vunpack.c.l.b16 %v725
        %v918 = vunpack.c.l.b16 %v726
        %v919 = vunpack.c.l.b16 %v727
        %v920 = vunpack.c.l.b16 %v728
        %v921 = vunpack.c.l.b16 %v729
        %v922 = vunpack.c.l.b16 %v730
        %v923 = vunpack.c.l.b16 %v731
        %v924 = vunpack.c.l.b16 %v732
        %v925 = vunpack.c.l.b16 %v733
        %v926 = vunpack.c.l.b16 %v734
        %v927 = vunpack.c.l.b16 %v735
        %v928 = vunpack.c.l.b16 %v736
        %v929 = vunpack.c.l.b16 %v737
        %v930 = vunpack.c.l.b16 %v738
        %v931 = vpack.c.b16 %v908, %v907
        %v932 = vpack.c.b16 %v910, %v909
        %v933 = vpack.c.b16 %v912, %v911
        %v934 = vpack.c.b16 %v914, %v913
        %v935 = vpack.c.b16 %v916, %v915
        %v936 = vpack.c.b16 %v918, %v917
        %v937 = vpack.c.b16 %v920, %v919
        %v938 = vpack.c.b16 %v922, %v921
        %v939 = vpack.c.b16 %v924, %v923
        %v940 = vpack.c.b16 %v926, %v925
        %v941 = vpack.c.b16 %v928, %v927
        %v942 = vpack.c.b16 %v930, %v929
        %vm943 = vcmask 523264
        %v945 = vsel %vm943, %v931, 0
        %v948 = vsel %vm943, %v932, 0
        %v951 = vsel %vm943, %v933, 0
        %v954 = vsel %vm943, %v934, 0
        %v957 = vsel %vm943, %v935, 0
        %v960 = vsel %vm943, %v936, 0
        %v963 = vsel %vm943, %v937, 0
        %v966 = vsel %vm943, %v938, 0
        %v969 = vsel %vm943, %v939, 0
        %v972 = vsel %vm943, %v940, 0
        %v975 = vsel %vm943, %v941, 0
        %v978 = vsel %vm943, %v942, 0
        %980 = vmatprep.subr.bf16.mxu0 0
        %981 = vmatpush1.bf16.msra.mxu0 %v711
        %982 = vmatprep.subr.bf16.mxu0 0
        %983 = vmatpush1.bf16.msra.mxu0 %v712
        %984 = vmatprep.subr.bf16.mxu0 0
        %985 = vmatpush1.bf16.msra.mxu0 %v713
        %986 = vmatprep.subr.bf16.mxu0 0
        %987 = vmatpush1.bf16.msra.mxu0 %v714
        %988 = vmatprep.subr.bf16.mxu0 0
        %989 = vmatpush1.bf16.msra.mxu0 0
        %990 = vmatprep.subr.bf16.mxu0 0
        %991 = vmatpush1.bf16.msra.mxu0 0
        %992 = vmatprep.subr.bf16.mxu0 0
        %993 = vmatpush1.bf16.msra.mxu0 0
        %994 = vmatprep.subr.bf16.mxu0 0
        %995 = vmatpush1.bf16.msra.mxu0 0
        %996 = vmatprep.subr.bf16.mxu0 0
        %997 = vmatpush1.bf16.msra.mxu0 0
        %998 = vmatprep.subr.bf16.mxu0 0
        %999 = vmatpush1.bf16.msra.mxu0 0
        %1000 = vmatprep.subr.bf16.mxu0 0
        %1001 = vmatpush1.bf16.msra.mxu0 0
        %1002 = vmatprep.subr.bf16.mxu0 0
        %1003 = vmatpush1.bf16.msra.mxu0 0
        %1004 = vmatprep.subr.bf16.mxu0 0
        %1005 = vmatpush1.bf16.msra.mxu0 0
        %1006 = vmatprep.subr.bf16.mxu0 0
        %1007 = vmatpush1.bf16.msra.mxu0 0
        %1008 = vmatprep.subr.bf16.mxu0 0
        %1009 = vmatpush1.bf16.msra.mxu0 0
        %1010 = vmatprep.subr.bf16.mxu0 0
        %1011 = vmatpush1.bf16.msra.mxu0 0
        %1012 = vmatprep.mubr.bf16.mxu0 0
        %1013 = vmatmul.mubr.bf16.gmra.mrb[0].mxu0 %v945
        %v1014 = vpop.f32.mrb[0].mxu0
        %v1015 = vadd.f32 %v766, %v1014
        %v1016 = vpop.f32.mrb[0].mxu0
        %v1017 = vpop.f32.mrb[0].mxu0
        %v1018 = vadd.f32 %v771, %v1017
        %v1019 = vpop.f32.mrb[0].mxu0
        %1020 = vmatprep.mubr.bf16.mxu0 0
        %1021 = vmatmul.mubr.bf16.gmra.mrb[0].mxu0 %v948
        %v1022 = vpop.f32.mrb[0].mxu0
        %v1023 = vadd.f32 %v776, %v1022
        %v1024 = vpop.f32.mrb[0].mxu0
        %v1025 = vpop.f32.mrb[0].mxu0
        %v1026 = vadd.f32 %v781, %v1025
        %v1027 = vpop.f32.mrb[0].mxu0
        %1028 = vmatprep.mubr.bf16.mxu0 0
        %1029 = vmatmul.mubr.bf16.gmra.mrb[0].mxu0 %v951
        %v1030 = vpop.f32.mrb[0].mxu0
        %v1031 = vadd.f32 %v786, %v1030
        %v1032 = vpop.f32.mrb[0].mxu0
        %v1033 = vpop.f32.mrb[0].mxu0
        %v1034 = vadd.f32 %v791, %v1033
        %v1035 = vpop.f32.mrb[0].mxu0
        %1036 = vmatprep.mubr.bf16.mxu0 0
        %1037 = vmatmul.mubr.bf16.gmra.mrb[0].mxu0 %v954
        %v1038 = vpop.f32.mrb[0].mxu0
        %v1039 = vadd.f32 %v796, %v1038
        %v1040 = vpop.f32.mrb[0].mxu0
        %v1041 = vpop.f32.mrb[0].mxu0
        %v1042 = vadd.f32 %v801, %v1041
        %v1043 = vpop.f32.mrb[0].mxu0
        %1044 = vmatprep.mubr.bf16.mxu0 0
        %1045 = vmatmul.mubr.bf16.gmra.mrb[0].mxu0 %v957
        %v1046 = vpop.f32.mrb[0].mxu0
        %v1047 = vadd.f32 %v806, %v1046
        %v1048 = vpop.f32.mrb[0].mxu0
        %v1049 = vpop.f32.mrb[0].mxu0
        %v1050 = vadd.f32 %v811, %v1049
        %v1051 = vpop.f32.mrb[0].mxu0
        %1052 = vmatprep.mubr.bf16.mxu0 0
        %1053 = vmatmul.mubr.bf16.gmra.mrb[0].mxu0 %v960
        %v1054 = vpop.f32.mrb[0].mxu0
        %v1055 = vadd.f32 %v816, %v1054
        %v1056 = vpop.f32.mrb[0].mxu0
        %v1057 = vpop.f32.mrb[0].mxu0
        %v1058 = vadd.f32 %v821, %v1057
        %v1059 = vpop.f32.mrb[0].mxu0
        %1060 = vmatprep.mubr.bf16.mxu0 0
        %1061 = vmatmul.mubr.bf16.gmra.mrb[0].mxu0 %v963
        %v1062 = vpop.f32.mrb[0].mxu0
        %v1063 = vadd.f32 %v826, %v1062
        %v1064 = vpop.f32.mrb[0].mxu0
        %v1065 = vpop.f32.mrb[0].mxu0
        %v1066 = vadd.f32 %v831, %v1065
        %v1067 = vpop.f32.mrb[0].mxu0
        %1068 = vmatprep.mubr.bf16.mxu0 0
        %1069 = vmatmul.mubr.bf16.gmra.mrb[0].mxu0 %v966
        %v1070 = vpop.f32.mrb[0].mxu0
        %v1071 = vadd.f32 %v836, %v1070
        %v1072 = vpop.f32.mrb[0].mxu0
        %v1073 = vpop.f32.mrb[0].mxu0
        %v1074 = vadd.f32 %v841, %v1073
        %v1075 = vpop.f32.mrb[0].mxu0
        %1076 = vmatprep.mubr.bf16.mxu0 0
        %1077 = vmatmul.mubr.bf16.gmra.mrb[0].mxu0 %v969
        %v1078 = vpop.f32.mrb[0].mxu0
        %v1079 = vadd.f32 %v846, %v1078
        %v1080 = vpop.f32.mrb[0].mxu0
        %v1081 = vpop.f32.mrb[0].mxu0
        %v1082 = vadd.f32 %v851, %v1081
        %v1083 = vpop.f32.mrb[0].mxu0
        %1084 = vmatprep.mubr.bf16.mxu0 0
        %1085 = vmatmul.mubr.bf16.gmra.mrb[0].mxu0 %v972
        %v1086 = vpop.f32.mrb[0].mxu0
        %v1087 = vadd.f32 %v856, %v1086
        %v1088 = vpop.f32.mrb[0].mxu0
        %v1089 = vpop.f32.mrb[0].mxu0
        %v1090 = vadd.f32 %v861, %v1089
        %v1091 = vpop.f32.mrb[0].mxu0
        %1092 = vmatprep.mubr.bf16.mxu0 0
        %1093 = vmatmul.mubr.bf16.gmra.mrb[0].mxu0 %v975
        %v1094 = vpop.f32.mrb[0].mxu0
        %v1095 = vadd.f32 %v866, %v1094
        %v1096 = vpop.f32.mrb[0].mxu0
        %v1097 = vpop.f32.mrb[0].mxu0
        %v1098 = vadd.f32 %v871, %v1097
        %v1099 = vpop.f32.mrb[0].mxu0
        %1100 = vmatprep.mubr.bf16.mxu0 0
        %1101 = vmatmul.mubr.bf16.gmra.mrb[0].mxu0 %v978
        %v1102 = vpop.f32.mrb[0].mxu0
        %v1103 = vadd.f32 %v876, %v1102
        %v1104 = vpop.f32.mrb[0].mxu0
        %v1105 = vpop.f32.mrb[0].mxu0
        %v1106 = vadd.f32 %v881, %v1105
        %v1107 = vpop.f32.mrb[0].mxu0
        %1108 = vdwg.mxu0
        %v1109 = vpack.c.bf16 %v1018, %v1015
        %v1110 = vpack.c.bf16 %v1026, %v1023
        %v1111 = vpack.c.bf16 %v1066, %v1063
        %v1112 = vpack.c.bf16 %v1074, %v1071
        %1113 = vxpose.xlu0.c.b16.start [1/8] %v1109, 128
        %1114 = vxpose.xlu0.c.b16.cont [2/8] %v1110, 128
        %1115 = vxpose.xlu0.c.b16.cont [3/8] 0, 128
        %1116 = vxpose.xlu0.c.b16.cont [4/8] 0, 128
        %1117 = vxpose.xlu0.c.b16.cont [5/8] 0, 128
        %1118 = vxpose.xlu0.c.b16.cont [6/8] 0, 128
        %1119 = vxpose.xlu0.c.b16.cont [7/8] 0, 128
        %1120 = vxpose.xlu0.c.b16.end [8/8] 0, 128
        %v1121 = vpop.trf.xlu0
        %v1122 = vpop.trf.xlu0
        %v1123 = vpop.trf.xlu0
        %v1124 = vpop.trf.xlu0
        %v1125 = vpop.trf.xlu0
        %v1126 = vpop.trf.xlu0
        %v1127 = vpop.trf.xlu0
        %v1128 = vpop.trf.xlu0
        %vm1129 = vcmask 261120
        %v1131 = vsel %vm1129, %v1121, 0
        %1133 = vmatprep.subr.bf16.mxu0 0
        %1134 = vmatpush1.bf16.msra.mxu0 %v1111
        %1135 = vmatprep.subr.bf16.mxu0 0
        %1136 = vmatpush1.bf16.msra.mxu0 %v1112
        %1137 = vmatprep.subr.bf16.mxu0 0
        %1138 = vmatpush1.bf16.msra.mxu0 0
        %1139 = vmatprep.subr.bf16.mxu0 0
        %1140 = vmatpush1.bf16.msra.mxu0 0
        %1141 = vmatprep.subr.bf16.mxu0 0
        %1142 = vmatpush1.bf16.msra.mxu0 0
        %1143 = vmatprep.subr.bf16.mxu0 0
        %1144 = vmatpush1.bf16.msra.mxu0 0
        %1145 = vmatprep.subr.bf16.mxu0 0
        %1146 = vmatpush1.bf16.msra.mxu0 0
        %1147 = vmatprep.subr.bf16.mxu0 0
        %1148 = vmatpush1.bf16.msra.mxu0 0
        %1149 = vmatprep.subr.bf16.mxu0 0
        %1150 = vmatpush1.bf16.msra.mxu0 0
        %1151 = vmatprep.subr.bf16.mxu0 0
        %1152 = vmatpush1.bf16.msra.mxu0 0
        %1153 = vmatprep.subr.bf16.mxu0 0
        %1154 = vmatpush1.bf16.msra.mxu0 0
        %1155 = vmatprep.subr.bf16.mxu0 0
        %1156 = vmatpush1.bf16.msra.mxu0 0
        %1157 = vmatprep.subr.bf16.mxu0 0
        %1158 = vmatpush1.bf16.msra.mxu0 0
        %1159 = vmatprep.subr.bf16.mxu0 0
        %1160 = vmatpush1.bf16.msra.mxu0 0
        %1161 = vmatprep.subr.bf16.mxu0 0
        %1162 = vmatpush1.bf16.msra.mxu0 0
        %1163 = vmatprep.subr.bf16.mxu0 0
        %1164 = vmatpush1.bf16.msra.mxu0 0
        %1165 = vmatprep.mubr.bf16.mxu0 0
        %1166 = vmatmul.mubr.bf16.gmra.mrb[0].mxu0 %v1131
        %v1167 = vpop.f32.mrb[0].mxu0
        %v1168 = vadd.f32 0.0, %v1167
        %v1169 = vpop.f32.mrb[0].mxu0
        %v1170 = vpop.f32.mrb[0].mxu0
        %v1171 = vadd.f32 0.0, %v1170
        %v1172 = vpop.f32.mrb[0].mxu0
        %1173 = vdwg.mxu0
        %v1174 = vmul.f32 %v1168, 0.03125
        %v1175 = vmul.f32 %v1171, 0.03125
        %v1176 = vtanh.pop %v1174
        %v1177 = vtanh.pop %v1175
        %v1178 = vld [vmem:[%s4] sm:$0xff]
        %v1179 = vld [vmem:[%s4 + $0x8] sm:$0xff]
        %v1180 = vmul.f32 %v1176, %v1178
        %v1181 = vmul.f32 %v1177, %v1179
        %v1182 = vld [vmem:[%s5] sm:$0xff]
        %v1183 = vld [vmem:[%s5 + $0x8] sm:$0xff]
        %v1184 = vadd.f32 %v1180, %v1182
        %v1185 = vadd.f32 %v1181, %v1183
        %v1186 = vld [vmem:[%s6] sm:$0xf]
        %v1187 = vld [vmem:[%s6 + $0x4] sm:$0xf]
        %v1188 = vld [vmem:[%s6 + $0x8] sm:$0xf]
        %v1189 = vld [vmem:[%s6 + $0xc] sm:$0xf]
        %v1190 = vld [vmem:[%s6 + $0x10] sm:$0xf]
        %v1191 = vld [vmem:[%s6 + $0x14] sm:$0xf]
        %v1192 = vld [vmem:[%s6 + $0x18] sm:$0xf]
        %v1193 = vld [vmem:[%s6 + $0x1c] sm:$0xf]
        %v1202 = vunpack.c.l.b16 %v1186
        %v1203 = vunpack.c.l.b16 %v1187
        %v1204 = vunpack.c.l.b16 %v1188
        %v1205 = vunpack.c.l.b16 %v1189
        %v1206 = vunpack.c.l.b16 %v1190
        %v1207 = vunpack.c.l.b16 %v1191
        %v1208 = vunpack.c.l.b16 %v1192
        %v1209 = vunpack.c.l.b16 %v1193
        %v1210 = vpack.c.b16 %v1203, %v1202
        %v1211 = vpack.c.b16 %v1205, %v1204
        %v1212 = vpack.c.b16 %v1207, %v1206
        %v1213 = vpack.c.b16 %v1209, %v1208
        %v1215 = vsel %vm943, %v1210, 0
        %v1218 = vsel %vm943, %v1211, 0
        %v1221 = vsel %vm943, %v1212, 0
        %v1224 = vsel %vm943, %v1213, 0
        %1226 = vmatprep.subr.bf16.mxu0 0
        %1227 = vmatpush1.bf16.msra.mxu0 %v691
        %1228 = vmatprep.subr.bf16.mxu0 0
        %1229 = vmatpush1.bf16.msra.mxu0 %v692
        %1230 = vmatprep.subr.bf16.mxu0 0
        %1231 = vmatpush1.bf16.msra.mxu0 %v693
        %1232 = vmatprep.subr.bf16.mxu0 0
        %1233 = vmatpush1.bf16.msra.mxu0 %v694
        %1234 = vmatprep.subr.bf16.mxu0 0
        %1235 = vmatpush1.bf16.msra.mxu0 0
        %1236 = vmatprep.subr.bf16.mxu0 0
        %1237 = vmatpush1.bf16.msra.mxu0 0
        %1238 = vmatprep.subr.bf16.mxu0 0
        %1239 = vmatpush1.bf16.msra.mxu0 0
        %1240 = vmatprep.subr.bf16.mxu0 0
        %1241 = vmatpush1.bf16.msra.mxu0 0
        %1242 = vmatprep.subr.bf16.mxu0 0
        %1243 = vmatpush1.bf16.msra.mxu0 0
        %1244 = vmatprep.subr.bf16.mxu0 0
        %1245 = vmatpush1.bf16.msra.mxu0 0
        %1246 = vmatprep.subr.bf16.mxu0 0
        %1247 = vmatpush1.bf16.msra.mxu0 0
        %1248 = vmatprep.subr.bf16.mxu0 0
        %1249 = vmatpush1.bf16.msra.mxu0 0
        %1250 = vmatprep.subr.bf16.mxu0 0
        %1251 = vmatpush1.bf16.msra.mxu0 0
        %1252 = vmatprep.subr.bf16.mxu0 0
        %1253 = vmatpush1.bf16.msra.mxu0 0
        %1254 = vmatprep.subr.bf16.mxu0 0
        %1255 = vmatpush1.bf16.msra.mxu0 0
        %1256 = vmatprep.subr.bf16.mxu0 0
        %1257 = vmatpush1.bf16.msra.mxu0 0
        %1258 = vmatprep.mubr.bf16.mxu0 0
        %1259 = vmatmul.mubr.bf16.gmra.mrb[0].mxu0 %v1215
        %v1260 = vpop.f32.mrb[0].mxu0
        %v1261 = vadd.f32 0.0, %v1260
        %v1262 = vpop.f32.mrb[0].mxu0
        %v1263 = vpop.f32.mrb[0].mxu0
        %v1264 = vadd.f32 0.0, %v1263
        %v1265 = vpop.f32.mrb[0].mxu0
        %1266 = vmatprep.mubr.bf16.mxu0 0
        %1267 = vmatmul.mubr.bf16.gmra.mrb[0].mxu0 %v1218
        %v1268 = vpop.f32.mrb[0].mxu0
        %v1269 = vadd.f32 0.0, %v1268
        %v1270 = vpop.f32.mrb[0].mxu0
        %v1271 = vpop.f32.mrb[0].mxu0
        %v1272 = vadd.f32 0.0, %v1271
        %v1273 = vpop.f32.mrb[0].mxu0
        %1274 = vmatprep.mubr.bf16.mxu0 0
        %1275 = vmatmul.mubr.bf16.gmra.mrb[0].mxu0 %v1221
        %v1276 = vpop.f32.mrb[0].mxu0
        %v1277 = vadd.f32 0.0, %v1276
        %v1278 = vpop.f32.mrb[0].mxu0
        %v1279 = vpop.f32.mrb[0].mxu0
        %v1280 = vadd.f32 0.0, %v1279
        %v1281 = vpop.f32.mrb[0].mxu0
        %1282 = vmatprep.mubr.bf16.mxu0 0
        %1283 = vmatmul.mubr.bf16.gmra.mrb[0].mxu0 %v1224
        %v1284 = vpop.f32.mrb[0].mxu0
        %v1285 = vadd.f32 0.0, %v1284
        %v1286 = vpop.f32.mrb[0].mxu0
        %v1287 = vpop.f32.mrb[0].mxu0
        %v1288 = vadd.f32 0.0, %v1287
        %v1289 = vpop.f32.mrb[0].mxu0
        %1290 = vdwg.mxu0
        %v1291 = vpack.c.bf16 %v1264, %v1261
        %v1292 = vpack.c.bf16 %v1272, %v1269
        %v1293 = vpack.c.bf16 %v1280, %v1277
        %v1294 = vpack.c.bf16 %v1288, %v1285
        %v1295 = vpack.c.bf16 %v1185, %v1184
        %v1296 = vpack.c.bf16 %v1034, %v1031
        %v1297 = vpack.c.bf16 %v1042, %v1039
        %v1298 = vpack.c.bf16 %v1082, %v1079
        %v1299 = vpack.c.bf16 %v1090, %v1087
        %1300 = vxpose.xlu0.c.b16.start [1/8] %v1296, 128
        %1301 = vxpose.xlu0.c.b16.cont [2/8] %v1297, 128
        %1302 = vxpose.xlu0.c.b16.cont [3/8] 0, 128
        %1303 = vxpose.xlu0.c.b16.cont [4/8] 0, 128
        %1304 = vxpose.xlu0.c.b16.cont [5/8] 0, 128
        %1305 = vxpose.xlu0.c.b16.cont [6/8] 0, 128
        %1306 = vxpose.xlu0.c.b16.cont [7/8] 0, 128
        %1307 = vxpose.xlu0.c.b16.end [8/8] 0, 128
        %v1308 = vpop.trf.xlu0
        %v1309 = vpop.trf.xlu0
        %v1310 = vpop.trf.xlu0
        %v1311 = vpop.trf.xlu0
        %v1312 = vpop.trf.xlu0
        %v1313 = vpop.trf.xlu0
        %v1314 = vpop.trf.xlu0
        %v1315 = vpop.trf.xlu0
        %v1317 = vsel %vm1129, %v1308, 0
        %1319 = vmatprep.subr.bf16.mxu0 0
        %1320 = vmatpush1.bf16.msra.mxu0 %v1298
        %1321 = vmatprep.subr.bf16.mxu0 0
        %1322 = vmatpush1.bf16.msra.mxu0 %v1299
        %1323 = vmatprep.subr.bf16.mxu0 0
        %1324 = vmatpush1.bf16.msra.mxu0 0
        %1325 = vmatprep.subr.bf16.mxu0 0
        %1326 = vmatpush1.bf16.msra.mxu0 0
        %1327 = vmatprep.subr.bf16.mxu0 0
        %1328 = vmatpush1.bf16.msra.mxu0 0
        %1329 = vmatprep.subr.bf16.mxu0 0
        %1330 = vmatpush1.bf16.msra.mxu0 0
        %1331 = vmatprep.subr.bf16.mxu0 0
        %1332 = vmatpush1.bf16.msra.mxu0 0
        %1333 = vmatprep.subr.bf16.mxu0 0
        %1334 = vmatpush1.bf16.msra.mxu0 0
        %1335 = vmatprep.subr.bf16.mxu0 0
        %1336 = vmatpush1.bf16.msra.mxu0 0
        %1337 = vmatprep.subr.bf16.mxu0 0
        %1338 = vmatpush1.bf16.msra.mxu0 0
        %1339 = vmatprep.subr.bf16.mxu0 0
        %1340 = vmatpush1.bf16.msra.mxu0 0
        %1341 = vmatprep.subr.bf16.mxu0 0
        %1342 = vmatpush1.bf16.msra.mxu0 0
        %1343 = vmatprep.subr.bf16.mxu0 0
        %1344 = vmatpush1.bf16.msra.mxu0 0
        %1345 = vmatprep.subr.bf16.mxu0 0
        %1346 = vmatpush1.bf16.msra.mxu0 0
        %1347 = vmatprep.subr.bf16.mxu0 0
        %1348 = vmatpush1.bf16.msra.mxu0 0
        %1349 = vmatprep.subr.bf16.mxu0 0
        %1350 = vmatpush1.bf16.msra.mxu0 0
        %1351 = vmatprep.mubr.bf16.mxu0 0
        %1352 = vmatmul.mubr.bf16.gmra.mrb[0].mxu0 %v1317
        %v1353 = vpop.f32.mrb[0].mxu0
        %v1354 = vadd.f32 0.0, %v1353
        %v1355 = vpop.f32.mrb[0].mxu0
        %v1356 = vpop.f32.mrb[0].mxu0
        %v1357 = vadd.f32 0.0, %v1356
        %v1358 = vpop.f32.mrb[0].mxu0
        %1359 = vdwg.mxu0
        %v1360 = vmul.f32 %v1354, 0.03125
        %v1361 = vmul.f32 %v1357, 0.03125
        %v1362 = vtanh.pop %v1360
        %v1363 = vtanh.pop %v1361
        %s1364 = scalar_lea.vmem %s4, 16
        %v1365 = vld [vmem:[%s1364] sm:$0xff]
        %v1366 = vld [vmem:[%s1364 + $0x8] sm:$0xff]
        %v1367 = vmul.f32 %v1362, %v1365
        %v1368 = vmul.f32 %v1363, %v1366
        %s1369 = scalar_lea.vmem %s5, 16
        %v1370 = vld [vmem:[%s1369] sm:$0xff]
        %v1371 = vld [vmem:[%s1369 + $0x8] sm:$0xff]
        %v1372 = vadd.f32 %v1367, %v1370
        %v1373 = vadd.f32 %v1368, %v1371
        %s1374 = scalar_lea.vmem %s6, 32
        %v1375 = vld [vmem:[%s1374] sm:$0xf]
        %v1376 = vld [vmem:[%s1374 + $0x4] sm:$0xf]
        %v1377 = vld [vmem:[%s1374 + $0x8] sm:$0xf]
        %v1378 = vld [vmem:[%s1374 + $0xc] sm:$0xf]
        %v1379 = vld [vmem:[%s1374 + $0x10] sm:$0xf]
        %v1380 = vld [vmem:[%s1374 + $0x14] sm:$0xf]
        %v1381 = vld [vmem:[%s1374 + $0x18] sm:$0xf]
        %v1382 = vld [vmem:[%s1374 + $0x1c] sm:$0xf]
        %v1391 = vunpack.c.l.b16 %v1375
        %v1392 = vunpack.c.l.b16 %v1376
        %v1393 = vunpack.c.l.b16 %v1377
        %v1394 = vunpack.c.l.b16 %v1378
        %v1395 = vunpack.c.l.b16 %v1379
        %v1396 = vunpack.c.l.b16 %v1380
        %v1397 = vunpack.c.l.b16 %v1381
        %v1398 = vunpack.c.l.b16 %v1382
        %v1399 = vpack.c.b16 %v1392, %v1391
        %v1400 = vpack.c.b16 %v1394, %v1393
        %v1401 = vpack.c.b16 %v1396, %v1395
        %v1402 = vpack.c.b16 %v1398, %v1397
        %v1404 = vsel %vm943, %v1399, 0
        %v1407 = vsel %vm943, %v1400, 0
        %v1410 = vsel %vm943, %v1401, 0
        %v1413 = vsel %vm943, %v1402, 0
        %1415 = vmatprep.subr.bf16.mxu0 0
        %1416 = vmatpush1.bf16.msra.mxu0 %v691
        %1417 = vmatprep.subr.bf16.mxu0 0
        %1418 = vmatpush1.bf16.msra.mxu0 %v692
        %1419 = vmatprep.subr.bf16.mxu0 0
        %1420 = vmatpush1.bf16.msra.mxu0 %v693
        %1421 = vmatprep.subr.bf16.mxu0 0
        %1422 = vmatpush1.bf16.msra.mxu0 %v694
        %1423 = vmatprep.subr.bf16.mxu0 0
        %1424 = vmatpush1.bf16.msra.mxu0 0
        %1425 = vmatprep.subr.bf16.mxu0 0
        %1426 = vmatpush1.bf16.msra.mxu0 0
        %1427 = vmatprep.subr.bf16.mxu0 0
        %1428 = vmatpush1.bf16.msra.mxu0 0
        %1429 = vmatprep.subr.bf16.mxu0 0
        %1430 = vmatpush1.bf16.msra.mxu0 0
        %1431 = vmatprep.subr.bf16.mxu0 0
        %1432 = vmatpush1.bf16.msra.mxu0 0
        %1433 = vmatprep.subr.bf16.mxu0 0
        %1434 = vmatpush1.bf16.msra.mxu0 0
        %1435 = vmatprep.subr.bf16.mxu0 0
        %1436 = vmatpush1.bf16.msra.mxu0 0
        %1437 = vmatprep.subr.bf16.mxu0 0
        %1438 = vmatpush1.bf16.msra.mxu0 0
        %1439 = vmatprep.subr.bf16.mxu0 0
        %1440 = vmatpush1.bf16.msra.mxu0 0
        %1441 = vmatprep.subr.bf16.mxu0 0
        %1442 = vmatpush1.bf16.msra.mxu0 0
        %1443 = vmatprep.subr.bf16.mxu0 0
        %1444 = vmatpush1.bf16.msra.mxu0 0
        %1445 = vmatprep.subr.bf16.mxu0 0
        %1446 = vmatpush1.bf16.msra.mxu0 0
        %1447 = vmatprep.mubr.bf16.mxu0 0
        %1448 = vmatmul.mubr.bf16.gmra.mrb[0].mxu0 %v1404
        %v1449 = vpop.f32.mrb[0].mxu0
        %v1450 = vadd.f32 0.0, %v1449
        %v1451 = vpop.f32.mrb[0].mxu0
        %v1452 = vpop.f32.mrb[0].mxu0
        %v1453 = vadd.f32 0.0, %v1452
        %v1454 = vpop.f32.mrb[0].mxu0
        %1455 = vmatprep.mubr.bf16.mxu0 0
        %1456 = vmatmul.mubr.bf16.gmra.mrb[0].mxu0 %v1407
        %v1457 = vpop.f32.mrb[0].mxu0
        %v1458 = vadd.f32 0.0, %v1457
        %v1459 = vpop.f32.mrb[0].mxu0
        %v1460 = vpop.f32.mrb[0].mxu0
        %v1461 = vadd.f32 0.0, %v1460
        %v1462 = vpop.f32.mrb[0].mxu0
        %1463 = vmatprep.mubr.bf16.mxu0 0
        %1464 = vmatmul.mubr.bf16.gmra.mrb[0].mxu0 %v1410
        %v1465 = vpop.f32.mrb[0].mxu0
        %v1466 = vadd.f32 0.0, %v1465
        %v1467 = vpop.f32.mrb[0].mxu0
        %v1468 = vpop.f32.mrb[0].mxu0
        %v1469 = vadd.f32 0.0, %v1468
        %v1470 = vpop.f32.mrb[0].mxu0
        %1471 = vmatprep.mubr.bf16.mxu0 0
        %1472 = vmatmul.mubr.bf16.gmra.mrb[0].mxu0 %v1413
        %v1473 = vpop.f32.mrb[0].mxu0
        %v1474 = vadd.f32 0.0, %v1473
        %v1475 = vpop.f32.mrb[0].mxu0
        %v1476 = vpop.f32.mrb[0].mxu0
        %v1477 = vadd.f32 0.0, %v1476
        %v1478 = vpop.f32.mrb[0].mxu0
        %1479 = vdwg.mxu0
        %v1480 = vpack.c.bf16 %v1453, %v1450
        %v1481 = vpack.c.bf16 %v1461, %v1458
        %v1482 = vpack.c.bf16 %v1469, %v1466
        %v1483 = vpack.c.bf16 %v1477, %v1474
        %v1484 = vpack.c.bf16 %v1373, %v1372
        %vm1485 = vcmask 130048
        %v1487 = vsel %vm1485, %v1480, 0
        %v1490 = vsel %vm1485, %v1481, 0
        %v1493 = vsel %vm1485, %v1482, 0
        %v1496 = vsel %vm1485, %v1483, 0
        %1498 = vmatprep.subr.bf16.mxu0 0
        %1499 = vmatpush1.bf16.msra.mxu0 %v1484
        %1500 = vmatprep.subr.bf16.mxu0 0
        %1501 = vmatpush1.bf16.msra.mxu0 0
        %1502 = vmatprep.subr.bf16.mxu0 0
        %1503 = vmatpush1.bf16.msra.mxu0 0
        %1504 = vmatprep.subr.bf16.mxu0 0
        %1505 = vmatpush1.bf16.msra.mxu0 0
        %1506 = vmatprep.subr.bf16.mxu0 0
        %1507 = vmatpush1.bf16.msra.mxu0 0
        %1508 = vmatprep.subr.bf16.mxu0 0
        %1509 = vmatpush1.bf16.msra.mxu0 0
        %1510 = vmatprep.subr.bf16.mxu0 0
        %1511 = vmatpush1.bf16.msra.mxu0 0
        %1512 = vmatprep.subr.bf16.mxu0 0
        %1513 = vmatpush1.bf16.msra.mxu0 0
        %1514 = vmatprep.subr.bf16.mxu0 0
        %1515 = vmatpush1.bf16.msra.mxu0 0
        %1516 = vmatprep.subr.bf16.mxu0 0
        %1517 = vmatpush1.bf16.msra.mxu0 0
        %1518 = vmatprep.subr.bf16.mxu0 0
        %1519 = vmatpush1.bf16.msra.mxu0 0
        %1520 = vmatprep.subr.bf16.mxu0 0
        %1521 = vmatpush1.bf16.msra.mxu0 0
        %1522 = vmatprep.subr.bf16.mxu0 0
        %1523 = vmatpush1.bf16.msra.mxu0 0
        %1524 = vmatprep.subr.bf16.mxu0 0
        %1525 = vmatpush1.bf16.msra.mxu0 0
        %1526 = vmatprep.subr.bf16.mxu0 0
        %1527 = vmatpush1.bf16.msra.mxu0 0
        %1528 = vmatprep.subr.bf16.mxu0 0
        %1529 = vmatpush1.bf16.msra.mxu0 0
        %1530 = vmatprep.mubr.bf16.mxu0 0
        %1531 = vmatmul.mubr.bf16.gmra.mrb[0].mxu0 %v1487
        %v1532 = vpop.f32.mrb[0].mxu0
        %v1533 = vadd.f32 0.0, %v1532
        %v1534 = vpop.f32.mrb[0].mxu0
        %v1535 = vpop.f32.mrb[0].mxu0
        %v1536 = vadd.f32 0.0, %v1535
        %v1537 = vpop.f32.mrb[0].mxu0
        %1538 = vmatprep.mubr.bf16.mxu0 0
        %1539 = vmatmul.mubr.bf16.gmra.mrb[0].mxu0 %v1490
        %v1540 = vpop.f32.mrb[0].mxu0
        %v1541 = vadd.f32 0.0, %v1540
        %v1542 = vpop.f32.mrb[0].mxu0
        %v1543 = vpop.f32.mrb[0].mxu0
        %v1544 = vadd.f32 0.0, %v1543
        %v1545 = vpop.f32.mrb[0].mxu0
        %1546 = vmatprep.mubr.bf16.mxu0 0
        %1547 = vmatmul.mubr.bf16.gmra.mrb[0].mxu0 %v1493
        %v1548 = vpop.f32.mrb[0].mxu0
        %v1549 = vadd.f32 0.0, %v1548
        %v1550 = vpop.f32.mrb[0].mxu0
        %v1551 = vpop.f32.mrb[0].mxu0
        %v1552 = vadd.f32 0.0, %v1551
        %v1553 = vpop.f32.mrb[0].mxu0
        %1554 = vmatprep.mubr.bf16.mxu0 0
        %1555 = vmatmul.mubr.bf16.gmra.mrb[0].mxu0 %v1496
        %v1556 = vpop.f32.mrb[0].mxu0
        %v1557 = vadd.f32 0.0, %v1556
        %v1558 = vpop.f32.mrb[0].mxu0
        %v1559 = vpop.f32.mrb[0].mxu0
        %v1560 = vadd.f32 0.0, %v1559
        %v1561 = vpop.f32.mrb[0].mxu0
        %1562 = vdwg.mxu0
        %v1564 = vsel %vm1485, %v1291, 0
        %v1567 = vsel %vm1485, %v1292, 0
        %v1570 = vsel %vm1485, %v1293, 0
        %v1573 = vsel %vm1485, %v1294, 0
        %1575 = vmatprep.subr.bf16.mxu0 0
        %1576 = vmatpush1.bf16.msra.mxu0 %v1295
        %1577 = vmatprep.subr.bf16.mxu0 0
        %1578 = vmatpush1.bf16.msra.mxu0 0
        %1579 = vmatprep.subr.bf16.mxu0 0
        %1580 = vmatpush1.bf16.msra.mxu0 0
        %1581 = vmatprep.subr.bf16.mxu0 0
        %1582 = vmatpush1.bf16.msra.mxu0 0
        %1583 = vmatprep.subr.bf16.mxu0 0
        %1584 = vmatpush1.bf16.msra.mxu0 0
        %1585 = vmatprep.subr.bf16.mxu0 0
        %1586 = vmatpush1.bf16.msra.mxu0 0
        %1587 = vmatprep.subr.bf16.mxu0 0
        %1588 = vmatpush1.bf16.msra.mxu0 0
        %1589 = vmatprep.subr.bf16.mxu0 0
        %1590 = vmatpush1.bf16.msra.mxu0 0
        %1591 = vmatprep.subr.bf16.mxu0 0
        %1592 = vmatpush1.bf16.msra.mxu0 0
        %1593 = vmatprep.subr.bf16.mxu0 0
        %1594 = vmatpush1.bf16.msra.mxu0 0
        %1595 = vmatprep.subr.bf16.mxu0 0
        %1596 = vmatpush1.bf16.msra.mxu0 0
        %1597 = vmatprep.subr.bf16.mxu0 0
        %1598 = vmatpush1.bf16.msra.mxu0 0
        %1599 = vmatprep.subr.bf16.mxu0 0
        %1600 = vmatpush1.bf16.msra.mxu0 0
        %1601 = vmatprep.subr.bf16.mxu0 0
        %1602 = vmatpush1.bf16.msra.mxu0 0
        %1603 = vmatprep.subr.bf16.mxu0 0
        %1604 = vmatpush1.bf16.msra.mxu0 0
        %1605 = vmatprep.subr.bf16.mxu0 0
        %1606 = vmatpush1.bf16.msra.mxu0 0
        %1607 = vmatprep.mubr.bf16.mxu0 0
        %1608 = vmatmul.mubr.bf16.gmra.mrb[0].mxu0 %v1564
        %v1609 = vpop.f32.mrb[0].mxu0
        %v1610 = vadd.f32 %v1533, %v1609
        %v1611 = vpop.f32.mrb[0].mxu0
        %v1612 = vpop.f32.mrb[0].mxu0
        %v1613 = vadd.f32 %v1536, %v1612
        %v1614 = vpop.f32.mrb[0].mxu0
        %1615 = vmatprep.mubr.bf16.mxu0 0
        %1616 = vmatmul.mubr.bf16.gmra.mrb[0].mxu0 %v1567
        %v1617 = vpop.f32.mrb[0].mxu0
        %v1618 = vadd.f32 %v1541, %v1617
        %v1619 = vpop.f32.mrb[0].mxu0
        %v1620 = vpop.f32.mrb[0].mxu0
        %v1621 = vadd.f32 %v1544, %v1620
        %v1622 = vpop.f32.mrb[0].mxu0
        %1623 = vmatprep.mubr.bf16.mxu0 0
        %1624 = vmatmul.mubr.bf16.gmra.mrb[0].mxu0 %v1570
        %v1625 = vpop.f32.mrb[0].mxu0
        %v1626 = vadd.f32 %v1549, %v1625
        %v1627 = vpop.f32.mrb[0].mxu0
        %v1628 = vpop.f32.mrb[0].mxu0
        %v1629 = vadd.f32 %v1552, %v1628
        %v1630 = vpop.f32.mrb[0].mxu0
        %1631 = vmatprep.mubr.bf16.mxu0 0
        %1632 = vmatmul.mubr.bf16.gmra.mrb[0].mxu0 %v1573
        %v1633 = vpop.f32.mrb[0].mxu0
        %v1634 = vadd.f32 %v1557, %v1633
        %v1635 = vpop.f32.mrb[0].mxu0
        %v1636 = vpop.f32.mrb[0].mxu0
        %v1637 = vadd.f32 %v1560, %v1636
        %v1638 = vpop.f32.mrb[0].mxu0
        %1639 = vdwg.mxu0
        %v1640 = vpack.c.bf16 %v1050, %v1047
        %v1641 = vpack.c.bf16 %v1058, %v1055
        %v1642 = vpack.c.bf16 %v1098, %v1095
        %v1643 = vpack.c.bf16 %v1106, %v1103
        %1644 = vxpose.xlu0.c.b16.start [1/8] %v1640, 128
        %1645 = vxpose.xlu0.c.b16.cont [2/8] %v1641, 128
        %1646 = vxpose.xlu0.c.b16.cont [3/8] 0, 128
        %1647 = vxpose.xlu0.c.b16.cont [4/8] 0, 128
        %1648 = vxpose.xlu0.c.b16.cont [5/8] 0, 128
        %1649 = vxpose.xlu0.c.b16.cont [6/8] 0, 128
        %1650 = vxpose.xlu0.c.b16.cont [7/8] 0, 128
        %1651 = vxpose.xlu0.c.b16.end [8/8] 0, 128
        %v1652 = vpop.trf.xlu0
        %v1653 = vpop.trf.xlu0
        %v1654 = vpop.trf.xlu0
        %v1655 = vpop.trf.xlu0
        %v1656 = vpop.trf.xlu0
        %v1657 = vpop.trf.xlu0
        %v1658 = vpop.trf.xlu0
        %v1659 = vpop.trf.xlu0
        %v1661 = vsel %vm1129, %v1652, 0
        %1663 = vmatprep.subr.bf16.mxu0 0
        %1664 = vmatpush1.bf16.msra.mxu0 %v1642
        %1665 = vmatprep.subr.bf16.mxu0 0
        %1666 = vmatpush1.bf16.msra.mxu0 %v1643
        %1667 = vmatprep.subr.bf16.mxu0 0
        %1668 = vmatpush1.bf16.msra.mxu0 0
        %1669 = vmatprep.subr.bf16.mxu0 0
        %1670 = vmatpush1.bf16.msra.mxu0 0
        %1671 = vmatprep.subr.bf16.mxu0 0
        %1672 = vmatpush1.bf16.msra.mxu0 0
        %1673 = vmatprep.subr.bf16.mxu0 0
        %1674 = vmatpush1.bf16.msra.mxu0 0
        %1675 = vmatprep.subr.bf16.mxu0 0
        %1676 = vmatpush1.bf16.msra.mxu0 0
        %1677 = vmatprep.subr.bf16.mxu0 0
        %1678 = vmatpush1.bf16.msra.mxu0 0
        %1679 = vmatprep.subr.bf16.mxu0 0
        %1680 = vmatpush1.bf16.msra.mxu0 0
        %1681 = vmatprep.subr.bf16.mxu0 0
        %1682 = vmatpush1.bf16.msra.mxu0 0
        %1683 = vmatprep.subr.bf16.mxu0 0
        %1684 = vmatpush1.bf16.msra.mxu0 0
        %1685 = vmatprep.subr.bf16.mxu0 0
        %1686 = vmatpush1.bf16.msra.mxu0 0
        %1687 = vmatprep.subr.bf16.mxu0 0
        %1688 = vmatpush1.bf16.msra.mxu0 0
        %1689 = vmatprep.subr.bf16.mxu0 0
        %1690 = vmatpush1.bf16.msra.mxu0 0
        %1691 = vmatprep.subr.bf16.mxu0 0
        %1692 = vmatpush1.bf16.msra.mxu0 0
        %1693 = vmatprep.subr.bf16.mxu0 0
        %1694 = vmatpush1.bf16.msra.mxu0 0
        %1695 = vmatprep.mubr.bf16.mxu0 0
        %1696 = vmatmul.mubr.bf16.gmra.mrb[0].mxu0 %v1661
        %v1697 = vpop.f32.mrb[0].mxu0
        %v1698 = vadd.f32 0.0, %v1697
        %v1699 = vpop.f32.mrb[0].mxu0
        %v1700 = vpop.f32.mrb[0].mxu0
        %v1701 = vadd.f32 0.0, %v1700
        %v1702 = vpop.f32.mrb[0].mxu0
        %1703 = vdwg.mxu0
        %v1704 = vmul.f32 %v1698, 0.03125
        %v1705 = vmul.f32 %v1701, 0.03125
        %v1706 = vtanh.pop %v1704
        %v1707 = vtanh.pop %v1705
        %s1708 = scalar_lea.vmem %s4, 32
        %v1709 = vld [vmem:[%s1708] sm:$0xff]
        %v1710 = vld [vmem:[%s1708 + $0x8] sm:$0xff]
        %v1711 = vmul.f32 %v1706, %v1709
        %v1712 = vmul.f32 %v1707, %v1710
        %s1713 = scalar_lea.vmem %s5, 32
        %v1714 = vld [vmem:[%s1713] sm:$0xff]
        %v1715 = vld [vmem:[%s1713 + $0x8] sm:$0xff]
        %v1716 = vadd.f32 %v1711, %v1714
        %v1717 = vadd.f32 %v1712, %v1715
        %s1718 = scalar_lea.vmem %s6, 64
        %v1719 = vld [vmem:[%s1718] sm:$0xf]
        %v1720 = vld [vmem:[%s1718 + $0x4] sm:$0xf]
        %v1721 = vld [vmem:[%s1718 + $0x8] sm:$0xf]
        %v1722 = vld [vmem:[%s1718 + $0xc] sm:$0xf]
        %v1723 = vld [vmem:[%s1718 + $0x10] sm:$0xf]
        %v1724 = vld [vmem:[%s1718 + $0x14] sm:$0xf]
        %v1725 = vld [vmem:[%s1718 + $0x18] sm:$0xf]
        %v1726 = vld [vmem:[%s1718 + $0x1c] sm:$0xf]
        %v1735 = vunpack.c.l.b16 %v1719
        %v1736 = vunpack.c.l.b16 %v1720
        %v1737 = vunpack.c.l.b16 %v1721
        %v1738 = vunpack.c.l.b16 %v1722
        %v1739 = vunpack.c.l.b16 %v1723
        %v1740 = vunpack.c.l.b16 %v1724
        %v1741 = vunpack.c.l.b16 %v1725
        %v1742 = vunpack.c.l.b16 %v1726
        %v1743 = vpack.c.b16 %v1736, %v1735
        %v1744 = vpack.c.b16 %v1738, %v1737
        %v1745 = vpack.c.b16 %v1740, %v1739
        %v1746 = vpack.c.b16 %v1742, %v1741
        %v1748 = vsel %vm943, %v1743, 0
        %v1751 = vsel %vm943, %v1744, 0
        %v1754 = vsel %vm943, %v1745, 0
        %v1757 = vsel %vm943, %v1746, 0
        %1759 = vmatprep.subr.bf16.mxu0 0
        %1760 = vmatpush1.bf16.msra.mxu0 %v691
        %1761 = vmatprep.subr.bf16.mxu0 0
        %1762 = vmatpush1.bf16.msra.mxu0 %v692
        %1763 = vmatprep.subr.bf16.mxu0 0
        %1764 = vmatpush1.bf16.msra.mxu0 %v693
        %1765 = vmatprep.subr.bf16.mxu0 0
        %1766 = vmatpush1.bf16.msra.mxu0 %v694
        %1767 = vmatprep.subr.bf16.mxu0 0
        %1768 = vmatpush1.bf16.msra.mxu0 0
        %1769 = vmatprep.subr.bf16.mxu0 0
        %1770 = vmatpush1.bf16.msra.mxu0 0
        %1771 = vmatprep.subr.bf16.mxu0 0
        %1772 = vmatpush1.bf16.msra.mxu0 0
        %1773 = vmatprep.subr.bf16.mxu0 0
        %1774 = vmatpush1.bf16.msra.mxu0 0
        %1775 = vmatprep.subr.bf16.mxu0 0
        %1776 = vmatpush1.bf16.msra.mxu0 0
        %1777 = vmatprep.subr.bf16.mxu0 0
        %1778 = vmatpush1.bf16.msra.mxu0 0
        %1779 = vmatprep.subr.bf16.mxu0 0
        %1780 = vmatpush1.bf16.msra.mxu0 0
        %1781 = vmatprep.subr.bf16.mxu0 0
        %1782 = vmatpush1.bf16.msra.mxu0 0
        %1783 = vmatprep.subr.bf16.mxu0 0
        %1784 = vmatpush1.bf16.msra.mxu0 0
        %1785 = vmatprep.subr.bf16.mxu0 0
        %1786 = vmatpush1.bf16.msra.mxu0 0
        %1787 = vmatprep.subr.bf16.mxu0 0
        %1788 = vmatpush1.bf16.msra.mxu0 0
        %1789 = vmatprep.subr.bf16.mxu0 0
        %1790 = vmatpush1.bf16.msra.mxu0 0
        %1791 = vmatprep.mubr.bf16.mxu0 0
        %1792 = vmatmul.mubr.bf16.gmra.mrb[0].mxu0 %v1748
        %v1793 = vpop.f32.mrb[0].mxu0
        %v1794 = vadd.f32 0.0, %v1793
        %v1795 = vpop.f32.mrb[0].mxu0
        %v1796 = vpop.f32.mrb[0].mxu0
        %v1797 = vadd.f32 0.0, %v1796
        %v1798 = vpop.f32.mrb[0].mxu0
        %1799 = vmatprep.mubr.bf16.mxu0 0
        %1800 = vmatmul.mubr.bf16.gmra.mrb[0].mxu0 %v1751
        %v1801 = vpop.f32.mrb[0].mxu0
        %v1802 = vadd.f32 0.0, %v1801
        %v1803 = vpop.f32.mrb[0].mxu0
        %v1804 = vpop.f32.mrb[0].mxu0
        %v1805 = vadd.f32 0.0, %v1804
        %v1806 = vpop.f32.mrb[0].mxu0
        %1807 = vmatprep.mubr.bf16.mxu0 0
        %1808 = vmatmul.mubr.bf16.gmra.mrb[0].mxu0 %v1754
        %v1809 = vpop.f32.mrb[0].mxu0
        %v1810 = vadd.f32 0.0, %v1809
        %v1811 = vpop.f32.mrb[0].mxu0
        %v1812 = vpop.f32.mrb[0].mxu0
        %v1813 = vadd.f32 0.0, %v1812
        %v1814 = vpop.f32.mrb[0].mxu0
        %1815 = vmatprep.mubr.bf16.mxu0 0
        %1816 = vmatmul.mubr.bf16.gmra.mrb[0].mxu0 %v1757
        %v1817 = vpop.f32.mrb[0].mxu0
        %v1818 = vadd.f32 0.0, %v1817
        %v1819 = vpop.f32.mrb[0].mxu0
        %v1820 = vpop.f32.mrb[0].mxu0
        %v1821 = vadd.f32 0.0, %v1820
        %v1822 = vpop.f32.mrb[0].mxu0
        %1823 = vdwg.mxu0
        %v1824 = vpack.c.bf16 %v1797, %v1794
        %v1825 = vpack.c.bf16 %v1805, %v1802
        %v1826 = vpack.c.bf16 %v1813, %v1810
        %v1827 = vpack.c.bf16 %v1821, %v1818
        %v1828 = vpack.c.bf16 %v1717, %v1716
        %v1830 = vsel %vm1485, %v1824, 0
        %v1833 = vsel %vm1485, %v1825, 0
        %v1836 = vsel %vm1485, %v1826, 0
        %v1839 = vsel %vm1485, %v1827, 0
        %1841 = vmatprep.subr.bf16.mxu0 0
        %1842 = vmatpush1.bf16.msra.mxu0 %v1828
        %1843 = vmatprep.subr.bf16.mxu0 0
        %1844 = vmatpush1.bf16.msra.mxu0 0
        %1845 = vmatprep.subr.bf16.mxu0 0
        %1846 = vmatpush1.bf16.msra.mxu0 0
        %1847 = vmatprep.subr.bf16.mxu0 0
        %1848 = vmatpush1.bf16.msra.mxu0 0
        %1849 = vmatprep.subr.bf16.mxu0 0
        %1850 = vmatpush1.bf16.msra.mxu0 0
        %1851 = vmatprep.subr.bf16.mxu0 0
        %1852 = vmatpush1.bf16.msra.mxu0 0
        %1853 = vmatprep.subr.bf16.mxu0 0
        %1854 = vmatpush1.bf16.msra.mxu0 0
        %1855 = vmatprep.subr.bf16.mxu0 0
        %1856 = vmatpush1.bf16.msra.mxu0 0
        %1857 = vmatprep.subr.bf16.mxu0 0
        %1858 = vmatpush1.bf16.msra.mxu0 0
        %1859 = vmatprep.subr.bf16.mxu0 0
        %1860 = vmatpush1.bf16.msra.mxu0 0
        %1861 = vmatprep.subr.bf16.mxu0 0
        %1862 = vmatpush1.bf16.msra.mxu0 0
        %1863 = vmatprep.subr.bf16.mxu0 0
        %1864 = vmatpush1.bf16.msra.mxu0 0
        %1865 = vmatprep.subr.bf16.mxu0 0
        %1866 = vmatpush1.bf16.msra.mxu0 0
        %1867 = vmatprep.subr.bf16.mxu0 0
        %1868 = vmatpush1.bf16.msra.mxu0 0
        %1869 = vmatprep.subr.bf16.mxu0 0
        %1870 = vmatpush1.bf16.msra.mxu0 0
        %1871 = vmatprep.subr.bf16.mxu0 0
        %1872 = vmatpush1.bf16.msra.mxu0 0
        %1873 = vmatprep.mubr.bf16.mxu0 0
        %1874 = vmatmul.mubr.bf16.gmra.mrb[0].mxu0 %v1830
        %v1875 = vpop.f32.mrb[0].mxu0
        %v1876 = vadd.f32 0.0, %v1875
        %v1877 = vpop.f32.mrb[0].mxu0
        %v1878 = vpop.f32.mrb[0].mxu0
        %v1879 = vadd.f32 0.0, %v1878
        %v1880 = vpop.f32.mrb[0].mxu0
        %1881 = vmatprep.mubr.bf16.mxu0 0
        %1882 = vmatmul.mubr.bf16.gmra.mrb[0].mxu0 %v1833
        %v1883 = vpop.f32.mrb[0].mxu0
        %v1884 = vadd.f32 0.0, %v1883
        %v1885 = vpop.f32.mrb[0].mxu0
        %v1886 = vpop.f32.mrb[0].mxu0
        %v1887 = vadd.f32 0.0, %v1886
        %v1888 = vpop.f32.mrb[0].mxu0
        %1889 = vmatprep.mubr.bf16.mxu0 0
        %1890 = vmatmul.mubr.bf16.gmra.mrb[0].mxu0 %v1836
        %v1891 = vpop.f32.mrb[0].mxu0
        %v1892 = vadd.f32 0.0, %v1891
        %v1893 = vpop.f32.mrb[0].mxu0
        %v1894 = vpop.f32.mrb[0].mxu0
        %v1895 = vadd.f32 0.0, %v1894
        %v1896 = vpop.f32.mrb[0].mxu0
        %1897 = vmatprep.mubr.bf16.mxu0 0
        %1898 = vmatmul.mubr.bf16.gmra.mrb[0].mxu0 %v1839
        %v1899 = vpop.f32.mrb[0].mxu0
        %v1900 = vadd.f32 0.0, %v1899
        %v1901 = vpop.f32.mrb[0].mxu0
        %v1902 = vpop.f32.mrb[0].mxu0
        %v1903 = vadd.f32 0.0, %v1902
        %v1904 = vpop.f32.mrb[0].mxu0
        %1905 = vdwg.mxu0
        %v1906 = vadd.f32 %v1610, %v1876
        %v1907 = vadd.f32 %v1613, %v1879
        %v1908 = vadd.f32 %v1618, %v1884
        %v1909 = vadd.f32 %v1621, %v1887
        %v1910 = vadd.f32 %v1626, %v1892
        %v1911 = vadd.f32 %v1629, %v1895
        %v1912 = vadd.f32 %v1634, %v1900
        %v1913 = vadd.f32 %v1637, %v1903
        %v1914 = vld [vmem:[%s7] sm:$0xff]
        %v1915 = vld [vmem:[%s7 + $0x8] sm:$0xff]
        %v1916 = vld [vmem:[%s7 + $0x10] sm:$0xff]
        %v1917 = vld [vmem:[%s7 + $0x18] sm:$0xff]
        %v1918 = vld [vmem:[%s7 + $0x20] sm:$0xff]
        %v1919 = vld [vmem:[%s7 + $0x28] sm:$0xff]
        %v1920 = vld [vmem:[%s7 + $0x30] sm:$0xff]
        %v1921 = vld [vmem:[%s7 + $0x38] sm:$0xff]
        %1923 = vset.pattern.permute.xlu0 0
        %1924 = vperm.xlu0 %1923, %v1914
        %v1925 = vpop.permute.xlu0 %1924
        %1928 = vset.pattern.permute.xlu0 0
        %1929 = vperm.xlu0 %1928, %v1915
        %v1930 = vpop.permute.xlu0 %1929
        %1933 = vset.pattern.permute.xlu0 0
        %1934 = vperm.xlu0 %1933, %v1916
        %v1935 = vpop.permute.xlu0 %1934
        %1938 = vset.pattern.permute.xlu0 0
        %1939 = vperm.xlu0 %1938, %v1917
        %v1940 = vpop.permute.xlu0 %1939
        %1943 = vset.pattern.permute.xlu0 0
        %1944 = vperm.xlu0 %1943, %v1918
        %v1945 = vpop.permute.xlu0 %1944
        %1948 = vset.pattern.permute.xlu0 0
        %1949 = vperm.xlu0 %1948, %v1919
        %v1950 = vpop.permute.xlu0 %1949
        %1953 = vset.pattern.permute.xlu0 0
        %1954 = vperm.xlu0 %1953, %v1920
        %v1955 = vpop.permute.xlu0 %1954
        %1958 = vset.pattern.permute.xlu0 0
        %1959 = vperm.xlu0 %1958, %v1921
        %v1960 = vpop.permute.xlu0 %1959
        %v1962 = vadd.f32 %v1906, %v1925
        %v1963 = vadd.f32 %v1907, %v1930
        %v1964 = vadd.f32 %v1908, %v1935
        %v1965 = vadd.f32 %v1909, %v1940
        %v1966 = vadd.f32 %v1910, %v1945
        %v1967 = vadd.f32 %v1911, %v1950
        %v1968 = vadd.f32 %v1912, %v1955
        %v1969 = vadd.f32 %v1913, %v1960
        %v1970 = vadd.f32 %v1962, %v683
        %v1971 = vadd.f32 %v1963, %v684
        %v1972 = vadd.f32 %v1964, %v685
        %v1973 = vadd.f32 %v1965, %v686
        %v1974 = vadd.f32 %v1966, %v687
        %v1975 = vadd.f32 %v1967, %v688
        %v1976 = vadd.f32 %v1968, %v689
        %v1977 = vadd.f32 %v1969, %v690
        %vm1978 = vcmp.gt.f32.partialorder %v1970, 0.0
        %vm1979 = vcmp.gt.f32.partialorder %v1971, 0.0
        %vm1980 = vcmp.gt.f32.partialorder %v1972, 0.0
        %vm1981 = vcmp.gt.f32.partialorder %v1973, 0.0
        %vm1982 = vcmp.gt.f32.partialorder %v1974, 0.0
        %vm1983 = vcmp.gt.f32.partialorder %v1975, 0.0
        %vm1984 = vcmp.gt.f32.partialorder %v1976, 0.0
        %vm1985 = vcmp.gt.f32.partialorder %v1977, 0.0
        %v1986 = vmul.f32 %v1970, 0.1
        %v1987 = vmul.f32 %v1971, 0.1
        %v1988 = vmul.f32 %v1972, 0.1
        %v1989 = vmul.f32 %v1973, 0.1
        %v1990 = vmul.f32 %v1974, 0.1
        %v1991 = vmul.f32 %v1975, 0.1
        %v1992 = vmul.f32 %v1976, 0.1
        %v1993 = vmul.f32 %v1977, 0.1
        %v1994 = vsel %vm1978, %v1970, %v1986
        %v1995 = vsel %vm1979, %v1971, %v1987
        %v1996 = vsel %vm1980, %v1972, %v1988
        %v1997 = vsel %vm1981, %v1973, %v1989
        %v1998 = vsel %vm1982, %v1974, %v1990
        %v1999 = vsel %vm1983, %v1975, %v1991
        %v2000 = vsel %vm1984, %v1976, %v1992
        %v2001 = vsel %vm1985, %v1977, %v1993
        %v2002 = vld [vmem:[%s8] sm:$0xf]
        %v2003 = vld [vmem:[%s8 + $0x4] sm:$0xf]
        %v2004 = vld [vmem:[%s8 + $0x8] sm:$0xf]
        %v2005 = vld [vmem:[%s8 + $0xc] sm:$0xf]
        %v2006 = vld [vmem:[%s8 + $0x10] sm:$0xf]
        %v2007 = vld [vmem:[%s8 + $0x14] sm:$0xf]
        %v2008 = vld [vmem:[%s8 + $0x18] sm:$0xf]
        %v2009 = vld [vmem:[%s8 + $0x1c] sm:$0xf]
        %v2010 = vpack.c.bf16 %v1995, %v1994
        %v2011 = vpack.c.bf16 %v1997, %v1996
        %v2012 = vpack.c.bf16 %v1999, %v1998
        %v2013 = vpack.c.bf16 %v2001, %v2000
        %v2014 = vld [vmem:[%s9] sm:$0xff]
        %v2015 = vld [vmem:[%s9 + $0x8] sm:$0xff]
        %v2016 = vld [vmem:[%s9 + $0x10] sm:$0xff]
        %v2017 = vld [vmem:[%s9 + $0x18] sm:$0xff]
        %v2018 = vld [vmem:[%s9 + $0x20] sm:$0xff]
        %v2019 = vld [vmem:[%s9 + $0x28] sm:$0xff]
        %v2020 = vld [vmem:[%s9 + $0x30] sm:$0xff]
        %v2021 = vld [vmem:[%s9 + $0x38] sm:$0xff]
        %2023 = vset.pattern.permute.xlu0 0
        %2024 = vperm.xlu0 %2023, %v2014
        %v2025 = vpop.permute.xlu0 %2024
        %2028 = vset.pattern.permute.xlu0 0
        %2029 = vperm.xlu0 %2028, %v2015
        %v2030 = vpop.permute.xlu0 %2029
        %2033 = vset.pattern.permute.xlu0 0
        %2034 = vperm.xlu0 %2033, %v2016
        %v2035 = vpop.permute.xlu0 %2034
        %2038 = vset.pattern.permute.xlu0 0
        %2039 = vperm.xlu0 %2038, %v2017
        %v2040 = vpop.permute.xlu0 %2039
        %2043 = vset.pattern.permute.xlu0 0
        %2044 = vperm.xlu0 %2043, %v2018
        %v2045 = vpop.permute.xlu0 %2044
        %2048 = vset.pattern.permute.xlu0 0
        %2049 = vperm.xlu0 %2048, %v2019
        %v2050 = vpop.permute.xlu0 %2049
        %2053 = vset.pattern.permute.xlu0 0
        %2054 = vperm.xlu0 %2053, %v2020
        %v2055 = vpop.permute.xlu0 %2054
        %2058 = vset.pattern.permute.xlu0 0
        %2059 = vperm.xlu0 %2058, %v2021
        %v2060 = vpop.permute.xlu0 %2059
        %v2070 = vunpack.c.l.b16 %v2002
        %v2071 = vunpack.c.l.b16 %v2003
        %v2072 = vunpack.c.l.b16 %v2004
        %v2073 = vunpack.c.l.b16 %v2005
        %v2074 = vunpack.c.l.b16 %v2006
        %v2075 = vunpack.c.l.b16 %v2007
        %v2076 = vunpack.c.l.b16 %v2008
        %v2077 = vunpack.c.l.b16 %v2009
        %v2078 = vpack.c.b16 %v2071, %v2070
        %v2079 = vpack.c.b16 %v2073, %v2072
        %v2080 = vpack.c.b16 %v2075, %v2074
        %v2081 = vpack.c.b16 %v2077, %v2076
        %v2083 = vsel %vm943, %v2078, 0
        %v2086 = vsel %vm943, %v2079, 0
        %v2089 = vsel %vm943, %v2080, 0
        %v2092 = vsel %vm943, %v2081, 0
        %2094 = vmatprep.subr.bf16.mxu0 0
        %2095 = vmatpush1.bf16.msra.mxu0 %v2010
        %2096 = vmatprep.subr.bf16.mxu0 0
        %2097 = vmatpush1.bf16.msra.mxu0 %v2011
        %2098 = vmatprep.subr.bf16.mxu0 0
        %2099 = vmatpush1.bf16.msra.mxu0 %v2012
        %2100 = vmatprep.subr.bf16.mxu0 0
        %2101 = vmatpush1.bf16.msra.mxu0 %v2013
        %2102 = vmatprep.subr.bf16.mxu0 0
        %2103 = vmatpush1.bf16.msra.mxu0 0
        %2104 = vmatprep.subr.bf16.mxu0 0
        %2105 = vmatpush1.bf16.msra.mxu0 0
        %2106 = vmatprep.subr.bf16.mxu0 0
        %2107 = vmatpush1.bf16.msra.mxu0 0
        %2108 = vmatprep.subr.bf16.mxu0 0
        %2109 = vmatpush1.bf16.msra.mxu0 0
        %2110 = vmatprep.subr.bf16.mxu0 0
        %2111 = vmatpush1.bf16.msra.mxu0 0
        %2112 = vmatprep.subr.bf16.mxu0 0
        %2113 = vmatpush1.bf16.msra.mxu0 0
        %2114 = vmatprep.subr.bf16.mxu0 0
        %2115 = vmatpush1.bf16.msra.mxu0 0
        %2116 = vmatprep.subr.bf16.mxu0 0
        %2117 = vmatpush1.bf16.msra.mxu0 0
        %2118 = vmatprep.subr.bf16.mxu0 0
        %2119 = vmatpush1.bf16.msra.mxu0 0
        %2120 = vmatprep.subr.bf16.mxu0 0
        %2121 = vmatpush1.bf16.msra.mxu0 0
        %2122 = vmatprep.subr.bf16.mxu0 0
        %2123 = vmatpush1.bf16.msra.mxu0 0
        %2124 = vmatprep.subr.bf16.mxu0 0
        %2125 = vmatpush1.bf16.msra.mxu0 0
        %2126 = vmatprep.mubr.bf16.mxu0 0
        %2127 = vmatmul.mubr.bf16.gmra.mrb[0].mxu0 %v2083
        %v2128 = vpop.f32.mrb[0].mxu0
        %v2129 = vadd.f32 %v2025, %v2128
        %v2130 = vpop.f32.mrb[0].mxu0
        %v2131 = vpop.f32.mrb[0].mxu0
        %v2132 = vadd.f32 %v2030, %v2131
        %v2133 = vpop.f32.mrb[0].mxu0
        %2134 = vmatprep.mubr.bf16.mxu0 0
        %2135 = vmatmul.mubr.bf16.gmra.mrb[0].mxu0 %v2086
        %v2136 = vpop.f32.mrb[0].mxu0
        %v2137 = vadd.f32 %v2035, %v2136
        %v2138 = vpop.f32.mrb[0].mxu0
        %v2139 = vpop.f32.mrb[0].mxu0
        %v2140 = vadd.f32 %v2040, %v2139
        %v2141 = vpop.f32.mrb[0].mxu0
        %2142 = vmatprep.mubr.bf16.mxu0 0
        %2143 = vmatmul.mubr.bf16.gmra.mrb[0].mxu0 %v2089
        %v2144 = vpop.f32.mrb[0].mxu0
        %v2145 = vadd.f32 %v2045, %v2144
        %v2146 = vpop.f32.mrb[0].mxu0
        %v2147 = vpop.f32.mrb[0].mxu0
        %v2148 = vadd.f32 %v2050, %v2147
        %v2149 = vpop.f32.mrb[0].mxu0
        %2150 = vmatprep.mubr.bf16.mxu0 0
        %2151 = vmatmul.mubr.bf16.gmra.mrb[0].mxu0 %v2092
        %v2152 = vpop.f32.mrb[0].mxu0
        %v2153 = vadd.f32 %v2055, %v2152
        %v2154 = vpop.f32.mrb[0].mxu0
        %v2155 = vpop.f32.mrb[0].mxu0
        %v2156 = vadd.f32 %v2060, %v2155
        %v2157 = vpop.f32.mrb[0].mxu0
        %2158 = vdwg.mxu0
        %v2159 = vadd.f32 %v2129, %v683
        %v2160 = vadd.f32 %v2132, %v684
        %v2161 = vadd.f32 %v2137, %v685
        %v2162 = vadd.f32 %v2140, %v686
        %v2163 = vadd.f32 %v2145, %v687
        %v2164 = vadd.f32 %v2148, %v688
        %v2165 = vadd.f32 %v2153, %v689
        %v2166 = vadd.f32 %v2156, %v690
        %vm2167 = vcmp.gt.f32.partialorder %v2159, 0.0
        %vm2168 = vcmp.gt.f32.partialorder %v2160, 0.0
        %vm2169 = vcmp.gt.f32.partialorder %v2161, 0.0
        %vm2170 = vcmp.gt.f32.partialorder %v2162, 0.0
        %vm2171 = vcmp.gt.f32.partialorder %v2163, 0.0
        %vm2172 = vcmp.gt.f32.partialorder %v2164, 0.0
        %vm2173 = vcmp.gt.f32.partialorder %v2165, 0.0
        %vm2174 = vcmp.gt.f32.partialorder %v2166, 0.0
        %v2175 = vmul.f32 %v2159, 0.1
        %v2176 = vmul.f32 %v2160, 0.1
        %v2177 = vmul.f32 %v2161, 0.1
        %v2178 = vmul.f32 %v2162, 0.1
        %v2179 = vmul.f32 %v2163, 0.1
        %v2180 = vmul.f32 %v2164, 0.1
        %v2181 = vmul.f32 %v2165, 0.1
        %v2182 = vmul.f32 %v2166, 0.1
        %v2183 = vsel %vm2167, %v2159, %v2175
        %v2184 = vsel %vm2168, %v2160, %v2176
        %v2185 = vsel %vm2169, %v2161, %v2177
        %v2186 = vsel %vm2170, %v2162, %v2178
        %v2187 = vsel %vm2171, %v2163, %v2179
        %v2188 = vsel %vm2172, %v2164, %v2180
        %v2189 = vsel %vm2173, %v2165, %v2181
        %v2190 = vsel %vm2174, %v2166, %v2182
        %v2191 = vpack.c.bf16 %v2184, %v2183
        %v2192 = vpack.c.bf16 %v2186, %v2185
        %v2193 = vpack.c.bf16 %v2188, %v2187
        %v2194 = vpack.c.bf16 %v2190, %v2189
        %v2195 = vld [vmem:[%s10] sm:$0xff]
        %v2196 = vld [vmem:[%s10 + $0x8] sm:$0xff]
        %v2197 = vld [vmem:[%s10 + $0x10] sm:$0xff]
        %v2198 = vld [vmem:[%s10 + $0x18] sm:$0xff]
        %v2199 = vld [vmem:[%s10 + $0x20] sm:$0xff]
        %v2200 = vld [vmem:[%s10 + $0x28] sm:$0xff]
        %v2201 = vld [vmem:[%s10 + $0x30] sm:$0xff]
        %v2202 = vld [vmem:[%s10 + $0x38] sm:$0xff]
        %v2203 = vadd.f32 %v2183, %v2195
        %v2204 = vadd.f32 %v2184, %v2196
        %v2205 = vadd.f32 %v2185, %v2197
        %v2206 = vadd.f32 %v2186, %v2198
        %v2207 = vadd.f32 %v2187, %v2199
        %v2208 = vadd.f32 %v2188, %v2200
        %v2209 = vadd.f32 %v2189, %v2201
        %v2210 = vadd.f32 %v2190, %v2202
        %v2211 = vpack.c.bf16 %v2204, %v2203
        %v2212 = vpack.c.bf16 %v2206, %v2205
        %v2213 = vpack.c.bf16 %v2208, %v2207
        %v2214 = vpack.c.bf16 %v2210, %v2209
        %v2215 = vld [vmem:[%s15] sm:$0xff]
        %v2216 = vld [vmem:[%s15 + $0x8] sm:$0xff]
        %v2217 = vld [vmem:[%s15 + $0x10] sm:$0xff]
        %v2218 = vld [vmem:[%s15 + $0x18] sm:$0xff]
        %v2219 = vld [vmem:[%s15 + $0x20] sm:$0xff]
        %v2220 = vld [vmem:[%s15 + $0x28] sm:$0xff]
        %v2221 = vld [vmem:[%s15 + $0x30] sm:$0xff]
        %v2222 = vld [vmem:[%s15 + $0x38] sm:$0xff]
        %v2223 = vld [vmem:[%s16] sm:$0xff]
        %v2224 = vld [vmem:[%s11] sm:$0xf]
        %v2225 = vld [vmem:[%s11 + $0x4] sm:$0xf]
        %v2226 = vld [vmem:[%s11 + $0x8] sm:$0xf]
        %v2227 = vld [vmem:[%s11 + $0xc] sm:$0xf]
        %v2228 = vld [vmem:[%s12] sm:$0xff]
        %v2229 = vld [vmem:[%s12 + $0x8] sm:$0xff]
        %v2230 = vld [vmem:[%s12 + $0x10] sm:$0xff]
        %v2231 = vld [vmem:[%s12 + $0x18] sm:$0xff]
        %2233 = vset.pattern.permute.xlu0 0
        %2234 = vperm.xlu0 %2233, %v2228
        %v2235 = vpop.permute.xlu0 %2234
        %2238 = vset.pattern.permute.xlu0 0
        %2239 = vperm.xlu0 %2238, %v2229
        %v2240 = vpop.permute.xlu0 %2239
        %2243 = vset.pattern.permute.xlu0 0
        %2244 = vperm.xlu0 %2243, %v2230
        %v2245 = vpop.permute.xlu0 %2244
        %2248 = vset.pattern.permute.xlu0 0
        %2249 = vperm.xlu0 %2248, %v2231
        %v2250 = vpop.permute.xlu0 %2249
        %v2256 = vunpack.c.l.b16 %v2224
        %v2257 = vunpack.c.l.b16 %v2225
        %v2258 = vunpack.c.l.b16 %v2226
        %v2259 = vunpack.c.l.b16 %v2227
        %v2260 = vpack.c.b16 %v2257, %v2256
        %v2261 = vpack.c.b16 %v2259, %v2258
        %v2263 = vsel %vm943, %v2260, 0
        %v2266 = vsel %vm943, %v2261, 0
        %2268 = vmatprep.subr.bf16.mxu0 0
        %2269 = vmatpush1.bf16.msra.mxu0 %v2211
        %2270 = vmatprep.subr.bf16.mxu0 0
        %2271 = vmatpush1.bf16.msra.mxu0 %v2212
        %2272 = vmatprep.subr.bf16.mxu0 0
        %2273 = vmatpush1.bf16.msra.mxu0 %v2213
        %2274 = vmatprep.subr.bf16.mxu0 0
        %2275 = vmatpush1.bf16.msra.mxu0 %v2214
        %2276 = vmatprep.subr.bf16.mxu0 0
        %2277 = vmatpush1.bf16.msra.mxu0 0
        %2278 = vmatprep.subr.bf16.mxu0 0
        %2279 = vmatpush1.bf16.msra.mxu0 0
        %2280 = vmatprep.subr.bf16.mxu0 0
        %2281 = vmatpush1.bf16.msra.mxu0 0
        %2282 = vmatprep.subr.bf16.mxu0 0
        %2283 = vmatpush1.bf16.msra.mxu0 0
        %2284 = vmatprep.subr.bf16.mxu0 0
        %2285 = vmatpush1.bf16.msra.mxu0 0
        %2286 = vmatprep.subr.bf16.mxu0 0
        %2287 = vmatpush1.bf16.msra.mxu0 0
        %2288 = vmatprep.subr.bf16.mxu0 0
        %2289 = vmatpush1.bf16.msra.mxu0 0
        %2290 = vmatprep.subr.bf16.mxu0 0
        %2291 = vmatpush1.bf16.msra.mxu0 0
        %2292 = vmatprep.subr.bf16.mxu0 0
        %2293 = vmatpush1.bf16.msra.mxu0 0
        %2294 = vmatprep.subr.bf16.mxu0 0
        %2295 = vmatpush1.bf16.msra.mxu0 0
        %2296 = vmatprep.subr.bf16.mxu0 0
        %2297 = vmatpush1.bf16.msra.mxu0 0
        %2298 = vmatprep.subr.bf16.mxu0 0
        %2299 = vmatpush1.bf16.msra.mxu0 0
        %2300 = vmatprep.mubr.bf16.mxu0 0
        %2301 = vmatmul.mubr.bf16.gmra.mrb[0].mxu0 %v2263
        %v2302 = vpop.f32.mrb[0].mxu0
        %v2303 = vadd.f32 %v2235, %v2302
        %v2304 = vpop.f32.mrb[0].mxu0
        %v2305 = vpop.f32.mrb[0].mxu0
        %v2306 = vadd.f32 %v2240, %v2305
        %v2307 = vpop.f32.mrb[0].mxu0
        %2308 = vmatprep.mubr.bf16.mxu0 0
        %2309 = vmatmul.mubr.bf16.gmra.mrb[0].mxu0 %v2266
        %v2310 = vpop.f32.mrb[0].mxu0
        %v2311 = vadd.f32 %v2245, %v2310
        %v2312 = vpop.f32.mrb[0].mxu0
        %v2313 = vpop.f32.mrb[0].mxu0
        %v2314 = vadd.f32 %v2250, %v2313
        %v2315 = vpop.f32.mrb[0].mxu0
        %2316 = vdwg.mxu0
        %s2317 = scalar_lea.vmem %s11, 144
        %v2318 = vld [vmem:[%s2317] sm:$0xf]
        %v2319 = vld [vmem:[%s2317 + $0x4] sm:$0xf]
        %v2320 = vld [vmem:[%s2317 + $0x8] sm:$0xf]
        %v2321 = vld [vmem:[%s2317 + $0xc] sm:$0xf]
        %s2322 = scalar_lea.vmem %s12, 288
        %v2323 = vld [vmem:[%s2322] sm:$0xff]
        %v2324 = vld [vmem:[%s2322 + $0x8] sm:$0xff]
        %v2325 = vld [vmem:[%s2322 + $0x10] sm:$0xff]
        %v2326 = vld [vmem:[%s2322 + $0x18] sm:$0xff]
        %2328 = vset.pattern.permute.xlu0 0
        %2329 = vperm.xlu0 %2328, %v2323
        %v2330 = vpop.permute.xlu0 %2329
        %2333 = vset.pattern.permute.xlu0 0
        %2334 = vperm.xlu0 %2333, %v2324
        %v2335 = vpop.permute.xlu0 %2334
        %2338 = vset.pattern.permute.xlu0 0
        %2339 = vperm.xlu0 %2338, %v2325
        %v2340 = vpop.permute.xlu0 %2339
        %2343 = vset.pattern.permute.xlu0 0
        %2344 = vperm.xlu0 %2343, %v2326
        %v2345 = vpop.permute.xlu0 %2344
        %v2351 = vunpack.c.l.b16 %v2318
        %v2352 = vunpack.c.l.b16 %v2319
        %v2353 = vunpack.c.l.b16 %v2320
        %v2354 = vunpack.c.l.b16 %v2321
        %v2355 = vpack.c.b16 %v2352, %v2351
        %v2356 = vpack.c.b16 %v2354, %v2353
        %v2358 = vsel %vm943, %v2355, 0
        %v2361 = vsel %vm943, %v2356, 0
        %2363 = vmatprep.subr.bf16.mxu0 0
        %2364 = vmatpush1.bf16.msra.mxu0 %v2211
        %2365 = vmatprep.subr.bf16.mxu0 0
        %2366 = vmatpush1.bf16.msra.mxu0 %v2212
        %2367 = vmatprep.subr.bf16.mxu0 0
        %2368 = vmatpush1.bf16.msra.mxu0 %v2213
        %2369 = vmatprep.subr.bf16.mxu0 0
        %2370 = vmatpush1.bf16.msra.mxu0 %v2214
        %2371 = vmatprep.subr.bf16.mxu0 0
        %2372 = vmatpush1.bf16.msra.mxu0 0
        %2373 = vmatprep.subr.bf16.mxu0 0
        %2374 = vmatpush1.bf16.msra.mxu0 0
        %2375 = vmatprep.subr.bf16.mxu0 0
        %2376 = vmatpush1.bf16.msra.mxu0 0
        %2377 = vmatprep.subr.bf16.mxu0 0
        %2378 = vmatpush1.bf16.msra.mxu0 0
        %2379 = vmatprep.subr.bf16.mxu0 0
        %2380 = vmatpush1.bf16.msra.mxu0 0
        %2381 = vmatprep.subr.bf16.mxu0 0
        %2382 = vmatpush1.bf16.msra.mxu0 0
        %2383 = vmatprep.subr.bf16.mxu0 0
        %2384 = vmatpush1.bf16.msra.mxu0 0
        %2385 = vmatprep.subr.bf16.mxu0 0
        %2386 = vmatpush1.bf16.msra.mxu0 0
        %2387 = vmatprep.subr.bf16.mxu0 0
        %2388 = vmatpush1.bf16.msra.mxu0 0
        %2389 = vmatprep.subr.bf16.mxu0 0
        %2390 = vmatpush1.bf16.msra.mxu0 0
        %2391 = vmatprep.subr.bf16.mxu0 0
        %2392 = vmatpush1.bf16.msra.mxu0 0
        %2393 = vmatprep.subr.bf16.mxu0 0
        %2394 = vmatpush1.bf16.msra.mxu0 0
        %2395 = vmatprep.mubr.bf16.mxu0 0
        %2396 = vmatmul.mubr.bf16.gmra.mrb[0].mxu0 %v2358
        %v2397 = vpop.f32.mrb[0].mxu0
        %v2398 = vadd.f32 %v2330, %v2397
        %v2399 = vpop.f32.mrb[0].mxu0
        %v2400 = vpop.f32.mrb[0].mxu0
        %v2401 = vadd.f32 %v2335, %v2400
        %v2402 = vpop.f32.mrb[0].mxu0
        %2403 = vmatprep.mubr.bf16.mxu0 0
        %2404 = vmatmul.mubr.bf16.gmra.mrb[0].mxu0 %v2361
        %v2405 = vpop.f32.mrb[0].mxu0
        %v2406 = vadd.f32 %v2340, %v2405
        %v2407 = vpop.f32.mrb[0].mxu0
        %v2408 = vpop.f32.mrb[0].mxu0
        %v2409 = vadd.f32 %v2345, %v2408
        %v2410 = vpop.f32.mrb[0].mxu0
        %2411 = vdwg.mxu0
        %v2412 = vpack.c.bf16 %v2398, %v2398
        %v2413 = vpack.c.bf16 %v2303, %v2303
        %v2414 = vpack.c.bf16 %v2401, %v2401
        %v2415 = vpack.c.bf16 %v2306, %v2306
        %v2417 = vsel %vm1485, %v2414, 0
        %v2420 = vsel %vm1485, %v2415, 0
        %2422 = vmatprep.subr.bf16.mxu0 0
        %2423 = vmatpush1.bf16.xpose.msra.mxu0 %v2420
        %2424 = vmatprep.subr.bf16.mxu0 0
        %2425 = vmatpush1.bf16.xpose.msra.mxu0 0
        %2426 = vmatprep.subr.bf16.mxu0 0
        %2427 = vmatpush1.bf16.xpose.msra.mxu0 0
        %2428 = vmatprep.subr.bf16.mxu0 0
        %2429 = vmatpush1.bf16.xpose.msra.mxu0 0
        %2430 = vmatprep.subr.bf16.mxu0 0
        %2431 = vmatpush1.bf16.xpose.msra.mxu0 0
        %2432 = vmatprep.subr.bf16.mxu0 0
        %2433 = vmatpush1.bf16.xpose.msra.mxu0 0
        %2434 = vmatprep.subr.bf16.mxu0 0
        %2435 = vmatpush1.bf16.xpose.msra.mxu0 0
        %2436 = vmatprep.subr.bf16.mxu0 0
        %2437 = vmatpush1.bf16.xpose.msra.mxu0 0
        %2438 = vmatprep.subr.bf16.mxu0 0
        %2439 = vmatpush1.bf16.xpose.msra.mxu0 0
        %2440 = vmatprep.subr.bf16.mxu0 0
        %2441 = vmatpush1.bf16.xpose.msra.mxu0 0
        %2442 = vmatprep.subr.bf16.mxu0 0
        %2443 = vmatpush1.bf16.xpose.msra.mxu0 0
        %2444 = vmatprep.subr.bf16.mxu0 0
        %2445 = vmatpush1.bf16.xpose.msra.mxu0 0
        %2446 = vmatprep.subr.bf16.mxu0 0
        %2447 = vmatpush1.bf16.xpose.msra.mxu0 0
        %2448 = vmatprep.subr.bf16.mxu0 0
        %2449 = vmatpush1.bf16.xpose.msra.mxu0 0
        %2450 = vmatprep.subr.bf16.mxu0 0
        %2451 = vmatpush1.bf16.xpose.msra.mxu0 0
        %2452 = vmatprep.subr.bf16.mxu0 0
        %2453 = vmatpush1.bf16.xpose.msra.mxu0 0
        %2454 = vmatprep.mubr.bf16.mxu0 0
        %2455 = vmatmul.mubr.bf16.gmra.mrb[0].mxu0 %v2417
        %v2456 = vpop.f32.mrb[0].mxu0
        %v2457 = vadd.f32 0.0, %v2456
        %v2458 = vpop.f32.mrb[0].mxu0
        %v2459 = vpop.f32.mrb[0].mxu0
        %v2460 = vpop.f32.mrb[0].mxu0
        %2461 = vdwg.mxu0
        %v2463 = vsel %vm1485, %v2412, 0
        %v2466 = vsel %vm1485, %v2413, 0
        %2468 = vmatprep.subr.bf16.mxu0 0
        %2469 = vmatpush1.bf16.xpose.msra.mxu0 %v2466
        %2470 = vmatprep.subr.bf16.mxu0 0
        %2471 = vmatpush1.bf16.xpose.msra.mxu0 0
        %2472 = vmatprep.subr.bf16.mxu0 0
        %2473 = vmatpush1.bf16.xpose.msra.mxu0 0
        %2474 = vmatprep.subr.bf16.mxu0 0
        %2475 = vmatpush1.bf16.xpose.msra.mxu0 0
        %2476 = vmatprep.subr.bf16.mxu0 0
        %2477 = vmatpush1.bf16.xpose.msra.mxu0 0
        %2478 = vmatprep.subr.bf16.mxu0 0
        %2479 = vmatpush1.bf16.xpose.msra.mxu0 0
        %2480 = vmatprep.subr.bf16.mxu0 0
        %2481 = vmatpush1.bf16.xpose.msra.mxu0 0
        %2482 = vmatprep.subr.bf16.mxu0 0
        %2483 = vmatpush1.bf16.xpose.msra.mxu0 0
        %2484 = vmatprep.subr.bf16.mxu0 0
        %2485 = vmatpush1.bf16.xpose.msra.mxu0 0
        %2486 = vmatprep.subr.bf16.mxu0 0
        %2487 = vmatpush1.bf16.xpose.msra.mxu0 0
        %2488 = vmatprep.subr.bf16.mxu0 0
        %2489 = vmatpush1.bf16.xpose.msra.mxu0 0
        %2490 = vmatprep.subr.bf16.mxu0 0
        %2491 = vmatpush1.bf16.xpose.msra.mxu0 0
        %2492 = vmatprep.subr.bf16.mxu0 0
        %2493 = vmatpush1.bf16.xpose.msra.mxu0 0
        %2494 = vmatprep.subr.bf16.mxu0 0
        %2495 = vmatpush1.bf16.xpose.msra.mxu0 0
        %2496 = vmatprep.subr.bf16.mxu0 0
        %2497 = vmatpush1.bf16.xpose.msra.mxu0 0
        %2498 = vmatprep.subr.bf16.mxu0 0
        %2499 = vmatpush1.bf16.xpose.msra.mxu0 0
        %2500 = vmatprep.mubr.bf16.mxu0 0
        %2501 = vmatmul.mubr.bf16.gmra.mrb[0].mxu0 %v2463
        %v2502 = vpop.f32.mrb[0].mxu0
        %v2503 = vadd.f32 %v2457, %v2502
        %v2504 = vpop.f32.mrb[0].mxu0
        %v2505 = vpop.f32.mrb[0].mxu0
        %v2506 = vpop.f32.mrb[0].mxu0
        %2507 = vdwg.mxu0
        %v2508 = vpack.c.bf16 %v2406, %v2406
        %v2509 = vpack.c.bf16 %v2311, %v2311
        %v2511 = vsel %vm1485, %v2508, 0
        %v2514 = vsel %vm1485, %v2509, 0
        %2516 = vmatprep.subr.bf16.mxu0 0
        %2517 = vmatpush1.bf16.xpose.msra.mxu0 %v2514
        %2518 = vmatprep.subr.bf16.mxu0 0
        %2519 = vmatpush1.bf16.xpose.msra.mxu0 0
        %2520 = vmatprep.subr.bf16.mxu0 0
        %2521 = vmatpush1.bf16.xpose.msra.mxu0 0
        %2522 = vmatprep.subr.bf16.mxu0 0
        %2523 = vmatpush1.bf16.xpose.msra.mxu0 0
        %2524 = vmatprep.subr.bf16.mxu0 0
        %2525 = vmatpush1.bf16.xpose.msra.mxu0 0
        %2526 = vmatprep.subr.bf16.mxu0 0
        %2527 = vmatpush1.bf16.xpose.msra.mxu0 0
        %2528 = vmatprep.subr.bf16.mxu0 0
        %2529 = vmatpush1.bf16.xpose.msra.mxu0 0
        %2530 = vmatprep.subr.bf16.mxu0 0
        %2531 = vmatpush1.bf16.xpose.msra.mxu0 0
        %2532 = vmatprep.subr.bf16.mxu0 0
        %2533 = vmatpush1.bf16.xpose.msra.mxu0 0
        %2534 = vmatprep.subr.bf16.mxu0 0
        %2535 = vmatpush1.bf16.xpose.msra.mxu0 0
        %2536 = vmatprep.subr.bf16.mxu0 0
        %2537 = vmatpush1.bf16.xpose.msra.mxu0 0
        %2538 = vmatprep.subr.bf16.mxu0 0
        %2539 = vmatpush1.bf16.xpose.msra.mxu0 0
        %2540 = vmatprep.subr.bf16.mxu0 0
        %2541 = vmatpush1.bf16.xpose.msra.mxu0 0
        %2542 = vmatprep.subr.bf16.mxu0 0
        %2543 = vmatpush1.bf16.xpose.msra.mxu0 0
        %2544 = vmatprep.subr.bf16.mxu0 0
        %2545 = vmatpush1.bf16.xpose.msra.mxu0 0
        %2546 = vmatprep.subr.bf16.mxu0 0
        %2547 = vmatpush1.bf16.xpose.msra.mxu0 0
        %2548 = vmatprep.mubr.bf16.mxu0 0
        %2549 = vmatmul.mubr.bf16.gmra.mrb[0].mxu0 %v2511
        %v2550 = vpop.f32.mrb[0].mxu0
        %v2551 = vadd.f32 0.0, %v2550
        %v2552 = vpop.f32.mrb[0].mxu0
        %v2553 = vpop.f32.mrb[0].mxu0
        %v2554 = vpop.f32.mrb[0].mxu0
        %2555 = vdwg.mxu0
        %v2556 = vadd.f32 %v2503, %v2551
        %v2557 = vpack.c.bf16 %v2409, %v2409
        %v2558 = vpack.c.bf16 %v2314, %v2314
        %v2560 = vsel %vm1485, %v2557, 0
        %v2563 = vsel %vm1485, %v2558, 0
        %2565 = vmatprep.subr.bf16.mxu0 0
        %2566 = vmatpush1.bf16.xpose.msra.mxu0 %v2563
        %2567 = vmatprep.subr.bf16.mxu0 0
        %2568 = vmatpush1.bf16.xpose.msra.mxu0 0
        %2569 = vmatprep.subr.bf16.mxu0 0
        %2570 = vmatpush1.bf16.xpose.msra.mxu0 0
        %2571 = vmatprep.subr.bf16.mxu0 0
        %2572 = vmatpush1.bf16.xpose.msra.mxu0 0
        %2573 = vmatprep.subr.bf16.mxu0 0
        %2574 = vmatpush1.bf16.xpose.msra.mxu0 0
        %2575 = vmatprep.subr.bf16.mxu0 0
        %2576 = vmatpush1.bf16.xpose.msra.mxu0 0
        %2577 = vmatprep.subr.bf16.mxu0 0
        %2578 = vmatpush1.bf16.xpose.msra.mxu0 0
        %2579 = vmatprep.subr.bf16.mxu0 0
        %2580 = vmatpush1.bf16.xpose.msra.mxu0 0
        %2581 = vmatprep.subr.bf16.mxu0 0
        %2582 = vmatpush1.bf16.xpose.msra.mxu0 0
        %2583 = vmatprep.subr.bf16.mxu0 0
        %2584 = vmatpush1.bf16.xpose.msra.mxu0 0
        %2585 = vmatprep.subr.bf16.mxu0 0
        %2586 = vmatpush1.bf16.xpose.msra.mxu0 0
        %2587 = vmatprep.subr.bf16.mxu0 0
        %2588 = vmatpush1.bf16.xpose.msra.mxu0 0
        %2589 = vmatprep.subr.bf16.mxu0 0
        %2590 = vmatpush1.bf16.xpose.msra.mxu0 0
        %2591 = vmatprep.subr.bf16.mxu0 0
        %2592 = vmatpush1.bf16.xpose.msra.mxu0 0
        %2593 = vmatprep.subr.bf16.mxu0 0
        %2594 = vmatpush1.bf16.xpose.msra.mxu0 0
        %2595 = vmatprep.subr.bf16.mxu0 0
        %2596 = vmatpush1.bf16.xpose.msra.mxu0 0
        %2597 = vmatprep.mubr.bf16.mxu0 0
        %2598 = vmatmul.mubr.bf16.gmra.mrb[0].mxu0 %v2560
        %v2599 = vpop.f32.mrb[0].mxu0
        %v2600 = vadd.f32 0.0, %v2599
        %v2601 = vpop.f32.mrb[0].mxu0
        %v2602 = vpop.f32.mrb[0].mxu0
        %v2603 = vpop.f32.mrb[0].mxu0
        %2604 = vdwg.mxu0
        %v2605 = vadd.f32 %v2556, %v2600
        %v2606 = vld [vmem:[%s13] sm:$0xff]
        %v2607 = vmul.f32 %v2605, %v2606
        %vm2608 = vcmask 64512
        %v2610 = vsel %vm2608, %v2215, 0
        %v2613 = vsel %vm2608, %v2216, 0
        %v2616 = vsel %vm2608, %v2217, 0
        %v2619 = vsel %vm2608, %v2218, 0
        %v2622 = vsel %vm2608, %v2219, 0
        %v2625 = vsel %vm2608, %v2220, 0
        %v2628 = vsel %vm2608, %v2221, 0
        %v2631 = vsel %vm2608, %v2222, 0
        %2633 = vmatprep.subr.mxu0 0.0
        %2634 = vmatpush1.msra.mxu0 %v2607
        %2635 = vmatprep.subr.mxu0 0.0
        %2636 = vmatpush1.msra.mxu0 0.0
        %2637 = vmatprep.subr.mxu0 0.0
        %2638 = vmatpush1.msra.mxu0 0.0
        %2639 = vmatprep.subr.mxu0 0.0
        %2640 = vmatpush1.msra.mxu0 0.0
        %2641 = vmatprep.subr.mxu0 0.0
        %2642 = vmatpush1.msra.mxu0 0.0
        %2643 = vmatprep.subr.mxu0 0.0
        %2644 = vmatpush1.msra.mxu0 0.0
        %2645 = vmatprep.subr.mxu0 0.0
        %2646 = vmatpush1.msra.mxu0 0.0
        %2647 = vmatprep.subr.mxu0 0.0
        %2648 = vmatpush1.msra.mxu0 0.0
        %2649 = vmatprep.subr.mxu0 0.0
        %2650 = vmatpush1.msra.mxu0 0.0
        %2651 = vmatprep.subr.mxu0 0.0
        %2652 = vmatpush1.msra.mxu0 0.0
        %2653 = vmatprep.subr.mxu0 0.0
        %2654 = vmatpush1.msra.mxu0 0.0
        %2655 = vmatprep.subr.mxu0 0.0
        %2656 = vmatpush1.msra.mxu0 0.0
        %2657 = vmatprep.subr.mxu0 0.0
        %2658 = vmatpush1.msra.mxu0 0.0
        %2659 = vmatprep.subr.mxu0 0.0
        %2660 = vmatpush1.msra.mxu0 0.0
        %2661 = vmatprep.subr.mxu0 0.0
        %2662 = vmatpush1.msra.mxu0 0.0
        %2663 = vmatprep.subr.mxu0 0.0
        %2664 = vmatpush1.msra.mxu0 0.0
        %2665 = vmatprep.subr.mxu0 0.0
        %2666 = vmatpush1.msra.mxu0 0.0
        %2667 = vmatprep.subr.mxu0 0.0
        %2668 = vmatpush1.msra.mxu0 0.0
        %2669 = vmatprep.subr.mxu0 0.0
        %2670 = vmatpush1.msra.mxu0 0.0
        %2671 = vmatprep.subr.mxu0 0.0
        %2672 = vmatpush1.msra.mxu0 0.0
        %2673 = vmatprep.subr.mxu0 0.0
        %2674 = vmatpush1.msra.mxu0 0.0
        %2675 = vmatprep.subr.mxu0 0.0
        %2676 = vmatpush1.msra.mxu0 0.0
        %2677 = vmatprep.subr.mxu0 0.0
        %2678 = vmatpush1.msra.mxu0 0.0
        %2679 = vmatprep.subr.mxu0 0.0
        %2680 = vmatpush1.msra.mxu0 0.0
        %2681 = vmatprep.subr.mxu0 0.0
        %2682 = vmatpush1.msra.mxu0 0.0
        %2683 = vmatprep.subr.mxu0 0.0
        %2684 = vmatpush1.msra.mxu0 0.0
        %2685 = vmatprep.subr.mxu0 0.0
        %2686 = vmatpush1.msra.mxu0 0.0
        %2687 = vmatprep.subr.mxu0 0.0
        %2688 = vmatpush1.msra.mxu0 0.0
        %2689 = vmatprep.subr.mxu0 0.0
        %2690 = vmatpush1.msra.mxu0 0.0
        %2691 = vmatprep.subr.mxu0 0.0
        %2692 = vmatpush1.msra.mxu0 0.0
        %2693 = vmatprep.subr.mxu0 0.0
        %2694 = vmatpush1.msra.mxu0 0.0
        %2695 = vmatprep.subr.mxu0 0.0
        %2696 = vmatpush1.msra.mxu0 0.0
        %2697 = vmatprep.mubr.f32.mxu0 0.0
        %2698 = vmatmul.mubr.f32.gmra.mrb[0].mxu0 %v2610
        %v2699 = vpop.f32.mrb[0].mxu0
        %v2700 = vadd.f32 0.0, %v2699
        %v2701 = vpop.f32.mrb[0].mxu0
        %2702 = vmatprep.mubr.f32.mxu0 0.0
        %2703 = vmatmul.mubr.f32.gmra.mrb[0].mxu0 %v2613
        %v2704 = vpop.f32.mrb[0].mxu0
        %v2705 = vadd.f32 0.0, %v2704
        %v2706 = vpop.f32.mrb[0].mxu0
        %2707 = vmatprep.mubr.f32.mxu0 0.0
        %2708 = vmatmul.mubr.f32.gmra.mrb[0].mxu0 %v2616
        %v2709 = vpop.f32.mrb[0].mxu0
        %v2710 = vadd.f32 0.0, %v2709
        %v2711 = vpop.f32.mrb[0].mxu0
        %2712 = vmatprep.mubr.f32.mxu0 0.0
        %2713 = vmatmul.mubr.f32.gmra.mrb[0].mxu0 %v2619
        %v2714 = vpop.f32.mrb[0].mxu0
        %v2715 = vadd.f32 0.0, %v2714
        %v2716 = vpop.f32.mrb[0].mxu0
        %2717 = vmatprep.mubr.f32.mxu0 0.0
        %2718 = vmatmul.mubr.f32.gmra.mrb[0].mxu0 %v2622
        %v2719 = vpop.f32.mrb[0].mxu0
        %v2720 = vadd.f32 0.0, %v2719
        %v2721 = vpop.f32.mrb[0].mxu0
        %2722 = vmatprep.mubr.f32.mxu0 0.0
        %2723 = vmatmul.mubr.f32.gmra.mrb[0].mxu0 %v2625
        %v2724 = vpop.f32.mrb[0].mxu0
        %v2725 = vadd.f32 0.0, %v2724
        %v2726 = vpop.f32.mrb[0].mxu0
        %2727 = vmatprep.mubr.f32.mxu0 0.0
        %2728 = vmatmul.mubr.f32.gmra.mrb[0].mxu0 %v2628
        %v2729 = vpop.f32.mrb[0].mxu0
        %v2730 = vadd.f32 0.0, %v2729
        %v2731 = vpop.f32.mrb[0].mxu0
        %2732 = vmatprep.mubr.f32.mxu0 0.0
        %2733 = vmatmul.mubr.f32.gmra.mrb[0].mxu0 %v2631
        %v2734 = vpop.f32.mrb[0].mxu0
        %v2735 = vadd.f32 0.0, %v2734
        %v2736 = vpop.f32.mrb[0].mxu0
        %2737 = vdwg.mxu0
        %v2739 = vsel %vm2608, %v2700, 0
        %v2742 = vsel %vm2608, %v2705, 0
        %v2745 = vsel %vm2608, %v2710, 0
        %v2748 = vsel %vm2608, %v2715, 0
        %v2751 = vsel %vm2608, %v2720, 0
        %v2754 = vsel %vm2608, %v2725, 0
        %v2757 = vsel %vm2608, %v2730, 0
        %v2760 = vsel %vm2608, %v2735, 0
        %2762 = vmatprep.subr.mxu0 0.0
        %2763 = vmatpush1.msra.mxu0 %v2223
        %2764 = vmatprep.subr.mxu0 0.0
        %2765 = vmatpush1.msra.mxu0 0.0
        %2766 = vmatprep.subr.mxu0 0.0
        %2767 = vmatpush1.msra.mxu0 0.0
        %2768 = vmatprep.subr.mxu0 0.0
        %2769 = vmatpush1.msra.mxu0 0.0
        %2770 = vmatprep.subr.mxu0 0.0
        %2771 = vmatpush1.msra.mxu0 0.0
        %2772 = vmatprep.subr.mxu0 0.0
        %2773 = vmatpush1.msra.mxu0 0.0
        %2774 = vmatprep.subr.mxu0 0.0
        %2775 = vmatpush1.msra.mxu0 0.0
        %2776 = vmatprep.subr.mxu0 0.0
        %2777 = vmatpush1.msra.mxu0 0.0
        %2778 = vmatprep.subr.mxu0 0.0
        %2779 = vmatpush1.msra.mxu0 0.0
        %2780 = vmatprep.subr.mxu0 0.0
        %2781 = vmatpush1.msra.mxu0 0.0
        %2782 = vmatprep.subr.mxu0 0.0
        %2783 = vmatpush1.msra.mxu0 0.0
        %2784 = vmatprep.subr.mxu0 0.0
        %2785 = vmatpush1.msra.mxu0 0.0
        %2786 = vmatprep.subr.mxu0 0.0
        %2787 = vmatpush1.msra.mxu0 0.0
        %2788 = vmatprep.subr.mxu0 0.0
        %2789 = vmatpush1.msra.mxu0 0.0
        %2790 = vmatprep.subr.mxu0 0.0
        %2791 = vmatpush1.msra.mxu0 0.0
        %2792 = vmatprep.subr.mxu0 0.0
        %2793 = vmatpush1.msra.mxu0 0.0
        %2794 = vmatprep.subr.mxu0 0.0
        %2795 = vmatpush1.msra.mxu0 0.0
        %2796 = vmatprep.subr.mxu0 0.0
        %2797 = vmatpush1.msra.mxu0 0.0
        %2798 = vmatprep.subr.mxu0 0.0
        %2799 = vmatpush1.msra.mxu0 0.0
        %2800 = vmatprep.subr.mxu0 0.0
        %2801 = vmatpush1.msra.mxu0 0.0
        %2802 = vmatprep.subr.mxu0 0.0
        %2803 = vmatpush1.msra.mxu0 0.0
        %2804 = vmatprep.subr.mxu0 0.0
        %2805 = vmatpush1.msra.mxu0 0.0
        %2806 = vmatprep.subr.mxu0 0.0
        %2807 = vmatpush1.msra.mxu0 0.0
        %2808 = vmatprep.subr.mxu0 0.0
        %2809 = vmatpush1.msra.mxu0 0.0
        %2810 = vmatprep.subr.mxu0 0.0
        %2811 = vmatpush1.msra.mxu0 0.0
        %2812 = vmatprep.subr.mxu0 0.0
        %2813 = vmatpush1.msra.mxu0 0.0
        %2814 = vmatprep.subr.mxu0 0.0
        %2815 = vmatpush1.msra.mxu0 0.0
        %2816 = vmatprep.subr.mxu0 0.0
        %2817 = vmatpush1.msra.mxu0 0.0
        %2818 = vmatprep.subr.mxu0 0.0
        %2819 = vmatpush1.msra.mxu0 0.0
        %2820 = vmatprep.subr.mxu0 0.0
        %2821 = vmatpush1.msra.mxu0 0.0
        %2822 = vmatprep.subr.mxu0 0.0
        %2823 = vmatpush1.msra.mxu0 0.0
        %2824 = vmatprep.subr.mxu0 0.0
        %2825 = vmatpush1.msra.mxu0 0.0
        %2826 = vmatprep.mubr.f32.mxu0 0.0
        %2827 = vmatmul.mubr.f32.gmra.mrb[0].mxu0 %v2739
        %v2828 = vpop.f32.mrb[0].mxu0
        %v2829 = vadd.f32 0.0, %v2828
        %v2830 = vpop.f32.mrb[0].mxu0
        %2831 = vmatprep.mubr.f32.mxu0 0.0
        %2832 = vmatmul.mubr.f32.gmra.mrb[0].mxu0 %v2742
        %v2833 = vpop.f32.mrb[0].mxu0
        %v2834 = vadd.f32 0.0, %v2833
        %v2835 = vpop.f32.mrb[0].mxu0
        %2836 = vmatprep.mubr.f32.mxu0 0.0
        %2837 = vmatmul.mubr.f32.gmra.mrb[0].mxu0 %v2745
        %v2838 = vpop.f32.mrb[0].mxu0
        %v2839 = vadd.f32 0.0, %v2838
        %v2840 = vpop.f32.mrb[0].mxu0
        %2841 = vmatprep.mubr.f32.mxu0 0.0
        %2842 = vmatmul.mubr.f32.gmra.mrb[0].mxu0 %v2748
        %v2843 = vpop.f32.mrb[0].mxu0
        %v2844 = vadd.f32 0.0, %v2843
        %v2845 = vpop.f32.mrb[0].mxu0
        %2846 = vmatprep.mubr.f32.mxu0 0.0
        %2847 = vmatmul.mubr.f32.gmra.mrb[0].mxu0 %v2751
        %v2848 = vpop.f32.mrb[0].mxu0
        %v2849 = vadd.f32 0.0, %v2848
        %v2850 = vpop.f32.mrb[0].mxu0
        %2851 = vmatprep.mubr.f32.mxu0 0.0
        %2852 = vmatmul.mubr.f32.gmra.mrb[0].mxu0 %v2754
        %v2853 = vpop.f32.mrb[0].mxu0
        %v2854 = vadd.f32 0.0, %v2853
        %v2855 = vpop.f32.mrb[0].mxu0
        %2856 = vmatprep.mubr.f32.mxu0 0.0
        %2857 = vmatmul.mubr.f32.gmra.mrb[0].mxu0 %v2757
        %v2858 = vpop.f32.mrb[0].mxu0
        %v2859 = vadd.f32 0.0, %v2858
        %v2860 = vpop.f32.mrb[0].mxu0
        %2861 = vmatprep.mubr.f32.mxu0 0.0
        %2862 = vmatmul.mubr.f32.gmra.mrb[0].mxu0 %v2760
        %v2863 = vpop.f32.mrb[0].mxu0
        %v2864 = vadd.f32 0.0, %v2863
        %v2865 = vpop.f32.mrb[0].mxu0
        %2866 = vdwg.mxu0
        %v2867 = vld [vmem:[%s14] sm:$0xff]
        %v2868 = vld [vmem:[%s14 + $0x8] sm:$0xff]
        %v2869 = vld [vmem:[%s14 + $0x10] sm:$0xff]
        %v2870 = vld [vmem:[%s14 + $0x18] sm:$0xff]
        %v2871 = vld [vmem:[%s14 + $0x20] sm:$0xff]
        %v2872 = vld [vmem:[%s14 + $0x28] sm:$0xff]
        %v2873 = vld [vmem:[%s14 + $0x30] sm:$0xff]
        %v2874 = vld [vmem:[%s14 + $0x38] sm:$0xff]
        %v2875 = vmul.f32 %v2867, %v2829
        %v2876 = vmul.f32 %v2868, %v2834
        %v2877 = vmul.f32 %v2869, %v2839
        %v2878 = vmul.f32 %v2870, %v2844
        %v2879 = vmul.f32 %v2871, %v2849
        %v2880 = vmul.f32 %v2872, %v2854
        %v2881 = vmul.f32 %v2873, %v2859
        %v2882 = vmul.f32 %v2874, %v2864
        %v2883 = vpack.c.bf16 %v2876, %v2875
        %v2884 = vpack.c.bf16 %v2878, %v2877
        %v2885 = vpack.c.bf16 %v2880, %v2879
        %v2886 = vpack.c.bf16 %v2882, %v2881
        %s2887 = scalar_lea.vmem %s11, 16
        %v2888 = vld [vmem:[%s2887] sm:$0xf]
        %v2889 = vld [vmem:[%s2887 + $0x4] sm:$0xf]
        %v2890 = vld [vmem:[%s2887 + $0x8] sm:$0xf]
        %v2891 = vld [vmem:[%s2887 + $0xc] sm:$0xf]
        %s2892 = scalar_lea.vmem %s12, 32
        %v2893 = vld [vmem:[%s2892] sm:$0xff]
        %v2894 = vld [vmem:[%s2892 + $0x8] sm:$0xff]
        %v2895 = vld [vmem:[%s2892 + $0x10] sm:$0xff]
        %v2896 = vld [vmem:[%s2892 + $0x18] sm:$0xff]
        %2898 = vset.pattern.permute.xlu0 0
        %2899 = vperm.xlu0 %2898, %v2893
        %v2900 = vpop.permute.xlu0 %2899
        %2903 = vset.pattern.permute.xlu0 0
        %2904 = vperm.xlu0 %2903, %v2894
        %v2905 = vpop.permute.xlu0 %2904
        %2908 = vset.pattern.permute.xlu0 0
        %2909 = vperm.xlu0 %2908, %v2895
        %v2910 = vpop.permute.xlu0 %2909
        %2913 = vset.pattern.permute.xlu0 0
        %2914 = vperm.xlu0 %2913, %v2896
        %v2915 = vpop.permute.xlu0 %2914
        %v2921 = vunpack.c.l.b16 %v2888
        %v2922 = vunpack.c.l.b16 %v2889
        %v2923 = vunpack.c.l.b16 %v2890
        %v2924 = vunpack.c.l.b16 %v2891
        %v2925 = vpack.c.b16 %v2922, %v2921
        %v2926 = vpack.c.b16 %v2924, %v2923
        %v2928 = vsel %vm943, %v2925, 0
        %v2931 = vsel %vm943, %v2926, 0
        %2933 = vmatprep.subr.bf16.mxu0 0
        %2934 = vmatpush1.bf16.msra.mxu0 %v2211
        %2935 = vmatprep.subr.bf16.mxu0 0
        %2936 = vmatpush1.bf16.msra.mxu0 %v2212
        %2937 = vmatprep.subr.bf16.mxu0 0
        %2938 = vmatpush1.bf16.msra.mxu0 %v2213
        %2939 = vmatprep.subr.bf16.mxu0 0
        %2940 = vmatpush1.bf16.msra.mxu0 %v2214
        %2941 = vmatprep.subr.bf16.mxu0 0
        %2942 = vmatpush1.bf16.msra.mxu0 0
        %2943 = vmatprep.subr.bf16.mxu0 0
        %2944 = vmatpush1.bf16.msra.mxu0 0
        %2945 = vmatprep.subr.bf16.mxu0 0
        %2946 = vmatpush1.bf16.msra.mxu0 0
        %2947 = vmatprep.subr.bf16.mxu0 0
        %2948 = vmatpush1.bf16.msra.mxu0 0
        %2949 = vmatprep.subr.bf16.mxu0 0
        %2950 = vmatpush1.bf16.msra.mxu0 0
        %2951 = vmatprep.subr.bf16.mxu0 0
        %2952 = vmatpush1.bf16.msra.mxu0 0
        %2953 = vmatprep.subr.bf16.mxu0 0
        %2954 = vmatpush1.bf16.msra.mxu0 0
        %2955 = vmatprep.subr.bf16.mxu0 0
        %2956 = vmatpush1.bf16.msra.mxu0 0
        %2957 = vmatprep.subr.bf16.mxu0 0
        %2958 = vmatpush1.bf16.msra.mxu0 0
        %2959 = vmatprep.subr.bf16.mxu0 0
        %2960 = vmatpush1.bf16.msra.mxu0 0
        %2961 = vmatprep.subr.bf16.mxu0 0
        %2962 = vmatpush1.bf16.msra.mxu0 0
        %2963 = vmatprep.subr.bf16.mxu0 0
        %2964 = vmatpush1.bf16.msra.mxu0 0
        %2965 = vmatprep.mubr.bf16.mxu0 0
        %2966 = vmatmul.mubr.bf16.gmra.mrb[0].mxu0 %v2928
        %v2967 = vpop.f32.mrb[0].mxu0
        %v2968 = vadd.f32 %v2900, %v2967
        %v2969 = vpop.f32.mrb[0].mxu0
        %v2970 = vpop.f32.mrb[0].mxu0
        %v2971 = vadd.f32 %v2905, %v2970
        %v2972 = vpop.f32.mrb[0].mxu0
        %2973 = vmatprep.mubr.bf16.mxu0 0
        %2974 = vmatmul.mubr.bf16.gmra.mrb[0].mxu0 %v2931
        %v2975 = vpop.f32.mrb[0].mxu0
        %v2976 = vadd.f32 %v2910, %v2975
        %v2977 = vpop.f32.mrb[0].mxu0
        %v2978 = vpop.f32.mrb[0].mxu0
        %v2979 = vadd.f32 %v2915, %v2978
        %v2980 = vpop.f32.mrb[0].mxu0
        %2981 = vdwg.mxu0
        %s2982 = scalar_lea.vmem %s11, 160
        %v2983 = vld [vmem:[%s2982] sm:$0xf]
        %v2984 = vld [vmem:[%s2982 + $0x4] sm:$0xf]
        %v2985 = vld [vmem:[%s2982 + $0x8] sm:$0xf]
        %v2986 = vld [vmem:[%s2982 + $0xc] sm:$0xf]
        %s2987 = scalar_lea.vmem %s12, 320
        %v2988 = vld [vmem:[%s2987] sm:$0xff]
        %v2989 = vld [vmem:[%s2987 + $0x8] sm:$0xff]
        %v2990 = vld [vmem:[%s2987 + $0x10] sm:$0xff]
        %v2991 = vld [vmem:[%s2987 + $0x18] sm:$0xff]
        %2993 = vset.pattern.permute.xlu0 0
        %2994 = vperm.xlu0 %2993, %v2988
        %v2995 = vpop.permute.xlu0 %2994
        %2998 = vset.pattern.permute.xlu0 0
        %2999 = vperm.xlu0 %2998, %v2989
        %v3000 = vpop.permute.xlu0 %2999
        %3003 = vset.pattern.permute.xlu0 0
        %3004 = vperm.xlu0 %3003, %v2990
        %v3005 = vpop.permute.xlu0 %3004
        %3008 = vset.pattern.permute.xlu0 0
        %3009 = vperm.xlu0 %3008, %v2991
        %v3010 = vpop.permute.xlu0 %3009
        %v3016 = vunpack.c.l.b16 %v2983
        %v3017 = vunpack.c.l.b16 %v2984
        %v3018 = vunpack.c.l.b16 %v2985
        %v3019 = vunpack.c.l.b16 %v2986
        %v3020 = vpack.c.b16 %v3017, %v3016
        %v3021 = vpack.c.b16 %v3019, %v3018
        %v3023 = vsel %vm943, %v3020, 0
        %v3026 = vsel %vm943, %v3021, 0
        %3028 = vmatprep.subr.bf16.mxu0 0
        %3029 = vmatpush1.bf16.msra.mxu0 %v2211
        %3030 = vmatprep.subr.bf16.mxu0 0
        %3031 = vmatpush1.bf16.msra.mxu0 %v2212
        %3032 = vmatprep.subr.bf16.mxu0 0
        %3033 = vmatpush1.bf16.msra.mxu0 %v2213
        %3034 = vmatprep.subr.bf16.mxu0 0
        %3035 = vmatpush1.bf16.msra.mxu0 %v2214
        %3036 = vmatprep.subr.bf16.mxu0 0
        %3037 = vmatpush1.bf16.msra.mxu0 0
        %3038 = vmatprep.subr.bf16.mxu0 0
        %3039 = vmatpush1.bf16.msra.mxu0 0
        %3040 = vmatprep.subr.bf16.mxu0 0
        %3041 = vmatpush1.bf16.msra.mxu0 0
        %3042 = vmatprep.subr.bf16.mxu0 0
        %3043 = vmatpush1.bf16.msra.mxu0 0
        %3044 = vmatprep.subr.bf16.mxu0 0
        %3045 = vmatpush1.bf16.msra.mxu0 0
        %3046 = vmatprep.subr.bf16.mxu0 0
        %3047 = vmatpush1.bf16.msra.mxu0 0
        %3048 = vmatprep.subr.bf16.mxu0 0
        %3049 = vmatpush1.bf16.msra.mxu0 0
        %3050 = vmatprep.subr.bf16.mxu0 0
        %3051 = vmatpush1.bf16.msra.mxu0 0
        %3052 = vmatprep.subr.bf16.mxu0 0
        %3053 = vmatpush1.bf16.msra.mxu0 0
        %3054 = vmatprep.subr.bf16.mxu0 0
        %3055 = vmatpush1.bf16.msra.mxu0 0
        %3056 = vmatprep.subr.bf16.mxu0 0
        %3057 = vmatpush1.bf16.msra.mxu0 0
        %3058 = vmatprep.subr.bf16.mxu0 0
        %3059 = vmatpush1.bf16.msra.mxu0 0
        %3060 = vmatprep.mubr.bf16.mxu0 0
        %3061 = vmatmul.mubr.bf16.gmra.mrb[0].mxu0 %v3023
        %v3062 = vpop.f32.mrb[0].mxu0
        %v3063 = vadd.f32 %v2995, %v3062
        %v3064 = vpop.f32.mrb[0].mxu0
        %v3065 = vpop.f32.mrb[0].mxu0
        %v3066 = vadd.f32 %v3000, %v3065
        %v3067 = vpop.f32.mrb[0].mxu0
        %3068 = vmatprep.mubr.bf16.mxu0 0
        %3069 = vmatmul.mubr.bf16.gmra.mrb[0].mxu0 %v3026
        %v3070 = vpop.f32.mrb[0].mxu0
        %v3071 = vadd.f32 %v3005, %v3070
        %v3072 = vpop.f32.mrb[0].mxu0
        %v3073 = vpop.f32.mrb[0].mxu0
        %v3074 = vadd.f32 %v3010, %v3073
        %v3075 = vpop.f32.mrb[0].mxu0
        %3076 = vdwg.mxu0
        %v3077 = vpack.c.bf16 %v3063, %v3063
        %v3078 = vpack.c.bf16 %v2968, %v2968
        %v3079 = vpack.c.bf16 %v3066, %v3066
        %v3080 = vpack.c.bf16 %v2971, %v2971
        %v3082 = vsel %vm1485, %v3079, 0
        %v3085 = vsel %vm1485, %v3080, 0
        %3087 = vmatprep.subr.bf16.mxu0 0
        %3088 = vmatpush1.bf16.xpose.msra.mxu0 %v3085
        %3089 = vmatprep.subr.bf16.mxu0 0
        %3090 = vmatpush1.bf16.xpose.msra.mxu0 0
        %3091 = vmatprep.subr.bf16.mxu0 0
        %3092 = vmatpush1.bf16.xpose.msra.mxu0 0
        %3093 = vmatprep.subr.bf16.mxu0 0
        %3094 = vmatpush1.bf16.xpose.msra.mxu0 0
        %3095 = vmatprep.subr.bf16.mxu0 0
        %3096 = vmatpush1.bf16.xpose.msra.mxu0 0
        %3097 = vmatprep.subr.bf16.mxu0 0
        %3098 = vmatpush1.bf16.xpose.msra.mxu0 0
        %3099 = vmatprep.subr.bf16.mxu0 0
        %3100 = vmatpush1.bf16.xpose.msra.mxu0 0
        %3101 = vmatprep.subr.bf16.mxu0 0
        %3102 = vmatpush1.bf16.xpose.msra.mxu0 0
        %3103 = vmatprep.subr.bf16.mxu0 0
        %3104 = vmatpush1.bf16.xpose.msra.mxu0 0
        %3105 = vmatprep.subr.bf16.mxu0 0
        %3106 = vmatpush1.bf16.xpose.msra.mxu0 0
        %3107 = vmatprep.subr.bf16.mxu0 0
        %3108 = vmatpush1.bf16.xpose.msra.mxu0 0
        %3109 = vmatprep.subr.bf16.mxu0 0
        %3110 = vmatpush1.bf16.xpose.msra.mxu0 0
        %3111 = vmatprep.subr.bf16.mxu0 0
        %3112 = vmatpush1.bf16.xpose.msra.mxu0 0
        %3113 = vmatprep.subr.bf16.mxu0 0
        %3114 = vmatpush1.bf16.xpose.msra.mxu0 0
        %3115 = vmatprep.subr.bf16.mxu0 0
        %3116 = vmatpush1.bf16.xpose.msra.mxu0 0
        %3117 = vmatprep.subr.bf16.mxu0 0
        %3118 = vmatpush1.bf16.xpose.msra.mxu0 0
        %3119 = vmatprep.mubr.bf16.mxu0 0
        %3120 = vmatmul.mubr.bf16.gmra.mrb[0].mxu0 %v3082
        %v3121 = vpop.f32.mrb[0].mxu0
        %v3122 = vadd.f32 0.0, %v3121
        %v3123 = vpop.f32.mrb[0].mxu0
        %v3124 = vpop.f32.mrb[0].mxu0
        %v3125 = vpop.f32.mrb[0].mxu0
        %3126 = vdwg.mxu0
        %v3128 = vsel %vm1485, %v3077, 0
        %v3131 = vsel %vm1485, %v3078, 0
        %3133 = vmatprep.subr.bf16.mxu0 0
        %3134 = vmatpush1.bf16.xpose.msra.mxu0 %v3131
        %3135 = vmatprep.subr.bf16.mxu0 0
        %3136 = vmatpush1.bf16.xpose.msra.mxu0 0
        %3137 = vmatprep.subr.bf16.mxu0 0
        %3138 = vmatpush1.bf16.xpose.msra.mxu0 0
        %3139 = vmatprep.subr.bf16.mxu0 0
        %3140 = vmatpush1.bf16.xpose.msra.mxu0 0
        %3141 = vmatprep.subr.bf16.mxu0 0
        %3142 = vmatpush1.bf16.xpose.msra.mxu0 0
        %3143 = vmatprep.subr.bf16.mxu0 0
        %3144 = vmatpush1.bf16.xpose.msra.mxu0 0
        %3145 = vmatprep.subr.bf16.mxu0 0
        %3146 = vmatpush1.bf16.xpose.msra.mxu0 0
        %3147 = vmatprep.subr.bf16.mxu0 0
        %3148 = vmatpush1.bf16.xpose.msra.mxu0 0
        %3149 = vmatprep.subr.bf16.mxu0 0
        %3150 = vmatpush1.bf16.xpose.msra.mxu0 0
        %3151 = vmatprep.subr.bf16.mxu0 0
        %3152 = vmatpush1.bf16.xpose.msra.mxu0 0
        %3153 = vmatprep.subr.bf16.mxu0 0
        %3154 = vmatpush1.bf16.xpose.msra.mxu0 0
        %3155 = vmatprep.subr.bf16.mxu0 0
        %3156 = vmatpush1.bf16.xpose.msra.mxu0 0
        %3157 = vmatprep.subr.bf16.mxu0 0
        %3158 = vmatpush1.bf16.xpose.msra.mxu0 0
        %3159 = vmatprep.subr.bf16.mxu0 0
        %3160 = vmatpush1.bf16.xpose.msra.mxu0 0
        %3161 = vmatprep.subr.bf16.mxu0 0
        %3162 = vmatpush1.bf16.xpose.msra.mxu0 0
        %3163 = vmatprep.subr.bf16.mxu0 0
        %3164 = vmatpush1.bf16.xpose.msra.mxu0 0
        %3165 = vmatprep.mubr.bf16.mxu0 0
        %3166 = vmatmul.mubr.bf16.gmra.mrb[0].mxu0 %v3128
        %v3167 = vpop.f32.mrb[0].mxu0
        %v3168 = vadd.f32 %v3122, %v3167
        %v3169 = vpop.f32.mrb[0].mxu0
        %v3170 = vpop.f32.mrb[0].mxu0
        %v3171 = vpop.f32.mrb[0].mxu0
        %3172 = vdwg.mxu0
        %v3173 = vpack.c.bf16 %v3071, %v3071
        %v3174 = vpack.c.bf16 %v2976, %v2976
        %v3176 = vsel %vm1485, %v3173, 0
        %v3179 = vsel %vm1485, %v3174, 0
        %3181 = vmatprep.subr.bf16.mxu0 0
        %3182 = vmatpush1.bf16.xpose.msra.mxu0 %v3179
        %3183 = vmatprep.subr.bf16.mxu0 0
        %3184 = vmatpush1.bf16.xpose.msra.mxu0 0
        %3185 = vmatprep.subr.bf16.mxu0 0
        %3186 = vmatpush1.bf16.xpose.msra.mxu0 0
        %3187 = vmatprep.subr.bf16.mxu0 0
        %3188 = vmatpush1.bf16.xpose.msra.mxu0 0
        %3189 = vmatprep.subr.bf16.mxu0 0
        %3190 = vmatpush1.bf16.xpose.msra.mxu0 0
        %3191 = vmatprep.subr.bf16.mxu0 0
        %3192 = vmatpush1.bf16.xpose.msra.mxu0 0
        %3193 = vmatprep.subr.bf16.mxu0 0
        %3194 = vmatpush1.bf16.xpose.msra.mxu0 0
        %3195 = vmatprep.subr.bf16.mxu0 0
        %3196 = vmatpush1.bf16.xpose.msra.mxu0 0
        %3197 = vmatprep.subr.bf16.mxu0 0
        %3198 = vmatpush1.bf16.xpose.msra.mxu0 0
        %3199 = vmatprep.subr.bf16.mxu0 0
        %3200 = vmatpush1.bf16.xpose.msra.mxu0 0
        %3201 = vmatprep.subr.bf16.mxu0 0
        %3202 = vmatpush1.bf16.xpose.msra.mxu0 0
        %3203 = vmatprep.subr.bf16.mxu0 0
        %3204 = vmatpush1.bf16.xpose.msra.mxu0 0
        %3205 = vmatprep.subr.bf16.mxu0 0
        %3206 = vmatpush1.bf16.xpose.msra.mxu0 0
        %3207 = vmatprep.subr.bf16.mxu0 0
        %3208 = vmatpush1.bf16.xpose.msra.mxu0 0
        %3209 = vmatprep.subr.bf16.mxu0 0
        %3210 = vmatpush1.bf16.xpose.msra.mxu0 0
        %3211 = vmatprep.subr.bf16.mxu0 0
        %3212 = vmatpush1.bf16.xpose.msra.mxu0 0
        %3213 = vmatprep.mubr.bf16.mxu0 0
        %3214 = vmatmul.mubr.bf16.gmra.mrb[0].mxu0 %v3176
        %v3215 = vpop.f32.mrb[0].mxu0
        %v3216 = vadd.f32 0.0, %v3215
        %v3217 = vpop.f32.mrb[0].mxu0
        %v3218 = vpop.f32.mrb[0].mxu0
        %v3219 = vpop.f32.mrb[0].mxu0
        %3220 = vdwg.mxu0
        %v3221 = vadd.f32 %v3168, %v3216
        %v3222 = vpack.c.bf16 %v3074, %v3074
        %v3223 = vpack.c.bf16 %v2979, %v2979
        %v3225 = vsel %vm1485, %v3222, 0
        %v3228 = vsel %vm1485, %v3223, 0
        %3230 = vmatprep.subr.bf16.mxu0 0
        %3231 = vmatpush1.bf16.xpose.msra.mxu0 %v3228
        %3232 = vmatprep.subr.bf16.mxu0 0
        %3233 = vmatpush1.bf16.xpose.msra.mxu0 0
        %3234 = vmatprep.subr.bf16.mxu0 0
        %3235 = vmatpush1.bf16.xpose.msra.mxu0 0
        %3236 = vmatprep.subr.bf16.mxu0 0
        %3237 = vmatpush1.bf16.xpose.msra.mxu0 0
        %3238 = vmatprep.subr.bf16.mxu0 0
        %3239 = vmatpush1.bf16.xpose.msra.mxu0 0
        %3240 = vmatprep.subr.bf16.mxu0 0
        %3241 = vmatpush1.bf16.xpose.msra.mxu0 0
        %3242 = vmatprep.subr.bf16.mxu0 0
        %3243 = vmatpush1.bf16.xpose.msra.mxu0 0
        %3244 = vmatprep.subr.bf16.mxu0 0
        %3245 = vmatpush1.bf16.xpose.msra.mxu0 0
        %3246 = vmatprep.subr.bf16.mxu0 0
        %3247 = vmatpush1.bf16.xpose.msra.mxu0 0
        %3248 = vmatprep.subr.bf16.mxu0 0
        %3249 = vmatpush1.bf16.xpose.msra.mxu0 0
        %3250 = vmatprep.subr.bf16.mxu0 0
        %3251 = vmatpush1.bf16.xpose.msra.mxu0 0
        %3252 = vmatprep.subr.bf16.mxu0 0
        %3253 = vmatpush1.bf16.xpose.msra.mxu0 0
        %3254 = vmatprep.subr.bf16.mxu0 0
        %3255 = vmatpush1.bf16.xpose.msra.mxu0 0
        %3256 = vmatprep.subr.bf16.mxu0 0
        %3257 = vmatpush1.bf16.xpose.msra.mxu0 0
        %3258 = vmatprep.subr.bf16.mxu0 0
        %3259 = vmatpush1.bf16.xpose.msra.mxu0 0
        %3260 = vmatprep.subr.bf16.mxu0 0
        %3261 = vmatpush1.bf16.xpose.msra.mxu0 0
        %3262 = vmatprep.mubr.bf16.mxu0 0
        %3263 = vmatmul.mubr.bf16.gmra.mrb[0].mxu0 %v3225
        %v3264 = vpop.f32.mrb[0].mxu0
        %v3265 = vadd.f32 0.0, %v3264
        %v3266 = vpop.f32.mrb[0].mxu0
        %v3267 = vpop.f32.mrb[0].mxu0
        %v3268 = vpop.f32.mrb[0].mxu0
        %3269 = vdwg.mxu0
        %v3270 = vadd.f32 %v3221, %v3265
        %s3271 = scalar_lea.vmem %s13, 8
        %v3272 = vld [vmem:[%s3271] sm:$0xff]
        %v3273 = vmul.f32 %v3270, %v3272
        %3274 = vmatprep.subr.mxu0 0.0
        %3275 = vmatpush1.msra.mxu0 %v3273
        %3276 = vmatprep.subr.mxu0 0.0
        %3277 = vmatpush1.msra.mxu0 0.0
        %3278 = vmatprep.subr.mxu0 0.0
        %3279 = vmatpush1.msra.mxu0 0.0
        %3280 = vmatprep.subr.mxu0 0.0
        %3281 = vmatpush1.msra.mxu0 0.0
        %3282 = vmatprep.subr.mxu0 0.0
        %3283 = vmatpush1.msra.mxu0 0.0
        %3284 = vmatprep.subr.mxu0 0.0
        %3285 = vmatpush1.msra.mxu0 0.0
        %3286 = vmatprep.subr.mxu0 0.0
        %3287 = vmatpush1.msra.mxu0 0.0
        %3288 = vmatprep.subr.mxu0 0.0
        %3289 = vmatpush1.msra.mxu0 0.0
        %3290 = vmatprep.subr.mxu0 0.0
        %3291 = vmatpush1.msra.mxu0 0.0
        %3292 = vmatprep.subr.mxu0 0.0
        %3293 = vmatpush1.msra.mxu0 0.0
        %3294 = vmatprep.subr.mxu0 0.0
        %3295 = vmatpush1.msra.mxu0 0.0
        %3296 = vmatprep.subr.mxu0 0.0
        %3297 = vmatpush1.msra.mxu0 0.0
        %3298 = vmatprep.subr.mxu0 0.0
        %3299 = vmatpush1.msra.mxu0 0.0
        %3300 = vmatprep.subr.mxu0 0.0
        %3301 = vmatpush1.msra.mxu0 0.0
        %3302 = vmatprep.subr.mxu0 0.0
        %3303 = vmatpush1.msra.mxu0 0.0
        %3304 = vmatprep.subr.mxu0 0.0
        %3305 = vmatpush1.msra.mxu0 0.0
        %3306 = vmatprep.subr.mxu0 0.0
        %3307 = vmatpush1.msra.mxu0 0.0
        %3308 = vmatprep.subr.mxu0 0.0
        %3309 = vmatpush1.msra.mxu0 0.0
        %3310 = vmatprep.subr.mxu0 0.0
        %3311 = vmatpush1.msra.mxu0 0.0
        %3312 = vmatprep.subr.mxu0 0.0
        %3313 = vmatpush1.msra.mxu0 0.0
        %3314 = vmatprep.subr.mxu0 0.0
        %3315 = vmatpush1.msra.mxu0 0.0
        %3316 = vmatprep.subr.mxu0 0.0
        %3317 = vmatpush1.msra.mxu0 0.0
        %3318 = vmatprep.subr.mxu0 0.0
        %3319 = vmatpush1.msra.mxu0 0.0
        %3320 = vmatprep.subr.mxu0 0.0
        %3321 = vmatpush1.msra.mxu0 0.0
        %3322 = vmatprep.subr.mxu0 0.0
        %3323 = vmatpush1.msra.mxu0 0.0
        %3324 = vmatprep.subr.mxu0 0.0
        %3325 = vmatpush1.msra.mxu0 0.0
        %3326 = vmatprep.subr.mxu0 0.0
        %3327 = vmatpush1.msra.mxu0 0.0
        %3328 = vmatprep.subr.mxu0 0.0
        %3329 = vmatpush1.msra.mxu0 0.0
        %3330 = vmatprep.subr.mxu0 0.0
        %3331 = vmatpush1.msra.mxu0 0.0
        %3332 = vmatprep.subr.mxu0 0.0
        %3333 = vmatpush1.msra.mxu0 0.0
        %3334 = vmatprep.subr.mxu0 0.0
        %3335 = vmatpush1.msra.mxu0 0.0
        %3336 = vmatprep.subr.mxu0 0.0
        %3337 = vmatpush1.msra.mxu0 0.0
        %3338 = vmatprep.mubr.f32.mxu0 0.0
        %3339 = vmatmul.mubr.f32.gmra.mrb[0].mxu0 %v2610
        %v3340 = vpop.f32.mrb[0].mxu0
        %v3341 = vadd.f32 0.0, %v3340
        %v3342 = vpop.f32.mrb[0].mxu0
        %3343 = vmatprep.mubr.f32.mxu0 0.0
        %3344 = vmatmul.mubr.f32.gmra.mrb[0].mxu0 %v2613
        %v3345 = vpop.f32.mrb[0].mxu0
        %v3346 = vadd.f32 0.0, %v3345
        %v3347 = vpop.f32.mrb[0].mxu0
        %3348 = vmatprep.mubr.f32.mxu0 0.0
        %3349 = vmatmul.mubr.f32.gmra.mrb[0].mxu0 %v2616
        %v3350 = vpop.f32.mrb[0].mxu0
        %v3351 = vadd.f32 0.0, %v3350
        %v3352 = vpop.f32.mrb[0].mxu0
        %3353 = vmatprep.mubr.f32.mxu0 0.0
        %3354 = vmatmul.mubr.f32.gmra.mrb[0].mxu0 %v2619
        %v3355 = vpop.f32.mrb[0].mxu0
        %v3356 = vadd.f32 0.0, %v3355
        %v3357 = vpop.f32.mrb[0].mxu0
        %3358 = vmatprep.mubr.f32.mxu0 0.0
        %3359 = vmatmul.mubr.f32.gmra.mrb[0].mxu0 %v2622
        %v3360 = vpop.f32.mrb[0].mxu0
        %v3361 = vadd.f32 0.0, %v3360
        %v3362 = vpop.f32.mrb[0].mxu0
        %3363 = vmatprep.mubr.f32.mxu0 0.0
        %3364 = vmatmul.mubr.f32.gmra.mrb[0].mxu0 %v2625
        %v3365 = vpop.f32.mrb[0].mxu0
        %v3366 = vadd.f32 0.0, %v3365
        %v3367 = vpop.f32.mrb[0].mxu0
        %3368 = vmatprep.mubr.f32.mxu0 0.0
        %3369 = vmatmul.mubr.f32.gmra.mrb[0].mxu0 %v2628
        %v3370 = vpop.f32.mrb[0].mxu0
        %v3371 = vadd.f32 0.0, %v3370
        %v3372 = vpop.f32.mrb[0].mxu0
        %3373 = vmatprep.mubr.f32.mxu0 0.0
        %3374 = vmatmul.mubr.f32.gmra.mrb[0].mxu0 %v2631
        %v3375 = vpop.f32.mrb[0].mxu0
        %v3376 = vadd.f32 0.0, %v3375
        %v3377 = vpop.f32.mrb[0].mxu0
        %3378 = vdwg.mxu0
        %v3380 = vsel %vm2608, %v3341, 0
        %v3383 = vsel %vm2608, %v3346, 0
        %v3386 = vsel %vm2608, %v3351, 0
        %v3389 = vsel %vm2608, %v3356, 0
        %v3392 = vsel %vm2608, %v3361, 0
        %v3395 = vsel %vm2608, %v3366, 0
        %v3398 = vsel %vm2608, %v3371, 0
        %v3401 = vsel %vm2608, %v3376, 0
        %3403 = vmatprep.subr.mxu0 0.0
        %3404 = vmatpush1.msra.mxu0 %v2223
        %3405 = vmatprep.subr.mxu0 0.0
        %3406 = vmatpush1.msra.mxu0 0.0
        %3407 = vmatprep.subr.mxu0 0.0
        %3408 = vmatpush1.msra.mxu0 0.0
        %3409 = vmatprep.subr.mxu0 0.0
        %3410 = vmatpush1.msra.mxu0 0.0
        %3411 = vmatprep.subr.mxu0 0.0
        %3412 = vmatpush1.msra.mxu0 0.0
        %3413 = vmatprep.subr.mxu0 0.0
        %3414 = vmatpush1.msra.mxu0 0.0
        %3415 = vmatprep.subr.mxu0 0.0
        %3416 = vmatpush1.msra.mxu0 0.0
        %3417 = vmatprep.subr.mxu0 0.0
        %3418 = vmatpush1.msra.mxu0 0.0
        %3419 = vmatprep.subr.mxu0 0.0
        %3420 = vmatpush1.msra.mxu0 0.0
        %3421 = vmatprep.subr.mxu0 0.0
        %3422 = vmatpush1.msra.mxu0 0.0
        %3423 = vmatprep.subr.mxu0 0.0
        %3424 = vmatpush1.msra.mxu0 0.0
        %3425 = vmatprep.subr.mxu0 0.0
        %3426 = vmatpush1.msra.mxu0 0.0
        %3427 = vmatprep.subr.mxu0 0.0
        %3428 = vmatpush1.msra.mxu0 0.0
        %3429 = vmatprep.subr.mxu0 0.0
        %3430 = vmatpush1.msra.mxu0 0.0
        %3431 = vmatprep.subr.mxu0 0.0
        %3432 = vmatpush1.msra.mxu0 0.0
        %3433 = vmatprep.subr.mxu0 0.0
        %3434 = vmatpush1.msra.mxu0 0.0
        %3435 = vmatprep.subr.mxu0 0.0
        %3436 = vmatpush1.msra.mxu0 0.0
        %3437 = vmatprep.subr.mxu0 0.0
        %3438 = vmatpush1.msra.mxu0 0.0
        %3439 = vmatprep.subr.mxu0 0.0
        %3440 = vmatpush1.msra.mxu0 0.0
        %3441 = vmatprep.subr.mxu0 0.0
        %3442 = vmatpush1.msra.mxu0 0.0
        %3443 = vmatprep.subr.mxu0 0.0
        %3444 = vmatpush1.msra.mxu0 0.0
        %3445 = vmatprep.subr.mxu0 0.0
        %3446 = vmatpush1.msra.mxu0 0.0
        %3447 = vmatprep.subr.mxu0 0.0
        %3448 = vmatpush1.msra.mxu0 0.0
        %3449 = vmatprep.subr.mxu0 0.0
        %3450 = vmatpush1.msra.mxu0 0.0
        %3451 = vmatprep.subr.mxu0 0.0
        %3452 = vmatpush1.msra.mxu0 0.0
        %3453 = vmatprep.subr.mxu0 0.0
        %3454 = vmatpush1.msra.mxu0 0.0
        %3455 = vmatprep.subr.mxu0 0.0
        %3456 = vmatpush1.msra.mxu0 0.0
        %3457 = vmatprep.subr.mxu0 0.0
        %3458 = vmatpush1.msra.mxu0 0.0
        %3459 = vmatprep.subr.mxu0 0.0
        %3460 = vmatpush1.msra.mxu0 0.0
        %3461 = vmatprep.subr.mxu0 0.0
        %3462 = vmatpush1.msra.mxu0 0.0
        %3463 = vmatprep.subr.mxu0 0.0
        %3464 = vmatpush1.msra.mxu0 0.0
        %3465 = vmatprep.subr.mxu0 0.0
        %3466 = vmatpush1.msra.mxu0 0.0
        %3467 = vmatprep.mubr.f32.mxu0 0.0
        %3468 = vmatmul.mubr.f32.gmra.mrb[0].mxu0 %v3380
        %v3469 = vpop.f32.mrb[0].mxu0
        %v3470 = vadd.f32 0.0, %v3469
        %v3471 = vpop.f32.mrb[0].mxu0
        %3472 = vmatprep.mubr.f32.mxu0 0.0
        %3473 = vmatmul.mubr.f32.gmra.mrb[0].mxu0 %v3383
        %v3474 = vpop.f32.mrb[0].mxu0
        %v3475 = vadd.f32 0.0, %v3474
        %v3476 = vpop.f32.mrb[0].mxu0
        %3477 = vmatprep.mubr.f32.mxu0 0.0
        %3478 = vmatmul.mubr.f32.gmra.mrb[0].mxu0 %v3386
        %v3479 = vpop.f32.mrb[0].mxu0
        %v3480 = vadd.f32 0.0, %v3479
        %v3481 = vpop.f32.mrb[0].mxu0
        %3482 = vmatprep.mubr.f32.mxu0 0.0
        %3483 = vmatmul.mubr.f32.gmra.mrb[0].mxu0 %v3389
        %v3484 = vpop.f32.mrb[0].mxu0
        %v3485 = vadd.f32 0.0, %v3484
        %v3486 = vpop.f32.mrb[0].mxu0
        %3487 = vmatprep.mubr.f32.mxu0 0.0
        %3488 = vmatmul.mubr.f32.gmra.mrb[0].mxu0 %v3392
        %v3489 = vpop.f32.mrb[0].mxu0
        %v3490 = vadd.f32 0.0, %v3489
        %v3491 = vpop.f32.mrb[0].mxu0
        %3492 = vmatprep.mubr.f32.mxu0 0.0
        %3493 = vmatmul.mubr.f32.gmra.mrb[0].mxu0 %v3395
        %v3494 = vpop.f32.mrb[0].mxu0
        %v3495 = vadd.f32 0.0, %v3494
        %v3496 = vpop.f32.mrb[0].mxu0
        %3497 = vmatprep.mubr.f32.mxu0 0.0
        %3498 = vmatmul.mubr.f32.gmra.mrb[0].mxu0 %v3398
        %v3499 = vpop.f32.mrb[0].mxu0
        %v3500 = vadd.f32 0.0, %v3499
        %v3501 = vpop.f32.mrb[0].mxu0
        %3502 = vmatprep.mubr.f32.mxu0 0.0
        %3503 = vmatmul.mubr.f32.gmra.mrb[0].mxu0 %v3401
        %v3504 = vpop.f32.mrb[0].mxu0
        %v3505 = vadd.f32 0.0, %v3504
        %v3506 = vpop.f32.mrb[0].mxu0
        %3507 = vdwg.mxu0
        %s3508 = scalar_lea.vmem %s14, 64
        %v3509 = vld [vmem:[%s3508] sm:$0xff]
        %v3510 = vld [vmem:[%s3508 + $0x8] sm:$0xff]
        %v3511 = vld [vmem:[%s3508 + $0x10] sm:$0xff]
        %v3512 = vld [vmem:[%s3508 + $0x18] sm:$0xff]
        %v3513 = vld [vmem:[%s3508 + $0x20] sm:$0xff]
        %v3514 = vld [vmem:[%s3508 + $0x28] sm:$0xff]
        %v3515 = vld [vmem:[%s3508 + $0x30] sm:$0xff]
        %v3516 = vld [vmem:[%s3508 + $0x38] sm:$0xff]
        %v3517 = vmul.f32 %v3509, %v3470
        %v3518 = vmul.f32 %v3510, %v3475
        %v3519 = vmul.f32 %v3511, %v3480
        %v3520 = vmul.f32 %v3512, %v3485
        %v3521 = vmul.f32 %v3513, %v3490
        %v3522 = vmul.f32 %v3514, %v3495
        %v3523 = vmul.f32 %v3515, %v3500
        %v3524 = vmul.f32 %v3516, %v3505
        %v3525 = vpack.c.bf16 %v3518, %v3517
        %v3526 = vpack.c.bf16 %v3520, %v3519
        %v3527 = vpack.c.bf16 %v3522, %v3521
        %v3528 = vpack.c.bf16 %v3524, %v3523
        %v3530 = vsel %vm943, %v3525, 0
        %v3533 = vsel %vm943, %v3526, 0
        %v3536 = vsel %vm943, %v3527, 0
        %v3539 = vsel %vm943, %v3528, 0
        %3541 = vmatprep.subr.bf16.mxu0 0
        %3542 = vmatpush1.bf16.msra.mxu0 %v2191
        %3543 = vmatprep.subr.bf16.mxu0 0
        %3544 = vmatpush1.bf16.msra.mxu0 %v2192
        %3545 = vmatprep.subr.bf16.mxu0 0
        %3546 = vmatpush1.bf16.msra.mxu0 %v2193
        %3547 = vmatprep.subr.bf16.mxu0 0
        %3548 = vmatpush1.bf16.msra.mxu0 %v2194
        %3549 = vmatprep.subr.bf16.mxu0 0
        %3550 = vmatpush1.bf16.msra.mxu0 0
        %3551 = vmatprep.subr.bf16.mxu0 0
        %3552 = vmatpush1.bf16.msra.mxu0 0
        %3553 = vmatprep.subr.bf16.mxu0 0
        %3554 = vmatpush1.bf16.msra.mxu0 0
        %3555 = vmatprep.subr.bf16.mxu0 0
        %3556 = vmatpush1.bf16.msra.mxu0 0
        %3557 = vmatprep.subr.bf16.mxu0 0
        %3558 = vmatpush1.bf16.msra.mxu0 0
        %3559 = vmatprep.subr.bf16.mxu0 0
        %3560 = vmatpush1.bf16.msra.mxu0 0
        %3561 = vmatprep.subr.bf16.mxu0 0
        %3562 = vmatpush1.bf16.msra.mxu0 0
        %3563 = vmatprep.subr.bf16.mxu0 0
        %3564 = vmatpush1.bf16.msra.mxu0 0
        %3565 = vmatprep.subr.bf16.mxu0 0
        %3566 = vmatpush1.bf16.msra.mxu0 0
        %3567 = vmatprep.subr.bf16.mxu0 0
        %3568 = vmatpush1.bf16.msra.mxu0 0
        %3569 = vmatprep.subr.bf16.mxu0 0
        %3570 = vmatpush1.bf16.msra.mxu0 0
        %3571 = vmatprep.subr.bf16.mxu0 0
        %3572 = vmatpush1.bf16.msra.mxu0 0
        %3573 = vmatprep.mubr.bf16.mxu0 0
        %3574 = vmatmul.mubr.bf16.gmra.mrb[0].mxu0 %v3530
        %v3575 = vpop.f32.mrb[0].mxu0
        %v3576 = vadd.f32 0.0, %v3575
        %v3577 = vpop.f32.mrb[0].mxu0
        %v3578 = vpop.f32.mrb[0].mxu0
        %v3579 = vadd.f32 0.0, %v3578
        %v3580 = vpop.f32.mrb[0].mxu0
        %3581 = vmatprep.mubr.bf16.mxu0 0
        %3582 = vmatmul.mubr.bf16.gmra.mrb[0].mxu0 %v3533
        %v3583 = vpop.f32.mrb[0].mxu0
        %v3584 = vadd.f32 0.0, %v3583
        %v3585 = vpop.f32.mrb[0].mxu0
        %v3586 = vpop.f32.mrb[0].mxu0
        %v3587 = vadd.f32 0.0, %v3586
        %v3588 = vpop.f32.mrb[0].mxu0
        %3589 = vmatprep.mubr.bf16.mxu0 0
        %3590 = vmatmul.mubr.bf16.gmra.mrb[0].mxu0 %v3536
        %v3591 = vpop.f32.mrb[0].mxu0
        %v3592 = vadd.f32 0.0, %v3591
        %v3593 = vpop.f32.mrb[0].mxu0
        %v3594 = vpop.f32.mrb[0].mxu0
        %v3595 = vadd.f32 0.0, %v3594
        %v3596 = vpop.f32.mrb[0].mxu0
        %3597 = vmatprep.mubr.bf16.mxu0 0
        %3598 = vmatmul.mubr.bf16.gmra.mrb[0].mxu0 %v3539
        %v3599 = vpop.f32.mrb[0].mxu0
        %v3600 = vadd.f32 0.0, %v3599
        %v3601 = vpop.f32.mrb[0].mxu0
        %v3602 = vpop.f32.mrb[0].mxu0
        %v3603 = vadd.f32 0.0, %v3602
        %v3604 = vpop.f32.mrb[0].mxu0
        %3605 = vdwg.mxu0
        %v3607 = vsel %vm943, %v2883, 0
        %v3610 = vsel %vm943, %v2884, 0
        %v3613 = vsel %vm943, %v2885, 0
        %v3616 = vsel %vm943, %v2886, 0
        %3618 = vmatprep.subr.bf16.mxu0 0
        %3619 = vmatpush1.bf16.msra.mxu0 %v2191
        %3620 = vmatprep.subr.bf16.mxu0 0
        %3621 = vmatpush1.bf16.msra.mxu0 %v2192
        %3622 = vmatprep.subr.bf16.mxu0 0
        %3623 = vmatpush1.bf16.msra.mxu0 %v2193
        %3624 = vmatprep.subr.bf16.mxu0 0
        %3625 = vmatpush1.bf16.msra.mxu0 %v2194
        %3626 = vmatprep.subr.bf16.mxu0 0
        %3627 = vmatpush1.bf16.msra.mxu0 0
        %3628 = vmatprep.subr.bf16.mxu0 0
        %3629 = vmatpush1.bf16.msra.mxu0 0
        %3630 = vmatprep.subr.bf16.mxu0 0
        %3631 = vmatpush1.bf16.msra.mxu0 0
        %3632 = vmatprep.subr.bf16.mxu0 0
        %3633 = vmatpush1.bf16.msra.mxu0 0
        %3634 = vmatprep.subr.bf16.mxu0 0
        %3635 = vmatpush1.bf16.msra.mxu0 0
        %3636 = vmatprep.subr.bf16.mxu0 0
        %3637 = vmatpush1.bf16.msra.mxu0 0
        %3638 = vmatprep.subr.bf16.mxu0 0
        %3639 = vmatpush1.bf16.msra.mxu0 0
        %3640 = vmatprep.subr.bf16.mxu0 0
        %3641 = vmatpush1.bf16.msra.mxu0 0
        %3642 = vmatprep.subr.bf16.mxu0 0
        %3643 = vmatpush1.bf16.msra.mxu0 0
        %3644 = vmatprep.subr.bf16.mxu0 0
        %3645 = vmatpush1.bf16.msra.mxu0 0
        %3646 = vmatprep.subr.bf16.mxu0 0
        %3647 = vmatpush1.bf16.msra.mxu0 0
        %3648 = vmatprep.subr.bf16.mxu0 0
        %3649 = vmatpush1.bf16.msra.mxu0 0
        %3650 = vmatprep.mubr.bf16.mxu0 0
        %3651 = vmatmul.mubr.bf16.gmra.mrb[0].mxu0 %v3607
        %v3652 = vpop.f32.mrb[0].mxu0
        %v3653 = vadd.f32 %v3576, %v3652
        %v3654 = vpop.f32.mrb[0].mxu0
        %v3655 = vpop.f32.mrb[0].mxu0
        %v3656 = vadd.f32 %v3579, %v3655
        %v3657 = vpop.f32.mrb[0].mxu0
        %3658 = vmatprep.mubr.bf16.mxu0 0
        %3659 = vmatmul.mubr.bf16.gmra.mrb[0].mxu0 %v3610
        %v3660 = vpop.f32.mrb[0].mxu0
        %v3661 = vadd.f32 %v3584, %v3660
        %v3662 = vpop.f32.mrb[0].mxu0
        %v3663 = vpop.f32.mrb[0].mxu0
        %v3664 = vadd.f32 %v3587, %v3663
        %v3665 = vpop.f32.mrb[0].mxu0
        %3666 = vmatprep.mubr.bf16.mxu0 0
        %3667 = vmatmul.mubr.bf16.gmra.mrb[0].mxu0 %v3613
        %v3668 = vpop.f32.mrb[0].mxu0
        %v3669 = vadd.f32 %v3592, %v3668
        %v3670 = vpop.f32.mrb[0].mxu0
        %v3671 = vpop.f32.mrb[0].mxu0
        %v3672 = vadd.f32 %v3595, %v3671
        %v3673 = vpop.f32.mrb[0].mxu0
        %3674 = vmatprep.mubr.bf16.mxu0 0
        %3675 = vmatmul.mubr.bf16.gmra.mrb[0].mxu0 %v3616
        %v3676 = vpop.f32.mrb[0].mxu0
        %v3677 = vadd.f32 %v3600, %v3676
        %v3678 = vpop.f32.mrb[0].mxu0
        %v3679 = vpop.f32.mrb[0].mxu0
        %v3680 = vadd.f32 %v3603, %v3679
        %v3681 = vpop.f32.mrb[0].mxu0
        %3682 = vdwg.mxu0
        %s3683 = scalar_lea.vmem %s11, 32
        %v3684 = vld [vmem:[%s3683] sm:$0xf]
        %v3685 = vld [vmem:[%s3683 + $0x4] sm:$0xf]
        %v3686 = vld [vmem:[%s3683 + $0x8] sm:$0xf]
        %v3687 = vld [vmem:[%s3683 + $0xc] sm:$0xf]
        %s3688 = scalar_lea.vmem %s12, 64
        %v3689 = vld [vmem:[%s3688] sm:$0xff]
        %v3690 = vld [vmem:[%s3688 + $0x8] sm:$0xff]
        %v3691 = vld [vmem:[%s3688 + $0x10] sm:$0xff]
        %v3692 = vld [vmem:[%s3688 + $0x18] sm:$0xff]
        %3694 = vset.pattern.permute.xlu0 0
        %3695 = vperm.xlu0 %3694, %v3689
        %v3696 = vpop.permute.xlu0 %3695
        %3699 = vset.pattern.permute.xlu0 0
        %3700 = vperm.xlu0 %3699, %v3690
        %v3701 = vpop.permute.xlu0 %3700
        %3704 = vset.pattern.permute.xlu0 0
        %3705 = vperm.xlu0 %3704, %v3691
        %v3706 = vpop.permute.xlu0 %3705
        %3709 = vset.pattern.permute.xlu0 0
        %3710 = vperm.xlu0 %3709, %v3692
        %v3711 = vpop.permute.xlu0 %3710
        %v3717 = vunpack.c.l.b16 %v3684
        %v3718 = vunpack.c.l.b16 %v3685
        %v3719 = vunpack.c.l.b16 %v3686
        %v3720 = vunpack.c.l.b16 %v3687
        %v3721 = vpack.c.b16 %v3718, %v3717
        %v3722 = vpack.c.b16 %v3720, %v3719
        %v3724 = vsel %vm943, %v3721, 0
        %v3727 = vsel %vm943, %v3722, 0
        %3729 = vmatprep.subr.bf16.mxu0 0
        %3730 = vmatpush1.bf16.msra.mxu0 %v2211
        %3731 = vmatprep.subr.bf16.mxu0 0
        %3732 = vmatpush1.bf16.msra.mxu0 %v2212
        %3733 = vmatprep.subr.bf16.mxu0 0
        %3734 = vmatpush1.bf16.msra.mxu0 %v2213
        %3735 = vmatprep.subr.bf16.mxu0 0
        %3736 = vmatpush1.bf16.msra.mxu0 %v2214
        %3737 = vmatprep.subr.bf16.mxu0 0
        %3738 = vmatpush1.bf16.msra.mxu0 0
        %3739 = vmatprep.subr.bf16.mxu0 0
        %3740 = vmatpush1.bf16.msra.mxu0 0
        %3741 = vmatprep.subr.bf16.mxu0 0
        %3742 = vmatpush1.bf16.msra.mxu0 0
        %3743 = vmatprep.subr.bf16.mxu0 0
        %3744 = vmatpush1.bf16.msra.mxu0 0
        %3745 = vmatprep.subr.bf16.mxu0 0
        %3746 = vmatpush1.bf16.msra.mxu0 0
        %3747 = vmatprep.subr.bf16.mxu0 0
        %3748 = vmatpush1.bf16.msra.mxu0 0
        %3749 = vmatprep.subr.bf16.mxu0 0
        %3750 = vmatpush1.bf16.msra.mxu0 0
        %3751 = vmatprep.subr.bf16.mxu0 0
        %3752 = vmatpush1.bf16.msra.mxu0 0
        %3753 = vmatprep.subr.bf16.mxu0 0
        %3754 = vmatpush1.bf16.msra.mxu0 0
        %3755 = vmatprep.subr.bf16.mxu0 0
        %3756 = vmatpush1.bf16.msra.mxu0 0
        %3757 = vmatprep.subr.bf16.mxu0 0
        %3758 = vmatpush1.bf16.msra.mxu0 0
        %3759 = vmatprep.subr.bf16.mxu0 0
        %3760 = vmatpush1.bf16.msra.mxu0 0
        %3761 = vmatprep.mubr.bf16.mxu0 0
        %3762 = vmatmul.mubr.bf16.gmra.mrb[0].mxu0 %v3724
        %v3763 = vpop.f32.mrb[0].mxu0
        %v3764 = vadd.f32 %v3696, %v3763
        %v3765 = vpop.f32.mrb[0].mxu0
        %v3766 = vpop.f32.mrb[0].mxu0
        %v3767 = vadd.f32 %v3701, %v3766
        %v3768 = vpop.f32.mrb[0].mxu0
        %3769 = vmatprep.mubr.bf16.mxu0 0
        %3770 = vmatmul.mubr.bf16.gmra.mrb[0].mxu0 %v3727
        %v3771 = vpop.f32.mrb[0].mxu0
        %v3772 = vadd.f32 %v3706, %v3771
        %v3773 = vpop.f32.mrb[0].mxu0
        %v3774 = vpop.f32.mrb[0].mxu0
        %v3775 = vadd.f32 %v3711, %v3774
        %v3776 = vpop.f32.mrb[0].mxu0
        %3777 = vdwg.mxu0
        %s3778 = scalar_lea.vmem %s11, 176
        %v3779 = vld [vmem:[%s3778] sm:$0xf]
        %v3780 = vld [vmem:[%s3778 + $0x4] sm:$0xf]
        %v3781 = vld [vmem:[%s3778 + $0x8] sm:$0xf]
        %v3782 = vld [vmem:[%s3778 + $0xc] sm:$0xf]
        %s3783 = scalar_lea.vmem %s12, 352
        %v3784 = vld [vmem:[%s3783] sm:$0xff]
        %v3785 = vld [vmem:[%s3783 + $0x8] sm:$0xff]
        %v3786 = vld [vmem:[%s3783 + $0x10] sm:$0xff]
        %v3787 = vld [vmem:[%s3783 + $0x18] sm:$0xff]
        %3789 = vset.pattern.permute.xlu0 0
        %3790 = vperm.xlu0 %3789, %v3784
        %v3791 = vpop.permute.xlu0 %3790
        %3794 = vset.pattern.permute.xlu0 0
        %3795 = vperm.xlu0 %3794, %v3785
        %v3796 = vpop.permute.xlu0 %3795
        %3799 = vset.pattern.permute.xlu0 0
        %3800 = vperm.xlu0 %3799, %v3786
        %v3801 = vpop.permute.xlu0 %3800
        %3804 = vset.pattern.permute.xlu0 0
        %3805 = vperm.xlu0 %3804, %v3787
        %v3806 = vpop.permute.xlu0 %3805
        %v3812 = vunpack.c.l.b16 %v3779
        %v3813 = vunpack.c.l.b16 %v3780
        %v3814 = vunpack.c.l.b16 %v3781
        %v3815 = vunpack.c.l.b16 %v3782
        %v3816 = vpack.c.b16 %v3813, %v3812
        %v3817 = vpack.c.b16 %v3815, %v3814
        %v3819 = vsel %vm943, %v3816, 0
        %v3822 = vsel %vm943, %v3817, 0
        %3824 = vmatprep.subr.bf16.mxu0 0
        %3825 = vmatpush1.bf16.msra.mxu0 %v2211
        %3826 = vmatprep.subr.bf16.mxu0 0
        %3827 = vmatpush1.bf16.msra.mxu0 %v2212
        %3828 = vmatprep.subr.bf16.mxu0 0
        %3829 = vmatpush1.bf16.msra.mxu0 %v2213
        %3830 = vmatprep.subr.bf16.mxu0 0
        %3831 = vmatpush1.bf16.msra.mxu0 %v2214
        %3832 = vmatprep.subr.bf16.mxu0 0
        %3833 = vmatpush1.bf16.msra.mxu0 0
        %3834 = vmatprep.subr.bf16.mxu0 0
        %3835 = vmatpush1.bf16.msra.mxu0 0
        %3836 = vmatprep.subr.bf16.mxu0 0
        %3837 = vmatpush1.bf16.msra.mxu0 0
        %3838 = vmatprep.subr.bf16.mxu0 0
        %3839 = vmatpush1.bf16.msra.mxu0 0
        %3840 = vmatprep.subr.bf16.mxu0 0
        %3841 = vmatpush1.bf16.msra.mxu0 0
        %3842 = vmatprep.subr.bf16.mxu0 0
        %3843 = vmatpush1.bf16.msra.mxu0 0
        %3844 = vmatprep.subr.bf16.mxu0 0
        %3845 = vmatpush1.bf16.msra.mxu0 0
        %3846 = vmatprep.subr.bf16.mxu0 0
        %3847 = vmatpush1.bf16.msra.mxu0 0
        %3848 = vmatprep.subr.bf16.mxu0 0
        %3849 = vmatpush1.bf16.msra.mxu0 0
        %3850 = vmatprep.subr.bf16.mxu0 0
        %3851 = vmatpush1.bf16.msra.mxu0 0
        %3852 = vmatprep.subr.bf16.mxu0 0
        %3853 = vmatpush1.bf16.msra.mxu0 0
        %3854 = vmatprep.subr.bf16.mxu0 0
        %3855 = vmatpush1.bf16.msra.mxu0 0
        %3856 = vmatprep.mubr.bf16.mxu0 0
        %3857 = vmatmul.mubr.bf16.gmra.mrb[0].mxu0 %v3819
        %v3858 = vpop.f32.mrb[0].mxu0
        %v3859 = vadd.f32 %v3791, %v3858
        %v3860 = vpop.f32.mrb[0].mxu0
        %v3861 = vpop.f32.mrb[0].mxu0
        %v3862 = vadd.f32 %v3796, %v3861
        %v3863 = vpop.f32.mrb[0].mxu0
        %3864 = vmatprep.mubr.bf16.mxu0 0
        %3865 = vmatmul.mubr.bf16.gmra.mrb[0].mxu0 %v3822
        %v3866 = vpop.f32.mrb[0].mxu0
        %v3867 = vadd.f32 %v3801, %v3866
        %v3868 = vpop.f32.mrb[0].mxu0
        %v3869 = vpop.f32.mrb[0].mxu0
        %v3870 = vadd.f32 %v3806, %v3869
        %v3871 = vpop.f32.mrb[0].mxu0
        %3872 = vdwg.mxu0
        %v3873 = vpack.c.bf16 %v3859, %v3859
        %v3874 = vpack.c.bf16 %v3764, %v3764
        %v3875 = vpack.c.bf16 %v3862, %v3862
        %v3876 = vpack.c.bf16 %v3767, %v3767
        %v3878 = vsel %vm1485, %v3875, 0
        %v3881 = vsel %vm1485, %v3876, 0
        %3883 = vmatprep.subr.bf16.mxu0 0
        %3884 = vmatpush1.bf16.xpose.msra.mxu0 %v3881
        %3885 = vmatprep.subr.bf16.mxu0 0
        %3886 = vmatpush1.bf16.xpose.msra.mxu0 0
        %3887 = vmatprep.subr.bf16.mxu0 0
        %3888 = vmatpush1.bf16.xpose.msra.mxu0 0
        %3889 = vmatprep.subr.bf16.mxu0 0
        %3890 = vmatpush1.bf16.xpose.msra.mxu0 0
        %3891 = vmatprep.subr.bf16.mxu0 0
        %3892 = vmatpush1.bf16.xpose.msra.mxu0 0
        %3893 = vmatprep.subr.bf16.mxu0 0
        %3894 = vmatpush1.bf16.xpose.msra.mxu0 0
        %3895 = vmatprep.subr.bf16.mxu0 0
        %3896 = vmatpush1.bf16.xpose.msra.mxu0 0
        %3897 = vmatprep.subr.bf16.mxu0 0
        %3898 = vmatpush1.bf16.xpose.msra.mxu0 0
        %3899 = vmatprep.subr.bf16.mxu0 0
        %3900 = vmatpush1.bf16.xpose.msra.mxu0 0
        %3901 = vmatprep.subr.bf16.mxu0 0
        %3902 = vmatpush1.bf16.xpose.msra.mxu0 0
        %3903 = vmatprep.subr.bf16.mxu0 0
        %3904 = vmatpush1.bf16.xpose.msra.mxu0 0
        %3905 = vmatprep.subr.bf16.mxu0 0
        %3906 = vmatpush1.bf16.xpose.msra.mxu0 0
        %3907 = vmatprep.subr.bf16.mxu0 0
        %3908 = vmatpush1.bf16.xpose.msra.mxu0 0
        %3909 = vmatprep.subr.bf16.mxu0 0
        %3910 = vmatpush1.bf16.xpose.msra.mxu0 0
        %3911 = vmatprep.subr.bf16.mxu0 0
        %3912 = vmatpush1.bf16.xpose.msra.mxu0 0
        %3913 = vmatprep.subr.bf16.mxu0 0
        %3914 = vmatpush1.bf16.xpose.msra.mxu0 0
        %3915 = vmatprep.mubr.bf16.mxu0 0
        %3916 = vmatmul.mubr.bf16.gmra.mrb[0].mxu0 %v3878
        %v3917 = vpop.f32.mrb[0].mxu0
        %v3918 = vadd.f32 0.0, %v3917
        %v3919 = vpop.f32.mrb[0].mxu0
        %v3920 = vpop.f32.mrb[0].mxu0
        %v3921 = vpop.f32.mrb[0].mxu0
        %3922 = vdwg.mxu0
        %v3924 = vsel %vm1485, %v3873, 0
        %v3927 = vsel %vm1485, %v3874, 0
        %3929 = vmatprep.subr.bf16.mxu0 0
        %3930 = vmatpush1.bf16.xpose.msra.mxu0 %v3927
        %3931 = vmatprep.subr.bf16.mxu0 0
        %3932 = vmatpush1.bf16.xpose.msra.mxu0 0
        %3933 = vmatprep.subr.bf16.mxu0 0
        %3934 = vmatpush1.bf16.xpose.msra.mxu0 0
        %3935 = vmatprep.subr.bf16.mxu0 0
        %3936 = vmatpush1.bf16.xpose.msra.mxu0 0
        %3937 = vmatprep.subr.bf16.mxu0 0
        %3938 = vmatpush1.bf16.xpose.msra.mxu0 0
        %3939 = vmatprep.subr.bf16.mxu0 0
        %3940 = vmatpush1.bf16.xpose.msra.mxu0 0
        %3941 = vmatprep.subr.bf16.mxu0 0
        %3942 = vmatpush1.bf16.xpose.msra.mxu0 0
        %3943 = vmatprep.subr.bf16.mxu0 0
        %3944 = vmatpush1.bf16.xpose.msra.mxu0 0
        %3945 = vmatprep.subr.bf16.mxu0 0
        %3946 = vmatpush1.bf16.xpose.msra.mxu0 0
        %3947 = vmatprep.subr.bf16.mxu0 0
        %3948 = vmatpush1.bf16.xpose.msra.mxu0 0
        %3949 = vmatprep.subr.bf16.mxu0 0
        %3950 = vmatpush1.bf16.xpose.msra.mxu0 0
        %3951 = vmatprep.subr.bf16.mxu0 0
        %3952 = vmatpush1.bf16.xpose.msra.mxu0 0
        %3953 = vmatprep.subr.bf16.mxu0 0
        %3954 = vmatpush1.bf16.xpose.msra.mxu0 0
        %3955 = vmatprep.subr.bf16.mxu0 0
        %3956 = vmatpush1.bf16.xpose.msra.mxu0 0
        %3957 = vmatprep.subr.bf16.mxu0 0
        %3958 = vmatpush1.bf16.xpose.msra.mxu0 0
        %3959 = vmatprep.subr.bf16.mxu0 0
        %3960 = vmatpush1.bf16.xpose.msra.mxu0 0
        %3961 = vmatprep.mubr.bf16.mxu0 0
        %3962 = vmatmul.mubr.bf16.gmra.mrb[0].mxu0 %v3924
        %v3963 = vpop.f32.mrb[0].mxu0
        %v3964 = vadd.f32 %v3918, %v3963
        %v3965 = vpop.f32.mrb[0].mxu0
        %v3966 = vpop.f32.mrb[0].mxu0
        %v3967 = vpop.f32.mrb[0].mxu0
        %3968 = vdwg.mxu0
        %v3969 = vpack.c.bf16 %v3867, %v3867
        %v3970 = vpack.c.bf16 %v3772, %v3772
        %v3972 = vsel %vm1485, %v3969, 0
        %v3975 = vsel %vm1485, %v3970, 0
        %3977 = vmatprep.subr.bf16.mxu0 0
        %3978 = vmatpush1.bf16.xpose.msra.mxu0 %v3975
        %3979 = vmatprep.subr.bf16.mxu0 0
        %3980 = vmatpush1.bf16.xpose.msra.mxu0 0
        %3981 = vmatprep.subr.bf16.mxu0 0
        %3982 = vmatpush1.bf16.xpose.msra.mxu0 0
        %3983 = vmatprep.subr.bf16.mxu0 0
        %3984 = vmatpush1.bf16.xpose.msra.mxu0 0
        %3985 = vmatprep.subr.bf16.mxu0 0
        %3986 = vmatpush1.bf16.xpose.msra.mxu0 0
        %3987 = vmatprep.subr.bf16.mxu0 0
        %3988 = vmatpush1.bf16.xpose.msra.mxu0 0
        %3989 = vmatprep.subr.bf16.mxu0 0
        %3990 = vmatpush1.bf16.xpose.msra.mxu0 0
        %3991 = vmatprep.subr.bf16.mxu0 0
        %3992 = vmatpush1.bf16.xpose.msra.mxu0 0
        %3993 = vmatprep.subr.bf16.mxu0 0
        %3994 = vmatpush1.bf16.xpose.msra.mxu0 0
        %3995 = vmatprep.subr.bf16.mxu0 0
        %3996 = vmatpush1.bf16.xpose.msra.mxu0 0
        %3997 = vmatprep.subr.bf16.mxu0 0
        %3998 = vmatpush1.bf16.xpose.msra.mxu0 0
        %3999 = vmatprep.subr.bf16.mxu0 0
        %4000 = vmatpush1.bf16.xpose.msra.mxu0 0
        %4001 = vmatprep.subr.bf16.mxu0 0
        %4002 = vmatpush1.bf16.xpose.msra.mxu0 0
        %4003 = vmatprep.subr.bf16.mxu0 0
        %4004 = vmatpush1.bf16.xpose.msra.mxu0 0
        %4005 = vmatprep.subr.bf16.mxu0 0
        %4006 = vmatpush1.bf16.xpose.msra.mxu0 0
        %4007 = vmatprep.subr.bf16.mxu0 0
        %4008 = vmatpush1.bf16.xpose.msra.mxu0 0
        %4009 = vmatprep.mubr.bf16.mxu0 0
        %4010 = vmatmul.mubr.bf16.gmra.mrb[0].mxu0 %v3972
        %v4011 = vpop.f32.mrb[0].mxu0
        %v4012 = vadd.f32 0.0, %v4011
        %v4013 = vpop.f32.mrb[0].mxu0
        %v4014 = vpop.f32.mrb[0].mxu0
        %v4015 = vpop.f32.mrb[0].mxu0
        %4016 = vdwg.mxu0
        %v4017 = vadd.f32 %v3964, %v4012
        %v4018 = vpack.c.bf16 %v3870, %v3870
        %v4019 = vpack.c.bf16 %v3775, %v3775
        %v4021 = vsel %vm1485, %v4018, 0
        %v4024 = vsel %vm1485, %v4019, 0
        %4026 = vmatprep.subr.bf16.mxu0 0
        %4027 = vmatpush1.bf16.xpose.msra.mxu0 %v4024
        %4028 = vmatprep.subr.bf16.mxu0 0
        %4029 = vmatpush1.bf16.xpose.msra.mxu0 0
        %4030 = vmatprep.subr.bf16.mxu0 0
        %4031 = vmatpush1.bf16.xpose.msra.mxu0 0
        %4032 = vmatprep.subr.bf16.mxu0 0
        %4033 = vmatpush1.bf16.xpose.msra.mxu0 0
        %4034 = vmatprep.subr.bf16.mxu0 0
        %4035 = vmatpush1.bf16.xpose.msra.mxu0 0
        %4036 = vmatprep.subr.bf16.mxu0 0
        %4037 = vmatpush1.bf16.xpose.msra.mxu0 0
        %4038 = vmatprep.subr.bf16.mxu0 0
        %4039 = vmatpush1.bf16.xpose.msra.mxu0 0
        %4040 = vmatprep.subr.bf16.mxu0 0
        %4041 = vmatpush1.bf16.xpose.msra.mxu0 0
        %4042 = vmatprep.subr.bf16.mxu0 0
        %4043 = vmatpush1.bf16.xpose.msra.mxu0 0
        %4044 = vmatprep.subr.bf16.mxu0 0
        %4045 = vmatpush1.bf16.xpose.msra.mxu0 0
        %4046 = vmatprep.subr.bf16.mxu0 0
        %4047 = vmatpush1.bf16.xpose.msra.mxu0 0
        %4048 = vmatprep.subr.bf16.mxu0 0
        %4049 = vmatpush1.bf16.xpose.msra.mxu0 0
        %4050 = vmatprep.subr.bf16.mxu0 0
        %4051 = vmatpush1.bf16.xpose.msra.mxu0 0
        %4052 = vmatprep.subr.bf16.mxu0 0
        %4053 = vmatpush1.bf16.xpose.msra.mxu0 0
        %4054 = vmatprep.subr.bf16.mxu0 0
        %4055 = vmatpush1.bf16.xpose.msra.mxu0 0
        %4056 = vmatprep.subr.bf16.mxu0 0
        %4057 = vmatpush1.bf16.xpose.msra.mxu0 0
        %4058 = vmatprep.mubr.bf16.mxu0 0
        %4059 = vmatmul.mubr.bf16.gmra.mrb[0].mxu0 %v4021
        %v4060 = vpop.f32.mrb[0].mxu0
        %v4061 = vadd.f32 0.0, %v4060
        %v4062 = vpop.f32.mrb[0].mxu0
        %v4063 = vpop.f32.mrb[0].mxu0
        %v4064 = vpop.f32.mrb[0].mxu0
        %4065 = vdwg.mxu0
        %v4066 = vadd.f32 %v4017, %v4061
        %s4067 = scalar_lea.vmem %s13, 16
        %v4068 = vld [vmem:[%s4067] sm:$0xff]
        %v4069 = vmul.f32 %v4066, %v4068
        %4070 = vmatprep.subr.mxu0 0.0
        %4071 = vmatpush1.msra.mxu0 %v4069
        %4072 = vmatprep.subr.mxu0 0.0
        %4073 = vmatpush1.msra.mxu0 0.0
        %4074 = vmatprep.subr.mxu0 0.0
        %4075 = vmatpush1.msra.mxu0 0.0
        %4076 = vmatprep.subr.mxu0 0.0
        %4077 = vmatpush1.msra.mxu0 0.0
        %4078 = vmatprep.subr.mxu0 0.0
        %4079 = vmatpush1.msra.mxu0 0.0
        %4080 = vmatprep.subr.mxu0 0.0
        %4081 = vmatpush1.msra.mxu0 0.0
        %4082 = vmatprep.subr.mxu0 0.0
        %4083 = vmatpush1.msra.mxu0 0.0
        %4084 = vmatprep.subr.mxu0 0.0
        %4085 = vmatpush1.msra.mxu0 0.0
        %4086 = vmatprep.subr.mxu0 0.0
        %4087 = vmatpush1.msra.mxu0 0.0
        %4088 = vmatprep.subr.mxu0 0.0
        %4089 = vmatpush1.msra.mxu0 0.0
        %4090 = vmatprep.subr.mxu0 0.0
        %4091 = vmatpush1.msra.mxu0 0.0
        %4092 = vmatprep.subr.mxu0 0.0
        %4093 = vmatpush1.msra.mxu0 0.0
        %4094 = vmatprep.subr.mxu0 0.0
        %4095 = vmatpush1.msra.mxu0 0.0
        %4096 = vmatprep.subr.mxu0 0.0
        %4097 = vmatpush1.msra.mxu0 0.0
        %4098 = vmatprep.subr.mxu0 0.0
        %4099 = vmatpush1.msra.mxu0 0.0
        %4100 = vmatprep.subr.mxu0 0.0
        %4101 = vmatpush1.msra.mxu0 0.0
        %4102 = vmatprep.subr.mxu0 0.0
        %4103 = vmatpush1.msra.mxu0 0.0
        %4104 = vmatprep.subr.mxu0 0.0
        %4105 = vmatpush1.msra.mxu0 0.0
        %4106 = vmatprep.subr.mxu0 0.0
        %4107 = vmatpush1.msra.mxu0 0.0
        %4108 = vmatprep.subr.mxu0 0.0
        %4109 = vmatpush1.msra.mxu0 0.0
        %4110 = vmatprep.subr.mxu0 0.0
        %4111 = vmatpush1.msra.mxu0 0.0
        %4112 = vmatprep.subr.mxu0 0.0
        %4113 = vmatpush1.msra.mxu0 0.0
        %4114 = vmatprep.subr.mxu0 0.0
        %4115 = vmatpush1.msra.mxu0 0.0
        %4116 = vmatprep.subr.mxu0 0.0
        %4117 = vmatpush1.msra.mxu0 0.0
        %4118 = vmatprep.subr.mxu0 0.0
        %4119 = vmatpush1.msra.mxu0 0.0
        %4120 = vmatprep.subr.mxu0 0.0
        %4121 = vmatpush1.msra.mxu0 0.0
        %4122 = vmatprep.subr.mxu0 0.0
        %4123 = vmatpush1.msra.mxu0 0.0
        %4124 = vmatprep.subr.mxu0 0.0
        %4125 = vmatpush1.msra.mxu0 0.0
        %4126 = vmatprep.subr.mxu0 0.0
        %4127 = vmatpush1.msra.mxu0 0.0
        %4128 = vmatprep.subr.mxu0 0.0
        %4129 = vmatpush1.msra.mxu0 0.0
        %4130 = vmatprep.subr.mxu0 0.0
        %4131 = vmatpush1.msra.mxu0 0.0
        %4132 = vmatprep.subr.mxu0 0.0
        %4133 = vmatpush1.msra.mxu0 0.0
        %4134 = vmatprep.mubr.f32.mxu0 0.0
        %4135 = vmatmul.mubr.f32.gmra.mrb[0].mxu0 %v2610
        %v4136 = vpop.f32.mrb[0].mxu0
        %v4137 = vadd.f32 0.0, %v4136
        %v4138 = vpop.f32.mrb[0].mxu0
        %4139 = vmatprep.mubr.f32.mxu0 0.0
        %4140 = vmatmul.mubr.f32.gmra.mrb[0].mxu0 %v2613
        %v4141 = vpop.f32.mrb[0].mxu0
        %v4142 = vadd.f32 0.0, %v4141
        %v4143 = vpop.f32.mrb[0].mxu0
        %4144 = vmatprep.mubr.f32.mxu0 0.0
        %4145 = vmatmul.mubr.f32.gmra.mrb[0].mxu0 %v2616
        %v4146 = vpop.f32.mrb[0].mxu0
        %v4147 = vadd.f32 0.0, %v4146
        %v4148 = vpop.f32.mrb[0].mxu0
        %4149 = vmatprep.mubr.f32.mxu0 0.0
        %4150 = vmatmul.mubr.f32.gmra.mrb[0].mxu0 %v2619
        %v4151 = vpop.f32.mrb[0].mxu0
        %v4152 = vadd.f32 0.0, %v4151
        %v4153 = vpop.f32.mrb[0].mxu0
        %4154 = vmatprep.mubr.f32.mxu0 0.0
        %4155 = vmatmul.mubr.f32.gmra.mrb[0].mxu0 %v2622
        %v4156 = vpop.f32.mrb[0].mxu0
        %v4157 = vadd.f32 0.0, %v4156
        %v4158 = vpop.f32.mrb[0].mxu0
        %4159 = vmatprep.mubr.f32.mxu0 0.0
        %4160 = vmatmul.mubr.f32.gmra.mrb[0].mxu0 %v2625
        %v4161 = vpop.f32.mrb[0].mxu0
        %v4162 = vadd.f32 0.0, %v4161
        %v4163 = vpop.f32.mrb[0].mxu0
        %4164 = vmatprep.mubr.f32.mxu0 0.0
        %4165 = vmatmul.mubr.f32.gmra.mrb[0].mxu0 %v2628
        %v4166 = vpop.f32.mrb[0].mxu0
        %v4167 = vadd.f32 0.0, %v4166
        %v4168 = vpop.f32.mrb[0].mxu0
        %4169 = vmatprep.mubr.f32.mxu0 0.0
        %4170 = vmatmul.mubr.f32.gmra.mrb[0].mxu0 %v2631
        %v4171 = vpop.f32.mrb[0].mxu0
        %v4172 = vadd.f32 0.0, %v4171
        %v4173 = vpop.f32.mrb[0].mxu0
        %4174 = vdwg.mxu0
        %v4176 = vsel %vm2608, %v4137, 0
        %v4179 = vsel %vm2608, %v4142, 0
        %v4182 = vsel %vm2608, %v4147, 0
        %v4185 = vsel %vm2608, %v4152, 0
        %v4188 = vsel %vm2608, %v4157, 0
        %v4191 = vsel %vm2608, %v4162, 0
        %v4194 = vsel %vm2608, %v4167, 0
        %v4197 = vsel %vm2608, %v4172, 0
        %4199 = vmatprep.subr.mxu0 0.0
        %4200 = vmatpush1.msra.mxu0 %v2223
        %4201 = vmatprep.subr.mxu0 0.0
        %4202 = vmatpush1.msra.mxu0 0.0
        %4203 = vmatprep.subr.mxu0 0.0
        %4204 = vmatpush1.msra.mxu0 0.0
        %4205 = vmatprep.subr.mxu0 0.0
        %4206 = vmatpush1.msra.mxu0 0.0
        %4207 = vmatprep.subr.mxu0 0.0
        %4208 = vmatpush1.msra.mxu0 0.0
        %4209 = vmatprep.subr.mxu0 0.0
        %4210 = vmatpush1.msra.mxu0 0.0
        %4211 = vmatprep.subr.mxu0 0.0
        %4212 = vmatpush1.msra.mxu0 0.0
        %4213 = vmatprep.subr.mxu0 0.0
        %4214 = vmatpush1.msra.mxu0 0.0
        %4215 = vmatprep.subr.mxu0 0.0
        %4216 = vmatpush1.msra.mxu0 0.0
        %4217 = vmatprep.subr.mxu0 0.0
        %4218 = vmatpush1.msra.mxu0 0.0
        %4219 = vmatprep.subr.mxu0 0.0
        %4220 = vmatpush1.msra.mxu0 0.0
        %4221 = vmatprep.subr.mxu0 0.0
        %4222 = vmatpush1.msra.mxu0 0.0
        %4223 = vmatprep.subr.mxu0 0.0
        %4224 = vmatpush1.msra.mxu0 0.0
        %4225 = vmatprep.subr.mxu0 0.0
        %4226 = vmatpush1.msra.mxu0 0.0
        %4227 = vmatprep.subr.mxu0 0.0
        %4228 = vmatpush1.msra.mxu0 0.0
        %4229 = vmatprep.subr.mxu0 0.0
        %4230 = vmatpush1.msra.mxu0 0.0
        %4231 = vmatprep.subr.mxu0 0.0
        %4232 = vmatpush1.msra.mxu0 0.0
        %4233 = vmatprep.subr.mxu0 0.0
        %4234 = vmatpush1.msra.mxu0 0.0
        %4235 = vmatprep.subr.mxu0 0.0
        %4236 = vmatpush1.msra.mxu0 0.0
        %4237 = vmatprep.subr.mxu0 0.0
        %4238 = vmatpush1.msra.mxu0 0.0
        %4239 = vmatprep.subr.mxu0 0.0
        %4240 = vmatpush1.msra.mxu0 0.0
        %4241 = vmatprep.subr.mxu0 0.0
        %4242 = vmatpush1.msra.mxu0 0.0
        %4243 = vmatprep.subr.mxu0 0.0
        %4244 = vmatpush1.msra.mxu0 0.0
        %4245 = vmatprep.subr.mxu0 0.0
        %4246 = vmatpush1.msra.mxu0 0.0
        %4247 = vmatprep.subr.mxu0 0.0
        %4248 = vmatpush1.msra.mxu0 0.0
        %4249 = vmatprep.subr.mxu0 0.0
        %4250 = vmatpush1.msra.mxu0 0.0
        %4251 = vmatprep.subr.mxu0 0.0
        %4252 = vmatpush1.msra.mxu0 0.0
        %4253 = vmatprep.subr.mxu0 0.0
        %4254 = vmatpush1.msra.mxu0 0.0
        %4255 = vmatprep.subr.mxu0 0.0
        %4256 = vmatpush1.msra.mxu0 0.0
        %4257 = vmatprep.subr.mxu0 0.0
        %4258 = vmatpush1.msra.mxu0 0.0
        %4259 = vmatprep.subr.mxu0 0.0
        %4260 = vmatpush1.msra.mxu0 0.0
        %4261 = vmatprep.subr.mxu0 0.0
        %4262 = vmatpush1.msra.mxu0 0.0
        %4263 = vmatprep.mubr.f32.mxu0 0.0
        %4264 = vmatmul.mubr.f32.gmra.mrb[0].mxu0 %v4176
        %v4265 = vpop.f32.mrb[0].mxu0
        %v4266 = vadd.f32 0.0, %v4265
        %v4267 = vpop.f32.mrb[0].mxu0
        %4268 = vmatprep.mubr.f32.mxu0 0.0
        %4269 = vmatmul.mubr.f32.gmra.mrb[0].mxu0 %v4179
        %v4270 = vpop.f32.mrb[0].mxu0
        %v4271 = vadd.f32 0.0, %v4270
        %v4272 = vpop.f32.mrb[0].mxu0
        %4273 = vmatprep.mubr.f32.mxu0 0.0
        %4274 = vmatmul.mubr.f32.gmra.mrb[0].mxu0 %v4182
        %v4275 = vpop.f32.mrb[0].mxu0
        %v4276 = vadd.f32 0.0, %v4275
        %v4277 = vpop.f32.mrb[0].mxu0
        %4278 = vmatprep.mubr.f32.mxu0 0.0
        %4279 = vmatmul.mubr.f32.gmra.mrb[0].mxu0 %v4185
        %v4280 = vpop.f32.mrb[0].mxu0
        %v4281 = vadd.f32 0.0, %v4280
        %v4282 = vpop.f32.mrb[0].mxu0
        %4283 = vmatprep.mubr.f32.mxu0 0.0
        %4284 = vmatmul.mubr.f32.gmra.mrb[0].mxu0 %v4188
        %v4285 = vpop.f32.mrb[0].mxu0
        %v4286 = vadd.f32 0.0, %v4285
        %v4287 = vpop.f32.mrb[0].mxu0
        %4288 = vmatprep.mubr.f32.mxu0 0.0
        %4289 = vmatmul.mubr.f32.gmra.mrb[0].mxu0 %v4191
        %v4290 = vpop.f32.mrb[0].mxu0
        %v4291 = vadd.f32 0.0, %v4290
        %v4292 = vpop.f32.mrb[0].mxu0
        %4293 = vmatprep.mubr.f32.mxu0 0.0
        %4294 = vmatmul.mubr.f32.gmra.mrb[0].mxu0 %v4194
        %v4295 = vpop.f32.mrb[0].mxu0
        %v4296 = vadd.f32 0.0, %v4295
        %v4297 = vpop.f32.mrb[0].mxu0
        %4298 = vmatprep.mubr.f32.mxu0 0.0
        %4299 = vmatmul.mubr.f32.gmra.mrb[0].mxu0 %v4197
        %v4300 = vpop.f32.mrb[0].mxu0
        %v4301 = vadd.f32 0.0, %v4300
        %v4302 = vpop.f32.mrb[0].mxu0
        %4303 = vdwg.mxu0
        %s4304 = scalar_lea.vmem %s14, 128
        %v4305 = vld [vmem:[%s4304] sm:$0xff]
        %v4306 = vld [vmem:[%s4304 + $0x8] sm:$0xff]
        %v4307 = vld [vmem:[%s4304 + $0x10] sm:$0xff]
        %v4308 = vld [vmem:[%s4304 + $0x18] sm:$0xff]
        %v4309 = vld [vmem:[%s4304 + $0x20] sm:$0xff]
        %v4310 = vld [vmem:[%s4304 + $0x28] sm:$0xff]
        %v4311 = vld [vmem:[%s4304 + $0x30] sm:$0xff]
        %v4312 = vld [vmem:[%s4304 + $0x38] sm:$0xff]
        %v4313 = vmul.f32 %v4305, %v4266
        %v4314 = vmul.f32 %v4306, %v4271
        %v4315 = vmul.f32 %v4307, %v4276
        %v4316 = vmul.f32 %v4308, %v4281
        %v4317 = vmul.f32 %v4309, %v4286
        %v4318 = vmul.f32 %v4310, %v4291
        %v4319 = vmul.f32 %v4311, %v4296
        %v4320 = vmul.f32 %v4312, %v4301
        %v4321 = vpack.c.bf16 %v4314, %v4313
        %v4322 = vpack.c.bf16 %v4316, %v4315
        %v4323 = vpack.c.bf16 %v4318, %v4317
        %v4324 = vpack.c.bf16 %v4320, %v4319
        %v4326 = vsel %vm943, %v4321, 0
        %v4329 = vsel %vm943, %v4322, 0
        %v4332 = vsel %vm943, %v4323, 0
        %v4335 = vsel %vm943, %v4324, 0
        %4337 = vmatprep.subr.bf16.mxu0 0
        %4338 = vmatpush1.bf16.msra.mxu0 %v2191
        %4339 = vmatprep.subr.bf16.mxu0 0
        %4340 = vmatpush1.bf16.msra.mxu0 %v2192
        %4341 = vmatprep.subr.bf16.mxu0 0
        %4342 = vmatpush1.bf16.msra.mxu0 %v2193
        %4343 = vmatprep.subr.bf16.mxu0 0
        %4344 = vmatpush1.bf16.msra.mxu0 %v2194
        %4345 = vmatprep.subr.bf16.mxu0 0
        %4346 = vmatpush1.bf16.msra.mxu0 0
        %4347 = vmatprep.subr.bf16.mxu0 0
        %4348 = vmatpush1.bf16.msra.mxu0 0
        %4349 = vmatprep.subr.bf16.mxu0 0
        %4350 = vmatpush1.bf16.msra.mxu0 0
        %4351 = vmatprep.subr.bf16.mxu0 0
        %4352 = vmatpush1.bf16.msra.mxu0 0
        %4353 = vmatprep.subr.bf16.mxu0 0
        %4354 = vmatpush1.bf16.msra.mxu0 0
        %4355 = vmatprep.subr.bf16.mxu0 0
        %4356 = vmatpush1.bf16.msra.mxu0 0
        %4357 = vmatprep.subr.bf16.mxu0 0
        %4358 = vmatpush1.bf16.msra.mxu0 0
        %4359 = vmatprep.subr.bf16.mxu0 0
        %4360 = vmatpush1.bf16.msra.mxu0 0
        %4361 = vmatprep.subr.bf16.mxu0 0
        %4362 = vmatpush1.bf16.msra.mxu0 0
        %4363 = vmatprep.subr.bf16.mxu0 0
        %4364 = vmatpush1.bf16.msra.mxu0 0
        %4365 = vmatprep.subr.bf16.mxu0 0
        %4366 = vmatpush1.bf16.msra.mxu0 0
        %4367 = vmatprep.subr.bf16.mxu0 0
        %4368 = vmatpush1.bf16.msra.mxu0 0
        %4369 = vmatprep.mubr.bf16.mxu0 0
        %4370 = vmatmul.mubr.bf16.gmra.mrb[0].mxu0 %v4326
        %v4371 = vpop.f32.mrb[0].mxu0
        %v4372 = vadd.f32 0.0, %v4371
        %v4373 = vpop.f32.mrb[0].mxu0
        %v4374 = vpop.f32.mrb[0].mxu0
        %v4375 = vadd.f32 0.0, %v4374
        %v4376 = vpop.f32.mrb[0].mxu0
        %4377 = vmatprep.mubr.bf16.mxu0 0
        %4378 = vmatmul.mubr.bf16.gmra.mrb[0].mxu0 %v4329
        %v4379 = vpop.f32.mrb[0].mxu0
        %v4380 = vadd.f32 0.0, %v4379
        %v4381 = vpop.f32.mrb[0].mxu0
        %v4382 = vpop.f32.mrb[0].mxu0
        %v4383 = vadd.f32 0.0, %v4382
        %v4384 = vpop.f32.mrb[0].mxu0
        %4385 = vmatprep.mubr.bf16.mxu0 0
        %4386 = vmatmul.mubr.bf16.gmra.mrb[0].mxu0 %v4332
        %v4387 = vpop.f32.mrb[0].mxu0
        %v4388 = vadd.f32 0.0, %v4387
        %v4389 = vpop.f32.mrb[0].mxu0
        %v4390 = vpop.f32.mrb[0].mxu0
        %v4391 = vadd.f32 0.0, %v4390
        %v4392 = vpop.f32.mrb[0].mxu0
        %4393 = vmatprep.mubr.bf16.mxu0 0
        %4394 = vmatmul.mubr.bf16.gmra.mrb[0].mxu0 %v4335
        %v4395 = vpop.f32.mrb[0].mxu0
        %v4396 = vadd.f32 0.0, %v4395
        %v4397 = vpop.f32.mrb[0].mxu0
        %v4398 = vpop.f32.mrb[0].mxu0
        %v4399 = vadd.f32 0.0, %v4398
        %v4400 = vpop.f32.mrb[0].mxu0
        %4401 = vdwg.mxu0
        %v4402 = vadd.f32 %v3653, %v4372
        %v4403 = vadd.f32 %v3656, %v4375
        %v4404 = vadd.f32 %v3661, %v4380
        %v4405 = vadd.f32 %v3664, %v4383
        %v4406 = vadd.f32 %v3669, %v4388
        %v4407 = vadd.f32 %v3672, %v4391
        %v4408 = vadd.f32 %v3677, %v4396
        %v4409 = vadd.f32 %v3680, %v4399
        %s4410 = scalar_lea.vmem %s11, 48
        %v4411 = vld [vmem:[%s4410] sm:$0xf]
        %v4412 = vld [vmem:[%s4410 + $0x4] sm:$0xf]
        %v4413 = vld [vmem:[%s4410 + $0x8] sm:$0xf]
        %v4414 = vld [vmem:[%s4410 + $0xc] sm:$0xf]
        %s4415 = scalar_lea.vmem %s12, 96
        %v4416 = vld [vmem:[%s4415] sm:$0xff]
        %v4417 = vld [vmem:[%s4415 + $0x8] sm:$0xff]
        %v4418 = vld [vmem:[%s4415 + $0x10] sm:$0xff]
        %v4419 = vld [vmem:[%s4415 + $0x18] sm:$0xff]
        %4421 = vset.pattern.permute.xlu0 0
        %4422 = vperm.xlu0 %4421, %v4416
        %v4423 = vpop.permute.xlu0 %4422
        %4426 = vset.pattern.permute.xlu0 0
        %4427 = vperm.xlu0 %4426, %v4417
        %v4428 = vpop.permute.xlu0 %4427
        %4431 = vset.pattern.permute.xlu0 0
        %4432 = vperm.xlu0 %4431, %v4418
        %v4433 = vpop.permute.xlu0 %4432
        %4436 = vset.pattern.permute.xlu0 0
        %4437 = vperm.xlu0 %4436, %v4419
        %v4438 = vpop.permute.xlu0 %4437
        %v4444 = vunpack.c.l.b16 %v4411
        %v4445 = vunpack.c.l.b16 %v4412
        %v4446 = vunpack.c.l.b16 %v4413
        %v4447 = vunpack.c.l.b16 %v4414
        %v4448 = vpack.c.b16 %v4445, %v4444
        %v4449 = vpack.c.b16 %v4447, %v4446
        %v4451 = vsel %vm943, %v4448, 0
        %v4454 = vsel %vm943, %v4449, 0
        %4456 = vmatprep.subr.bf16.mxu0 0
        %4457 = vmatpush1.bf16.msra.mxu0 %v2211
        %4458 = vmatprep.subr.bf16.mxu0 0
        %4459 = vmatpush1.bf16.msra.mxu0 %v2212
        %4460 = vmatprep.subr.bf16.mxu0 0
        %4461 = vmatpush1.bf16.msra.mxu0 %v2213
        %4462 = vmatprep.subr.bf16.mxu0 0
        %4463 = vmatpush1.bf16.msra.mxu0 %v2214
        %4464 = vmatprep.subr.bf16.mxu0 0
        %4465 = vmatpush1.bf16.msra.mxu0 0
        %4466 = vmatprep.subr.bf16.mxu0 0
        %4467 = vmatpush1.bf16.msra.mxu0 0
        %4468 = vmatprep.subr.bf16.mxu0 0
        %4469 = vmatpush1.bf16.msra.mxu0 0
        %4470 = vmatprep.subr.bf16.mxu0 0
        %4471 = vmatpush1.bf16.msra.mxu0 0
        %4472 = vmatprep.subr.bf16.mxu0 0
        %4473 = vmatpush1.bf16.msra.mxu0 0
        %4474 = vmatprep.subr.bf16.mxu0 0
        %4475 = vmatpush1.bf16.msra.mxu0 0
        %4476 = vmatprep.subr.bf16.mxu0 0
        %4477 = vmatpush1.bf16.msra.mxu0 0
        %4478 = vmatprep.subr.bf16.mxu0 0
        %4479 = vmatpush1.bf16.msra.mxu0 0
        %4480 = vmatprep.subr.bf16.mxu0 0
        %4481 = vmatpush1.bf16.msra.mxu0 0
        %4482 = vmatprep.subr.bf16.mxu0 0
        %4483 = vmatpush1.bf16.msra.mxu0 0
        %4484 = vmatprep.subr.bf16.mxu0 0
        %4485 = vmatpush1.bf16.msra.mxu0 0
        %4486 = vmatprep.subr.bf16.mxu0 0
        %4487 = vmatpush1.bf16.msra.mxu0 0
        %4488 = vmatprep.mubr.bf16.mxu0 0
        %4489 = vmatmul.mubr.bf16.gmra.mrb[0].mxu0 %v4451
        %v4490 = vpop.f32.mrb[0].mxu0
        %v4491 = vadd.f32 %v4423, %v4490
        %v4492 = vpop.f32.mrb[0].mxu0
        %v4493 = vpop.f32.mrb[0].mxu0
        %v4494 = vadd.f32 %v4428, %v4493
        %v4495 = vpop.f32.mrb[0].mxu0
        %4496 = vmatprep.mubr.bf16.mxu0 0
        %4497 = vmatmul.mubr.bf16.gmra.mrb[0].mxu0 %v4454
        %v4498 = vpop.f32.mrb[0].mxu0
        %v4499 = vadd.f32 %v4433, %v4498
        %v4500 = vpop.f32.mrb[0].mxu0
        %v4501 = vpop.f32.mrb[0].mxu0
        %v4502 = vadd.f32 %v4438, %v4501
        %v4503 = vpop.f32.mrb[0].mxu0
        %4504 = vdwg.mxu0
        %s4505 = scalar_lea.vmem %s11, 192
        %v4506 = vld [vmem:[%s4505] sm:$0xf]
        %v4507 = vld [vmem:[%s4505 + $0x4] sm:$0xf]
        %v4508 = vld [vmem:[%s4505 + $0x8] sm:$0xf]
        %v4509 = vld [vmem:[%s4505 + $0xc] sm:$0xf]
        %s4510 = scalar_lea.vmem %s12, 384
        %v4511 = vld [vmem:[%s4510] sm:$0xff]
        %v4512 = vld [vmem:[%s4510 + $0x8] sm:$0xff]
        %v4513 = vld [vmem:[%s4510 + $0x10] sm:$0xff]
        %v4514 = vld [vmem:[%s4510 + $0x18] sm:$0xff]
        %4516 = vset.pattern.permute.xlu0 0
        %4517 = vperm.xlu0 %4516, %v4511
        %v4518 = vpop.permute.xlu0 %4517
        %4521 = vset.pattern.permute.xlu0 0
        %4522 = vperm.xlu0 %4521, %v4512
        %v4523 = vpop.permute.xlu0 %4522
        %4526 = vset.pattern.permute.xlu0 0
        %4527 = vperm.xlu0 %4526, %v4513
        %v4528 = vpop.permute.xlu0 %4527
        %4531 = vset.pattern.permute.xlu0 0
        %4532 = vperm.xlu0 %4531, %v4514
        %v4533 = vpop.permute.xlu0 %4532
        %v4539 = vunpack.c.l.b16 %v4506
        %v4540 = vunpack.c.l.b16 %v4507
        %v4541 = vunpack.c.l.b16 %v4508
        %v4542 = vunpack.c.l.b16 %v4509
        %v4543 = vpack.c.b16 %v4540, %v4539
        %v4544 = vpack.c.b16 %v4542, %v4541
        %v4546 = vsel %vm943, %v4543, 0
        %v4549 = vsel %vm943, %v4544, 0
        %4551 = vmatprep.subr.bf16.mxu0 0
        %4552 = vmatpush1.bf16.msra.mxu0 %v2211
        %4553 = vmatprep.subr.bf16.mxu0 0
        %4554 = vmatpush1.bf16.msra.mxu0 %v2212
        %4555 = vmatprep.subr.bf16.mxu0 0
        %4556 = vmatpush1.bf16.msra.mxu0 %v2213
        %4557 = vmatprep.subr.bf16.mxu0 0
        %4558 = vmatpush1.bf16.msra.mxu0 %v2214
        %4559 = vmatprep.subr.bf16.mxu0 0
        %4560 = vmatpush1.bf16.msra.mxu0 0
        %4561 = vmatprep.subr.bf16.mxu0 0
        %4562 = vmatpush1.bf16.msra.mxu0 0
        %4563 = vmatprep.subr.bf16.mxu0 0
        %4564 = vmatpush1.bf16.msra.mxu0 0
        %4565 = vmatprep.subr.bf16.mxu0 0
        %4566 = vmatpush1.bf16.msra.mxu0 0
        %4567 = vmatprep.subr.bf16.mxu0 0
        %4568 = vmatpush1.bf16.msra.mxu0 0
        %4569 = vmatprep.subr.bf16.mxu0 0
        %4570 = vmatpush1.bf16.msra.mxu0 0
        %4571 = vmatprep.subr.bf16.mxu0 0
        %4572 = vmatpush1.bf16.msra.mxu0 0
        %4573 = vmatprep.subr.bf16.mxu0 0
        %4574 = vmatpush1.bf16.msra.mxu0 0
        %4575 = vmatprep.subr.bf16.mxu0 0
        %4576 = vmatpush1.bf16.msra.mxu0 0
        %4577 = vmatprep.subr.bf16.mxu0 0
        %4578 = vmatpush1.bf16.msra.mxu0 0
        %4579 = vmatprep.subr.bf16.mxu0 0
        %4580 = vmatpush1.bf16.msra.mxu0 0
        %4581 = vmatprep.subr.bf16.mxu0 0
        %4582 = vmatpush1.bf16.msra.mxu0 0
        %4583 = vmatprep.mubr.bf16.mxu0 0
        %4584 = vmatmul.mubr.bf16.gmra.mrb[0].mxu0 %v4546
        %v4585 = vpop.f32.mrb[0].mxu0
        %v4586 = vadd.f32 %v4518, %v4585
        %v4587 = vpop.f32.mrb[0].mxu0
        %v4588 = vpop.f32.mrb[0].mxu0
        %v4589 = vadd.f32 %v4523, %v4588
        %v4590 = vpop.f32.mrb[0].mxu0
        %4591 = vmatprep.mubr.bf16.mxu0 0
        %4592 = vmatmul.mubr.bf16.gmra.mrb[0].mxu0 %v4549
        %v4593 = vpop.f32.mrb[0].mxu0
        %v4594 = vadd.f32 %v4528, %v4593
        %v4595 = vpop.f32.mrb[0].mxu0
        %v4596 = vpop.f32.mrb[0].mxu0
        %v4597 = vadd.f32 %v4533, %v4596
        %v4598 = vpop.f32.mrb[0].mxu0
        %4599 = vdwg.mxu0
        %v4600 = vpack.c.bf16 %v4586, %v4586
        %v4601 = vpack.c.bf16 %v4491, %v4491
        %v4602 = vpack.c.bf16 %v4589, %v4589
        %v4603 = vpack.c.bf16 %v4494, %v4494
        %v4605 = vsel %vm1485, %v4602, 0
        %v4608 = vsel %vm1485, %v4603, 0
        %4610 = vmatprep.subr.bf16.mxu0 0
        %4611 = vmatpush1.bf16.xpose.msra.mxu0 %v4608
        %4612 = vmatprep.subr.bf16.mxu0 0
        %4613 = vmatpush1.bf16.xpose.msra.mxu0 0
        %4614 = vmatprep.subr.bf16.mxu0 0
        %4615 = vmatpush1.bf16.xpose.msra.mxu0 0
        %4616 = vmatprep.subr.bf16.mxu0 0
        %4617 = vmatpush1.bf16.xpose.msra.mxu0 0
        %4618 = vmatprep.subr.bf16.mxu0 0
        %4619 = vmatpush1.bf16.xpose.msra.mxu0 0
        %4620 = vmatprep.subr.bf16.mxu0 0
        %4621 = vmatpush1.bf16.xpose.msra.mxu0 0
        %4622 = vmatprep.subr.bf16.mxu0 0
        %4623 = vmatpush1.bf16.xpose.msra.mxu0 0
        %4624 = vmatprep.subr.bf16.mxu0 0
        %4625 = vmatpush1.bf16.xpose.msra.mxu0 0
        %4626 = vmatprep.subr.bf16.mxu0 0
        %4627 = vmatpush1.bf16.xpose.msra.mxu0 0
        %4628 = vmatprep.subr.bf16.mxu0 0
        %4629 = vmatpush1.bf16.xpose.msra.mxu0 0
        %4630 = vmatprep.subr.bf16.mxu0 0
        %4631 = vmatpush1.bf16.xpose.msra.mxu0 0
        %4632 = vmatprep.subr.bf16.mxu0 0
        %4633 = vmatpush1.bf16.xpose.msra.mxu0 0
        %4634 = vmatprep.subr.bf16.mxu0 0
        %4635 = vmatpush1.bf16.xpose.msra.mxu0 0
        %4636 = vmatprep.subr.bf16.mxu0 0
        %4637 = vmatpush1.bf16.xpose.msra.mxu0 0
        %4638 = vmatprep.subr.bf16.mxu0 0
        %4639 = vmatpush1.bf16.xpose.msra.mxu0 0
        %4640 = vmatprep.subr.bf16.mxu0 0
        %4641 = vmatpush1.bf16.xpose.msra.mxu0 0
        %4642 = vmatprep.mubr.bf16.mxu0 0
        %4643 = vmatmul.mubr.bf16.gmra.mrb[0].mxu0 %v4605
        %v4644 = vpop.f32.mrb[0].mxu0
        %v4645 = vadd.f32 0.0, %v4644
        %v4646 = vpop.f32.mrb[0].mxu0
        %v4647 = vpop.f32.mrb[0].mxu0
        %v4648 = vpop.f32.mrb[0].mxu0
        %4649 = vdwg.mxu0
        %v4651 = vsel %vm1485, %v4600, 0
        %v4654 = vsel %vm1485, %v4601, 0
        %4656 = vmatprep.subr.bf16.mxu0 0
        %4657 = vmatpush1.bf16.xpose.msra.mxu0 %v4654
        %4658 = vmatprep.subr.bf16.mxu0 0
        %4659 = vmatpush1.bf16.xpose.msra.mxu0 0
        %4660 = vmatprep.subr.bf16.mxu0 0
        %4661 = vmatpush1.bf16.xpose.msra.mxu0 0
        %4662 = vmatprep.subr.bf16.mxu0 0
        %4663 = vmatpush1.bf16.xpose.msra.mxu0 0
        %4664 = vmatprep.subr.bf16.mxu0 0
        %4665 = vmatpush1.bf16.xpose.msra.mxu0 0
        %4666 = vmatprep.subr.bf16.mxu0 0
        %4667 = vmatpush1.bf16.xpose.msra.mxu0 0
        %4668 = vmatprep.subr.bf16.mxu0 0
        %4669 = vmatpush1.bf16.xpose.msra.mxu0 0
        %4670 = vmatprep.subr.bf16.mxu0 0
        %4671 = vmatpush1.bf16.xpose.msra.mxu0 0
        %4672 = vmatprep.subr.bf16.mxu0 0
        %4673 = vmatpush1.bf16.xpose.msra.mxu0 0
        %4674 = vmatprep.subr.bf16.mxu0 0
        %4675 = vmatpush1.bf16.xpose.msra.mxu0 0
        %4676 = vmatprep.subr.bf16.mxu0 0
        %4677 = vmatpush1.bf16.xpose.msra.mxu0 0
        %4678 = vmatprep.subr.bf16.mxu0 0
        %4679 = vmatpush1.bf16.xpose.msra.mxu0 0
        %4680 = vmatprep.subr.bf16.mxu0 0
        %4681 = vmatpush1.bf16.xpose.msra.mxu0 0
        %4682 = vmatprep.subr.bf16.mxu0 0
        %4683 = vmatpush1.bf16.xpose.msra.mxu0 0
        %4684 = vmatprep.subr.bf16.mxu0 0
        %4685 = vmatpush1.bf16.xpose.msra.mxu0 0
        %4686 = vmatprep.subr.bf16.mxu0 0
        %4687 = vmatpush1.bf16.xpose.msra.mxu0 0
        %4688 = vmatprep.mubr.bf16.mxu0 0
        %4689 = vmatmul.mubr.bf16.gmra.mrb[0].mxu0 %v4651
        %v4690 = vpop.f32.mrb[0].mxu0
        %v4691 = vadd.f32 %v4645, %v4690
        %v4692 = vpop.f32.mrb[0].mxu0
        %v4693 = vpop.f32.mrb[0].mxu0
        %v4694 = vpop.f32.mrb[0].mxu0
        %4695 = vdwg.mxu0
        %v4696 = vpack.c.bf16 %v4594, %v4594
        %v4697 = vpack.c.bf16 %v4499, %v4499
        %v4699 = vsel %vm1485, %v4696, 0
        %v4702 = vsel %vm1485, %v4697, 0
        %4704 = vmatprep.subr.bf16.mxu0 0
        %4705 = vmatpush1.bf16.xpose.msra.mxu0 %v4702
        %4706 = vmatprep.subr.bf16.mxu0 0
        %4707 = vmatpush1.bf16.xpose.msra.mxu0 0
        %4708 = vmatprep.subr.bf16.mxu0 0
        %4709 = vmatpush1.bf16.xpose.msra.mxu0 0
        %4710 = vmatprep.subr.bf16.mxu0 0
        %4711 = vmatpush1.bf16.xpose.msra.mxu0 0
        %4712 = vmatprep.subr.bf16.mxu0 0
        %4713 = vmatpush1.bf16.xpose.msra.mxu0 0
        %4714 = vmatprep.subr.bf16.mxu0 0
        %4715 = vmatpush1.bf16.xpose.msra.mxu0 0
        %4716 = vmatprep.subr.bf16.mxu0 0
        %4717 = vmatpush1.bf16.xpose.msra.mxu0 0
        %4718 = vmatprep.subr.bf16.mxu0 0
        %4719 = vmatpush1.bf16.xpose.msra.mxu0 0
        %4720 = vmatprep.subr.bf16.mxu0 0
        %4721 = vmatpush1.bf16.xpose.msra.mxu0 0
        %4722 = vmatprep.subr.bf16.mxu0 0
        %4723 = vmatpush1.bf16.xpose.msra.mxu0 0
        %4724 = vmatprep.subr.bf16.mxu0 0
        %4725 = vmatpush1.bf16.xpose.msra.mxu0 0
        %4726 = vmatprep.subr.bf16.mxu0 0
        %4727 = vmatpush1.bf16.xpose.msra.mxu0 0
        %4728 = vmatprep.subr.bf16.mxu0 0
        %4729 = vmatpush1.bf16.xpose.msra.mxu0 0
        %4730 = vmatprep.subr.bf16.mxu0 0
        %4731 = vmatpush1.bf16.xpose.msra.mxu0 0
        %4732 = vmatprep.subr.bf16.mxu0 0
        %4733 = vmatpush1.bf16.xpose.msra.mxu0 0
        %4734 = vmatprep.subr.bf16.mxu0 0
        %4735 = vmatpush1.bf16.xpose.msra.mxu0 0
        %4736 = vmatprep.mubr.bf16.mxu0 0
        %4737 = vmatmul.mubr.bf16.gmra.mrb[0].mxu0 %v4699
        %v4738 = vpop.f32.mrb[0].mxu0
        %v4739 = vadd.f32 0.0, %v4738
        %v4740 = vpop.f32.mrb[0].mxu0
        %v4741 = vpop.f32.mrb[0].mxu0
        %v4742 = vpop.f32.mrb[0].mxu0
        %4743 = vdwg.mxu0
        %v4744 = vadd.f32 %v4691, %v4739
        %v4745 = vpack.c.bf16 %v4597, %v4597
        %v4746 = vpack.c.bf16 %v4502, %v4502
        %v4748 = vsel %vm1485, %v4745, 0
        %v4751 = vsel %vm1485, %v4746, 0
        %4753 = vmatprep.subr.bf16.mxu0 0
        %4754 = vmatpush1.bf16.xpose.msra.mxu0 %v4751
        %4755 = vmatprep.subr.bf16.mxu0 0
        %4756 = vmatpush1.bf16.xpose.msra.mxu0 0
        %4757 = vmatprep.subr.bf16.mxu0 0
        %4758 = vmatpush1.bf16.xpose.msra.mxu0 0
        %4759 = vmatprep.subr.bf16.mxu0 0
        %4760 = vmatpush1.bf16.xpose.msra.mxu0 0
        %4761 = vmatprep.subr.bf16.mxu0 0
        %4762 = vmatpush1.bf16.xpose.msra.mxu0 0
        %4763 = vmatprep.subr.bf16.mxu0 0
        %4764 = vmatpush1.bf16.xpose.msra.mxu0 0
        %4765 = vmatprep.subr.bf16.mxu0 0
        %4766 = vmatpush1.bf16.xpose.msra.mxu0 0
        %4767 = vmatprep.subr.bf16.mxu0 0
        %4768 = vmatpush1.bf16.xpose.msra.mxu0 0
        %4769 = vmatprep.subr.bf16.mxu0 0
        %4770 = vmatpush1.bf16.xpose.msra.mxu0 0
        %4771 = vmatprep.subr.bf16.mxu0 0
        %4772 = vmatpush1.bf16.xpose.msra.mxu0 0
        %4773 = vmatprep.subr.bf16.mxu0 0
        %4774 = vmatpush1.bf16.xpose.msra.mxu0 0
        %4775 = vmatprep.subr.bf16.mxu0 0
        %4776 = vmatpush1.bf16.xpose.msra.mxu0 0
        %4777 = vmatprep.subr.bf16.mxu0 0
        %4778 = vmatpush1.bf16.xpose.msra.mxu0 0
        %4779 = vmatprep.subr.bf16.mxu0 0
        %4780 = vmatpush1.bf16.xpose.msra.mxu0 0
        %4781 = vmatprep.subr.bf16.mxu0 0
        %4782 = vmatpush1.bf16.xpose.msra.mxu0 0
        %4783 = vmatprep.subr.bf16.mxu0 0
        %4784 = vmatpush1.bf16.xpose.msra.mxu0 0
        %4785 = vmatprep.mubr.bf16.mxu0 0
        %4786 = vmatmul.mubr.bf16.gmra.mrb[0].mxu0 %v4748
        %v4787 = vpop.f32.mrb[0].mxu0
        %v4788 = vadd.f32 0.0, %v4787
        %v4789 = vpop.f32.mrb[0].mxu0
        %v4790 = vpop.f32.mrb[0].mxu0
        %v4791 = vpop.f32.mrb[0].mxu0
        %4792 = vdwg.mxu0
        %v4793 = vadd.f32 %v4744, %v4788
        %s4794 = scalar_lea.vmem %s13, 24
        %v4795 = vld [vmem:[%s4794] sm:$0xff]
        %v4796 = vmul.f32 %v4793, %v4795
        %4797 = vmatprep.subr.mxu0 0.0
        %4798 = vmatpush1.msra.mxu0 %v4796
        %4799 = vmatprep.subr.mxu0 0.0
        %4800 = vmatpush1.msra.mxu0 0.0
        %4801 = vmatprep.subr.mxu0 0.0
        %4802 = vmatpush1.msra.mxu0 0.0
        %4803 = vmatprep.subr.mxu0 0.0
        %4804 = vmatpush1.msra.mxu0 0.0
        %4805 = vmatprep.subr.mxu0 0.0
        %4806 = vmatpush1.msra.mxu0 0.0
        %4807 = vmatprep.subr.mxu0 0.0
        %4808 = vmatpush1.msra.mxu0 0.0
        %4809 = vmatprep.subr.mxu0 0.0
        %4810 = vmatpush1.msra.mxu0 0.0
        %4811 = vmatprep.subr.mxu0 0.0
        %4812 = vmatpush1.msra.mxu0 0.0
        %4813 = vmatprep.subr.mxu0 0.0
        %4814 = vmatpush1.msra.mxu0 0.0
        %4815 = vmatprep.subr.mxu0 0.0
        %4816 = vmatpush1.msra.mxu0 0.0
        %4817 = vmatprep.subr.mxu0 0.0
        %4818 = vmatpush1.msra.mxu0 0.0
        %4819 = vmatprep.subr.mxu0 0.0
        %4820 = vmatpush1.msra.mxu0 0.0
        %4821 = vmatprep.subr.mxu0 0.0
        %4822 = vmatpush1.msra.mxu0 0.0
        %4823 = vmatprep.subr.mxu0 0.0
        %4824 = vmatpush1.msra.mxu0 0.0
        %4825 = vmatprep.subr.mxu0 0.0
        %4826 = vmatpush1.msra.mxu0 0.0
        %4827 = vmatprep.subr.mxu0 0.0
        %4828 = vmatpush1.msra.mxu0 0.0
        %4829 = vmatprep.subr.mxu0 0.0
        %4830 = vmatpush1.msra.mxu0 0.0
        %4831 = vmatprep.subr.mxu0 0.0
        %4832 = vmatpush1.msra.mxu0 0.0
        %4833 = vmatprep.subr.mxu0 0.0
        %4834 = vmatpush1.msra.mxu0 0.0
        %4835 = vmatprep.subr.mxu0 0.0
        %4836 = vmatpush1.msra.mxu0 0.0
        %4837 = vmatprep.subr.mxu0 0.0
        %4838 = vmatpush1.msra.mxu0 0.0
        %4839 = vmatprep.subr.mxu0 0.0
        %4840 = vmatpush1.msra.mxu0 0.0
        %4841 = vmatprep.subr.mxu0 0.0
        %4842 = vmatpush1.msra.mxu0 0.0
        %4843 = vmatprep.subr.mxu0 0.0
        %4844 = vmatpush1.msra.mxu0 0.0
        %4845 = vmatprep.subr.mxu0 0.0
        %4846 = vmatpush1.msra.mxu0 0.0
        %4847 = vmatprep.subr.mxu0 0.0
        %4848 = vmatpush1.msra.mxu0 0.0
        %4849 = vmatprep.subr.mxu0 0.0
        %4850 = vmatpush1.msra.mxu0 0.0
        %4851 = vmatprep.subr.mxu0 0.0
        %4852 = vmatpush1.msra.mxu0 0.0
        %4853 = vmatprep.subr.mxu0 0.0
        %4854 = vmatpush1.msra.mxu0 0.0
        %4855 = vmatprep.subr.mxu0 0.0
        %4856 = vmatpush1.msra.mxu0 0.0
        %4857 = vmatprep.subr.mxu0 0.0
        %4858 = vmatpush1.msra.mxu0 0.0
        %4859 = vmatprep.subr.mxu0 0.0
        %4860 = vmatpush1.msra.mxu0 0.0
        %4861 = vmatprep.mubr.f32.mxu0 0.0
        %4862 = vmatmul.mubr.f32.gmra.mrb[0].mxu0 %v2610
        %v4863 = vpop.f32.mrb[0].mxu0
        %v4864 = vadd.f32 0.0, %v4863
        %v4865 = vpop.f32.mrb[0].mxu0
        %4866 = vmatprep.mubr.f32.mxu0 0.0
        %4867 = vmatmul.mubr.f32.gmra.mrb[0].mxu0 %v2613
        %v4868 = vpop.f32.mrb[0].mxu0
        %v4869 = vadd.f32 0.0, %v4868
        %v4870 = vpop.f32.mrb[0].mxu0
        %4871 = vmatprep.mubr.f32.mxu0 0.0
        %4872 = vmatmul.mubr.f32.gmra.mrb[0].mxu0 %v2616
        %v4873 = vpop.f32.mrb[0].mxu0
        %v4874 = vadd.f32 0.0, %v4873
        %v4875 = vpop.f32.mrb[0].mxu0
        %4876 = vmatprep.mubr.f32.mxu0 0.0
        %4877 = vmatmul.mubr.f32.gmra.mrb[0].mxu0 %v2619
        %v4878 = vpop.f32.mrb[0].mxu0
        %v4879 = vadd.f32 0.0, %v4878
        %v4880 = vpop.f32.mrb[0].mxu0
        %4881 = vmatprep.mubr.f32.mxu0 0.0
        %4882 = vmatmul.mubr.f32.gmra.mrb[0].mxu0 %v2622
        %v4883 = vpop.f32.mrb[0].mxu0
        %v4884 = vadd.f32 0.0, %v4883
        %v4885 = vpop.f32.mrb[0].mxu0
        %4886 = vmatprep.mubr.f32.mxu0 0.0
        %4887 = vmatmul.mubr.f32.gmra.mrb[0].mxu0 %v2625
        %v4888 = vpop.f32.mrb[0].mxu0
        %v4889 = vadd.f32 0.0, %v4888
        %v4890 = vpop.f32.mrb[0].mxu0
        %4891 = vmatprep.mubr.f32.mxu0 0.0
        %4892 = vmatmul.mubr.f32.gmra.mrb[0].mxu0 %v2628
        %v4893 = vpop.f32.mrb[0].mxu0
        %v4894 = vadd.f32 0.0, %v4893
        %v4895 = vpop.f32.mrb[0].mxu0
        %4896 = vmatprep.mubr.f32.mxu0 0.0
        %4897 = vmatmul.mubr.f32.gmra.mrb[0].mxu0 %v2631
        %v4898 = vpop.f32.mrb[0].mxu0
        %v4899 = vadd.f32 0.0, %v4898
        %v4900 = vpop.f32.mrb[0].mxu0
        %4901 = vdwg.mxu0
        %v4903 = vsel %vm2608, %v4864, 0
        %v4906 = vsel %vm2608, %v4869, 0
        %v4909 = vsel %vm2608, %v4874, 0
        %v4912 = vsel %vm2608, %v4879, 0
        %v4915 = vsel %vm2608, %v4884, 0
        %v4918 = vsel %vm2608, %v4889, 0
        %v4921 = vsel %vm2608, %v4894, 0
        %v4924 = vsel %vm2608, %v4899, 0
        %4926 = vmatprep.subr.mxu0 0.0
        %4927 = vmatpush1.msra.mxu0 %v2223
        %4928 = vmatprep.subr.mxu0 0.0
        %4929 = vmatpush1.msra.mxu0 0.0
        %4930 = vmatprep.subr.mxu0 0.0
        %4931 = vmatpush1.msra.mxu0 0.0
        %4932 = vmatprep.subr.mxu0 0.0
        %4933 = vmatpush1.msra.mxu0 0.0
        %4934 = vmatprep.subr.mxu0 0.0
        %4935 = vmatpush1.msra.mxu0 0.0
        %4936 = vmatprep.subr.mxu0 0.0
        %4937 = vmatpush1.msra.mxu0 0.0
        %4938 = vmatprep.subr.mxu0 0.0
        %4939 = vmatpush1.msra.mxu0 0.0
        %4940 = vmatprep.subr.mxu0 0.0
        %4941 = vmatpush1.msra.mxu0 0.0
        %4942 = vmatprep.subr.mxu0 0.0
        %4943 = vmatpush1.msra.mxu0 0.0
        %4944 = vmatprep.subr.mxu0 0.0
        %4945 = vmatpush1.msra.mxu0 0.0
        %4946 = vmatprep.subr.mxu0 0.0
        %4947 = vmatpush1.msra.mxu0 0.0
        %4948 = vmatprep.subr.mxu0 0.0
        %4949 = vmatpush1.msra.mxu0 0.0
        %4950 = vmatprep.subr.mxu0 0.0
        %4951 = vmatpush1.msra.mxu0 0.0
        %4952 = vmatprep.subr.mxu0 0.0
        %4953 = vmatpush1.msra.mxu0 0.0
        %4954 = vmatprep.subr.mxu0 0.0
        %4955 = vmatpush1.msra.mxu0 0.0
        %4956 = vmatprep.subr.mxu0 0.0
        %4957 = vmatpush1.msra.mxu0 0.0
        %4958 = vmatprep.subr.mxu0 0.0
        %4959 = vmatpush1.msra.mxu0 0.0
        %4960 = vmatprep.subr.mxu0 0.0
        %4961 = vmatpush1.msra.mxu0 0.0
        %4962 = vmatprep.subr.mxu0 0.0
        %4963 = vmatpush1.msra.mxu0 0.0
        %4964 = vmatprep.subr.mxu0 0.0
        %4965 = vmatpush1.msra.mxu0 0.0
        %4966 = vmatprep.subr.mxu0 0.0
        %4967 = vmatpush1.msra.mxu0 0.0
        %4968 = vmatprep.subr.mxu0 0.0
        %4969 = vmatpush1.msra.mxu0 0.0
        %4970 = vmatprep.subr.mxu0 0.0
        %4971 = vmatpush1.msra.mxu0 0.0
        %4972 = vmatprep.subr.mxu0 0.0
        %4973 = vmatpush1.msra.mxu0 0.0
        %4974 = vmatprep.subr.mxu0 0.0
        %4975 = vmatpush1.msra.mxu0 0.0
        %4976 = vmatprep.subr.mxu0 0.0
        %4977 = vmatpush1.msra.mxu0 0.0
        %4978 = vmatprep.subr.mxu0 0.0
        %4979 = vmatpush1.msra.mxu0 0.0
        %4980 = vmatprep.subr.mxu0 0.0
        %4981 = vmatpush1.msra.mxu0 0.0
        %4982 = vmatprep.subr.mxu0 0.0
        %4983 = vmatpush1.msra.mxu0 0.0
        %4984 = vmatprep.subr.mxu0 0.0
        %4985 = vmatpush1.msra.mxu0 0.0
        %4986 = vmatprep.subr.mxu0 0.0
        %4987 = vmatpush1.msra.mxu0 0.0
        %4988 = vmatprep.subr.mxu0 0.0
        %4989 = vmatpush1.msra.mxu0 0.0
        %4990 = vmatprep.mubr.f32.mxu0 0.0
        %4991 = vmatmul.mubr.f32.gmra.mrb[0].mxu0 %v4903
        %v4992 = vpop.f32.mrb[0].mxu0
        %v4993 = vadd.f32 0.0, %v4992
        %v4994 = vpop.f32.mrb[0].mxu0
        %4995 = vmatprep.mubr.f32.mxu0 0.0
        %4996 = vmatmul.mubr.f32.gmra.mrb[0].mxu0 %v4906
        %v4997 = vpop.f32.mrb[0].mxu0
        %v4998 = vadd.f32 0.0, %v4997
        %v4999 = vpop.f32.mrb[0].mxu0
        %5000 = vmatprep.mubr.f32.mxu0 0.0
        %5001 = vmatmul.mubr.f32.gmra.mrb[0].mxu0 %v4909
        %v5002 = vpop.f32.mrb[0].mxu0
        %v5003 = vadd.f32 0.0, %v5002
        %v5004 = vpop.f32.mrb[0].mxu0
        %5005 = vmatprep.mubr.f32.mxu0 0.0
        %5006 = vmatmul.mubr.f32.gmra.mrb[0].mxu0 %v4912
        %v5007 = vpop.f32.mrb[0].mxu0
        %v5008 = vadd.f32 0.0, %v5007
        %v5009 = vpop.f32.mrb[0].mxu0
        %5010 = vmatprep.mubr.f32.mxu0 0.0
        %5011 = vmatmul.mubr.f32.gmra.mrb[0].mxu0 %v4915
        %v5012 = vpop.f32.mrb[0].mxu0
        %v5013 = vadd.f32 0.0, %v5012
        %v5014 = vpop.f32.mrb[0].mxu0
        %5015 = vmatprep.mubr.f32.mxu0 0.0
        %5016 = vmatmul.mubr.f32.gmra.mrb[0].mxu0 %v4918
        %v5017 = vpop.f32.mrb[0].mxu0
        %v5018 = vadd.f32 0.0, %v5017
        %v5019 = vpop.f32.mrb[0].mxu0
        %5020 = vmatprep.mubr.f32.mxu0 0.0
        %5021 = vmatmul.mubr.f32.gmra.mrb[0].mxu0 %v4921
        %v5022 = vpop.f32.mrb[0].mxu0
        %v5023 = vadd.f32 0.0, %v5022
        %v5024 = vpop.f32.mrb[0].mxu0
        %5025 = vmatprep.mubr.f32.mxu0 0.0
        %5026 = vmatmul.mubr.f32.gmra.mrb[0].mxu0 %v4924
        %v5027 = vpop.f32.mrb[0].mxu0
        %v5028 = vadd.f32 0.0, %v5027
        %v5029 = vpop.f32.mrb[0].mxu0
        %5030 = vdwg.mxu0
        %s5031 = scalar_lea.vmem %s14, 192
        %v5032 = vld [vmem:[%s5031] sm:$0xff]
        %v5033 = vld [vmem:[%s5031 + $0x8] sm:$0xff]
        %v5034 = vld [vmem:[%s5031 + $0x10] sm:$0xff]
        %v5035 = vld [vmem:[%s5031 + $0x18] sm:$0xff]
        %v5036 = vld [vmem:[%s5031 + $0x20] sm:$0xff]
        %v5037 = vld [vmem:[%s5031 + $0x28] sm:$0xff]
        %v5038 = vld [vmem:[%s5031 + $0x30] sm:$0xff]
        %v5039 = vld [vmem:[%s5031 + $0x38] sm:$0xff]
        %v5040 = vmul.f32 %v5032, %v4993
        %v5041 = vmul.f32 %v5033, %v4998
        %v5042 = vmul.f32 %v5034, %v5003
        %v5043 = vmul.f32 %v5035, %v5008
        %v5044 = vmul.f32 %v5036, %v5013
        %v5045 = vmul.f32 %v5037, %v5018
        %v5046 = vmul.f32 %v5038, %v5023
        %v5047 = vmul.f32 %v5039, %v5028
        %v5048 = vpack.c.bf16 %v5041, %v5040
        %v5049 = vpack.c.bf16 %v5043, %v5042
        %v5050 = vpack.c.bf16 %v5045, %v5044
        %v5051 = vpack.c.bf16 %v5047, %v5046
        %v5053 = vsel %vm943, %v5048, 0
        %v5056 = vsel %vm943, %v5049, 0
        %v5059 = vsel %vm943, %v5050, 0
        %v5062 = vsel %vm943, %v5051, 0
        %5064 = vmatprep.subr.bf16.mxu0 0
        %5065 = vmatpush1.bf16.msra.mxu0 %v2191
        %5066 = vmatprep.subr.bf16.mxu0 0
        %5067 = vmatpush1.bf16.msra.mxu0 %v2192
        %5068 = vmatprep.subr.bf16.mxu0 0
        %5069 = vmatpush1.bf16.msra.mxu0 %v2193
        %5070 = vmatprep.subr.bf16.mxu0 0
        %5071 = vmatpush1.bf16.msra.mxu0 %v2194
        %5072 = vmatprep.subr.bf16.mxu0 0
        %5073 = vmatpush1.bf16.msra.mxu0 0
        %5074 = vmatprep.subr.bf16.mxu0 0
        %5075 = vmatpush1.bf16.msra.mxu0 0
        %5076 = vmatprep.subr.bf16.mxu0 0
        %5077 = vmatpush1.bf16.msra.mxu0 0
        %5078 = vmatprep.subr.bf16.mxu0 0
        %5079 = vmatpush1.bf16.msra.mxu0 0
        %5080 = vmatprep.subr.bf16.mxu0 0
        %5081 = vmatpush1.bf16.msra.mxu0 0
        %5082 = vmatprep.subr.bf16.mxu0 0
        %5083 = vmatpush1.bf16.msra.mxu0 0
        %5084 = vmatprep.subr.bf16.mxu0 0
        %5085 = vmatpush1.bf16.msra.mxu0 0
        %5086 = vmatprep.subr.bf16.mxu0 0
        %5087 = vmatpush1.bf16.msra.mxu0 0
        %5088 = vmatprep.subr.bf16.mxu0 0
        %5089 = vmatpush1.bf16.msra.mxu0 0
        %5090 = vmatprep.subr.bf16.mxu0 0
        %5091 = vmatpush1.bf16.msra.mxu0 0
        %5092 = vmatprep.subr.bf16.mxu0 0
        %5093 = vmatpush1.bf16.msra.mxu0 0
        %5094 = vmatprep.subr.bf16.mxu0 0
        %5095 = vmatpush1.bf16.msra.mxu0 0
        %5096 = vmatprep.mubr.bf16.mxu0 0
        %5097 = vmatmul.mubr.bf16.gmra.mrb[0].mxu0 %v5053
        %v5098 = vpop.f32.mrb[0].mxu0
        %v5099 = vadd.f32 0.0, %v5098
        %v5100 = vpop.f32.mrb[0].mxu0
        %v5101 = vpop.f32.mrb[0].mxu0
        %v5102 = vadd.f32 0.0, %v5101
        %v5103 = vpop.f32.mrb[0].mxu0
        %5104 = vmatprep.mubr.bf16.mxu0 0
        %5105 = vmatmul.mubr.bf16.gmra.mrb[0].mxu0 %v5056
        %v5106 = vpop.f32.mrb[0].mxu0
        %v5107 = vadd.f32 0.0, %v5106
        %v5108 = vpop.f32.mrb[0].mxu0
        %v5109 = vpop.f32.mrb[0].mxu0
        %v5110 = vadd.f32 0.0, %v5109
        %v5111 = vpop.f32.mrb[0].mxu0
        %5112 = vmatprep.mubr.bf16.mxu0 0
        %5113 = vmatmul.mubr.bf16.gmra.mrb[0].mxu0 %v5059
        %v5114 = vpop.f32.mrb[0].mxu0
        %v5115 = vadd.f32 0.0, %v5114
        %v5116 = vpop.f32.mrb[0].mxu0
        %v5117 = vpop.f32.mrb[0].mxu0
        %v5118 = vadd.f32 0.0, %v5117
        %v5119 = vpop.f32.mrb[0].mxu0
        %5120 = vmatprep.mubr.bf16.mxu0 0
        %5121 = vmatmul.mubr.bf16.gmra.mrb[0].mxu0 %v5062
        %v5122 = vpop.f32.mrb[0].mxu0
        %v5123 = vadd.f32 0.0, %v5122
        %v5124 = vpop.f32.mrb[0].mxu0
        %v5125 = vpop.f32.mrb[0].mxu0
        %v5126 = vadd.f32 0.0, %v5125
        %v5127 = vpop.f32.mrb[0].mxu0
        %5128 = vdwg.mxu0
        %v5129 = vadd.f32 %v4402, %v5099
        %v5130 = vadd.f32 %v4403, %v5102
        %v5131 = vadd.f32 %v4404, %v5107
        %v5132 = vadd.f32 %v4405, %v5110
        %v5133 = vadd.f32 %v4406, %v5115
        %v5134 = vadd.f32 %v4407, %v5118
        %v5135 = vadd.f32 %v4408, %v5123
        %v5136 = vadd.f32 %v4409, %v5126
        %s5137 = scalar_lea.vmem %s11, 64
        %v5138 = vld [vmem:[%s5137] sm:$0xf]
        %v5139 = vld [vmem:[%s5137 + $0x4] sm:$0xf]
        %v5140 = vld [vmem:[%s5137 + $0x8] sm:$0xf]
        %v5141 = vld [vmem:[%s5137 + $0xc] sm:$0xf]
        %s5142 = scalar_lea.vmem %s12, 128
        %v5143 = vld [vmem:[%s5142] sm:$0xff]
        %v5144 = vld [vmem:[%s5142 + $0x8] sm:$0xff]
        %v5145 = vld [vmem:[%s5142 + $0x10] sm:$0xff]
        %v5146 = vld [vmem:[%s5142 + $0x18] sm:$0xff]
        %5148 = vset.pattern.permute.xlu0 0
        %5149 = vperm.xlu0 %5148, %v5143
        %v5150 = vpop.permute.xlu0 %5149
        %5153 = vset.pattern.permute.xlu0 0
        %5154 = vperm.xlu0 %5153, %v5144
        %v5155 = vpop.permute.xlu0 %5154
        %5158 = vset.pattern.permute.xlu0 0
        %5159 = vperm.xlu0 %5158, %v5145
        %v5160 = vpop.permute.xlu0 %5159
        %5163 = vset.pattern.permute.xlu0 0
        %5164 = vperm.xlu0 %5163, %v5146
        %v5165 = vpop.permute.xlu0 %5164
        %v5171 = vunpack.c.l.b16 %v5138
        %v5172 = vunpack.c.l.b16 %v5139
        %v5173 = vunpack.c.l.b16 %v5140
        %v5174 = vunpack.c.l.b16 %v5141
        %v5175 = vpack.c.b16 %v5172, %v5171
        %v5176 = vpack.c.b16 %v5174, %v5173
        %v5178 = vsel %vm943, %v5175, 0
        %v5181 = vsel %vm943, %v5176, 0
        %5183 = vmatprep.subr.bf16.mxu0 0
        %5184 = vmatpush1.bf16.msra.mxu0 %v2211
        %5185 = vmatprep.subr.bf16.mxu0 0
        %5186 = vmatpush1.bf16.msra.mxu0 %v2212
        %5187 = vmatprep.subr.bf16.mxu0 0
        %5188 = vmatpush1.bf16.msra.mxu0 %v2213
        %5189 = vmatprep.subr.bf16.mxu0 0
        %5190 = vmatpush1.bf16.msra.mxu0 %v2214
        %5191 = vmatprep.subr.bf16.mxu0 0
        %5192 = vmatpush1.bf16.msra.mxu0 0
        %5193 = vmatprep.subr.bf16.mxu0 0
        %5194 = vmatpush1.bf16.msra.mxu0 0
        %5195 = vmatprep.subr.bf16.mxu0 0
        %5196 = vmatpush1.bf16.msra.mxu0 0
        %5197 = vmatprep.subr.bf16.mxu0 0
        %5198 = vmatpush1.bf16.msra.mxu0 0
        %5199 = vmatprep.subr.bf16.mxu0 0
        %5200 = vmatpush1.bf16.msra.mxu0 0
        %5201 = vmatprep.subr.bf16.mxu0 0
        %5202 = vmatpush1.bf16.msra.mxu0 0
        %5203 = vmatprep.subr.bf16.mxu0 0
        %5204 = vmatpush1.bf16.msra.mxu0 0
        %5205 = vmatprep.subr.bf16.mxu0 0
        %5206 = vmatpush1.bf16.msra.mxu0 0
        %5207 = vmatprep.subr.bf16.mxu0 0
        %5208 = vmatpush1.bf16.msra.mxu0 0
        %5209 = vmatprep.subr.bf16.mxu0 0
        %5210 = vmatpush1.bf16.msra.mxu0 0
        %5211 = vmatprep.subr.bf16.mxu0 0
        %5212 = vmatpush1.bf16.msra.mxu0 0
        %5213 = vmatprep.subr.bf16.mxu0 0
        %5214 = vmatpush1.bf16.msra.mxu0 0
        %5215 = vmatprep.mubr.bf16.mxu0 0
        %5216 = vmatmul.mubr.bf16.gmra.mrb[0].mxu0 %v5178
        %v5217 = vpop.f32.mrb[0].mxu0
        %v5218 = vadd.f32 %v5150, %v5217
        %v5219 = vpop.f32.mrb[0].mxu0
        %v5220 = vpop.f32.mrb[0].mxu0
        %v5221 = vadd.f32 %v5155, %v5220
        %v5222 = vpop.f32.mrb[0].mxu0
        %5223 = vmatprep.mubr.bf16.mxu0 0
        %5224 = vmatmul.mubr.bf16.gmra.mrb[0].mxu0 %v5181
        %v5225 = vpop.f32.mrb[0].mxu0
        %v5226 = vadd.f32 %v5160, %v5225
        %v5227 = vpop.f32.mrb[0].mxu0
        %v5228 = vpop.f32.mrb[0].mxu0
        %v5229 = vadd.f32 %v5165, %v5228
        %v5230 = vpop.f32.mrb[0].mxu0
        %5231 = vdwg.mxu0
        %s5232 = scalar_lea.vmem %s11, 208
        %v5233 = vld [vmem:[%s5232] sm:$0xf]
        %v5234 = vld [vmem:[%s5232 + $0x4] sm:$0xf]
        %v5235 = vld [vmem:[%s5232 + $0x8] sm:$0xf]
        %v5236 = vld [vmem:[%s5232 + $0xc] sm:$0xf]
        %s5237 = scalar_lea.vmem %s12, 416
        %v5238 = vld [vmem:[%s5237] sm:$0xff]
        %v5239 = vld [vmem:[%s5237 + $0x8] sm:$0xff]
        %v5240 = vld [vmem:[%s5237 + $0x10] sm:$0xff]
        %v5241 = vld [vmem:[%s5237 + $0x18] sm:$0xff]
        %5243 = vset.pattern.permute.xlu0 0
        %5244 = vperm.xlu0 %5243, %v5238
        %v5245 = vpop.permute.xlu0 %5244
        %5248 = vset.pattern.permute.xlu0 0
        %5249 = vperm.xlu0 %5248, %v5239
        %v5250 = vpop.permute.xlu0 %5249
        %5253 = vset.pattern.permute.xlu0 0
        %5254 = vperm.xlu0 %5253, %v5240
        %v5255 = vpop.permute.xlu0 %5254
        %5258 = vset.pattern.permute.xlu0 0
        %5259 = vperm.xlu0 %5258, %v5241
        %v5260 = vpop.permute.xlu0 %5259
        %v5266 = vunpack.c.l.b16 %v5233
        %v5267 = vunpack.c.l.b16 %v5234
        %v5268 = vunpack.c.l.b16 %v5235
        %v5269 = vunpack.c.l.b16 %v5236
        %v5270 = vpack.c.b16 %v5267, %v5266
        %v5271 = vpack.c.b16 %v5269, %v5268
        %v5273 = vsel %vm943, %v5270, 0
        %v5276 = vsel %vm943, %v5271, 0
        %5278 = vmatprep.subr.bf16.mxu0 0
        %5279 = vmatpush1.bf16.msra.mxu0 %v2211
        %5280 = vmatprep.subr.bf16.mxu0 0
        %5281 = vmatpush1.bf16.msra.mxu0 %v2212
        %5282 = vmatprep.subr.bf16.mxu0 0
        %5283 = vmatpush1.bf16.msra.mxu0 %v2213
        %5284 = vmatprep.subr.bf16.mxu0 0
        %5285 = vmatpush1.bf16.msra.mxu0 %v2214
        %5286 = vmatprep.subr.bf16.mxu0 0
        %5287 = vmatpush1.bf16.msra.mxu0 0
        %5288 = vmatprep.subr.bf16.mxu0 0
        %5289 = vmatpush1.bf16.msra.mxu0 0
        %5290 = vmatprep.subr.bf16.mxu0 0
        %5291 = vmatpush1.bf16.msra.mxu0 0
        %5292 = vmatprep.subr.bf16.mxu0 0
        %5293 = vmatpush1.bf16.msra.mxu0 0
        %5294 = vmatprep.subr.bf16.mxu0 0
        %5295 = vmatpush1.bf16.msra.mxu0 0
        %5296 = vmatprep.subr.bf16.mxu0 0
        %5297 = vmatpush1.bf16.msra.mxu0 0
        %5298 = vmatprep.subr.bf16.mxu0 0
        %5299 = vmatpush1.bf16.msra.mxu0 0
        %5300 = vmatprep.subr.bf16.mxu0 0
        %5301 = vmatpush1.bf16.msra.mxu0 0
        %5302 = vmatprep.subr.bf16.mxu0 0
        %5303 = vmatpush1.bf16.msra.mxu0 0
        %5304 = vmatprep.subr.bf16.mxu0 0
        %5305 = vmatpush1.bf16.msra.mxu0 0
        %5306 = vmatprep.subr.bf16.mxu0 0
        %5307 = vmatpush1.bf16.msra.mxu0 0
        %5308 = vmatprep.subr.bf16.mxu0 0
        %5309 = vmatpush1.bf16.msra.mxu0 0
        %5310 = vmatprep.mubr.bf16.mxu0 0
        %5311 = vmatmul.mubr.bf16.gmra.mrb[0].mxu0 %v5273
        %v5312 = vpop.f32.mrb[0].mxu0
        %v5313 = vadd.f32 %v5245, %v5312
        %v5314 = vpop.f32.mrb[0].mxu0
        %v5315 = vpop.f32.mrb[0].mxu0
        %v5316 = vadd.f32 %v5250, %v5315
        %v5317 = vpop.f32.mrb[0].mxu0
        %5318 = vmatprep.mubr.bf16.mxu0 0
        %5319 = vmatmul.mubr.bf16.gmra.mrb[0].mxu0 %v5276
        %v5320 = vpop.f32.mrb[0].mxu0
        %v5321 = vadd.f32 %v5255, %v5320
        %v5322 = vpop.f32.mrb[0].mxu0
        %v5323 = vpop.f32.mrb[0].mxu0
        %v5324 = vadd.f32 %v5260, %v5323
        %v5325 = vpop.f32.mrb[0].mxu0
        %5326 = vdwg.mxu0
        %v5327 = vpack.c.bf16 %v5313, %v5313
        %v5328 = vpack.c.bf16 %v5218, %v5218
        %v5329 = vpack.c.bf16 %v5316, %v5316
        %v5330 = vpack.c.bf16 %v5221, %v5221
        %v5332 = vsel %vm1485, %v5329, 0
        %v5335 = vsel %vm1485, %v5330, 0
        %5337 = vmatprep.subr.bf16.mxu0 0
        %5338 = vmatpush1.bf16.xpose.msra.mxu0 %v5335
        %5339 = vmatprep.subr.bf16.mxu0 0
        %5340 = vmatpush1.bf16.xpose.msra.mxu0 0
        %5341 = vmatprep.subr.bf16.mxu0 0
        %5342 = vmatpush1.bf16.xpose.msra.mxu0 0
        %5343 = vmatprep.subr.bf16.mxu0 0
        %5344 = vmatpush1.bf16.xpose.msra.mxu0 0
        %5345 = vmatprep.subr.bf16.mxu0 0
        %5346 = vmatpush1.bf16.xpose.msra.mxu0 0
        %5347 = vmatprep.subr.bf16.mxu0 0
        %5348 = vmatpush1.bf16.xpose.msra.mxu0 0
        %5349 = vmatprep.subr.bf16.mxu0 0
        %5350 = vmatpush1.bf16.xpose.msra.mxu0 0
        %5351 = vmatprep.subr.bf16.mxu0 0
        %5352 = vmatpush1.bf16.xpose.msra.mxu0 0
        %5353 = vmatprep.subr.bf16.mxu0 0
        %5354 = vmatpush1.bf16.xpose.msra.mxu0 0
        %5355 = vmatprep.subr.bf16.mxu0 0
        %5356 = vmatpush1.bf16.xpose.msra.mxu0 0
        %5357 = vmatprep.subr.bf16.mxu0 0
        %5358 = vmatpush1.bf16.xpose.msra.mxu0 0
        %5359 = vmatprep.subr.bf16.mxu0 0
        %5360 = vmatpush1.bf16.xpose.msra.mxu0 0
        %5361 = vmatprep.subr.bf16.mxu0 0
        %5362 = vmatpush1.bf16.xpose.msra.mxu0 0
        %5363 = vmatprep.subr.bf16.mxu0 0
        %5364 = vmatpush1.bf16.xpose.msra.mxu0 0
        %5365 = vmatprep.subr.bf16.mxu0 0
        %5366 = vmatpush1.bf16.xpose.msra.mxu0 0
        %5367 = vmatprep.subr.bf16.mxu0 0
        %5368 = vmatpush1.bf16.xpose.msra.mxu0 0
        %5369 = vmatprep.mubr.bf16.mxu0 0
        %5370 = vmatmul.mubr.bf16.gmra.mrb[0].mxu0 %v5332
        %v5371 = vpop.f32.mrb[0].mxu0
        %v5372 = vadd.f32 0.0, %v5371
        %v5373 = vpop.f32.mrb[0].mxu0
        %v5374 = vpop.f32.mrb[0].mxu0
        %v5375 = vpop.f32.mrb[0].mxu0
        %5376 = vdwg.mxu0
        %v5378 = vsel %vm1485, %v5327, 0
        %v5381 = vsel %vm1485, %v5328, 0
        %5383 = vmatprep.subr.bf16.mxu0 0
        %5384 = vmatpush1.bf16.xpose.msra.mxu0 %v5381
        %5385 = vmatprep.subr.bf16.mxu0 0
        %5386 = vmatpush1.bf16.xpose.msra.mxu0 0
        %5387 = vmatprep.subr.bf16.mxu0 0
        %5388 = vmatpush1.bf16.xpose.msra.mxu0 0
        %5389 = vmatprep.subr.bf16.mxu0 0
        %5390 = vmatpush1.bf16.xpose.msra.mxu0 0
        %5391 = vmatprep.subr.bf16.mxu0 0
        %5392 = vmatpush1.bf16.xpose.msra.mxu0 0
        %5393 = vmatprep.subr.bf16.mxu0 0
        %5394 = vmatpush1.bf16.xpose.msra.mxu0 0
        %5395 = vmatprep.subr.bf16.mxu0 0
        %5396 = vmatpush1.bf16.xpose.msra.mxu0 0
        %5397 = vmatprep.subr.bf16.mxu0 0
        %5398 = vmatpush1.bf16.xpose.msra.mxu0 0
        %5399 = vmatprep.subr.bf16.mxu0 0
        %5400 = vmatpush1.bf16.xpose.msra.mxu0 0
        %5401 = vmatprep.subr.bf16.mxu0 0
        %5402 = vmatpush1.bf16.xpose.msra.mxu0 0
        %5403 = vmatprep.subr.bf16.mxu0 0
        %5404 = vmatpush1.bf16.xpose.msra.mxu0 0
        %5405 = vmatprep.subr.bf16.mxu0 0
        %5406 = vmatpush1.bf16.xpose.msra.mxu0 0
        %5407 = vmatprep.subr.bf16.mxu0 0
        %5408 = vmatpush1.bf16.xpose.msra.mxu0 0
        %5409 = vmatprep.subr.bf16.mxu0 0
        %5410 = vmatpush1.bf16.xpose.msra.mxu0 0
        %5411 = vmatprep.subr.bf16.mxu0 0
        %5412 = vmatpush1.bf16.xpose.msra.mxu0 0
        %5413 = vmatprep.subr.bf16.mxu0 0
        %5414 = vmatpush1.bf16.xpose.msra.mxu0 0
        %5415 = vmatprep.mubr.bf16.mxu0 0
        %5416 = vmatmul.mubr.bf16.gmra.mrb[0].mxu0 %v5378
        %v5417 = vpop.f32.mrb[0].mxu0
        %v5418 = vadd.f32 %v5372, %v5417
        %v5419 = vpop.f32.mrb[0].mxu0
        %v5420 = vpop.f32.mrb[0].mxu0
        %v5421 = vpop.f32.mrb[0].mxu0
        %5422 = vdwg.mxu0
        %v5423 = vpack.c.bf16 %v5321, %v5321
        %v5424 = vpack.c.bf16 %v5226, %v5226
        %v5426 = vsel %vm1485, %v5423, 0
        %v5429 = vsel %vm1485, %v5424, 0
        %5431 = vmatprep.subr.bf16.mxu0 0
        %5432 = vmatpush1.bf16.xpose.msra.mxu0 %v5429
        %5433 = vmatprep.subr.bf16.mxu0 0
        %5434 = vmatpush1.bf16.xpose.msra.mxu0 0
        %5435 = vmatprep.subr.bf16.mxu0 0
        %5436 = vmatpush1.bf16.xpose.msra.mxu0 0
        %5437 = vmatprep.subr.bf16.mxu0 0
        %5438 = vmatpush1.bf16.xpose.msra.mxu0 0
        %5439 = vmatprep.subr.bf16.mxu0 0
        %5440 = vmatpush1.bf16.xpose.msra.mxu0 0
        %5441 = vmatprep.subr.bf16.mxu0 0
        %5442 = vmatpush1.bf16.xpose.msra.mxu0 0
        %5443 = vmatprep.subr.bf16.mxu0 0
        %5444 = vmatpush1.bf16.xpose.msra.mxu0 0
        %5445 = vmatprep.subr.bf16.mxu0 0
        %5446 = vmatpush1.bf16.xpose.msra.mxu0 0
        %5447 = vmatprep.subr.bf16.mxu0 0
        %5448 = vmatpush1.bf16.xpose.msra.mxu0 0
        %5449 = vmatprep.subr.bf16.mxu0 0
        %5450 = vmatpush1.bf16.xpose.msra.mxu0 0
        %5451 = vmatprep.subr.bf16.mxu0 0
        %5452 = vmatpush1.bf16.xpose.msra.mxu0 0
        %5453 = vmatprep.subr.bf16.mxu0 0
        %5454 = vmatpush1.bf16.xpose.msra.mxu0 0
        %5455 = vmatprep.subr.bf16.mxu0 0
        %5456 = vmatpush1.bf16.xpose.msra.mxu0 0
        %5457 = vmatprep.subr.bf16.mxu0 0
        %5458 = vmatpush1.bf16.xpose.msra.mxu0 0
        %5459 = vmatprep.subr.bf16.mxu0 0
        %5460 = vmatpush1.bf16.xpose.msra.mxu0 0
        %5461 = vmatprep.subr.bf16.mxu0 0
        %5462 = vmatpush1.bf16.xpose.msra.mxu0 0
        %5463 = vmatprep.mubr.bf16.mxu0 0
        %5464 = vmatmul.mubr.bf16.gmra.mrb[0].mxu0 %v5426
        %v5465 = vpop.f32.mrb[0].mxu0
        %v5466 = vadd.f32 0.0, %v5465
        %v5467 = vpop.f32.mrb[0].mxu0
        %v5468 = vpop.f32.mrb[0].mxu0
        %v5469 = vpop.f32.mrb[0].mxu0
        %5470 = vdwg.mxu0
        %v5471 = vadd.f32 %v5418, %v5466
        %v5472 = vpack.c.bf16 %v5324, %v5324
        %v5473 = vpack.c.bf16 %v5229, %v5229
        %v5475 = vsel %vm1485, %v5472, 0
        %v5478 = vsel %vm1485, %v5473, 0
        %5480 = vmatprep.subr.bf16.mxu0 0
        %5481 = vmatpush1.bf16.xpose.msra.mxu0 %v5478
        %5482 = vmatprep.subr.bf16.mxu0 0
        %5483 = vmatpush1.bf16.xpose.msra.mxu0 0
        %5484 = vmatprep.subr.bf16.mxu0 0
        %5485 = vmatpush1.bf16.xpose.msra.mxu0 0
        %5486 = vmatprep.subr.bf16.mxu0 0
        %5487 = vmatpush1.bf16.xpose.msra.mxu0 0
        %5488 = vmatprep.subr.bf16.mxu0 0
        %5489 = vmatpush1.bf16.xpose.msra.mxu0 0
        %5490 = vmatprep.subr.bf16.mxu0 0
        %5491 = vmatpush1.bf16.xpose.msra.mxu0 0
        %5492 = vmatprep.subr.bf16.mxu0 0
        %5493 = vmatpush1.bf16.xpose.msra.mxu0 0
        %5494 = vmatprep.subr.bf16.mxu0 0
        %5495 = vmatpush1.bf16.xpose.msra.mxu0 0
        %5496 = vmatprep.subr.bf16.mxu0 0
        %5497 = vmatpush1.bf16.xpose.msra.mxu0 0
        %5498 = vmatprep.subr.bf16.mxu0 0
        %5499 = vmatpush1.bf16.xpose.msra.mxu0 0
        %5500 = vmatprep.subr.bf16.mxu0 0
        %5501 = vmatpush1.bf16.xpose.msra.mxu0 0
        %5502 = vmatprep.subr.bf16.mxu0 0
        %5503 = vmatpush1.bf16.xpose.msra.mxu0 0
        %5504 = vmatprep.subr.bf16.mxu0 0
        %5505 = vmatpush1.bf16.xpose.msra.mxu0 0
        %5506 = vmatprep.subr.bf16.mxu0 0
        %5507 = vmatpush1.bf16.xpose.msra.mxu0 0
        %5508 = vmatprep.subr.bf16.mxu0 0
        %5509 = vmatpush1.bf16.xpose.msra.mxu0 0
        %5510 = vmatprep.subr.bf16.mxu0 0
        %5511 = vmatpush1.bf16.xpose.msra.mxu0 0
        %5512 = vmatprep.mubr.bf16.mxu0 0
        %5513 = vmatmul.mubr.bf16.gmra.mrb[0].mxu0 %v5475
        %v5514 = vpop.f32.mrb[0].mxu0
        %v5515 = vadd.f32 0.0, %v5514
        %v5516 = vpop.f32.mrb[0].mxu0
        %v5517 = vpop.f32.mrb[0].mxu0
        %v5518 = vpop.f32.mrb[0].mxu0
        %5519 = vdwg.mxu0
        %v5520 = vadd.f32 %v5471, %v5515
        %s5521 = scalar_lea.vmem %s13, 32
        %v5522 = vld [vmem:[%s5521] sm:$0xff]
        %v5523 = vmul.f32 %v5520, %v5522
        %5524 = vmatprep.subr.mxu0 0.0
        %5525 = vmatpush1.msra.mxu0 %v5523
        %5526 = vmatprep.subr.mxu0 0.0
        %5527 = vmatpush1.msra.mxu0 0.0
        %5528 = vmatprep.subr.mxu0 0.0
        %5529 = vmatpush1.msra.mxu0 0.0
        %5530 = vmatprep.subr.mxu0 0.0
        %5531 = vmatpush1.msra.mxu0 0.0
        %5532 = vmatprep.subr.mxu0 0.0
        %5533 = vmatpush1.msra.mxu0 0.0
        %5534 = vmatprep.subr.mxu0 0.0
        %5535 = vmatpush1.msra.mxu0 0.0
        %5536 = vmatprep.subr.mxu0 0.0
        %5537 = vmatpush1.msra.mxu0 0.0
        %5538 = vmatprep.subr.mxu0 0.0
        %5539 = vmatpush1.msra.mxu0 0.0
        %5540 = vmatprep.subr.mxu0 0.0
        %5541 = vmatpush1.msra.mxu0 0.0
        %5542 = vmatprep.subr.mxu0 0.0
        %5543 = vmatpush1.msra.mxu0 0.0
        %5544 = vmatprep.subr.mxu0 0.0
        %5545 = vmatpush1.msra.mxu0 0.0
        %5546 = vmatprep.subr.mxu0 0.0
        %5547 = vmatpush1.msra.mxu0 0.0
        %5548 = vmatprep.subr.mxu0 0.0
        %5549 = vmatpush1.msra.mxu0 0.0
        %5550 = vmatprep.subr.mxu0 0.0
        %5551 = vmatpush1.msra.mxu0 0.0
        %5552 = vmatprep.subr.mxu0 0.0
        %5553 = vmatpush1.msra.mxu0 0.0
        %5554 = vmatprep.subr.mxu0 0.0
        %5555 = vmatpush1.msra.mxu0 0.0
        %5556 = vmatprep.subr.mxu0 0.0
        %5557 = vmatpush1.msra.mxu0 0.0
        %5558 = vmatprep.subr.mxu0 0.0
        %5559 = vmatpush1.msra.mxu0 0.0
        %5560 = vmatprep.subr.mxu0 0.0
        %5561 = vmatpush1.msra.mxu0 0.0
        %5562 = vmatprep.subr.mxu0 0.0
        %5563 = vmatpush1.msra.mxu0 0.0
        %5564 = vmatprep.subr.mxu0 0.0
        %5565 = vmatpush1.msra.mxu0 0.0
        %5566 = vmatprep.subr.mxu0 0.0
        %5567 = vmatpush1.msra.mxu0 0.0
        %5568 = vmatprep.subr.mxu0 0.0
        %5569 = vmatpush1.msra.mxu0 0.0
        %5570 = vmatprep.subr.mxu0 0.0
        %5571 = vmatpush1.msra.mxu0 0.0
        %5572 = vmatprep.subr.mxu0 0.0
        %5573 = vmatpush1.msra.mxu0 0.0
        %5574 = vmatprep.subr.mxu0 0.0
        %5575 = vmatpush1.msra.mxu0 0.0
        %5576 = vmatprep.subr.mxu0 0.0
        %5577 = vmatpush1.msra.mxu0 0.0
        %5578 = vmatprep.subr.mxu0 0.0
        %5579 = vmatpush1.msra.mxu0 0.0
        %5580 = vmatprep.subr.mxu0 0.0
        %5581 = vmatpush1.msra.mxu0 0.0
        %5582 = vmatprep.subr.mxu0 0.0
        %5583 = vmatpush1.msra.mxu0 0.0
        %5584 = vmatprep.subr.mxu0 0.0
        %5585 = vmatpush1.msra.mxu0 0.0
        %5586 = vmatprep.subr.mxu0 0.0
        %5587 = vmatpush1.msra.mxu0 0.0
        %5588 = vmatprep.mubr.f32.mxu0 0.0
        %5589 = vmatmul.mubr.f32.gmra.mrb[0].mxu0 %v2610
        %v5590 = vpop.f32.mrb[0].mxu0
        %v5591 = vadd.f32 0.0, %v5590
        %v5592 = vpop.f32.mrb[0].mxu0
        %5593 = vmatprep.mubr.f32.mxu0 0.0
        %5594 = vmatmul.mubr.f32.gmra.mrb[0].mxu0 %v2613
        %v5595 = vpop.f32.mrb[0].mxu0
        %v5596 = vadd.f32 0.0, %v5595
        %v5597 = vpop.f32.mrb[0].mxu0
        %5598 = vmatprep.mubr.f32.mxu0 0.0
        %5599 = vmatmul.mubr.f32.gmra.mrb[0].mxu0 %v2616
        %v5600 = vpop.f32.mrb[0].mxu0
        %v5601 = vadd.f32 0.0, %v5600
        %v5602 = vpop.f32.mrb[0].mxu0
        %5603 = vmatprep.mubr.f32.mxu0 0.0
        %5604 = vmatmul.mubr.f32.gmra.mrb[0].mxu0 %v2619
        %v5605 = vpop.f32.mrb[0].mxu0
        %v5606 = vadd.f32 0.0, %v5605
        %v5607 = vpop.f32.mrb[0].mxu0
        %5608 = vmatprep.mubr.f32.mxu0 0.0
        %5609 = vmatmul.mubr.f32.gmra.mrb[0].mxu0 %v2622
        %v5610 = vpop.f32.mrb[0].mxu0
        %v5611 = vadd.f32 0.0, %v5610
        %v5612 = vpop.f32.mrb[0].mxu0
        %5613 = vmatprep.mubr.f32.mxu0 0.0
        %5614 = vmatmul.mubr.f32.gmra.mrb[0].mxu0 %v2625
        %v5615 = vpop.f32.mrb[0].mxu0
        %v5616 = vadd.f32 0.0, %v5615
        %v5617 = vpop.f32.mrb[0].mxu0
        %5618 = vmatprep.mubr.f32.mxu0 0.0
        %5619 = vmatmul.mubr.f32.gmra.mrb[0].mxu0 %v2628
        %v5620 = vpop.f32.mrb[0].mxu0
        %v5621 = vadd.f32 0.0, %v5620
        %v5622 = vpop.f32.mrb[0].mxu0
        %5623 = vmatprep.mubr.f32.mxu0 0.0
        %5624 = vmatmul.mubr.f32.gmra.mrb[0].mxu0 %v2631
        %v5625 = vpop.f32.mrb[0].mxu0
        %v5626 = vadd.f32 0.0, %v5625
        %v5627 = vpop.f32.mrb[0].mxu0
        %5628 = vdwg.mxu0
        %v5630 = vsel %vm2608, %v5591, 0
        %v5633 = vsel %vm2608, %v5596, 0
        %v5636 = vsel %vm2608, %v5601, 0
        %v5639 = vsel %vm2608, %v5606, 0
        %v5642 = vsel %vm2608, %v5611, 0
        %v5645 = vsel %vm2608, %v5616, 0
        %v5648 = vsel %vm2608, %v5621, 0
        %v5651 = vsel %vm2608, %v5626, 0
        %5653 = vmatprep.subr.mxu0 0.0
        %5654 = vmatpush1.msra.mxu0 %v2223
        %5655 = vmatprep.subr.mxu0 0.0
        %5656 = vmatpush1.msra.mxu0 0.0
        %5657 = vmatprep.subr.mxu0 0.0
        %5658 = vmatpush1.msra.mxu0 0.0
        %5659 = vmatprep.subr.mxu0 0.0
        %5660 = vmatpush1.msra.mxu0 0.0
        %5661 = vmatprep.subr.mxu0 0.0
        %5662 = vmatpush1.msra.mxu0 0.0
        %5663 = vmatprep.subr.mxu0 0.0
        %5664 = vmatpush1.msra.mxu0 0.0
        %5665 = vmatprep.subr.mxu0 0.0
        %5666 = vmatpush1.msra.mxu0 0.0
        %5667 = vmatprep.subr.mxu0 0.0
        %5668 = vmatpush1.msra.mxu0 0.0
        %5669 = vmatprep.subr.mxu0 0.0
        %5670 = vmatpush1.msra.mxu0 0.0
        %5671 = vmatprep.subr.mxu0 0.0
        %5672 = vmatpush1.msra.mxu0 0.0
        %5673 = vmatprep.subr.mxu0 0.0
        %5674 = vmatpush1.msra.mxu0 0.0
        %5675 = vmatprep.subr.mxu0 0.0
        %5676 = vmatpush1.msra.mxu0 0.0
        %5677 = vmatprep.subr.mxu0 0.0
        %5678 = vmatpush1.msra.mxu0 0.0
        %5679 = vmatprep.subr.mxu0 0.0
        %5680 = vmatpush1.msra.mxu0 0.0
        %5681 = vmatprep.subr.mxu0 0.0
        %5682 = vmatpush1.msra.mxu0 0.0
        %5683 = vmatprep.subr.mxu0 0.0
        %5684 = vmatpush1.msra.mxu0 0.0
        %5685 = vmatprep.subr.mxu0 0.0
        %5686 = vmatpush1.msra.mxu0 0.0
        %5687 = vmatprep.subr.mxu0 0.0
        %5688 = vmatpush1.msra.mxu0 0.0
        %5689 = vmatprep.subr.mxu0 0.0
        %5690 = vmatpush1.msra.mxu0 0.0
        %5691 = vmatprep.subr.mxu0 0.0
        %5692 = vmatpush1.msra.mxu0 0.0
        %5693 = vmatprep.subr.mxu0 0.0
        %5694 = vmatpush1.msra.mxu0 0.0
        %5695 = vmatprep.subr.mxu0 0.0
        %5696 = vmatpush1.msra.mxu0 0.0
        %5697 = vmatprep.subr.mxu0 0.0
        %5698 = vmatpush1.msra.mxu0 0.0
        %5699 = vmatprep.subr.mxu0 0.0
        %5700 = vmatpush1.msra.mxu0 0.0
        %5701 = vmatprep.subr.mxu0 0.0
        %5702 = vmatpush1.msra.mxu0 0.0
        %5703 = vmatprep.subr.mxu0 0.0
        %5704 = vmatpush1.msra.mxu0 0.0
        %5705 = vmatprep.subr.mxu0 0.0
        %5706 = vmatpush1.msra.mxu0 0.0
        %5707 = vmatprep.subr.mxu0 0.0
        %5708 = vmatpush1.msra.mxu0 0.0
        %5709 = vmatprep.subr.mxu0 0.0
        %5710 = vmatpush1.msra.mxu0 0.0
        %5711 = vmatprep.subr.mxu0 0.0
        %5712 = vmatpush1.msra.mxu0 0.0
        %5713 = vmatprep.subr.mxu0 0.0
        %5714 = vmatpush1.msra.mxu0 0.0
        %5715 = vmatprep.subr.mxu0 0.0
        %5716 = vmatpush1.msra.mxu0 0.0
        %5717 = vmatprep.mubr.f32.mxu0 0.0
        %5718 = vmatmul.mubr.f32.gmra.mrb[0].mxu0 %v5630
        %v5719 = vpop.f32.mrb[0].mxu0
        %v5720 = vadd.f32 0.0, %v5719
        %v5721 = vpop.f32.mrb[0].mxu0
        %5722 = vmatprep.mubr.f32.mxu0 0.0
        %5723 = vmatmul.mubr.f32.gmra.mrb[0].mxu0 %v5633
        %v5724 = vpop.f32.mrb[0].mxu0
        %v5725 = vadd.f32 0.0, %v5724
        %v5726 = vpop.f32.mrb[0].mxu0
        %5727 = vmatprep.mubr.f32.mxu0 0.0
        %5728 = vmatmul.mubr.f32.gmra.mrb[0].mxu0 %v5636
        %v5729 = vpop.f32.mrb[0].mxu0
        %v5730 = vadd.f32 0.0, %v5729
        %v5731 = vpop.f32.mrb[0].mxu0
        %5732 = vmatprep.mubr.f32.mxu0 0.0
        %5733 = vmatmul.mubr.f32.gmra.mrb[0].mxu0 %v5639
        %v5734 = vpop.f32.mrb[0].mxu0
        %v5735 = vadd.f32 0.0, %v5734
        %v5736 = vpop.f32.mrb[0].mxu0
        %5737 = vmatprep.mubr.f32.mxu0 0.0
        %5738 = vmatmul.mubr.f32.gmra.mrb[0].mxu0 %v5642
        %v5739 = vpop.f32.mrb[0].mxu0
        %v5740 = vadd.f32 0.0, %v5739
        %v5741 = vpop.f32.mrb[0].mxu0
        %5742 = vmatprep.mubr.f32.mxu0 0.0
        %5743 = vmatmul.mubr.f32.gmra.mrb[0].mxu0 %v5645
        %v5744 = vpop.f32.mrb[0].mxu0
        %v5745 = vadd.f32 0.0, %v5744
        %v5746 = vpop.f32.mrb[0].mxu0
        %5747 = vmatprep.mubr.f32.mxu0 0.0
        %5748 = vmatmul.mubr.f32.gmra.mrb[0].mxu0 %v5648
        %v5749 = vpop.f32.mrb[0].mxu0
        %v5750 = vadd.f32 0.0, %v5749
        %v5751 = vpop.f32.mrb[0].mxu0
        %5752 = vmatprep.mubr.f32.mxu0 0.0
        %5753 = vmatmul.mubr.f32.gmra.mrb[0].mxu0 %v5651
        %v5754 = vpop.f32.mrb[0].mxu0
        %v5755 = vadd.f32 0.0, %v5754
        %v5756 = vpop.f32.mrb[0].mxu0
        %5757 = vdwg.mxu0
        %s5758 = scalar_lea.vmem %s14, 256
        %v5759 = vld [vmem:[%s5758] sm:$0xff]
        %v5760 = vld [vmem:[%s5758 + $0x8] sm:$0xff]
        %v5761 = vld [vmem:[%s5758 + $0x10] sm:$0xff]
        %v5762 = vld [vmem:[%s5758 + $0x18] sm:$0xff]
        %v5763 = vld [vmem:[%s5758 + $0x20] sm:$0xff]
        %v5764 = vld [vmem:[%s5758 + $0x28] sm:$0xff]
        %v5765 = vld [vmem:[%s5758 + $0x30] sm:$0xff]
        %v5766 = vld [vmem:[%s5758 + $0x38] sm:$0xff]
        %v5767 = vmul.f32 %v5759, %v5720
        %v5768 = vmul.f32 %v5760, %v5725
        %v5769 = vmul.f32 %v5761, %v5730
        %v5770 = vmul.f32 %v5762, %v5735
        %v5771 = vmul.f32 %v5763, %v5740
        %v5772 = vmul.f32 %v5764, %v5745
        %v5773 = vmul.f32 %v5765, %v5750
        %v5774 = vmul.f32 %v5766, %v5755
        %v5775 = vpack.c.bf16 %v5768, %v5767
        %v5776 = vpack.c.bf16 %v5770, %v5769
        %v5777 = vpack.c.bf16 %v5772, %v5771
        %v5778 = vpack.c.bf16 %v5774, %v5773
        %v5780 = vsel %vm943, %v5775, 0
        %v5783 = vsel %vm943, %v5776, 0
        %v5786 = vsel %vm943, %v5777, 0
        %v5789 = vsel %vm943, %v5778, 0
        %5791 = vmatprep.subr.bf16.mxu0 0
        %5792 = vmatpush1.bf16.msra.mxu0 %v2191
        %5793 = vmatprep.subr.bf16.mxu0 0
        %5794 = vmatpush1.bf16.msra.mxu0 %v2192
        %5795 = vmatprep.subr.bf16.mxu0 0
        %5796 = vmatpush1.bf16.msra.mxu0 %v2193
        %5797 = vmatprep.subr.bf16.mxu0 0
        %5798 = vmatpush1.bf16.msra.mxu0 %v2194
        %5799 = vmatprep.subr.bf16.mxu0 0
        %5800 = vmatpush1.bf16.msra.mxu0 0
        %5801 = vmatprep.subr.bf16.mxu0 0
        %5802 = vmatpush1.bf16.msra.mxu0 0
        %5803 = vmatprep.subr.bf16.mxu0 0
        %5804 = vmatpush1.bf16.msra.mxu0 0
        %5805 = vmatprep.subr.bf16.mxu0 0
        %5806 = vmatpush1.bf16.msra.mxu0 0
        %5807 = vmatprep.subr.bf16.mxu0 0
        %5808 = vmatpush1.bf16.msra.mxu0 0
        %5809 = vmatprep.subr.bf16.mxu0 0
        %5810 = vmatpush1.bf16.msra.mxu0 0
        %5811 = vmatprep.subr.bf16.mxu0 0
        %5812 = vmatpush1.bf16.msra.mxu0 0
        %5813 = vmatprep.subr.bf16.mxu0 0
        %5814 = vmatpush1.bf16.msra.mxu0 0
        %5815 = vmatprep.subr.bf16.mxu0 0
        %5816 = vmatpush1.bf16.msra.mxu0 0
        %5817 = vmatprep.subr.bf16.mxu0 0
        %5818 = vmatpush1.bf16.msra.mxu0 0
        %5819 = vmatprep.subr.bf16.mxu0 0
        %5820 = vmatpush1.bf16.msra.mxu0 0
        %5821 = vmatprep.subr.bf16.mxu0 0
        %5822 = vmatpush1.bf16.msra.mxu0 0
        %5823 = vmatprep.mubr.bf16.mxu0 0
        %5824 = vmatmul.mubr.bf16.gmra.mrb[0].mxu0 %v5780
        %v5825 = vpop.f32.mrb[0].mxu0
        %v5826 = vadd.f32 0.0, %v5825
        %v5827 = vpop.f32.mrb[0].mxu0
        %v5828 = vpop.f32.mrb[0].mxu0
        %v5829 = vadd.f32 0.0, %v5828
        %v5830 = vpop.f32.mrb[0].mxu0
        %5831 = vmatprep.mubr.bf16.mxu0 0
        %5832 = vmatmul.mubr.bf16.gmra.mrb[0].mxu0 %v5783
        %v5833 = vpop.f32.mrb[0].mxu0
        %v5834 = vadd.f32 0.0, %v5833
        %v5835 = vpop.f32.mrb[0].mxu0
        %v5836 = vpop.f32.mrb[0].mxu0
        %v5837 = vadd.f32 0.0, %v5836
        %v5838 = vpop.f32.mrb[0].mxu0
        %5839 = vmatprep.mubr.bf16.mxu0 0
        %5840 = vmatmul.mubr.bf16.gmra.mrb[0].mxu0 %v5786
        %v5841 = vpop.f32.mrb[0].mxu0
        %v5842 = vadd.f32 0.0, %v5841
        %v5843 = vpop.f32.mrb[0].mxu0
        %v5844 = vpop.f32.mrb[0].mxu0
        %v5845 = vadd.f32 0.0, %v5844
        %v5846 = vpop.f32.mrb[0].mxu0
        %5847 = vmatprep.mubr.bf16.mxu0 0
        %5848 = vmatmul.mubr.bf16.gmra.mrb[0].mxu0 %v5789
        %v5849 = vpop.f32.mrb[0].mxu0
        %v5850 = vadd.f32 0.0, %v5849
        %v5851 = vpop.f32.mrb[0].mxu0
        %v5852 = vpop.f32.mrb[0].mxu0
        %v5853 = vadd.f32 0.0, %v5852
        %v5854 = vpop.f32.mrb[0].mxu0
        %5855 = vdwg.mxu0
        %v5856 = vadd.f32 %v5129, %v5826
        %v5857 = vadd.f32 %v5130, %v5829
        %v5858 = vadd.f32 %v5131, %v5834
        %v5859 = vadd.f32 %v5132, %v5837
        %v5860 = vadd.f32 %v5133, %v5842
        %v5861 = vadd.f32 %v5134, %v5845
        %v5862 = vadd.f32 %v5135, %v5850
        %v5863 = vadd.f32 %v5136, %v5853
        %s5864 = scalar_lea.vmem %s11, 80
        %v5865 = vld [vmem:[%s5864] sm:$0xf]
        %v5866 = vld [vmem:[%s5864 + $0x4] sm:$0xf]
        %v5867 = vld [vmem:[%s5864 + $0x8] sm:$0xf]
        %v5868 = vld [vmem:[%s5864 + $0xc] sm:$0xf]
        %s5869 = scalar_lea.vmem %s12, 160
        %v5870 = vld [vmem:[%s5869] sm:$0xff]
        %v5871 = vld [vmem:[%s5869 + $0x8] sm:$0xff]
        %v5872 = vld [vmem:[%s5869 + $0x10] sm:$0xff]
        %v5873 = vld [vmem:[%s5869 + $0x18] sm:$0xff]
        %5875 = vset.pattern.permute.xlu0 0
        %5876 = vperm.xlu0 %5875, %v5870
        %v5877 = vpop.permute.xlu0 %5876
        %5880 = vset.pattern.permute.xlu0 0
        %5881 = vperm.xlu0 %5880, %v5871
        %v5882 = vpop.permute.xlu0 %5881
        %5885 = vset.pattern.permute.xlu0 0
        %5886 = vperm.xlu0 %5885, %v5872
        %v5887 = vpop.permute.xlu0 %5886
        %5890 = vset.pattern.permute.xlu0 0
        %5891 = vperm.xlu0 %5890, %v5873
        %v5892 = vpop.permute.xlu0 %5891
        %v5898 = vunpack.c.l.b16 %v5865
        %v5899 = vunpack.c.l.b16 %v5866
        %v5900 = vunpack.c.l.b16 %v5867
        %v5901 = vunpack.c.l.b16 %v5868
        %v5902 = vpack.c.b16 %v5899, %v5898
        %v5903 = vpack.c.b16 %v5901, %v5900
        %v5905 = vsel %vm943, %v5902, 0
        %v5908 = vsel %vm943, %v5903, 0
        %5910 = vmatprep.subr.bf16.mxu0 0
        %5911 = vmatpush1.bf16.msra.mxu0 %v2211
        %5912 = vmatprep.subr.bf16.mxu0 0
        %5913 = vmatpush1.bf16.msra.mxu0 %v2212
        %5914 = vmatprep.subr.bf16.mxu0 0
        %5915 = vmatpush1.bf16.msra.mxu0 %v2213
        %5916 = vmatprep.subr.bf16.mxu0 0
        %5917 = vmatpush1.bf16.msra.mxu0 %v2214
        %5918 = vmatprep.subr.bf16.mxu0 0
        %5919 = vmatpush1.bf16.msra.mxu0 0
        %5920 = vmatprep.subr.bf16.mxu0 0
        %5921 = vmatpush1.bf16.msra.mxu0 0
        %5922 = vmatprep.subr.bf16.mxu0 0
        %5923 = vmatpush1.bf16.msra.mxu0 0
        %5924 = vmatprep.subr.bf16.mxu0 0
        %5925 = vmatpush1.bf16.msra.mxu0 0
        %5926 = vmatprep.subr.bf16.mxu0 0
        %5927 = vmatpush1.bf16.msra.mxu0 0
        %5928 = vmatprep.subr.bf16.mxu0 0
        %5929 = vmatpush1.bf16.msra.mxu0 0
        %5930 = vmatprep.subr.bf16.mxu0 0
        %5931 = vmatpush1.bf16.msra.mxu0 0
        %5932 = vmatprep.subr.bf16.mxu0 0
        %5933 = vmatpush1.bf16.msra.mxu0 0
        %5934 = vmatprep.subr.bf16.mxu0 0
        %5935 = vmatpush1.bf16.msra.mxu0 0
        %5936 = vmatprep.subr.bf16.mxu0 0
        %5937 = vmatpush1.bf16.msra.mxu0 0
        %5938 = vmatprep.subr.bf16.mxu0 0
        %5939 = vmatpush1.bf16.msra.mxu0 0
        %5940 = vmatprep.subr.bf16.mxu0 0
        %5941 = vmatpush1.bf16.msra.mxu0 0
        %5942 = vmatprep.mubr.bf16.mxu0 0
        %5943 = vmatmul.mubr.bf16.gmra.mrb[0].mxu0 %v5905
        %v5944 = vpop.f32.mrb[0].mxu0
        %v5945 = vadd.f32 %v5877, %v5944
        %v5946 = vpop.f32.mrb[0].mxu0
        %v5947 = vpop.f32.mrb[0].mxu0
        %v5948 = vadd.f32 %v5882, %v5947
        %v5949 = vpop.f32.mrb[0].mxu0
        %5950 = vmatprep.mubr.bf16.mxu0 0
        %5951 = vmatmul.mubr.bf16.gmra.mrb[0].mxu0 %v5908
        %v5952 = vpop.f32.mrb[0].mxu0
        %v5953 = vadd.f32 %v5887, %v5952
        %v5954 = vpop.f32.mrb[0].mxu0
        %v5955 = vpop.f32.mrb[0].mxu0
        %v5956 = vadd.f32 %v5892, %v5955
        %v5957 = vpop.f32.mrb[0].mxu0
        %5958 = vdwg.mxu0
        %s5959 = scalar_lea.vmem %s11, 224
        %v5960 = vld [vmem:[%s5959] sm:$0xf]
        %v5961 = vld [vmem:[%s5959 + $0x4] sm:$0xf]
        %v5962 = vld [vmem:[%s5959 + $0x8] sm:$0xf]
        %v5963 = vld [vmem:[%s5959 + $0xc] sm:$0xf]
        %s5964 = scalar_lea.vmem %s12, 448
        %v5965 = vld [vmem:[%s5964] sm:$0xff]
        %v5966 = vld [vmem:[%s5964 + $0x8] sm:$0xff]
        %v5967 = vld [vmem:[%s5964 + $0x10] sm:$0xff]
        %v5968 = vld [vmem:[%s5964 + $0x18] sm:$0xff]
        %5970 = vset.pattern.permute.xlu0 0
        %5971 = vperm.xlu0 %5970, %v5965
        %v5972 = vpop.permute.xlu0 %5971
        %5975 = vset.pattern.permute.xlu0 0
        %5976 = vperm.xlu0 %5975, %v5966
        %v5977 = vpop.permute.xlu0 %5976
        %5980 = vset.pattern.permute.xlu0 0
        %5981 = vperm.xlu0 %5980, %v5967
        %v5982 = vpop.permute.xlu0 %5981
        %5985 = vset.pattern.permute.xlu0 0
        %5986 = vperm.xlu0 %5985, %v5968
        %v5987 = vpop.permute.xlu0 %5986
        %v5993 = vunpack.c.l.b16 %v5960
        %v5994 = vunpack.c.l.b16 %v5961
        %v5995 = vunpack.c.l.b16 %v5962
        %v5996 = vunpack.c.l.b16 %v5963
        %v5997 = vpack.c.b16 %v5994, %v5993
        %v5998 = vpack.c.b16 %v5996, %v5995
        %v6000 = vsel %vm943, %v5997, 0
        %v6003 = vsel %vm943, %v5998, 0
        %6005 = vmatprep.subr.bf16.mxu0 0
        %6006 = vmatpush1.bf16.msra.mxu0 %v2211
        %6007 = vmatprep.subr.bf16.mxu0 0
        %6008 = vmatpush1.bf16.msra.mxu0 %v2212
        %6009 = vmatprep.subr.bf16.mxu0 0
        %6010 = vmatpush1.bf16.msra.mxu0 %v2213
        %6011 = vmatprep.subr.bf16.mxu0 0
        %6012 = vmatpush1.bf16.msra.mxu0 %v2214
        %6013 = vmatprep.subr.bf16.mxu0 0
        %6014 = vmatpush1.bf16.msra.mxu0 0
        %6015 = vmatprep.subr.bf16.mxu0 0
        %6016 = vmatpush1.bf16.msra.mxu0 0
        %6017 = vmatprep.subr.bf16.mxu0 0
        %6018 = vmatpush1.bf16.msra.mxu0 0
        %6019 = vmatprep.subr.bf16.mxu0 0
        %6020 = vmatpush1.bf16.msra.mxu0 0
        %6021 = vmatprep.subr.bf16.mxu0 0
        %6022 = vmatpush1.bf16.msra.mxu0 0
        %6023 = vmatprep.subr.bf16.mxu0 0
        %6024 = vmatpush1.bf16.msra.mxu0 0
        %6025 = vmatprep.subr.bf16.mxu0 0
        %6026 = vmatpush1.bf16.msra.mxu0 0
        %6027 = vmatprep.subr.bf16.mxu0 0
        %6028 = vmatpush1.bf16.msra.mxu0 0
        %6029 = vmatprep.subr.bf16.mxu0 0
        %6030 = vmatpush1.bf16.msra.mxu0 0
        %6031 = vmatprep.subr.bf16.mxu0 0
        %6032 = vmatpush1.bf16.msra.mxu0 0
        %6033 = vmatprep.subr.bf16.mxu0 0
        %6034 = vmatpush1.bf16.msra.mxu0 0
        %6035 = vmatprep.subr.bf16.mxu0 0
        %6036 = vmatpush1.bf16.msra.mxu0 0
        %6037 = vmatprep.mubr.bf16.mxu0 0
        %6038 = vmatmul.mubr.bf16.gmra.mrb[0].mxu0 %v6000
        %v6039 = vpop.f32.mrb[0].mxu0
        %v6040 = vadd.f32 %v5972, %v6039
        %v6041 = vpop.f32.mrb[0].mxu0
        %v6042 = vpop.f32.mrb[0].mxu0
        %v6043 = vadd.f32 %v5977, %v6042
        %v6044 = vpop.f32.mrb[0].mxu0
        %6045 = vmatprep.mubr.bf16.mxu0 0
        %6046 = vmatmul.mubr.bf16.gmra.mrb[0].mxu0 %v6003
        %v6047 = vpop.f32.mrb[0].mxu0
        %v6048 = vadd.f32 %v5982, %v6047
        %v6049 = vpop.f32.mrb[0].mxu0
        %v6050 = vpop.f32.mrb[0].mxu0
        %v6051 = vadd.f32 %v5987, %v6050
        %v6052 = vpop.f32.mrb[0].mxu0
        %6053 = vdwg.mxu0
        %v6054 = vpack.c.bf16 %v6040, %v6040
        %v6055 = vpack.c.bf16 %v5945, %v5945
        %v6056 = vpack.c.bf16 %v6043, %v6043
        %v6057 = vpack.c.bf16 %v5948, %v5948
        %v6059 = vsel %vm1485, %v6056, 0
        %v6062 = vsel %vm1485, %v6057, 0
        %6064 = vmatprep.subr.bf16.mxu0 0
        %6065 = vmatpush1.bf16.xpose.msra.mxu0 %v6062
        %6066 = vmatprep.subr.bf16.mxu0 0
        %6067 = vmatpush1.bf16.xpose.msra.mxu0 0
        %6068 = vmatprep.subr.bf16.mxu0 0
        %6069 = vmatpush1.bf16.xpose.msra.mxu0 0
        %6070 = vmatprep.subr.bf16.mxu0 0
        %6071 = vmatpush1.bf16.xpose.msra.mxu0 0
        %6072 = vmatprep.subr.bf16.mxu0 0
        %6073 = vmatpush1.bf16.xpose.msra.mxu0 0
        %6074 = vmatprep.subr.bf16.mxu0 0
        %6075 = vmatpush1.bf16.xpose.msra.mxu0 0
        %6076 = vmatprep.subr.bf16.mxu0 0
        %6077 = vmatpush1.bf16.xpose.msra.mxu0 0
        %6078 = vmatprep.subr.bf16.mxu0 0
        %6079 = vmatpush1.bf16.xpose.msra.mxu0 0
        %6080 = vmatprep.subr.bf16.mxu0 0
        %6081 = vmatpush1.bf16.xpose.msra.mxu0 0
        %6082 = vmatprep.subr.bf16.mxu0 0
        %6083 = vmatpush1.bf16.xpose.msra.mxu0 0
        %6084 = vmatprep.subr.bf16.mxu0 0
        %6085 = vmatpush1.bf16.xpose.msra.mxu0 0
        %6086 = vmatprep.subr.bf16.mxu0 0
        %6087 = vmatpush1.bf16.xpose.msra.mxu0 0
        %6088 = vmatprep.subr.bf16.mxu0 0
        %6089 = vmatpush1.bf16.xpose.msra.mxu0 0
        %6090 = vmatprep.subr.bf16.mxu0 0
        %6091 = vmatpush1.bf16.xpose.msra.mxu0 0
        %6092 = vmatprep.subr.bf16.mxu0 0
        %6093 = vmatpush1.bf16.xpose.msra.mxu0 0
        %6094 = vmatprep.subr.bf16.mxu0 0
        %6095 = vmatpush1.bf16.xpose.msra.mxu0 0
        %6096 = vmatprep.mubr.bf16.mxu0 0
        %6097 = vmatmul.mubr.bf16.gmra.mrb[0].mxu0 %v6059
        %v6098 = vpop.f32.mrb[0].mxu0
        %v6099 = vadd.f32 0.0, %v6098
        %v6100 = vpop.f32.mrb[0].mxu0
        %v6101 = vpop.f32.mrb[0].mxu0
        %v6102 = vpop.f32.mrb[0].mxu0
        %6103 = vdwg.mxu0
        %v6105 = vsel %vm1485, %v6054, 0
        %v6108 = vsel %vm1485, %v6055, 0
        %6110 = vmatprep.subr.bf16.mxu0 0
        %6111 = vmatpush1.bf16.xpose.msra.mxu0 %v6108
        %6112 = vmatprep.subr.bf16.mxu0 0
        %6113 = vmatpush1.bf16.xpose.msra.mxu0 0
        %6114 = vmatprep.subr.bf16.mxu0 0
        %6115 = vmatpush1.bf16.xpose.msra.mxu0 0
        %6116 = vmatprep.subr.bf16.mxu0 0
        %6117 = vmatpush1.bf16.xpose.msra.mxu0 0
        %6118 = vmatprep.subr.bf16.mxu0 0
        %6119 = vmatpush1.bf16.xpose.msra.mxu0 0
        %6120 = vmatprep.subr.bf16.mxu0 0
        %6121 = vmatpush1.bf16.xpose.msra.mxu0 0
        %6122 = vmatprep.subr.bf16.mxu0 0
        %6123 = vmatpush1.bf16.xpose.msra.mxu0 0
        %6124 = vmatprep.subr.bf16.mxu0 0
        %6125 = vmatpush1.bf16.xpose.msra.mxu0 0
        %6126 = vmatprep.subr.bf16.mxu0 0
        %6127 = vmatpush1.bf16.xpose.msra.mxu0 0
        %6128 = vmatprep.subr.bf16.mxu0 0
        %6129 = vmatpush1.bf16.xpose.msra.mxu0 0
        %6130 = vmatprep.subr.bf16.mxu0 0
        %6131 = vmatpush1.bf16.xpose.msra.mxu0 0
        %6132 = vmatprep.subr.bf16.mxu0 0
        %6133 = vmatpush1.bf16.xpose.msra.mxu0 0
        %6134 = vmatprep.subr.bf16.mxu0 0
        %6135 = vmatpush1.bf16.xpose.msra.mxu0 0
        %6136 = vmatprep.subr.bf16.mxu0 0
        %6137 = vmatpush1.bf16.xpose.msra.mxu0 0
        %6138 = vmatprep.subr.bf16.mxu0 0
        %6139 = vmatpush1.bf16.xpose.msra.mxu0 0
        %6140 = vmatprep.subr.bf16.mxu0 0
        %6141 = vmatpush1.bf16.xpose.msra.mxu0 0
        %6142 = vmatprep.mubr.bf16.mxu0 0
        %6143 = vmatmul.mubr.bf16.gmra.mrb[0].mxu0 %v6105
        %v6144 = vpop.f32.mrb[0].mxu0
        %v6145 = vadd.f32 %v6099, %v6144
        %v6146 = vpop.f32.mrb[0].mxu0
        %v6147 = vpop.f32.mrb[0].mxu0
        %v6148 = vpop.f32.mrb[0].mxu0
        %6149 = vdwg.mxu0
        %v6150 = vpack.c.bf16 %v6048, %v6048
        %v6151 = vpack.c.bf16 %v5953, %v5953
        %v6153 = vsel %vm1485, %v6150, 0
        %v6156 = vsel %vm1485, %v6151, 0
        %6158 = vmatprep.subr.bf16.mxu0 0
        %6159 = vmatpush1.bf16.xpose.msra.mxu0 %v6156
        %6160 = vmatprep.subr.bf16.mxu0 0
        %6161 = vmatpush1.bf16.xpose.msra.mxu0 0
        %6162 = vmatprep.subr.bf16.mxu0 0
        %6163 = vmatpush1.bf16.xpose.msra.mxu0 0
        %6164 = vmatprep.subr.bf16.mxu0 0
        %6165 = vmatpush1.bf16.xpose.msra.mxu0 0
        %6166 = vmatprep.subr.bf16.mxu0 0
        %6167 = vmatpush1.bf16.xpose.msra.mxu0 0
        %6168 = vmatprep.subr.bf16.mxu0 0
        %6169 = vmatpush1.bf16.xpose.msra.mxu0 0
        %6170 = vmatprep.subr.bf16.mxu0 0
        %6171 = vmatpush1.bf16.xpose.msra.mxu0 0
        %6172 = vmatprep.subr.bf16.mxu0 0
        %6173 = vmatpush1.bf16.xpose.msra.mxu0 0
        %6174 = vmatprep.subr.bf16.mxu0 0
        %6175 = vmatpush1.bf16.xpose.msra.mxu0 0
        %6176 = vmatprep.subr.bf16.mxu0 0
        %6177 = vmatpush1.bf16.xpose.msra.mxu0 0
        %6178 = vmatprep.subr.bf16.mxu0 0
        %6179 = vmatpush1.bf16.xpose.msra.mxu0 0
        %6180 = vmatprep.subr.bf16.mxu0 0
        %6181 = vmatpush1.bf16.xpose.msra.mxu0 0
        %6182 = vmatprep.subr.bf16.mxu0 0
        %6183 = vmatpush1.bf16.xpose.msra.mxu0 0
        %6184 = vmatprep.subr.bf16.mxu0 0
        %6185 = vmatpush1.bf16.xpose.msra.mxu0 0
        %6186 = vmatprep.subr.bf16.mxu0 0
        %6187 = vmatpush1.bf16.xpose.msra.mxu0 0
        %6188 = vmatprep.subr.bf16.mxu0 0
        %6189 = vmatpush1.bf16.xpose.msra.mxu0 0
        %6190 = vmatprep.mubr.bf16.mxu0 0
        %6191 = vmatmul.mubr.bf16.gmra.mrb[0].mxu0 %v6153
        %v6192 = vpop.f32.mrb[0].mxu0
        %v6193 = vadd.f32 0.0, %v6192
        %v6194 = vpop.f32.mrb[0].mxu0
        %v6195 = vpop.f32.mrb[0].mxu0
        %v6196 = vpop.f32.mrb[0].mxu0
        %6197 = vdwg.mxu0
        %v6198 = vadd.f32 %v6145, %v6193
        %v6199 = vpack.c.bf16 %v6051, %v6051
        %v6200 = vpack.c.bf16 %v5956, %v5956
        %v6202 = vsel %vm1485, %v6199, 0
        %v6205 = vsel %vm1485, %v6200, 0
        %6207 = vmatprep.subr.bf16.mxu0 0
        %6208 = vmatpush1.bf16.xpose.msra.mxu0 %v6205
        %6209 = vmatprep.subr.bf16.mxu0 0
        %6210 = vmatpush1.bf16.xpose.msra.mxu0 0
        %6211 = vmatprep.subr.bf16.mxu0 0
        %6212 = vmatpush1.bf16.xpose.msra.mxu0 0
        %6213 = vmatprep.subr.bf16.mxu0 0
        %6214 = vmatpush1.bf16.xpose.msra.mxu0 0
        %6215 = vmatprep.subr.bf16.mxu0 0
        %6216 = vmatpush1.bf16.xpose.msra.mxu0 0
        %6217 = vmatprep.subr.bf16.mxu0 0
        %6218 = vmatpush1.bf16.xpose.msra.mxu0 0
        %6219 = vmatprep.subr.bf16.mxu0 0
        %6220 = vmatpush1.bf16.xpose.msra.mxu0 0
        %6221 = vmatprep.subr.bf16.mxu0 0
        %6222 = vmatpush1.bf16.xpose.msra.mxu0 0
        %6223 = vmatprep.subr.bf16.mxu0 0
        %6224 = vmatpush1.bf16.xpose.msra.mxu0 0
        %6225 = vmatprep.subr.bf16.mxu0 0
        %6226 = vmatpush1.bf16.xpose.msra.mxu0 0
        %6227 = vmatprep.subr.bf16.mxu0 0
        %6228 = vmatpush1.bf16.xpose.msra.mxu0 0
        %6229 = vmatprep.subr.bf16.mxu0 0
        %6230 = vmatpush1.bf16.xpose.msra.mxu0 0
        %6231 = vmatprep.subr.bf16.mxu0 0
        %6232 = vmatpush1.bf16.xpose.msra.mxu0 0
        %6233 = vmatprep.subr.bf16.mxu0 0
        %6234 = vmatpush1.bf16.xpose.msra.mxu0 0
        %6235 = vmatprep.subr.bf16.mxu0 0
        %6236 = vmatpush1.bf16.xpose.msra.mxu0 0
        %6237 = vmatprep.subr.bf16.mxu0 0
        %6238 = vmatpush1.bf16.xpose.msra.mxu0 0
        %6239 = vmatprep.mubr.bf16.mxu0 0
        %6240 = vmatmul.mubr.bf16.gmra.mrb[0].mxu0 %v6202
        %v6241 = vpop.f32.mrb[0].mxu0
        %v6242 = vadd.f32 0.0, %v6241
        %v6243 = vpop.f32.mrb[0].mxu0
        %v6244 = vpop.f32.mrb[0].mxu0
        %v6245 = vpop.f32.mrb[0].mxu0
        %6246 = vdwg.mxu0
        %v6247 = vadd.f32 %v6198, %v6242
        %s6248 = scalar_lea.vmem %s13, 40
        %v6249 = vld [vmem:[%s6248] sm:$0xff]
        %v6250 = vmul.f32 %v6247, %v6249
        %6251 = vmatprep.subr.mxu0 0.0
        %6252 = vmatpush1.msra.mxu0 %v6250
        %6253 = vmatprep.subr.mxu0 0.0
        %6254 = vmatpush1.msra.mxu0 0.0
        %6255 = vmatprep.subr.mxu0 0.0
        %6256 = vmatpush1.msra.mxu0 0.0
        %6257 = vmatprep.subr.mxu0 0.0
        %6258 = vmatpush1.msra.mxu0 0.0
        %6259 = vmatprep.subr.mxu0 0.0
        %6260 = vmatpush1.msra.mxu0 0.0
        %6261 = vmatprep.subr.mxu0 0.0
        %6262 = vmatpush1.msra.mxu0 0.0
        %6263 = vmatprep.subr.mxu0 0.0
        %6264 = vmatpush1.msra.mxu0 0.0
        %6265 = vmatprep.subr.mxu0 0.0
        %6266 = vmatpush1.msra.mxu0 0.0
        %6267 = vmatprep.subr.mxu0 0.0
        %6268 = vmatpush1.msra.mxu0 0.0
        %6269 = vmatprep.subr.mxu0 0.0
        %6270 = vmatpush1.msra.mxu0 0.0
        %6271 = vmatprep.subr.mxu0 0.0
        %6272 = vmatpush1.msra.mxu0 0.0
        %6273 = vmatprep.subr.mxu0 0.0
        %6274 = vmatpush1.msra.mxu0 0.0
        %6275 = vmatprep.subr.mxu0 0.0
        %6276 = vmatpush1.msra.mxu0 0.0
        %6277 = vmatprep.subr.mxu0 0.0
        %6278 = vmatpush1.msra.mxu0 0.0
        %6279 = vmatprep.subr.mxu0 0.0
        %6280 = vmatpush1.msra.mxu0 0.0
        %6281 = vmatprep.subr.mxu0 0.0
        %6282 = vmatpush1.msra.mxu0 0.0
        %6283 = vmatprep.subr.mxu0 0.0
        %6284 = vmatpush1.msra.mxu0 0.0
        %6285 = vmatprep.subr.mxu0 0.0
        %6286 = vmatpush1.msra.mxu0 0.0
        %6287 = vmatprep.subr.mxu0 0.0
        %6288 = vmatpush1.msra.mxu0 0.0
        %6289 = vmatprep.subr.mxu0 0.0
        %6290 = vmatpush1.msra.mxu0 0.0
        %6291 = vmatprep.subr.mxu0 0.0
        %6292 = vmatpush1.msra.mxu0 0.0
        %6293 = vmatprep.subr.mxu0 0.0
        %6294 = vmatpush1.msra.mxu0 0.0
        %6295 = vmatprep.subr.mxu0 0.0
        %6296 = vmatpush1.msra.mxu0 0.0
        %6297 = vmatprep.subr.mxu0 0.0
        %6298 = vmatpush1.msra.mxu0 0.0
        %6299 = vmatprep.subr.mxu0 0.0
        %6300 = vmatpush1.msra.mxu0 0.0
        %6301 = vmatprep.subr.mxu0 0.0
        %6302 = vmatpush1.msra.mxu0 0.0
        %6303 = vmatprep.subr.mxu0 0.0
        %6304 = vmatpush1.msra.mxu0 0.0
        %6305 = vmatprep.subr.mxu0 0.0
        %6306 = vmatpush1.msra.mxu0 0.0
        %6307 = vmatprep.subr.mxu0 0.0
        %6308 = vmatpush1.msra.mxu0 0.0
        %6309 = vmatprep.subr.mxu0 0.0
        %6310 = vmatpush1.msra.mxu0 0.0
        %6311 = vmatprep.subr.mxu0 0.0
        %6312 = vmatpush1.msra.mxu0 0.0
        %6313 = vmatprep.subr.mxu0 0.0
        %6314 = vmatpush1.msra.mxu0 0.0
        %6315 = vmatprep.mubr.f32.mxu0 0.0
        %6316 = vmatmul.mubr.f32.gmra.mrb[0].mxu0 %v2610
        %v6317 = vpop.f32.mrb[0].mxu0
        %v6318 = vadd.f32 0.0, %v6317
        %v6319 = vpop.f32.mrb[0].mxu0
        %6320 = vmatprep.mubr.f32.mxu0 0.0
        %6321 = vmatmul.mubr.f32.gmra.mrb[0].mxu0 %v2613
        %v6322 = vpop.f32.mrb[0].mxu0
        %v6323 = vadd.f32 0.0, %v6322
        %v6324 = vpop.f32.mrb[0].mxu0
        %6325 = vmatprep.mubr.f32.mxu0 0.0
        %6326 = vmatmul.mubr.f32.gmra.mrb[0].mxu0 %v2616
        %v6327 = vpop.f32.mrb[0].mxu0
        %v6328 = vadd.f32 0.0, %v6327
        %v6329 = vpop.f32.mrb[0].mxu0
        %6330 = vmatprep.mubr.f32.mxu0 0.0
        %6331 = vmatmul.mubr.f32.gmra.mrb[0].mxu0 %v2619
        %v6332 = vpop.f32.mrb[0].mxu0
        %v6333 = vadd.f32 0.0, %v6332
        %v6334 = vpop.f32.mrb[0].mxu0
        %6335 = vmatprep.mubr.f32.mxu0 0.0
        %6336 = vmatmul.mubr.f32.gmra.mrb[0].mxu0 %v2622
        %v6337 = vpop.f32.mrb[0].mxu0
        %v6338 = vadd.f32 0.0, %v6337
        %v6339 = vpop.f32.mrb[0].mxu0
        %6340 = vmatprep.mubr.f32.mxu0 0.0
        %6341 = vmatmul.mubr.f32.gmra.mrb[0].mxu0 %v2625
        %v6342 = vpop.f32.mrb[0].mxu0
        %v6343 = vadd.f32 0.0, %v6342
        %v6344 = vpop.f32.mrb[0].mxu0
        %6345 = vmatprep.mubr.f32.mxu0 0.0
        %6346 = vmatmul.mubr.f32.gmra.mrb[0].mxu0 %v2628
        %v6347 = vpop.f32.mrb[0].mxu0
        %v6348 = vadd.f32 0.0, %v6347
        %v6349 = vpop.f32.mrb[0].mxu0
        %6350 = vmatprep.mubr.f32.mxu0 0.0
        %6351 = vmatmul.mubr.f32.gmra.mrb[0].mxu0 %v2631
        %v6352 = vpop.f32.mrb[0].mxu0
        %v6353 = vadd.f32 0.0, %v6352
        %v6354 = vpop.f32.mrb[0].mxu0
        %6355 = vdwg.mxu0
        %v6357 = vsel %vm2608, %v6318, 0
        %v6360 = vsel %vm2608, %v6323, 0
        %v6363 = vsel %vm2608, %v6328, 0
        %v6366 = vsel %vm2608, %v6333, 0
        %v6369 = vsel %vm2608, %v6338, 0
        %v6372 = vsel %vm2608, %v6343, 0
        %v6375 = vsel %vm2608, %v6348, 0
        %v6378 = vsel %vm2608, %v6353, 0
        %6380 = vmatprep.subr.mxu0 0.0
        %6381 = vmatpush1.msra.mxu0 %v2223
        %6382 = vmatprep.subr.mxu0 0.0
        %6383 = vmatpush1.msra.mxu0 0.0
        %6384 = vmatprep.subr.mxu0 0.0
        %6385 = vmatpush1.msra.mxu0 0.0
        %6386 = vmatprep.subr.mxu0 0.0
        %6387 = vmatpush1.msra.mxu0 0.0
        %6388 = vmatprep.subr.mxu0 0.0
        %6389 = vmatpush1.msra.mxu0 0.0
        %6390 = vmatprep.subr.mxu0 0.0
        %6391 = vmatpush1.msra.mxu0 0.0
        %6392 = vmatprep.subr.mxu0 0.0
        %6393 = vmatpush1.msra.mxu0 0.0
        %6394 = vmatprep.subr.mxu0 0.0
        %6395 = vmatpush1.msra.mxu0 0.0
        %6396 = vmatprep.subr.mxu0 0.0
        %6397 = vmatpush1.msra.mxu0 0.0
        %6398 = vmatprep.subr.mxu0 0.0
        %6399 = vmatpush1.msra.mxu0 0.0
        %6400 = vmatprep.subr.mxu0 0.0
        %6401 = vmatpush1.msra.mxu0 0.0
        %6402 = vmatprep.subr.mxu0 0.0
        %6403 = vmatpush1.msra.mxu0 0.0
        %6404 = vmatprep.subr.mxu0 0.0
        %6405 = vmatpush1.msra.mxu0 0.0
        %6406 = vmatprep.subr.mxu0 0.0
        %6407 = vmatpush1.msra.mxu0 0.0
        %6408 = vmatprep.subr.mxu0 0.0
        %6409 = vmatpush1.msra.mxu0 0.0
        %6410 = vmatprep.subr.mxu0 0.0
        %6411 = vmatpush1.msra.mxu0 0.0
        %6412 = vmatprep.subr.mxu0 0.0
        %6413 = vmatpush1.msra.mxu0 0.0
        %6414 = vmatprep.subr.mxu0 0.0
        %6415 = vmatpush1.msra.mxu0 0.0
        %6416 = vmatprep.subr.mxu0 0.0
        %6417 = vmatpush1.msra.mxu0 0.0
        %6418 = vmatprep.subr.mxu0 0.0
        %6419 = vmatpush1.msra.mxu0 0.0
        %6420 = vmatprep.subr.mxu0 0.0
        %6421 = vmatpush1.msra.mxu0 0.0
        %6422 = vmatprep.subr.mxu0 0.0
        %6423 = vmatpush1.msra.mxu0 0.0
        %6424 = vmatprep.subr.mxu0 0.0
        %6425 = vmatpush1.msra.mxu0 0.0
        %6426 = vmatprep.subr.mxu0 0.0
        %6427 = vmatpush1.msra.mxu0 0.0
        %6428 = vmatprep.subr.mxu0 0.0
        %6429 = vmatpush1.msra.mxu0 0.0
        %6430 = vmatprep.subr.mxu0 0.0
        %6431 = vmatpush1.msra.mxu0 0.0
        %6432 = vmatprep.subr.mxu0 0.0
        %6433 = vmatpush1.msra.mxu0 0.0
        %6434 = vmatprep.subr.mxu0 0.0
        %6435 = vmatpush1.msra.mxu0 0.0
        %6436 = vmatprep.subr.mxu0 0.0
        %6437 = vmatpush1.msra.mxu0 0.0
        %6438 = vmatprep.subr.mxu0 0.0
        %6439 = vmatpush1.msra.mxu0 0.0
        %6440 = vmatprep.subr.mxu0 0.0
        %6441 = vmatpush1.msra.mxu0 0.0
        %6442 = vmatprep.subr.mxu0 0.0
        %6443 = vmatpush1.msra.mxu0 0.0
        %6444 = vmatprep.mubr.f32.mxu0 0.0
        %6445 = vmatmul.mubr.f32.gmra.mrb[0].mxu0 %v6357
        %v6446 = vpop.f32.mrb[0].mxu0
        %v6447 = vadd.f32 0.0, %v6446
        %v6448 = vpop.f32.mrb[0].mxu0
        %6449 = vmatprep.mubr.f32.mxu0 0.0
        %6450 = vmatmul.mubr.f32.gmra.mrb[0].mxu0 %v6360
        %v6451 = vpop.f32.mrb[0].mxu0
        %v6452 = vadd.f32 0.0, %v6451
        %v6453 = vpop.f32.mrb[0].mxu0
        %6454 = vmatprep.mubr.f32.mxu0 0.0
        %6455 = vmatmul.mubr.f32.gmra.mrb[0].mxu0 %v6363
        %v6456 = vpop.f32.mrb[0].mxu0
        %v6457 = vadd.f32 0.0, %v6456
        %v6458 = vpop.f32.mrb[0].mxu0
        %6459 = vmatprep.mubr.f32.mxu0 0.0
        %6460 = vmatmul.mubr.f32.gmra.mrb[0].mxu0 %v6366
        %v6461 = vpop.f32.mrb[0].mxu0
        %v6462 = vadd.f32 0.0, %v6461
        %v6463 = vpop.f32.mrb[0].mxu0
        %6464 = vmatprep.mubr.f32.mxu0 0.0
        %6465 = vmatmul.mubr.f32.gmra.mrb[0].mxu0 %v6369
        %v6466 = vpop.f32.mrb[0].mxu0
        %v6467 = vadd.f32 0.0, %v6466
        %v6468 = vpop.f32.mrb[0].mxu0
        %6469 = vmatprep.mubr.f32.mxu0 0.0
        %6470 = vmatmul.mubr.f32.gmra.mrb[0].mxu0 %v6372
        %v6471 = vpop.f32.mrb[0].mxu0
        %v6472 = vadd.f32 0.0, %v6471
        %v6473 = vpop.f32.mrb[0].mxu0
        %6474 = vmatprep.mubr.f32.mxu0 0.0
        %6475 = vmatmul.mubr.f32.gmra.mrb[0].mxu0 %v6375
        %v6476 = vpop.f32.mrb[0].mxu0
        %v6477 = vadd.f32 0.0, %v6476
        %v6478 = vpop.f32.mrb[0].mxu0
        %6479 = vmatprep.mubr.f32.mxu0 0.0
        %6480 = vmatmul.mubr.f32.gmra.mrb[0].mxu0 %v6378
        %v6481 = vpop.f32.mrb[0].mxu0
        %v6482 = vadd.f32 0.0, %v6481
        %v6483 = vpop.f32.mrb[0].mxu0
        %6484 = vdwg.mxu0
        %s6485 = scalar_lea.vmem %s14, 320
        %v6486 = vld [vmem:[%s6485] sm:$0xff]
        %v6487 = vld [vmem:[%s6485 + $0x8] sm:$0xff]
        %v6488 = vld [vmem:[%s6485 + $0x10] sm:$0xff]
        %v6489 = vld [vmem:[%s6485 + $0x18] sm:$0xff]
        %v6490 = vld [vmem:[%s6485 + $0x20] sm:$0xff]
        %v6491 = vld [vmem:[%s6485 + $0x28] sm:$0xff]
        %v6492 = vld [vmem:[%s6485 + $0x30] sm:$0xff]
        %v6493 = vld [vmem:[%s6485 + $0x38] sm:$0xff]
        %v6494 = vmul.f32 %v6486, %v6447
        %v6495 = vmul.f32 %v6487, %v6452
        %v6496 = vmul.f32 %v6488, %v6457
        %v6497 = vmul.f32 %v6489, %v6462
        %v6498 = vmul.f32 %v6490, %v6467
        %v6499 = vmul.f32 %v6491, %v6472
        %v6500 = vmul.f32 %v6492, %v6477
        %v6501 = vmul.f32 %v6493, %v6482
        %v6502 = vpack.c.bf16 %v6495, %v6494
        %v6503 = vpack.c.bf16 %v6497, %v6496
        %v6504 = vpack.c.bf16 %v6499, %v6498
        %v6505 = vpack.c.bf16 %v6501, %v6500
        %v6507 = vsel %vm943, %v6502, 0
        %v6510 = vsel %vm943, %v6503, 0
        %v6513 = vsel %vm943, %v6504, 0
        %v6516 = vsel %vm943, %v6505, 0
        %6518 = vmatprep.subr.bf16.mxu0 0
        %6519 = vmatpush1.bf16.msra.mxu0 %v2191
        %6520 = vmatprep.subr.bf16.mxu0 0
        %6521 = vmatpush1.bf16.msra.mxu0 %v2192
        %6522 = vmatprep.subr.bf16.mxu0 0
        %6523 = vmatpush1.bf16.msra.mxu0 %v2193
        %6524 = vmatprep.subr.bf16.mxu0 0
        %6525 = vmatpush1.bf16.msra.mxu0 %v2194
        %6526 = vmatprep.subr.bf16.mxu0 0
        %6527 = vmatpush1.bf16.msra.mxu0 0
        %6528 = vmatprep.subr.bf16.mxu0 0
        %6529 = vmatpush1.bf16.msra.mxu0 0
        %6530 = vmatprep.subr.bf16.mxu0 0
        %6531 = vmatpush1.bf16.msra.mxu0 0
        %6532 = vmatprep.subr.bf16.mxu0 0
        %6533 = vmatpush1.bf16.msra.mxu0 0
        %6534 = vmatprep.subr.bf16.mxu0 0
        %6535 = vmatpush1.bf16.msra.mxu0 0
        %6536 = vmatprep.subr.bf16.mxu0 0
        %6537 = vmatpush1.bf16.msra.mxu0 0
        %6538 = vmatprep.subr.bf16.mxu0 0
        %6539 = vmatpush1.bf16.msra.mxu0 0
        %6540 = vmatprep.subr.bf16.mxu0 0
        %6541 = vmatpush1.bf16.msra.mxu0 0
        %6542 = vmatprep.subr.bf16.mxu0 0
        %6543 = vmatpush1.bf16.msra.mxu0 0
        %6544 = vmatprep.subr.bf16.mxu0 0
        %6545 = vmatpush1.bf16.msra.mxu0 0
        %6546 = vmatprep.subr.bf16.mxu0 0
        %6547 = vmatpush1.bf16.msra.mxu0 0
        %6548 = vmatprep.subr.bf16.mxu0 0
        %6549 = vmatpush1.bf16.msra.mxu0 0
        %6550 = vmatprep.mubr.bf16.mxu0 0
        %6551 = vmatmul.mubr.bf16.gmra.mrb[0].mxu0 %v6507
        %v6552 = vpop.f32.mrb[0].mxu0
        %v6553 = vadd.f32 0.0, %v6552
        %v6554 = vpop.f32.mrb[0].mxu0
        %v6555 = vpop.f32.mrb[0].mxu0
        %v6556 = vadd.f32 0.0, %v6555
        %v6557 = vpop.f32.mrb[0].mxu0
        %6558 = vmatprep.mubr.bf16.mxu0 0
        %6559 = vmatmul.mubr.bf16.gmra.mrb[0].mxu0 %v6510
        %v6560 = vpop.f32.mrb[0].mxu0
        %v6561 = vadd.f32 0.0, %v6560
        %v6562 = vpop.f32.mrb[0].mxu0
        %v6563 = vpop.f32.mrb[0].mxu0
        %v6564 = vadd.f32 0.0, %v6563
        %v6565 = vpop.f32.mrb[0].mxu0
        %6566 = vmatprep.mubr.bf16.mxu0 0
        %6567 = vmatmul.mubr.bf16.gmra.mrb[0].mxu0 %v6513
        %v6568 = vpop.f32.mrb[0].mxu0
        %v6569 = vadd.f32 0.0, %v6568
        %v6570 = vpop.f32.mrb[0].mxu0
        %v6571 = vpop.f32.mrb[0].mxu0
        %v6572 = vadd.f32 0.0, %v6571
        %v6573 = vpop.f32.mrb[0].mxu0
        %6574 = vmatprep.mubr.bf16.mxu0 0
        %6575 = vmatmul.mubr.bf16.gmra.mrb[0].mxu0 %v6516
        %v6576 = vpop.f32.mrb[0].mxu0
        %v6577 = vadd.f32 0.0, %v6576
        %v6578 = vpop.f32.mrb[0].mxu0
        %v6579 = vpop.f32.mrb[0].mxu0
        %v6580 = vadd.f32 0.0, %v6579
        %v6581 = vpop.f32.mrb[0].mxu0
        %6582 = vdwg.mxu0
        %v6583 = vadd.f32 %v5856, %v6553
        %v6584 = vadd.f32 %v5857, %v6556
        %v6585 = vadd.f32 %v5858, %v6561
        %v6586 = vadd.f32 %v5859, %v6564
        %v6587 = vadd.f32 %v5860, %v6569
        %v6588 = vadd.f32 %v5861, %v6572
        %v6589 = vadd.f32 %v5862, %v6577
        %v6590 = vadd.f32 %v5863, %v6580
        %s6591 = scalar_lea.vmem %s11, 96
        %v6592 = vld [vmem:[%s6591] sm:$0xf]
        %v6593 = vld [vmem:[%s6591 + $0x4] sm:$0xf]
        %v6594 = vld [vmem:[%s6591 + $0x8] sm:$0xf]
        %v6595 = vld [vmem:[%s6591 + $0xc] sm:$0xf]
        %s6596 = scalar_lea.vmem %s12, 192
        %v6597 = vld [vmem:[%s6596] sm:$0xff]
        %v6598 = vld [vmem:[%s6596 + $0x8] sm:$0xff]
        %v6599 = vld [vmem:[%s6596 + $0x10] sm:$0xff]
        %v6600 = vld [vmem:[%s6596 + $0x18] sm:$0xff]
        %6602 = vset.pattern.permute.xlu0 0
        %6603 = vperm.xlu0 %6602, %v6597
        %v6604 = vpop.permute.xlu0 %6603
        %6607 = vset.pattern.permute.xlu0 0
        %6608 = vperm.xlu0 %6607, %v6598
        %v6609 = vpop.permute.xlu0 %6608
        %6612 = vset.pattern.permute.xlu0 0
        %6613 = vperm.xlu0 %6612, %v6599
        %v6614 = vpop.permute.xlu0 %6613
        %6617 = vset.pattern.permute.xlu0 0
        %6618 = vperm.xlu0 %6617, %v6600
        %v6619 = vpop.permute.xlu0 %6618
        %v6625 = vunpack.c.l.b16 %v6592
        %v6626 = vunpack.c.l.b16 %v6593
        %v6627 = vunpack.c.l.b16 %v6594
        %v6628 = vunpack.c.l.b16 %v6595
        %v6629 = vpack.c.b16 %v6626, %v6625
        %v6630 = vpack.c.b16 %v6628, %v6627
        %v6632 = vsel %vm943, %v6629, 0
        %v6635 = vsel %vm943, %v6630, 0
        %6637 = vmatprep.subr.bf16.mxu0 0
        %6638 = vmatpush1.bf16.msra.mxu0 %v2211
        %6639 = vmatprep.subr.bf16.mxu0 0
        %6640 = vmatpush1.bf16.msra.mxu0 %v2212
        %6641 = vmatprep.subr.bf16.mxu0 0
        %6642 = vmatpush1.bf16.msra.mxu0 %v2213
        %6643 = vmatprep.subr.bf16.mxu0 0
        %6644 = vmatpush1.bf16.msra.mxu0 %v2214
        %6645 = vmatprep.subr.bf16.mxu0 0
        %6646 = vmatpush1.bf16.msra.mxu0 0
        %6647 = vmatprep.subr.bf16.mxu0 0
        %6648 = vmatpush1.bf16.msra.mxu0 0
        %6649 = vmatprep.subr.bf16.mxu0 0
        %6650 = vmatpush1.bf16.msra.mxu0 0
        %6651 = vmatprep.subr.bf16.mxu0 0
        %6652 = vmatpush1.bf16.msra.mxu0 0
        %6653 = vmatprep.subr.bf16.mxu0 0
        %6654 = vmatpush1.bf16.msra.mxu0 0
        %6655 = vmatprep.subr.bf16.mxu0 0
        %6656 = vmatpush1.bf16.msra.mxu0 0
        %6657 = vmatprep.subr.bf16.mxu0 0
        %6658 = vmatpush1.bf16.msra.mxu0 0
        %6659 = vmatprep.subr.bf16.mxu0 0
        %6660 = vmatpush1.bf16.msra.mxu0 0
        %6661 = vmatprep.subr.bf16.mxu0 0
        %6662 = vmatpush1.bf16.msra.mxu0 0
        %6663 = vmatprep.subr.bf16.mxu0 0
        %6664 = vmatpush1.bf16.msra.mxu0 0
        %6665 = vmatprep.subr.bf16.mxu0 0
        %6666 = vmatpush1.bf16.msra.mxu0 0
        %6667 = vmatprep.subr.bf16.mxu0 0
        %6668 = vmatpush1.bf16.msra.mxu0 0
        %6669 = vmatprep.mubr.bf16.mxu0 0
        %6670 = vmatmul.mubr.bf16.gmra.mrb[0].mxu0 %v6632
        %v6671 = vpop.f32.mrb[0].mxu0
        %v6672 = vadd.f32 %v6604, %v6671
        %v6673 = vpop.f32.mrb[0].mxu0
        %v6674 = vpop.f32.mrb[0].mxu0
        %v6675 = vadd.f32 %v6609, %v6674
        %v6676 = vpop.f32.mrb[0].mxu0
        %6677 = vmatprep.mubr.bf16.mxu0 0
        %6678 = vmatmul.mubr.bf16.gmra.mrb[0].mxu0 %v6635
        %v6679 = vpop.f32.mrb[0].mxu0
        %v6680 = vadd.f32 %v6614, %v6679
        %v6681 = vpop.f32.mrb[0].mxu0
        %v6682 = vpop.f32.mrb[0].mxu0
        %v6683 = vadd.f32 %v6619, %v6682
        %v6684 = vpop.f32.mrb[0].mxu0
        %6685 = vdwg.mxu0
        %s6686 = scalar_lea.vmem %s11, 240
        %v6687 = vld [vmem:[%s6686] sm:$0xf]
        %v6688 = vld [vmem:[%s6686 + $0x4] sm:$0xf]
        %v6689 = vld [vmem:[%s6686 + $0x8] sm:$0xf]
        %v6690 = vld [vmem:[%s6686 + $0xc] sm:$0xf]
        %s6691 = scalar_lea.vmem %s12, 480
        %v6692 = vld [vmem:[%s6691] sm:$0xff]
        %v6693 = vld [vmem:[%s6691 + $0x8] sm:$0xff]
        %v6694 = vld [vmem:[%s6691 + $0x10] sm:$0xff]
        %v6695 = vld [vmem:[%s6691 + $0x18] sm:$0xff]
        %6697 = vset.pattern.permute.xlu0 0
        %6698 = vperm.xlu0 %6697, %v6692
        %v6699 = vpop.permute.xlu0 %6698
        %6702 = vset.pattern.permute.xlu0 0
        %6703 = vperm.xlu0 %6702, %v6693
        %v6704 = vpop.permute.xlu0 %6703
        %6707 = vset.pattern.permute.xlu0 0
        %6708 = vperm.xlu0 %6707, %v6694
        %v6709 = vpop.permute.xlu0 %6708
        %6712 = vset.pattern.permute.xlu0 0
        %6713 = vperm.xlu0 %6712, %v6695
        %v6714 = vpop.permute.xlu0 %6713
        %v6720 = vunpack.c.l.b16 %v6687
        %v6721 = vunpack.c.l.b16 %v6688
        %v6722 = vunpack.c.l.b16 %v6689
        %v6723 = vunpack.c.l.b16 %v6690
        %v6724 = vpack.c.b16 %v6721, %v6720
        %v6725 = vpack.c.b16 %v6723, %v6722
        %v6727 = vsel %vm943, %v6724, 0
        %v6730 = vsel %vm943, %v6725, 0
        %6732 = vmatprep.subr.bf16.mxu0 0
        %6733 = vmatpush1.bf16.msra.mxu0 %v2211
        %6734 = vmatprep.subr.bf16.mxu0 0
        %6735 = vmatpush1.bf16.msra.mxu0 %v2212
        %6736 = vmatprep.subr.bf16.mxu0 0
        %6737 = vmatpush1.bf16.msra.mxu0 %v2213
        %6738 = vmatprep.subr.bf16.mxu0 0
        %6739 = vmatpush1.bf16.msra.mxu0 %v2214
        %6740 = vmatprep.subr.bf16.mxu0 0
        %6741 = vmatpush1.bf16.msra.mxu0 0
        %6742 = vmatprep.subr.bf16.mxu0 0
        %6743 = vmatpush1.bf16.msra.mxu0 0
        %6744 = vmatprep.subr.bf16.mxu0 0
        %6745 = vmatpush1.bf16.msra.mxu0 0
        %6746 = vmatprep.subr.bf16.mxu0 0
        %6747 = vmatpush1.bf16.msra.mxu0 0
        %6748 = vmatprep.subr.bf16.mxu0 0
        %6749 = vmatpush1.bf16.msra.mxu0 0
        %6750 = vmatprep.subr.bf16.mxu0 0
        %6751 = vmatpush1.bf16.msra.mxu0 0
        %6752 = vmatprep.subr.bf16.mxu0 0
        %6753 = vmatpush1.bf16.msra.mxu0 0
        %6754 = vmatprep.subr.bf16.mxu0 0
        %6755 = vmatpush1.bf16.msra.mxu0 0
        %6756 = vmatprep.subr.bf16.mxu0 0
        %6757 = vmatpush1.bf16.msra.mxu0 0
        %6758 = vmatprep.subr.bf16.mxu0 0
        %6759 = vmatpush1.bf16.msra.mxu0 0
        %6760 = vmatprep.subr.bf16.mxu0 0
        %6761 = vmatpush1.bf16.msra.mxu0 0
        %6762 = vmatprep.subr.bf16.mxu0 0
        %6763 = vmatpush1.bf16.msra.mxu0 0
        %6764 = vmatprep.mubr.bf16.mxu0 0
        %6765 = vmatmul.mubr.bf16.gmra.mrb[0].mxu0 %v6727
        %v6766 = vpop.f32.mrb[0].mxu0
        %v6767 = vadd.f32 %v6699, %v6766
        %v6768 = vpop.f32.mrb[0].mxu0
        %v6769 = vpop.f32.mrb[0].mxu0
        %v6770 = vadd.f32 %v6704, %v6769
        %v6771 = vpop.f32.mrb[0].mxu0
        %6772 = vmatprep.mubr.bf16.mxu0 0
        %6773 = vmatmul.mubr.bf16.gmra.mrb[0].mxu0 %v6730
        %v6774 = vpop.f32.mrb[0].mxu0
        %v6775 = vadd.f32 %v6709, %v6774
        %v6776 = vpop.f32.mrb[0].mxu0
        %v6777 = vpop.f32.mrb[0].mxu0
        %v6778 = vadd.f32 %v6714, %v6777
        %v6779 = vpop.f32.mrb[0].mxu0
        %6780 = vdwg.mxu0
        %v6781 = vpack.c.bf16 %v6767, %v6767
        %v6782 = vpack.c.bf16 %v6672, %v6672
        %v6783 = vpack.c.bf16 %v6770, %v6770
        %v6784 = vpack.c.bf16 %v6675, %v6675
        %v6786 = vsel %vm1485, %v6783, 0
        %v6789 = vsel %vm1485, %v6784, 0
        %6791 = vmatprep.subr.bf16.mxu0 0
        %6792 = vmatpush1.bf16.xpose.msra.mxu0 %v6789
        %6793 = vmatprep.subr.bf16.mxu0 0
        %6794 = vmatpush1.bf16.xpose.msra.mxu0 0
        %6795 = vmatprep.subr.bf16.mxu0 0
        %6796 = vmatpush1.bf16.xpose.msra.mxu0 0
        %6797 = vmatprep.subr.bf16.mxu0 0
        %6798 = vmatpush1.bf16.xpose.msra.mxu0 0
        %6799 = vmatprep.subr.bf16.mxu0 0
        %6800 = vmatpush1.bf16.xpose.msra.mxu0 0
        %6801 = vmatprep.subr.bf16.mxu0 0
        %6802 = vmatpush1.bf16.xpose.msra.mxu0 0
        %6803 = vmatprep.subr.bf16.mxu0 0
        %6804 = vmatpush1.bf16.xpose.msra.mxu0 0
        %6805 = vmatprep.subr.bf16.mxu0 0
        %6806 = vmatpush1.bf16.xpose.msra.mxu0 0
        %6807 = vmatprep.subr.bf16.mxu0 0
        %6808 = vmatpush1.bf16.xpose.msra.mxu0 0
        %6809 = vmatprep.subr.bf16.mxu0 0
        %6810 = vmatpush1.bf16.xpose.msra.mxu0 0
        %6811 = vmatprep.subr.bf16.mxu0 0
        %6812 = vmatpush1.bf16.xpose.msra.mxu0 0
        %6813 = vmatprep.subr.bf16.mxu0 0
        %6814 = vmatpush1.bf16.xpose.msra.mxu0 0
        %6815 = vmatprep.subr.bf16.mxu0 0
        %6816 = vmatpush1.bf16.xpose.msra.mxu0 0
        %6817 = vmatprep.subr.bf16.mxu0 0
        %6818 = vmatpush1.bf16.xpose.msra.mxu0 0
        %6819 = vmatprep.subr.bf16.mxu0 0
        %6820 = vmatpush1.bf16.xpose.msra.mxu0 0
        %6821 = vmatprep.subr.bf16.mxu0 0
        %6822 = vmatpush1.bf16.xpose.msra.mxu0 0
        %6823 = vmatprep.mubr.bf16.mxu0 0
        %6824 = vmatmul.mubr.bf16.gmra.mrb[0].mxu0 %v6786
        %v6825 = vpop.f32.mrb[0].mxu0
        %v6826 = vadd.f32 0.0, %v6825
        %v6827 = vpop.f32.mrb[0].mxu0
        %v6828 = vpop.f32.mrb[0].mxu0
        %v6829 = vpop.f32.mrb[0].mxu0
        %6830 = vdwg.mxu0
        %v6832 = vsel %vm1485, %v6781, 0
        %v6835 = vsel %vm1485, %v6782, 0
        %6837 = vmatprep.subr.bf16.mxu0 0
        %6838 = vmatpush1.bf16.xpose.msra.mxu0 %v6835
        %6839 = vmatprep.subr.bf16.mxu0 0
        %6840 = vmatpush1.bf16.xpose.msra.mxu0 0
        %6841 = vmatprep.subr.bf16.mxu0 0
        %6842 = vmatpush1.bf16.xpose.msra.mxu0 0
        %6843 = vmatprep.subr.bf16.mxu0 0
        %6844 = vmatpush1.bf16.xpose.msra.mxu0 0
        %6845 = vmatprep.subr.bf16.mxu0 0
        %6846 = vmatpush1.bf16.xpose.msra.mxu0 0
        %6847 = vmatprep.subr.bf16.mxu0 0
        %6848 = vmatpush1.bf16.xpose.msra.mxu0 0
        %6849 = vmatprep.subr.bf16.mxu0 0
        %6850 = vmatpush1.bf16.xpose.msra.mxu0 0
        %6851 = vmatprep.subr.bf16.mxu0 0
        %6852 = vmatpush1.bf16.xpose.msra.mxu0 0
        %6853 = vmatprep.subr.bf16.mxu0 0
        %6854 = vmatpush1.bf16.xpose.msra.mxu0 0
        %6855 = vmatprep.subr.bf16.mxu0 0
        %6856 = vmatpush1.bf16.xpose.msra.mxu0 0
        %6857 = vmatprep.subr.bf16.mxu0 0
        %6858 = vmatpush1.bf16.xpose.msra.mxu0 0
        %6859 = vmatprep.subr.bf16.mxu0 0
        %6860 = vmatpush1.bf16.xpose.msra.mxu0 0
        %6861 = vmatprep.subr.bf16.mxu0 0
        %6862 = vmatpush1.bf16.xpose.msra.mxu0 0
        %6863 = vmatprep.subr.bf16.mxu0 0
        %6864 = vmatpush1.bf16.xpose.msra.mxu0 0
        %6865 = vmatprep.subr.bf16.mxu0 0
        %6866 = vmatpush1.bf16.xpose.msra.mxu0 0
        %6867 = vmatprep.subr.bf16.mxu0 0
        %6868 = vmatpush1.bf16.xpose.msra.mxu0 0
        %6869 = vmatprep.mubr.bf16.mxu0 0
        %6870 = vmatmul.mubr.bf16.gmra.mrb[0].mxu0 %v6832
        %v6871 = vpop.f32.mrb[0].mxu0
        %v6872 = vadd.f32 %v6826, %v6871
        %v6873 = vpop.f32.mrb[0].mxu0
        %v6874 = vpop.f32.mrb[0].mxu0
        %v6875 = vpop.f32.mrb[0].mxu0
        %6876 = vdwg.mxu0
        %v6877 = vpack.c.bf16 %v6775, %v6775
        %v6878 = vpack.c.bf16 %v6680, %v6680
        %v6880 = vsel %vm1485, %v6877, 0
        %v6883 = vsel %vm1485, %v6878, 0
        %6885 = vmatprep.subr.bf16.mxu0 0
        %6886 = vmatpush1.bf16.xpose.msra.mxu0 %v6883
        %6887 = vmatprep.subr.bf16.mxu0 0
        %6888 = vmatpush1.bf16.xpose.msra.mxu0 0
        %6889 = vmatprep.subr.bf16.mxu0 0
        %6890 = vmatpush1.bf16.xpose.msra.mxu0 0
        %6891 = vmatprep.subr.bf16.mxu0 0
        %6892 = vmatpush1.bf16.xpose.msra.mxu0 0
        %6893 = vmatprep.subr.bf16.mxu0 0
        %6894 = vmatpush1.bf16.xpose.msra.mxu0 0
        %6895 = vmatprep.subr.bf16.mxu0 0
        %6896 = vmatpush1.bf16.xpose.msra.mxu0 0
        %6897 = vmatprep.subr.bf16.mxu0 0
        %6898 = vmatpush1.bf16.xpose.msra.mxu0 0
        %6899 = vmatprep.subr.bf16.mxu0 0
        %6900 = vmatpush1.bf16.xpose.msra.mxu0 0
        %6901 = vmatprep.subr.bf16.mxu0 0
        %6902 = vmatpush1.bf16.xpose.msra.mxu0 0
        %6903 = vmatprep.subr.bf16.mxu0 0
        %6904 = vmatpush1.bf16.xpose.msra.mxu0 0
        %6905 = vmatprep.subr.bf16.mxu0 0
        %6906 = vmatpush1.bf16.xpose.msra.mxu0 0
        %6907 = vmatprep.subr.bf16.mxu0 0
        %6908 = vmatpush1.bf16.xpose.msra.mxu0 0
        %6909 = vmatprep.subr.bf16.mxu0 0
        %6910 = vmatpush1.bf16.xpose.msra.mxu0 0
        %6911 = vmatprep.subr.bf16.mxu0 0
        %6912 = vmatpush1.bf16.xpose.msra.mxu0 0
        %6913 = vmatprep.subr.bf16.mxu0 0
        %6914 = vmatpush1.bf16.xpose.msra.mxu0 0
        %6915 = vmatprep.subr.bf16.mxu0 0
        %6916 = vmatpush1.bf16.xpose.msra.mxu0 0
        %6917 = vmatprep.mubr.bf16.mxu0 0
        %6918 = vmatmul.mubr.bf16.gmra.mrb[0].mxu0 %v6880
        %v6919 = vpop.f32.mrb[0].mxu0
        %v6920 = vadd.f32 0.0, %v6919
        %v6921 = vpop.f32.mrb[0].mxu0
        %v6922 = vpop.f32.mrb[0].mxu0
        %v6923 = vpop.f32.mrb[0].mxu0
        %6924 = vdwg.mxu0
        %v6925 = vadd.f32 %v6872, %v6920
        %v6926 = vpack.c.bf16 %v6778, %v6778
        %v6927 = vpack.c.bf16 %v6683, %v6683
        %v6929 = vsel %vm1485, %v6926, 0
        %v6932 = vsel %vm1485, %v6927, 0
        %6934 = vmatprep.subr.bf16.mxu0 0
        %6935 = vmatpush1.bf16.xpose.msra.mxu0 %v6932
        %6936 = vmatprep.subr.bf16.mxu0 0
        %6937 = vmatpush1.bf16.xpose.msra.mxu0 0
        %6938 = vmatprep.subr.bf16.mxu0 0
        %6939 = vmatpush1.bf16.xpose.msra.mxu0 0
        %6940 = vmatprep.subr.bf16.mxu0 0
        %6941 = vmatpush1.bf16.xpose.msra.mxu0 0
        %6942 = vmatprep.subr.bf16.mxu0 0
        %6943 = vmatpush1.bf16.xpose.msra.mxu0 0
        %6944 = vmatprep.subr.bf16.mxu0 0
        %6945 = vmatpush1.bf16.xpose.msra.mxu0 0
        %6946 = vmatprep.subr.bf16.mxu0 0
        %6947 = vmatpush1.bf16.xpose.msra.mxu0 0
        %6948 = vmatprep.subr.bf16.mxu0 0
        %6949 = vmatpush1.bf16.xpose.msra.mxu0 0
        %6950 = vmatprep.subr.bf16.mxu0 0
        %6951 = vmatpush1.bf16.xpose.msra.mxu0 0
        %6952 = vmatprep.subr.bf16.mxu0 0
        %6953 = vmatpush1.bf16.xpose.msra.mxu0 0
        %6954 = vmatprep.subr.bf16.mxu0 0
        %6955 = vmatpush1.bf16.xpose.msra.mxu0 0
        %6956 = vmatprep.subr.bf16.mxu0 0
        %6957 = vmatpush1.bf16.xpose.msra.mxu0 0
        %6958 = vmatprep.subr.bf16.mxu0 0
        %6959 = vmatpush1.bf16.xpose.msra.mxu0 0
        %6960 = vmatprep.subr.bf16.mxu0 0
        %6961 = vmatpush1.bf16.xpose.msra.mxu0 0
        %6962 = vmatprep.subr.bf16.mxu0 0
        %6963 = vmatpush1.bf16.xpose.msra.mxu0 0
        %6964 = vmatprep.subr.bf16.mxu0 0
        %6965 = vmatpush1.bf16.xpose.msra.mxu0 0
        %6966 = vmatprep.mubr.bf16.mxu0 0
        %6967 = vmatmul.mubr.bf16.gmra.mrb[0].mxu0 %v6929
        %v6968 = vpop.f32.mrb[0].mxu0
        %v6969 = vadd.f32 0.0, %v6968
        %v6970 = vpop.f32.mrb[0].mxu0
        %v6971 = vpop.f32.mrb[0].mxu0
        %v6972 = vpop.f32.mrb[0].mxu0
        %6973 = vdwg.mxu0
        %v6974 = vadd.f32 %v6925, %v6969
        %s6975 = scalar_lea.vmem %s13, 48
        %v6976 = vld [vmem:[%s6975] sm:$0xff]
        %v6977 = vmul.f32 %v6974, %v6976
        %6978 = vmatprep.subr.mxu0 0.0
        %6979 = vmatpush1.msra.mxu0 %v6977
        %6980 = vmatprep.subr.mxu0 0.0
        %6981 = vmatpush1.msra.mxu0 0.0
        %6982 = vmatprep.subr.mxu0 0.0
        %6983 = vmatpush1.msra.mxu0 0.0
        %6984 = vmatprep.subr.mxu0 0.0
        %6985 = vmatpush1.msra.mxu0 0.0
        %6986 = vmatprep.subr.mxu0 0.0
        %6987 = vmatpush1.msra.mxu0 0.0
        %6988 = vmatprep.subr.mxu0 0.0
        %6989 = vmatpush1.msra.mxu0 0.0
        %6990 = vmatprep.subr.mxu0 0.0
        %6991 = vmatpush1.msra.mxu0 0.0
        %6992 = vmatprep.subr.mxu0 0.0
        %6993 = vmatpush1.msra.mxu0 0.0
        %6994 = vmatprep.subr.mxu0 0.0
        %6995 = vmatpush1.msra.mxu0 0.0
        %6996 = vmatprep.subr.mxu0 0.0
        %6997 = vmatpush1.msra.mxu0 0.0
        %6998 = vmatprep.subr.mxu0 0.0
        %6999 = vmatpush1.msra.mxu0 0.0
        %7000 = vmatprep.subr.mxu0 0.0
        %7001 = vmatpush1.msra.mxu0 0.0
        %7002 = vmatprep.subr.mxu0 0.0
        %7003 = vmatpush1.msra.mxu0 0.0
        %7004 = vmatprep.subr.mxu0 0.0
        %7005 = vmatpush1.msra.mxu0 0.0
        %7006 = vmatprep.subr.mxu0 0.0
        %7007 = vmatpush1.msra.mxu0 0.0
        %7008 = vmatprep.subr.mxu0 0.0
        %7009 = vmatpush1.msra.mxu0 0.0
        %7010 = vmatprep.subr.mxu0 0.0
        %7011 = vmatpush1.msra.mxu0 0.0
        %7012 = vmatprep.subr.mxu0 0.0
        %7013 = vmatpush1.msra.mxu0 0.0
        %7014 = vmatprep.subr.mxu0 0.0
        %7015 = vmatpush1.msra.mxu0 0.0
        %7016 = vmatprep.subr.mxu0 0.0
        %7017 = vmatpush1.msra.mxu0 0.0
        %7018 = vmatprep.subr.mxu0 0.0
        %7019 = vmatpush1.msra.mxu0 0.0
        %7020 = vmatprep.subr.mxu0 0.0
        %7021 = vmatpush1.msra.mxu0 0.0
        %7022 = vmatprep.subr.mxu0 0.0
        %7023 = vmatpush1.msra.mxu0 0.0
        %7024 = vmatprep.subr.mxu0 0.0
        %7025 = vmatpush1.msra.mxu0 0.0
        %7026 = vmatprep.subr.mxu0 0.0
        %7027 = vmatpush1.msra.mxu0 0.0
        %7028 = vmatprep.subr.mxu0 0.0
        %7029 = vmatpush1.msra.mxu0 0.0
        %7030 = vmatprep.subr.mxu0 0.0
        %7031 = vmatpush1.msra.mxu0 0.0
        %7032 = vmatprep.subr.mxu0 0.0
        %7033 = vmatpush1.msra.mxu0 0.0
        %7034 = vmatprep.subr.mxu0 0.0
        %7035 = vmatpush1.msra.mxu0 0.0
        %7036 = vmatprep.subr.mxu0 0.0
        %7037 = vmatpush1.msra.mxu0 0.0
        %7038 = vmatprep.subr.mxu0 0.0
        %7039 = vmatpush1.msra.mxu0 0.0
        %7040 = vmatprep.subr.mxu0 0.0
        %7041 = vmatpush1.msra.mxu0 0.0
        %7042 = vmatprep.mubr.f32.mxu0 0.0
        %7043 = vmatmul.mubr.f32.gmra.mrb[0].mxu0 %v2610
        %v7044 = vpop.f32.mrb[0].mxu0
        %v7045 = vadd.f32 0.0, %v7044
        %v7046 = vpop.f32.mrb[0].mxu0
        %7047 = vmatprep.mubr.f32.mxu0 0.0
        %7048 = vmatmul.mubr.f32.gmra.mrb[0].mxu0 %v2613
        %v7049 = vpop.f32.mrb[0].mxu0
        %v7050 = vadd.f32 0.0, %v7049
        %v7051 = vpop.f32.mrb[0].mxu0
        %7052 = vmatprep.mubr.f32.mxu0 0.0
        %7053 = vmatmul.mubr.f32.gmra.mrb[0].mxu0 %v2616
        %v7054 = vpop.f32.mrb[0].mxu0
        %v7055 = vadd.f32 0.0, %v7054
        %v7056 = vpop.f32.mrb[0].mxu0
        %7057 = vmatprep.mubr.f32.mxu0 0.0
        %7058 = vmatmul.mubr.f32.gmra.mrb[0].mxu0 %v2619
        %v7059 = vpop.f32.mrb[0].mxu0
        %v7060 = vadd.f32 0.0, %v7059
        %v7061 = vpop.f32.mrb[0].mxu0
        %7062 = vmatprep.mubr.f32.mxu0 0.0
        %7063 = vmatmul.mubr.f32.gmra.mrb[0].mxu0 %v2622
        %v7064 = vpop.f32.mrb[0].mxu0
        %v7065 = vadd.f32 0.0, %v7064
        %v7066 = vpop.f32.mrb[0].mxu0
        %7067 = vmatprep.mubr.f32.mxu0 0.0
        %7068 = vmatmul.mubr.f32.gmra.mrb[0].mxu0 %v2625
        %v7069 = vpop.f32.mrb[0].mxu0
        %v7070 = vadd.f32 0.0, %v7069
        %v7071 = vpop.f32.mrb[0].mxu0
        %7072 = vmatprep.mubr.f32.mxu0 0.0
        %7073 = vmatmul.mubr.f32.gmra.mrb[0].mxu0 %v2628
        %v7074 = vpop.f32.mrb[0].mxu0
        %v7075 = vadd.f32 0.0, %v7074
        %v7076 = vpop.f32.mrb[0].mxu0
        %7077 = vmatprep.mubr.f32.mxu0 0.0
        %7078 = vmatmul.mubr.f32.gmra.mrb[0].mxu0 %v2631
        %v7079 = vpop.f32.mrb[0].mxu0
        %v7080 = vadd.f32 0.0, %v7079
        %v7081 = vpop.f32.mrb[0].mxu0
        %7082 = vdwg.mxu0
        %v7084 = vsel %vm2608, %v7045, 0
        %v7087 = vsel %vm2608, %v7050, 0
        %v7090 = vsel %vm2608, %v7055, 0
        %v7093 = vsel %vm2608, %v7060, 0
        %v7096 = vsel %vm2608, %v7065, 0
        %v7099 = vsel %vm2608, %v7070, 0
        %v7102 = vsel %vm2608, %v7075, 0
        %v7105 = vsel %vm2608, %v7080, 0
        %7107 = vmatprep.subr.mxu0 0.0
        %7108 = vmatpush1.msra.mxu0 %v2223
        %7109 = vmatprep.subr.mxu0 0.0
        %7110 = vmatpush1.msra.mxu0 0.0
        %7111 = vmatprep.subr.mxu0 0.0
        %7112 = vmatpush1.msra.mxu0 0.0
        %7113 = vmatprep.subr.mxu0 0.0
        %7114 = vmatpush1.msra.mxu0 0.0
        %7115 = vmatprep.subr.mxu0 0.0
        %7116 = vmatpush1.msra.mxu0 0.0
        %7117 = vmatprep.subr.mxu0 0.0
        %7118 = vmatpush1.msra.mxu0 0.0
        %7119 = vmatprep.subr.mxu0 0.0
        %7120 = vmatpush1.msra.mxu0 0.0
        %7121 = vmatprep.subr.mxu0 0.0
        %7122 = vmatpush1.msra.mxu0 0.0
        %7123 = vmatprep.subr.mxu0 0.0
        %7124 = vmatpush1.msra.mxu0 0.0
        %7125 = vmatprep.subr.mxu0 0.0
        %7126 = vmatpush1.msra.mxu0 0.0
        %7127 = vmatprep.subr.mxu0 0.0
        %7128 = vmatpush1.msra.mxu0 0.0
        %7129 = vmatprep.subr.mxu0 0.0
        %7130 = vmatpush1.msra.mxu0 0.0
        %7131 = vmatprep.subr.mxu0 0.0
        %7132 = vmatpush1.msra.mxu0 0.0
        %7133 = vmatprep.subr.mxu0 0.0
        %7134 = vmatpush1.msra.mxu0 0.0
        %7135 = vmatprep.subr.mxu0 0.0
        %7136 = vmatpush1.msra.mxu0 0.0
        %7137 = vmatprep.subr.mxu0 0.0
        %7138 = vmatpush1.msra.mxu0 0.0
        %7139 = vmatprep.subr.mxu0 0.0
        %7140 = vmatpush1.msra.mxu0 0.0
        %7141 = vmatprep.subr.mxu0 0.0
        %7142 = vmatpush1.msra.mxu0 0.0
        %7143 = vmatprep.subr.mxu0 0.0
        %7144 = vmatpush1.msra.mxu0 0.0
        %7145 = vmatprep.subr.mxu0 0.0
        %7146 = vmatpush1.msra.mxu0 0.0
        %7147 = vmatprep.subr.mxu0 0.0
        %7148 = vmatpush1.msra.mxu0 0.0
        %7149 = vmatprep.subr.mxu0 0.0
        %7150 = vmatpush1.msra.mxu0 0.0
        %7151 = vmatprep.subr.mxu0 0.0
        %7152 = vmatpush1.msra.mxu0 0.0
        %7153 = vmatprep.subr.mxu0 0.0
        %7154 = vmatpush1.msra.mxu0 0.0
        %7155 = vmatprep.subr.mxu0 0.0
        %7156 = vmatpush1.msra.mxu0 0.0
        %7157 = vmatprep.subr.mxu0 0.0
        %7158 = vmatpush1.msra.mxu0 0.0
        %7159 = vmatprep.subr.mxu0 0.0
        %7160 = vmatpush1.msra.mxu0 0.0
        %7161 = vmatprep.subr.mxu0 0.0
        %7162 = vmatpush1.msra.mxu0 0.0
        %7163 = vmatprep.subr.mxu0 0.0
        %7164 = vmatpush1.msra.mxu0 0.0
        %7165 = vmatprep.subr.mxu0 0.0
        %7166 = vmatpush1.msra.mxu0 0.0
        %7167 = vmatprep.subr.mxu0 0.0
        %7168 = vmatpush1.msra.mxu0 0.0
        %7169 = vmatprep.subr.mxu0 0.0
        %7170 = vmatpush1.msra.mxu0 0.0
        %7171 = vmatprep.mubr.f32.mxu0 0.0
        %7172 = vmatmul.mubr.f32.gmra.mrb[0].mxu0 %v7084
        %v7173 = vpop.f32.mrb[0].mxu0
        %v7174 = vadd.f32 0.0, %v7173
        %v7175 = vpop.f32.mrb[0].mxu0
        %7176 = vmatprep.mubr.f32.mxu0 0.0
        %7177 = vmatmul.mubr.f32.gmra.mrb[0].mxu0 %v7087
        %v7178 = vpop.f32.mrb[0].mxu0
        %v7179 = vadd.f32 0.0, %v7178
        %v7180 = vpop.f32.mrb[0].mxu0
        %7181 = vmatprep.mubr.f32.mxu0 0.0
        %7182 = vmatmul.mubr.f32.gmra.mrb[0].mxu0 %v7090
        %v7183 = vpop.f32.mrb[0].mxu0
        %v7184 = vadd.f32 0.0, %v7183
        %v7185 = vpop.f32.mrb[0].mxu0
        %7186 = vmatprep.mubr.f32.mxu0 0.0
        %7187 = vmatmul.mubr.f32.gmra.mrb[0].mxu0 %v7093
        %v7188 = vpop.f32.mrb[0].mxu0
        %v7189 = vadd.f32 0.0, %v7188
        %v7190 = vpop.f32.mrb[0].mxu0
        %7191 = vmatprep.mubr.f32.mxu0 0.0
        %7192 = vmatmul.mubr.f32.gmra.mrb[0].mxu0 %v7096
        %v7193 = vpop.f32.mrb[0].mxu0
        %v7194 = vadd.f32 0.0, %v7193
        %v7195 = vpop.f32.mrb[0].mxu0
        %7196 = vmatprep.mubr.f32.mxu0 0.0
        %7197 = vmatmul.mubr.f32.gmra.mrb[0].mxu0 %v7099
        %v7198 = vpop.f32.mrb[0].mxu0
        %v7199 = vadd.f32 0.0, %v7198
        %v7200 = vpop.f32.mrb[0].mxu0
        %7201 = vmatprep.mubr.f32.mxu0 0.0
        %7202 = vmatmul.mubr.f32.gmra.mrb[0].mxu0 %v7102
        %v7203 = vpop.f32.mrb[0].mxu0
        %v7204 = vadd.f32 0.0, %v7203
        %v7205 = vpop.f32.mrb[0].mxu0
        %7206 = vmatprep.mubr.f32.mxu0 0.0
        %7207 = vmatmul.mubr.f32.gmra.mrb[0].mxu0 %v7105
        %v7208 = vpop.f32.mrb[0].mxu0
        %v7209 = vadd.f32 0.0, %v7208
        %v7210 = vpop.f32.mrb[0].mxu0
        %7211 = vdwg.mxu0
        %s7212 = scalar_lea.vmem %s14, 384
        %v7213 = vld [vmem:[%s7212] sm:$0xff]
        %v7214 = vld [vmem:[%s7212 + $0x8] sm:$0xff]
        %v7215 = vld [vmem:[%s7212 + $0x10] sm:$0xff]
        %v7216 = vld [vmem:[%s7212 + $0x18] sm:$0xff]
        %v7217 = vld [vmem:[%s7212 + $0x20] sm:$0xff]
        %v7218 = vld [vmem:[%s7212 + $0x28] sm:$0xff]
        %v7219 = vld [vmem:[%s7212 + $0x30] sm:$0xff]
        %v7220 = vld [vmem:[%s7212 + $0x38] sm:$0xff]
        %v7221 = vmul.f32 %v7213, %v7174
        %v7222 = vmul.f32 %v7214, %v7179
        %v7223 = vmul.f32 %v7215, %v7184
        %v7224 = vmul.f32 %v7216, %v7189
        %v7225 = vmul.f32 %v7217, %v7194
        %v7226 = vmul.f32 %v7218, %v7199
        %v7227 = vmul.f32 %v7219, %v7204
        %v7228 = vmul.f32 %v7220, %v7209
        %v7229 = vpack.c.bf16 %v7222, %v7221
        %v7230 = vpack.c.bf16 %v7224, %v7223
        %v7231 = vpack.c.bf16 %v7226, %v7225
        %v7232 = vpack.c.bf16 %v7228, %v7227
        %v7234 = vsel %vm943, %v7229, 0
        %v7237 = vsel %vm943, %v7230, 0
        %v7240 = vsel %vm943, %v7231, 0
        %v7243 = vsel %vm943, %v7232, 0
        %7245 = vmatprep.subr.bf16.mxu0 0
        %7246 = vmatpush1.bf16.msra.mxu0 %v2191
        %7247 = vmatprep.subr.bf16.mxu0 0
        %7248 = vmatpush1.bf16.msra.mxu0 %v2192
        %7249 = vmatprep.subr.bf16.mxu0 0
        %7250 = vmatpush1.bf16.msra.mxu0 %v2193
        %7251 = vmatprep.subr.bf16.mxu0 0
        %7252 = vmatpush1.bf16.msra.mxu0 %v2194
        %7253 = vmatprep.subr.bf16.mxu0 0
        %7254 = vmatpush1.bf16.msra.mxu0 0
        %7255 = vmatprep.subr.bf16.mxu0 0
        %7256 = vmatpush1.bf16.msra.mxu0 0
        %7257 = vmatprep.subr.bf16.mxu0 0
        %7258 = vmatpush1.bf16.msra.mxu0 0
        %7259 = vmatprep.subr.bf16.mxu0 0
        %7260 = vmatpush1.bf16.msra.mxu0 0
        %7261 = vmatprep.subr.bf16.mxu0 0
        %7262 = vmatpush1.bf16.msra.mxu0 0
        %7263 = vmatprep.subr.bf16.mxu0 0
        %7264 = vmatpush1.bf16.msra.mxu0 0
        %7265 = vmatprep.subr.bf16.mxu0 0
        %7266 = vmatpush1.bf16.msra.mxu0 0
        %7267 = vmatprep.subr.bf16.mxu0 0
        %7268 = vmatpush1.bf16.msra.mxu0 0
        %7269 = vmatprep.subr.bf16.mxu0 0
        %7270 = vmatpush1.bf16.msra.mxu0 0
        %7271 = vmatprep.subr.bf16.mxu0 0
        %7272 = vmatpush1.bf16.msra.mxu0 0
        %7273 = vmatprep.subr.bf16.mxu0 0
        %7274 = vmatpush1.bf16.msra.mxu0 0
        %7275 = vmatprep.subr.bf16.mxu0 0
        %7276 = vmatpush1.bf16.msra.mxu0 0
        %7277 = vmatprep.mubr.bf16.mxu0 0
        %7278 = vmatmul.mubr.bf16.gmra.mrb[0].mxu0 %v7234
        %v7279 = vpop.f32.mrb[0].mxu0
        %v7280 = vadd.f32 0.0, %v7279
        %v7281 = vpop.f32.mrb[0].mxu0
        %v7282 = vpop.f32.mrb[0].mxu0
        %v7283 = vadd.f32 0.0, %v7282
        %v7284 = vpop.f32.mrb[0].mxu0
        %7285 = vmatprep.mubr.bf16.mxu0 0
        %7286 = vmatmul.mubr.bf16.gmra.mrb[0].mxu0 %v7237
        %v7287 = vpop.f32.mrb[0].mxu0
        %v7288 = vadd.f32 0.0, %v7287
        %v7289 = vpop.f32.mrb[0].mxu0
        %v7290 = vpop.f32.mrb[0].mxu0
        %v7291 = vadd.f32 0.0, %v7290
        %v7292 = vpop.f32.mrb[0].mxu0
        %7293 = vmatprep.mubr.bf16.mxu0 0
        %7294 = vmatmul.mubr.bf16.gmra.mrb[0].mxu0 %v7240
        %v7295 = vpop.f32.mrb[0].mxu0
        %v7296 = vadd.f32 0.0, %v7295
        %v7297 = vpop.f32.mrb[0].mxu0
        %v7298 = vpop.f32.mrb[0].mxu0
        %v7299 = vadd.f32 0.0, %v7298
        %v7300 = vpop.f32.mrb[0].mxu0
        %7301 = vmatprep.mubr.bf16.mxu0 0
        %7302 = vmatmul.mubr.bf16.gmra.mrb[0].mxu0 %v7243
        %v7303 = vpop.f32.mrb[0].mxu0
        %v7304 = vadd.f32 0.0, %v7303
        %v7305 = vpop.f32.mrb[0].mxu0
        %v7306 = vpop.f32.mrb[0].mxu0
        %v7307 = vadd.f32 0.0, %v7306
        %v7308 = vpop.f32.mrb[0].mxu0
        %7309 = vdwg.mxu0
        %v7310 = vadd.f32 %v6583, %v7280
        %v7311 = vadd.f32 %v6584, %v7283
        %v7312 = vadd.f32 %v6585, %v7288
        %v7313 = vadd.f32 %v6586, %v7291
        %v7314 = vadd.f32 %v6587, %v7296
        %v7315 = vadd.f32 %v6588, %v7299
        %v7316 = vadd.f32 %v6589, %v7304
        %v7317 = vadd.f32 %v6590, %v7307
        %s7318 = scalar_lea.vmem %s11, 112
        %v7319 = vld [vmem:[%s7318] sm:$0xf]
        %v7320 = vld [vmem:[%s7318 + $0x4] sm:$0xf]
        %v7321 = vld [vmem:[%s7318 + $0x8] sm:$0xf]
        %v7322 = vld [vmem:[%s7318 + $0xc] sm:$0xf]
        %s7323 = scalar_lea.vmem %s12, 224
        %v7324 = vld [vmem:[%s7323] sm:$0xff]
        %v7325 = vld [vmem:[%s7323 + $0x8] sm:$0xff]
        %v7326 = vld [vmem:[%s7323 + $0x10] sm:$0xff]
        %v7327 = vld [vmem:[%s7323 + $0x18] sm:$0xff]
        %7329 = vset.pattern.permute.xlu0 0
        %7330 = vperm.xlu0 %7329, %v7324
        %v7331 = vpop.permute.xlu0 %7330
        %7334 = vset.pattern.permute.xlu0 0
        %7335 = vperm.xlu0 %7334, %v7325
        %v7336 = vpop.permute.xlu0 %7335
        %7339 = vset.pattern.permute.xlu0 0
        %7340 = vperm.xlu0 %7339, %v7326
        %v7341 = vpop.permute.xlu0 %7340
        %7344 = vset.pattern.permute.xlu0 0
        %7345 = vperm.xlu0 %7344, %v7327
        %v7346 = vpop.permute.xlu0 %7345
        %v7352 = vunpack.c.l.b16 %v7319
        %v7353 = vunpack.c.l.b16 %v7320
        %v7354 = vunpack.c.l.b16 %v7321
        %v7355 = vunpack.c.l.b16 %v7322
        %v7356 = vpack.c.b16 %v7353, %v7352
        %v7357 = vpack.c.b16 %v7355, %v7354
        %v7359 = vsel %vm943, %v7356, 0
        %v7362 = vsel %vm943, %v7357, 0
        %7364 = vmatprep.subr.bf16.mxu0 0
        %7365 = vmatpush1.bf16.msra.mxu0 %v2211
        %7366 = vmatprep.subr.bf16.mxu0 0
        %7367 = vmatpush1.bf16.msra.mxu0 %v2212
        %7368 = vmatprep.subr.bf16.mxu0 0
        %7369 = vmatpush1.bf16.msra.mxu0 %v2213
        %7370 = vmatprep.subr.bf16.mxu0 0
        %7371 = vmatpush1.bf16.msra.mxu0 %v2214
        %7372 = vmatprep.subr.bf16.mxu0 0
        %7373 = vmatpush1.bf16.msra.mxu0 0
        %7374 = vmatprep.subr.bf16.mxu0 0
        %7375 = vmatpush1.bf16.msra.mxu0 0
        %7376 = vmatprep.subr.bf16.mxu0 0
        %7377 = vmatpush1.bf16.msra.mxu0 0
        %7378 = vmatprep.subr.bf16.mxu0 0
        %7379 = vmatpush1.bf16.msra.mxu0 0
        %7380 = vmatprep.subr.bf16.mxu0 0
        %7381 = vmatpush1.bf16.msra.mxu0 0
        %7382 = vmatprep.subr.bf16.mxu0 0
        %7383 = vmatpush1.bf16.msra.mxu0 0
        %7384 = vmatprep.subr.bf16.mxu0 0
        %7385 = vmatpush1.bf16.msra.mxu0 0
        %7386 = vmatprep.subr.bf16.mxu0 0
        %7387 = vmatpush1.bf16.msra.mxu0 0
        %7388 = vmatprep.subr.bf16.mxu0 0
        %7389 = vmatpush1.bf16.msra.mxu0 0
        %7390 = vmatprep.subr.bf16.mxu0 0
        %7391 = vmatpush1.bf16.msra.mxu0 0
        %7392 = vmatprep.subr.bf16.mxu0 0
        %7393 = vmatpush1.bf16.msra.mxu0 0
        %7394 = vmatprep.subr.bf16.mxu0 0
        %7395 = vmatpush1.bf16.msra.mxu0 0
        %7396 = vmatprep.mubr.bf16.mxu0 0
        %7397 = vmatmul.mubr.bf16.gmra.mrb[0].mxu0 %v7359
        %v7398 = vpop.f32.mrb[0].mxu0
        %v7399 = vadd.f32 %v7331, %v7398
        %v7400 = vpop.f32.mrb[0].mxu0
        %v7401 = vpop.f32.mrb[0].mxu0
        %v7402 = vadd.f32 %v7336, %v7401
        %v7403 = vpop.f32.mrb[0].mxu0
        %7404 = vmatprep.mubr.bf16.mxu0 0
        %7405 = vmatmul.mubr.bf16.gmra.mrb[0].mxu0 %v7362
        %v7406 = vpop.f32.mrb[0].mxu0
        %v7407 = vadd.f32 %v7341, %v7406
        %v7408 = vpop.f32.mrb[0].mxu0
        %v7409 = vpop.f32.mrb[0].mxu0
        %v7410 = vadd.f32 %v7346, %v7409
        %v7411 = vpop.f32.mrb[0].mxu0
        %7412 = vdwg.mxu0
        %s7413 = scalar_lea.vmem %s11, 256
        %v7414 = vld [vmem:[%s7413] sm:$0xf]
        %v7415 = vld [vmem:[%s7413 + $0x4] sm:$0xf]
        %v7416 = vld [vmem:[%s7413 + $0x8] sm:$0xf]
        %v7417 = vld [vmem:[%s7413 + $0xc] sm:$0xf]
        %s7418 = scalar_lea.vmem %s12, 512
        %v7419 = vld [vmem:[%s7418] sm:$0xff]
        %v7420 = vld [vmem:[%s7418 + $0x8] sm:$0xff]
        %v7421 = vld [vmem:[%s7418 + $0x10] sm:$0xff]
        %v7422 = vld [vmem:[%s7418 + $0x18] sm:$0xff]
        %7424 = vset.pattern.permute.xlu0 0
        %7425 = vperm.xlu0 %7424, %v7419
        %v7426 = vpop.permute.xlu0 %7425
        %7429 = vset.pattern.permute.xlu0 0
        %7430 = vperm.xlu0 %7429, %v7420
        %v7431 = vpop.permute.xlu0 %7430
        %7434 = vset.pattern.permute.xlu0 0
        %7435 = vperm.xlu0 %7434, %v7421
        %v7436 = vpop.permute.xlu0 %7435
        %7439 = vset.pattern.permute.xlu0 0
        %7440 = vperm.xlu0 %7439, %v7422
        %v7441 = vpop.permute.xlu0 %7440
        %v7447 = vunpack.c.l.b16 %v7414
        %v7448 = vunpack.c.l.b16 %v7415
        %v7449 = vunpack.c.l.b16 %v7416
        %v7450 = vunpack.c.l.b16 %v7417
        %v7451 = vpack.c.b16 %v7448, %v7447
        %v7452 = vpack.c.b16 %v7450, %v7449
        %v7454 = vsel %vm943, %v7451, 0
        %v7457 = vsel %vm943, %v7452, 0
        %7459 = vmatprep.subr.bf16.mxu0 0
        %7460 = vmatpush1.bf16.msra.mxu0 %v2211
        %7461 = vmatprep.subr.bf16.mxu0 0
        %7462 = vmatpush1.bf16.msra.mxu0 %v2212
        %7463 = vmatprep.subr.bf16.mxu0 0
        %7464 = vmatpush1.bf16.msra.mxu0 %v2213
        %7465 = vmatprep.subr.bf16.mxu0 0
        %7466 = vmatpush1.bf16.msra.mxu0 %v2214
        %7467 = vmatprep.subr.bf16.mxu0 0
        %7468 = vmatpush1.bf16.msra.mxu0 0
        %7469 = vmatprep.subr.bf16.mxu0 0
        %7470 = vmatpush1.bf16.msra.mxu0 0
        %7471 = vmatprep.subr.bf16.mxu0 0
        %7472 = vmatpush1.bf16.msra.mxu0 0
        %7473 = vmatprep.subr.bf16.mxu0 0
        %7474 = vmatpush1.bf16.msra.mxu0 0
        %7475 = vmatprep.subr.bf16.mxu0 0
        %7476 = vmatpush1.bf16.msra.mxu0 0
        %7477 = vmatprep.subr.bf16.mxu0 0
        %7478 = vmatpush1.bf16.msra.mxu0 0
        %7479 = vmatprep.subr.bf16.mxu0 0
        %7480 = vmatpush1.bf16.msra.mxu0 0
        %7481 = vmatprep.subr.bf16.mxu0 0
        %7482 = vmatpush1.bf16.msra.mxu0 0
        %7483 = vmatprep.subr.bf16.mxu0 0
        %7484 = vmatpush1.bf16.msra.mxu0 0
        %7485 = vmatprep.subr.bf16.mxu0 0
        %7486 = vmatpush1.bf16.msra.mxu0 0
        %7487 = vmatprep.subr.bf16.mxu0 0
        %7488 = vmatpush1.bf16.msra.mxu0 0
        %7489 = vmatprep.subr.bf16.mxu0 0
        %7490 = vmatpush1.bf16.msra.mxu0 0
        %7491 = vmatprep.mubr.bf16.mxu0 0
        %7492 = vmatmul.mubr.bf16.gmra.mrb[0].mxu0 %v7454
        %v7493 = vpop.f32.mrb[0].mxu0
        %v7494 = vadd.f32 %v7426, %v7493
        %v7495 = vpop.f32.mrb[0].mxu0
        %v7496 = vpop.f32.mrb[0].mxu0
        %v7497 = vadd.f32 %v7431, %v7496
        %v7498 = vpop.f32.mrb[0].mxu0
        %7499 = vmatprep.mubr.bf16.mxu0 0
        %7500 = vmatmul.mubr.bf16.gmra.mrb[0].mxu0 %v7457
        %v7501 = vpop.f32.mrb[0].mxu0
        %v7502 = vadd.f32 %v7436, %v7501
        %v7503 = vpop.f32.mrb[0].mxu0
        %v7504 = vpop.f32.mrb[0].mxu0
        %v7505 = vadd.f32 %v7441, %v7504
        %v7506 = vpop.f32.mrb[0].mxu0
        %7507 = vdwg.mxu0
        %v7508 = vpack.c.bf16 %v7494, %v7494
        %v7509 = vpack.c.bf16 %v7399, %v7399
        %v7510 = vpack.c.bf16 %v7497, %v7497
        %v7511 = vpack.c.bf16 %v7402, %v7402
        %v7513 = vsel %vm1485, %v7510, 0
        %v7516 = vsel %vm1485, %v7511, 0
        %7518 = vmatprep.subr.bf16.mxu0 0
        %7519 = vmatpush1.bf16.xpose.msra.mxu0 %v7516
        %7520 = vmatprep.subr.bf16.mxu0 0
        %7521 = vmatpush1.bf16.xpose.msra.mxu0 0
        %7522 = vmatprep.subr.bf16.mxu0 0
        %7523 = vmatpush1.bf16.xpose.msra.mxu0 0
        %7524 = vmatprep.subr.bf16.mxu0 0
        %7525 = vmatpush1.bf16.xpose.msra.mxu0 0
        %7526 = vmatprep.subr.bf16.mxu0 0
        %7527 = vmatpush1.bf16.xpose.msra.mxu0 0
        %7528 = vmatprep.subr.bf16.mxu0 0
        %7529 = vmatpush1.bf16.xpose.msra.mxu0 0
        %7530 = vmatprep.subr.bf16.mxu0 0
        %7531 = vmatpush1.bf16.xpose.msra.mxu0 0
        %7532 = vmatprep.subr.bf16.mxu0 0
        %7533 = vmatpush1.bf16.xpose.msra.mxu0 0
        %7534 = vmatprep.subr.bf16.mxu0 0
        %7535 = vmatpush1.bf16.xpose.msra.mxu0 0
        %7536 = vmatprep.subr.bf16.mxu0 0
        %7537 = vmatpush1.bf16.xpose.msra.mxu0 0
        %7538 = vmatprep.subr.bf16.mxu0 0
        %7539 = vmatpush1.bf16.xpose.msra.mxu0 0
        %7540 = vmatprep.subr.bf16.mxu0 0
        %7541 = vmatpush1.bf16.xpose.msra.mxu0 0
        %7542 = vmatprep.subr.bf16.mxu0 0
        %7543 = vmatpush1.bf16.xpose.msra.mxu0 0
        %7544 = vmatprep.subr.bf16.mxu0 0
        %7545 = vmatpush1.bf16.xpose.msra.mxu0 0
        %7546 = vmatprep.subr.bf16.mxu0 0
        %7547 = vmatpush1.bf16.xpose.msra.mxu0 0
        %7548 = vmatprep.subr.bf16.mxu0 0
        %7549 = vmatpush1.bf16.xpose.msra.mxu0 0
        %7550 = vmatprep.mubr.bf16.mxu0 0
        %7551 = vmatmul.mubr.bf16.gmra.mrb[0].mxu0 %v7513
        %v7552 = vpop.f32.mrb[0].mxu0
        %v7553 = vadd.f32 0.0, %v7552
        %v7554 = vpop.f32.mrb[0].mxu0
        %v7555 = vpop.f32.mrb[0].mxu0
        %v7556 = vpop.f32.mrb[0].mxu0
        %7557 = vdwg.mxu0
        %v7559 = vsel %vm1485, %v7508, 0
        %v7562 = vsel %vm1485, %v7509, 0
        %7564 = vmatprep.subr.bf16.mxu0 0
        %7565 = vmatpush1.bf16.xpose.msra.mxu0 %v7562
        %7566 = vmatprep.subr.bf16.mxu0 0
        %7567 = vmatpush1.bf16.xpose.msra.mxu0 0
        %7568 = vmatprep.subr.bf16.mxu0 0
        %7569 = vmatpush1.bf16.xpose.msra.mxu0 0
        %7570 = vmatprep.subr.bf16.mxu0 0
        %7571 = vmatpush1.bf16.xpose.msra.mxu0 0
        %7572 = vmatprep.subr.bf16.mxu0 0
        %7573 = vmatpush1.bf16.xpose.msra.mxu0 0
        %7574 = vmatprep.subr.bf16.mxu0 0
        %7575 = vmatpush1.bf16.xpose.msra.mxu0 0
        %7576 = vmatprep.subr.bf16.mxu0 0
        %7577 = vmatpush1.bf16.xpose.msra.mxu0 0
        %7578 = vmatprep.subr.bf16.mxu0 0
        %7579 = vmatpush1.bf16.xpose.msra.mxu0 0
        %7580 = vmatprep.subr.bf16.mxu0 0
        %7581 = vmatpush1.bf16.xpose.msra.mxu0 0
        %7582 = vmatprep.subr.bf16.mxu0 0
        %7583 = vmatpush1.bf16.xpose.msra.mxu0 0
        %7584 = vmatprep.subr.bf16.mxu0 0
        %7585 = vmatpush1.bf16.xpose.msra.mxu0 0
        %7586 = vmatprep.subr.bf16.mxu0 0
        %7587 = vmatpush1.bf16.xpose.msra.mxu0 0
        %7588 = vmatprep.subr.bf16.mxu0 0
        %7589 = vmatpush1.bf16.xpose.msra.mxu0 0
        %7590 = vmatprep.subr.bf16.mxu0 0
        %7591 = vmatpush1.bf16.xpose.msra.mxu0 0
        %7592 = vmatprep.subr.bf16.mxu0 0
        %7593 = vmatpush1.bf16.xpose.msra.mxu0 0
        %7594 = vmatprep.subr.bf16.mxu0 0
        %7595 = vmatpush1.bf16.xpose.msra.mxu0 0
        %7596 = vmatprep.mubr.bf16.mxu0 0
        %7597 = vmatmul.mubr.bf16.gmra.mrb[0].mxu0 %v7559
        %v7598 = vpop.f32.mrb[0].mxu0
        %v7599 = vadd.f32 %v7553, %v7598
        %v7600 = vpop.f32.mrb[0].mxu0
        %v7601 = vpop.f32.mrb[0].mxu0
        %v7602 = vpop.f32.mrb[0].mxu0
        %7603 = vdwg.mxu0
        %v7604 = vpack.c.bf16 %v7502, %v7502
        %v7605 = vpack.c.bf16 %v7407, %v7407
        %v7607 = vsel %vm1485, %v7604, 0
        %v7610 = vsel %vm1485, %v7605, 0
        %7612 = vmatprep.subr.bf16.mxu0 0
        %7613 = vmatpush1.bf16.xpose.msra.mxu0 %v7610
        %7614 = vmatprep.subr.bf16.mxu0 0
        %7615 = vmatpush1.bf16.xpose.msra.mxu0 0
        %7616 = vmatprep.subr.bf16.mxu0 0
        %7617 = vmatpush1.bf16.xpose.msra.mxu0 0
        %7618 = vmatprep.subr.bf16.mxu0 0
        %7619 = vmatpush1.bf16.xpose.msra.mxu0 0
        %7620 = vmatprep.subr.bf16.mxu0 0
        %7621 = vmatpush1.bf16.xpose.msra.mxu0 0
        %7622 = vmatprep.subr.bf16.mxu0 0
        %7623 = vmatpush1.bf16.xpose.msra.mxu0 0
        %7624 = vmatprep.subr.bf16.mxu0 0
        %7625 = vmatpush1.bf16.xpose.msra.mxu0 0
        %7626 = vmatprep.subr.bf16.mxu0 0
        %7627 = vmatpush1.bf16.xpose.msra.mxu0 0
        %7628 = vmatprep.subr.bf16.mxu0 0
        %7629 = vmatpush1.bf16.xpose.msra.mxu0 0
        %7630 = vmatprep.subr.bf16.mxu0 0
        %7631 = vmatpush1.bf16.xpose.msra.mxu0 0
        %7632 = vmatprep.subr.bf16.mxu0 0
        %7633 = vmatpush1.bf16.xpose.msra.mxu0 0
        %7634 = vmatprep.subr.bf16.mxu0 0
        %7635 = vmatpush1.bf16.xpose.msra.mxu0 0
        %7636 = vmatprep.subr.bf16.mxu0 0
        %7637 = vmatpush1.bf16.xpose.msra.mxu0 0
        %7638 = vmatprep.subr.bf16.mxu0 0
        %7639 = vmatpush1.bf16.xpose.msra.mxu0 0
        %7640 = vmatprep.subr.bf16.mxu0 0
        %7641 = vmatpush1.bf16.xpose.msra.mxu0 0
        %7642 = vmatprep.subr.bf16.mxu0 0
        %7643 = vmatpush1.bf16.xpose.msra.mxu0 0
        %7644 = vmatprep.mubr.bf16.mxu0 0
        %7645 = vmatmul.mubr.bf16.gmra.mrb[0].mxu0 %v7607
        %v7646 = vpop.f32.mrb[0].mxu0
        %v7647 = vadd.f32 0.0, %v7646
        %v7648 = vpop.f32.mrb[0].mxu0
        %v7649 = vpop.f32.mrb[0].mxu0
        %v7650 = vpop.f32.mrb[0].mxu0
        %7651 = vdwg.mxu0
        %v7652 = vadd.f32 %v7599, %v7647
        %v7653 = vpack.c.bf16 %v7505, %v7505
        %v7654 = vpack.c.bf16 %v7410, %v7410
        %v7656 = vsel %vm1485, %v7653, 0
        %v7659 = vsel %vm1485, %v7654, 0
        %7661 = vmatprep.subr.bf16.mxu0 0
        %7662 = vmatpush1.bf16.xpose.msra.mxu0 %v7659
        %7663 = vmatprep.subr.bf16.mxu0 0
        %7664 = vmatpush1.bf16.xpose.msra.mxu0 0
        %7665 = vmatprep.subr.bf16.mxu0 0
        %7666 = vmatpush1.bf16.xpose.msra.mxu0 0
        %7667 = vmatprep.subr.bf16.mxu0 0
        %7668 = vmatpush1.bf16.xpose.msra.mxu0 0
        %7669 = vmatprep.subr.bf16.mxu0 0
        %7670 = vmatpush1.bf16.xpose.msra.mxu0 0
        %7671 = vmatprep.subr.bf16.mxu0 0
        %7672 = vmatpush1.bf16.xpose.msra.mxu0 0
        %7673 = vmatprep.subr.bf16.mxu0 0
        %7674 = vmatpush1.bf16.xpose.msra.mxu0 0
        %7675 = vmatprep.subr.bf16.mxu0 0
        %7676 = vmatpush1.bf16.xpose.msra.mxu0 0
        %7677 = vmatprep.subr.bf16.mxu0 0
        %7678 = vmatpush1.bf16.xpose.msra.mxu0 0
        %7679 = vmatprep.subr.bf16.mxu0 0
        %7680 = vmatpush1.bf16.xpose.msra.mxu0 0
        %7681 = vmatprep.subr.bf16.mxu0 0
        %7682 = vmatpush1.bf16.xpose.msra.mxu0 0
        %7683 = vmatprep.subr.bf16.mxu0 0
        %7684 = vmatpush1.bf16.xpose.msra.mxu0 0
        %7685 = vmatprep.subr.bf16.mxu0 0
        %7686 = vmatpush1.bf16.xpose.msra.mxu0 0
        %7687 = vmatprep.subr.bf16.mxu0 0
        %7688 = vmatpush1.bf16.xpose.msra.mxu0 0
        %7689 = vmatprep.subr.bf16.mxu0 0
        %7690 = vmatpush1.bf16.xpose.msra.mxu0 0
        %7691 = vmatprep.subr.bf16.mxu0 0
        %7692 = vmatpush1.bf16.xpose.msra.mxu0 0
        %7693 = vmatprep.mubr.bf16.mxu0 0
        %7694 = vmatmul.mubr.bf16.gmra.mrb[0].mxu0 %v7656
        %v7695 = vpop.f32.mrb[0].mxu0
        %v7696 = vadd.f32 0.0, %v7695
        %v7697 = vpop.f32.mrb[0].mxu0
        %v7698 = vpop.f32.mrb[0].mxu0
        %v7699 = vpop.f32.mrb[0].mxu0
        %7700 = vdwg.mxu0
        %v7701 = vadd.f32 %v7652, %v7696
        %s7702 = scalar_lea.vmem %s13, 56
        %v7703 = vld [vmem:[%s7702] sm:$0xff]
        %v7704 = vmul.f32 %v7701, %v7703
        %7705 = vmatprep.subr.mxu0 0.0
        %7706 = vmatpush1.msra.mxu0 %v7704
        %7707 = vmatprep.subr.mxu0 0.0
        %7708 = vmatpush1.msra.mxu0 0.0
        %7709 = vmatprep.subr.mxu0 0.0
        %7710 = vmatpush1.msra.mxu0 0.0
        %7711 = vmatprep.subr.mxu0 0.0
        %7712 = vmatpush1.msra.mxu0 0.0
        %7713 = vmatprep.subr.mxu0 0.0
        %7714 = vmatpush1.msra.mxu0 0.0
        %7715 = vmatprep.subr.mxu0 0.0
        %7716 = vmatpush1.msra.mxu0 0.0
        %7717 = vmatprep.subr.mxu0 0.0
        %7718 = vmatpush1.msra.mxu0 0.0
        %7719 = vmatprep.subr.mxu0 0.0
        %7720 = vmatpush1.msra.mxu0 0.0
        %7721 = vmatprep.subr.mxu0 0.0
        %7722 = vmatpush1.msra.mxu0 0.0
        %7723 = vmatprep.subr.mxu0 0.0
        %7724 = vmatpush1.msra.mxu0 0.0
        %7725 = vmatprep.subr.mxu0 0.0
        %7726 = vmatpush1.msra.mxu0 0.0
        %7727 = vmatprep.subr.mxu0 0.0
        %7728 = vmatpush1.msra.mxu0 0.0
        %7729 = vmatprep.subr.mxu0 0.0
        %7730 = vmatpush1.msra.mxu0 0.0
        %7731 = vmatprep.subr.mxu0 0.0
        %7732 = vmatpush1.msra.mxu0 0.0
        %7733 = vmatprep.subr.mxu0 0.0
        %7734 = vmatpush1.msra.mxu0 0.0
        %7735 = vmatprep.subr.mxu0 0.0
        %7736 = vmatpush1.msra.mxu0 0.0
        %7737 = vmatprep.subr.mxu0 0.0
        %7738 = vmatpush1.msra.mxu0 0.0
        %7739 = vmatprep.subr.mxu0 0.0
        %7740 = vmatpush1.msra.mxu0 0.0
        %7741 = vmatprep.subr.mxu0 0.0
        %7742 = vmatpush1.msra.mxu0 0.0
        %7743 = vmatprep.subr.mxu0 0.0
        %7744 = vmatpush1.msra.mxu0 0.0
        %7745 = vmatprep.subr.mxu0 0.0
        %7746 = vmatpush1.msra.mxu0 0.0
        %7747 = vmatprep.subr.mxu0 0.0
        %7748 = vmatpush1.msra.mxu0 0.0
        %7749 = vmatprep.subr.mxu0 0.0
        %7750 = vmatpush1.msra.mxu0 0.0
        %7751 = vmatprep.subr.mxu0 0.0
        %7752 = vmatpush1.msra.mxu0 0.0
        %7753 = vmatprep.subr.mxu0 0.0
        %7754 = vmatpush1.msra.mxu0 0.0
        %7755 = vmatprep.subr.mxu0 0.0
        %7756 = vmatpush1.msra.mxu0 0.0
        %7757 = vmatprep.subr.mxu0 0.0
        %7758 = vmatpush1.msra.mxu0 0.0
        %7759 = vmatprep.subr.mxu0 0.0
        %7760 = vmatpush1.msra.mxu0 0.0
        %7761 = vmatprep.subr.mxu0 0.0
        %7762 = vmatpush1.msra.mxu0 0.0
        %7763 = vmatprep.subr.mxu0 0.0
        %7764 = vmatpush1.msra.mxu0 0.0
        %7765 = vmatprep.subr.mxu0 0.0
        %7766 = vmatpush1.msra.mxu0 0.0
        %7767 = vmatprep.subr.mxu0 0.0
        %7768 = vmatpush1.msra.mxu0 0.0
        %7769 = vmatprep.mubr.f32.mxu0 0.0
        %7770 = vmatmul.mubr.f32.gmra.mrb[0].mxu0 %v2610
        %v7771 = vpop.f32.mrb[0].mxu0
        %v7772 = vadd.f32 0.0, %v7771
        %v7773 = vpop.f32.mrb[0].mxu0
        %7774 = vmatprep.mubr.f32.mxu0 0.0
        %7775 = vmatmul.mubr.f32.gmra.mrb[0].mxu0 %v2613
        %v7776 = vpop.f32.mrb[0].mxu0
        %v7777 = vadd.f32 0.0, %v7776
        %v7778 = vpop.f32.mrb[0].mxu0
        %7779 = vmatprep.mubr.f32.mxu0 0.0
        %7780 = vmatmul.mubr.f32.gmra.mrb[0].mxu0 %v2616
        %v7781 = vpop.f32.mrb[0].mxu0
        %v7782 = vadd.f32 0.0, %v7781
        %v7783 = vpop.f32.mrb[0].mxu0
        %7784 = vmatprep.mubr.f32.mxu0 0.0
        %7785 = vmatmul.mubr.f32.gmra.mrb[0].mxu0 %v2619
        %v7786 = vpop.f32.mrb[0].mxu0
        %v7787 = vadd.f32 0.0, %v7786
        %v7788 = vpop.f32.mrb[0].mxu0
        %7789 = vmatprep.mubr.f32.mxu0 0.0
        %7790 = vmatmul.mubr.f32.gmra.mrb[0].mxu0 %v2622
        %v7791 = vpop.f32.mrb[0].mxu0
        %v7792 = vadd.f32 0.0, %v7791
        %v7793 = vpop.f32.mrb[0].mxu0
        %7794 = vmatprep.mubr.f32.mxu0 0.0
        %7795 = vmatmul.mubr.f32.gmra.mrb[0].mxu0 %v2625
        %v7796 = vpop.f32.mrb[0].mxu0
        %v7797 = vadd.f32 0.0, %v7796
        %v7798 = vpop.f32.mrb[0].mxu0
        %7799 = vmatprep.mubr.f32.mxu0 0.0
        %7800 = vmatmul.mubr.f32.gmra.mrb[0].mxu0 %v2628
        %v7801 = vpop.f32.mrb[0].mxu0
        %v7802 = vadd.f32 0.0, %v7801
        %v7803 = vpop.f32.mrb[0].mxu0
        %7804 = vmatprep.mubr.f32.mxu0 0.0
        %7805 = vmatmul.mubr.f32.gmra.mrb[0].mxu0 %v2631
        %v7806 = vpop.f32.mrb[0].mxu0
        %v7807 = vadd.f32 0.0, %v7806
        %v7808 = vpop.f32.mrb[0].mxu0
        %7809 = vdwg.mxu0
        %v7811 = vsel %vm2608, %v7772, 0
        %v7814 = vsel %vm2608, %v7777, 0
        %v7817 = vsel %vm2608, %v7782, 0
        %v7820 = vsel %vm2608, %v7787, 0
        %v7823 = vsel %vm2608, %v7792, 0
        %v7826 = vsel %vm2608, %v7797, 0
        %v7829 = vsel %vm2608, %v7802, 0
        %v7832 = vsel %vm2608, %v7807, 0
        %7834 = vmatprep.subr.mxu0 0.0
        %7835 = vmatpush1.msra.mxu0 %v2223
        %7836 = vmatprep.subr.mxu0 0.0
        %7837 = vmatpush1.msra.mxu0 0.0
        %7838 = vmatprep.subr.mxu0 0.0
        %7839 = vmatpush1.msra.mxu0 0.0
        %7840 = vmatprep.subr.mxu0 0.0
        %7841 = vmatpush1.msra.mxu0 0.0
        %7842 = vmatprep.subr.mxu0 0.0
        %7843 = vmatpush1.msra.mxu0 0.0
        %7844 = vmatprep.subr.mxu0 0.0
        %7845 = vmatpush1.msra.mxu0 0.0
        %7846 = vmatprep.subr.mxu0 0.0
        %7847 = vmatpush1.msra.mxu0 0.0
        %7848 = vmatprep.subr.mxu0 0.0
        %7849 = vmatpush1.msra.mxu0 0.0
        %7850 = vmatprep.subr.mxu0 0.0
        %7851 = vmatpush1.msra.mxu0 0.0
        %7852 = vmatprep.subr.mxu0 0.0
        %7853 = vmatpush1.msra.mxu0 0.0
        %7854 = vmatprep.subr.mxu0 0.0
        %7855 = vmatpush1.msra.mxu0 0.0
        %7856 = vmatprep.subr.mxu0 0.0
        %7857 = vmatpush1.msra.mxu0 0.0
        %7858 = vmatprep.subr.mxu0 0.0
        %7859 = vmatpush1.msra.mxu0 0.0
        %7860 = vmatprep.subr.mxu0 0.0
        %7861 = vmatpush1.msra.mxu0 0.0
        %7862 = vmatprep.subr.mxu0 0.0
        %7863 = vmatpush1.msra.mxu0 0.0
        %7864 = vmatprep.subr.mxu0 0.0
        %7865 = vmatpush1.msra.mxu0 0.0
        %7866 = vmatprep.subr.mxu0 0.0
        %7867 = vmatpush1.msra.mxu0 0.0
        %7868 = vmatprep.subr.mxu0 0.0
        %7869 = vmatpush1.msra.mxu0 0.0
        %7870 = vmatprep.subr.mxu0 0.0
        %7871 = vmatpush1.msra.mxu0 0.0
        %7872 = vmatprep.subr.mxu0 0.0
        %7873 = vmatpush1.msra.mxu0 0.0
        %7874 = vmatprep.subr.mxu0 0.0
        %7875 = vmatpush1.msra.mxu0 0.0
        %7876 = vmatprep.subr.mxu0 0.0
        %7877 = vmatpush1.msra.mxu0 0.0
        %7878 = vmatprep.subr.mxu0 0.0
        %7879 = vmatpush1.msra.mxu0 0.0
        %7880 = vmatprep.subr.mxu0 0.0
        %7881 = vmatpush1.msra.mxu0 0.0
        %7882 = vmatprep.subr.mxu0 0.0
        %7883 = vmatpush1.msra.mxu0 0.0
        %7884 = vmatprep.subr.mxu0 0.0
        %7885 = vmatpush1.msra.mxu0 0.0
        %7886 = vmatprep.subr.mxu0 0.0
        %7887 = vmatpush1.msra.mxu0 0.0
        %7888 = vmatprep.subr.mxu0 0.0
        %7889 = vmatpush1.msra.mxu0 0.0
        %7890 = vmatprep.subr.mxu0 0.0
        %7891 = vmatpush1.msra.mxu0 0.0
        %7892 = vmatprep.subr.mxu0 0.0
        %7893 = vmatpush1.msra.mxu0 0.0
        %7894 = vmatprep.subr.mxu0 0.0
        %7895 = vmatpush1.msra.mxu0 0.0
        %7896 = vmatprep.subr.mxu0 0.0
        %7897 = vmatpush1.msra.mxu0 0.0
        %7898 = vmatprep.mubr.f32.mxu0 0.0
        %7899 = vmatmul.mubr.f32.gmra.mrb[0].mxu0 %v7811
        %v7900 = vpop.f32.mrb[0].mxu0
        %v7901 = vadd.f32 0.0, %v7900
        %v7902 = vpop.f32.mrb[0].mxu0
        %7903 = vmatprep.mubr.f32.mxu0 0.0
        %7904 = vmatmul.mubr.f32.gmra.mrb[0].mxu0 %v7814
        %v7905 = vpop.f32.mrb[0].mxu0
        %v7906 = vadd.f32 0.0, %v7905
        %v7907 = vpop.f32.mrb[0].mxu0
        %7908 = vmatprep.mubr.f32.mxu0 0.0
        %7909 = vmatmul.mubr.f32.gmra.mrb[0].mxu0 %v7817
        %v7910 = vpop.f32.mrb[0].mxu0
        %v7911 = vadd.f32 0.0, %v7910
        %v7912 = vpop.f32.mrb[0].mxu0
        %7913 = vmatprep.mubr.f32.mxu0 0.0
        %7914 = vmatmul.mubr.f32.gmra.mrb[0].mxu0 %v7820
        %v7915 = vpop.f32.mrb[0].mxu0
        %v7916 = vadd.f32 0.0, %v7915
        %v7917 = vpop.f32.mrb[0].mxu0
        %7918 = vmatprep.mubr.f32.mxu0 0.0
        %7919 = vmatmul.mubr.f32.gmra.mrb[0].mxu0 %v7823
        %v7920 = vpop.f32.mrb[0].mxu0
        %v7921 = vadd.f32 0.0, %v7920
        %v7922 = vpop.f32.mrb[0].mxu0
        %7923 = vmatprep.mubr.f32.mxu0 0.0
        %7924 = vmatmul.mubr.f32.gmra.mrb[0].mxu0 %v7826
        %v7925 = vpop.f32.mrb[0].mxu0
        %v7926 = vadd.f32 0.0, %v7925
        %v7927 = vpop.f32.mrb[0].mxu0
        %7928 = vmatprep.mubr.f32.mxu0 0.0
        %7929 = vmatmul.mubr.f32.gmra.mrb[0].mxu0 %v7829
        %v7930 = vpop.f32.mrb[0].mxu0
        %v7931 = vadd.f32 0.0, %v7930
        %v7932 = vpop.f32.mrb[0].mxu0
        %7933 = vmatprep.mubr.f32.mxu0 0.0
        %7934 = vmatmul.mubr.f32.gmra.mrb[0].mxu0 %v7832
        %v7935 = vpop.f32.mrb[0].mxu0
        %v7936 = vadd.f32 0.0, %v7935
        %v7937 = vpop.f32.mrb[0].mxu0
        %7938 = vdwg.mxu0
        %s7939 = scalar_lea.vmem %s14, 448
        %v7940 = vld [vmem:[%s7939] sm:$0xff]
        %v7941 = vld [vmem:[%s7939 + $0x8] sm:$0xff]
        %v7942 = vld [vmem:[%s7939 + $0x10] sm:$0xff]
        %v7943 = vld [vmem:[%s7939 + $0x18] sm:$0xff]
        %v7944 = vld [vmem:[%s7939 + $0x20] sm:$0xff]
        %v7945 = vld [vmem:[%s7939 + $0x28] sm:$0xff]
        %v7946 = vld [vmem:[%s7939 + $0x30] sm:$0xff]
        %v7947 = vld [vmem:[%s7939 + $0x38] sm:$0xff]
        %v7948 = vmul.f32 %v7940, %v7901
        %v7949 = vmul.f32 %v7941, %v7906
        %v7950 = vmul.f32 %v7942, %v7911
        %v7951 = vmul.f32 %v7943, %v7916
        %v7952 = vmul.f32 %v7944, %v7921
        %v7953 = vmul.f32 %v7945, %v7926
        %v7954 = vmul.f32 %v7946, %v7931
        %v7955 = vmul.f32 %v7947, %v7936
        %v7956 = vpack.c.bf16 %v7949, %v7948
        %v7957 = vpack.c.bf16 %v7951, %v7950
        %v7958 = vpack.c.bf16 %v7953, %v7952
        %v7959 = vpack.c.bf16 %v7955, %v7954
        %v7961 = vsel %vm943, %v7956, 0
        %v7964 = vsel %vm943, %v7957, 0
        %v7967 = vsel %vm943, %v7958, 0
        %v7970 = vsel %vm943, %v7959, 0
        %7972 = vmatprep.subr.bf16.mxu0 0
        %7973 = vmatpush1.bf16.msra.mxu0 %v2191
        %7974 = vmatprep.subr.bf16.mxu0 0
        %7975 = vmatpush1.bf16.msra.mxu0 %v2192
        %7976 = vmatprep.subr.bf16.mxu0 0
        %7977 = vmatpush1.bf16.msra.mxu0 %v2193
        %7978 = vmatprep.subr.bf16.mxu0 0
        %7979 = vmatpush1.bf16.msra.mxu0 %v2194
        %7980 = vmatprep.subr.bf16.mxu0 0
        %7981 = vmatpush1.bf16.msra.mxu0 0
        %7982 = vmatprep.subr.bf16.mxu0 0
        %7983 = vmatpush1.bf16.msra.mxu0 0
        %7984 = vmatprep.subr.bf16.mxu0 0
        %7985 = vmatpush1.bf16.msra.mxu0 0
        %7986 = vmatprep.subr.bf16.mxu0 0
        %7987 = vmatpush1.bf16.msra.mxu0 0
        %7988 = vmatprep.subr.bf16.mxu0 0
        %7989 = vmatpush1.bf16.msra.mxu0 0
        %7990 = vmatprep.subr.bf16.mxu0 0
        %7991 = vmatpush1.bf16.msra.mxu0 0
        %7992 = vmatprep.subr.bf16.mxu0 0
        %7993 = vmatpush1.bf16.msra.mxu0 0
        %7994 = vmatprep.subr.bf16.mxu0 0
        %7995 = vmatpush1.bf16.msra.mxu0 0
        %7996 = vmatprep.subr.bf16.mxu0 0
        %7997 = vmatpush1.bf16.msra.mxu0 0
        %7998 = vmatprep.subr.bf16.mxu0 0
        %7999 = vmatpush1.bf16.msra.mxu0 0
        %8000 = vmatprep.subr.bf16.mxu0 0
        %8001 = vmatpush1.bf16.msra.mxu0 0
        %8002 = vmatprep.subr.bf16.mxu0 0
        %8003 = vmatpush1.bf16.msra.mxu0 0
        %8004 = vmatprep.mubr.bf16.mxu0 0
        %8005 = vmatmul.mubr.bf16.gmra.mrb[0].mxu0 %v7961
        %v8006 = vpop.f32.mrb[0].mxu0
        %v8007 = vadd.f32 0.0, %v8006
        %v8008 = vpop.f32.mrb[0].mxu0
        %v8009 = vpop.f32.mrb[0].mxu0
        %v8010 = vadd.f32 0.0, %v8009
        %v8011 = vpop.f32.mrb[0].mxu0
        %8012 = vmatprep.mubr.bf16.mxu0 0
        %8013 = vmatmul.mubr.bf16.gmra.mrb[0].mxu0 %v7964
        %v8014 = vpop.f32.mrb[0].mxu0
        %v8015 = vadd.f32 0.0, %v8014
        %v8016 = vpop.f32.mrb[0].mxu0
        %v8017 = vpop.f32.mrb[0].mxu0
        %v8018 = vadd.f32 0.0, %v8017
        %v8019 = vpop.f32.mrb[0].mxu0
        %8020 = vmatprep.mubr.bf16.mxu0 0
        %8021 = vmatmul.mubr.bf16.gmra.mrb[0].mxu0 %v7967
        %v8022 = vpop.f32.mrb[0].mxu0
        %v8023 = vadd.f32 0.0, %v8022
        %v8024 = vpop.f32.mrb[0].mxu0
        %v8025 = vpop.f32.mrb[0].mxu0
        %v8026 = vadd.f32 0.0, %v8025
        %v8027 = vpop.f32.mrb[0].mxu0
        %8028 = vmatprep.mubr.bf16.mxu0 0
        %8029 = vmatmul.mubr.bf16.gmra.mrb[0].mxu0 %v7970
        %v8030 = vpop.f32.mrb[0].mxu0
        %v8031 = vadd.f32 0.0, %v8030
        %v8032 = vpop.f32.mrb[0].mxu0
        %v8033 = vpop.f32.mrb[0].mxu0
        %v8034 = vadd.f32 0.0, %v8033
        %v8035 = vpop.f32.mrb[0].mxu0
        %8036 = vdwg.mxu0
        %v8037 = vadd.f32 %v7310, %v8007
        %v8038 = vadd.f32 %v7311, %v8010
        %v8039 = vadd.f32 %v7312, %v8015
        %v8040 = vadd.f32 %v7313, %v8018
        %v8041 = vadd.f32 %v7314, %v8023
        %v8042 = vadd.f32 %v7315, %v8026
        %v8043 = vadd.f32 %v7316, %v8031
        %v8044 = vadd.f32 %v7317, %v8034
        %s8045 = scalar_lea.vmem %s11, 128
        %v8046 = vld [vmem:[%s8045] sm:$0xf]
        %v8047 = vld [vmem:[%s8045 + $0x4] sm:$0xf]
        %v8048 = vld [vmem:[%s8045 + $0x8] sm:$0xf]
        %v8049 = vld [vmem:[%s8045 + $0xc] sm:$0xf]
        %s8050 = scalar_lea.vmem %s12, 256
        %v8051 = vld [vmem:[%s8050] sm:$0xff]
        %v8052 = vld [vmem:[%s8050 + $0x8] sm:$0xff]
        %v8053 = vld [vmem:[%s8050 + $0x10] sm:$0xff]
        %v8054 = vld [vmem:[%s8050 + $0x18] sm:$0xff]
        %8056 = vset.pattern.permute.xlu0 0
        %8057 = vperm.xlu0 %8056, %v8051
        %v8058 = vpop.permute.xlu0 %8057
        %8061 = vset.pattern.permute.xlu0 0
        %8062 = vperm.xlu0 %8061, %v8052
        %v8063 = vpop.permute.xlu0 %8062
        %8066 = vset.pattern.permute.xlu0 0
        %8067 = vperm.xlu0 %8066, %v8053
        %v8068 = vpop.permute.xlu0 %8067
        %8071 = vset.pattern.permute.xlu0 0
        %8072 = vperm.xlu0 %8071, %v8054
        %v8073 = vpop.permute.xlu0 %8072
        %v8079 = vunpack.c.l.b16 %v8046
        %v8080 = vunpack.c.l.b16 %v8047
        %v8081 = vunpack.c.l.b16 %v8048
        %v8082 = vunpack.c.l.b16 %v8049
        %v8083 = vpack.c.b16 %v8080, %v8079
        %v8084 = vpack.c.b16 %v8082, %v8081
        %v8086 = vsel %vm943, %v8083, 0
        %v8089 = vsel %vm943, %v8084, 0
        %8091 = vmatprep.subr.bf16.mxu0 0
        %8092 = vmatpush1.bf16.msra.mxu0 %v2211
        %8093 = vmatprep.subr.bf16.mxu0 0
        %8094 = vmatpush1.bf16.msra.mxu0 %v2212
        %8095 = vmatprep.subr.bf16.mxu0 0
        %8096 = vmatpush1.bf16.msra.mxu0 %v2213
        %8097 = vmatprep.subr.bf16.mxu0 0
        %8098 = vmatpush1.bf16.msra.mxu0 %v2214
        %8099 = vmatprep.subr.bf16.mxu0 0
        %8100 = vmatpush1.bf16.msra.mxu0 0
        %8101 = vmatprep.subr.bf16.mxu0 0
        %8102 = vmatpush1.bf16.msra.mxu0 0
        %8103 = vmatprep.subr.bf16.mxu0 0
        %8104 = vmatpush1.bf16.msra.mxu0 0
        %8105 = vmatprep.subr.bf16.mxu0 0
        %8106 = vmatpush1.bf16.msra.mxu0 0
        %8107 = vmatprep.subr.bf16.mxu0 0
        %8108 = vmatpush1.bf16.msra.mxu0 0
        %8109 = vmatprep.subr.bf16.mxu0 0
        %8110 = vmatpush1.bf16.msra.mxu0 0
        %8111 = vmatprep.subr.bf16.mxu0 0
        %8112 = vmatpush1.bf16.msra.mxu0 0
        %8113 = vmatprep.subr.bf16.mxu0 0
        %8114 = vmatpush1.bf16.msra.mxu0 0
        %8115 = vmatprep.subr.bf16.mxu0 0
        %8116 = vmatpush1.bf16.msra.mxu0 0
        %8117 = vmatprep.subr.bf16.mxu0 0
        %8118 = vmatpush1.bf16.msra.mxu0 0
        %8119 = vmatprep.subr.bf16.mxu0 0
        %8120 = vmatpush1.bf16.msra.mxu0 0
        %8121 = vmatprep.subr.bf16.mxu0 0
        %8122 = vmatpush1.bf16.msra.mxu0 0
        %8123 = vmatprep.mubr.bf16.mxu0 0
        %8124 = vmatmul.mubr.bf16.gmra.mrb[0].mxu0 %v8086
        %v8125 = vpop.f32.mrb[0].mxu0
        %v8126 = vadd.f32 %v8058, %v8125
        %v8127 = vpop.f32.mrb[0].mxu0
        %v8128 = vpop.f32.mrb[0].mxu0
        %v8129 = vadd.f32 %v8063, %v8128
        %v8130 = vpop.f32.mrb[0].mxu0
        %8131 = vmatprep.mubr.bf16.mxu0 0
        %8132 = vmatmul.mubr.bf16.gmra.mrb[0].mxu0 %v8089
        %v8133 = vpop.f32.mrb[0].mxu0
        %v8134 = vadd.f32 %v8068, %v8133
        %v8135 = vpop.f32.mrb[0].mxu0
        %v8136 = vpop.f32.mrb[0].mxu0
        %v8137 = vadd.f32 %v8073, %v8136
        %v8138 = vpop.f32.mrb[0].mxu0
        %8139 = vdwg.mxu0
        %s8140 = scalar_lea.vmem %s11, 272
        %v8141 = vld [vmem:[%s8140] sm:$0xf]
        %v8142 = vld [vmem:[%s8140 + $0x4] sm:$0xf]
        %v8143 = vld [vmem:[%s8140 + $0x8] sm:$0xf]
        %v8144 = vld [vmem:[%s8140 + $0xc] sm:$0xf]
        %s8145 = scalar_lea.vmem %s12, 544
        %v8146 = vld [vmem:[%s8145] sm:$0xff]
        %v8147 = vld [vmem:[%s8145 + $0x8] sm:$0xff]
        %v8148 = vld [vmem:[%s8145 + $0x10] sm:$0xff]
        %v8149 = vld [vmem:[%s8145 + $0x18] sm:$0xff]
        %8151 = vset.pattern.permute.xlu0 0
        %8152 = vperm.xlu0 %8151, %v8146
        %v8153 = vpop.permute.xlu0 %8152
        %8156 = vset.pattern.permute.xlu0 0
        %8157 = vperm.xlu0 %8156, %v8147
        %v8158 = vpop.permute.xlu0 %8157
        %8161 = vset.pattern.permute.xlu0 0
        %8162 = vperm.xlu0 %8161, %v8148
        %v8163 = vpop.permute.xlu0 %8162
        %8166 = vset.pattern.permute.xlu0 0
        %8167 = vperm.xlu0 %8166, %v8149
        %v8168 = vpop.permute.xlu0 %8167
        %v8174 = vunpack.c.l.b16 %v8141
        %v8175 = vunpack.c.l.b16 %v8142
        %v8176 = vunpack.c.l.b16 %v8143
        %v8177 = vunpack.c.l.b16 %v8144
        %v8178 = vpack.c.b16 %v8175, %v8174
        %v8179 = vpack.c.b16 %v8177, %v8176
        %v8181 = vsel %vm943, %v8178, 0
        %v8184 = vsel %vm943, %v8179, 0
        %8186 = vmatprep.subr.bf16.mxu0 0
        %8187 = vmatpush1.bf16.msra.mxu0 %v2211
        %8188 = vmatprep.subr.bf16.mxu0 0
        %8189 = vmatpush1.bf16.msra.mxu0 %v2212
        %8190 = vmatprep.subr.bf16.mxu0 0
        %8191 = vmatpush1.bf16.msra.mxu0 %v2213
        %8192 = vmatprep.subr.bf16.mxu0 0
        %8193 = vmatpush1.bf16.msra.mxu0 %v2214
        %8194 = vmatprep.subr.bf16.mxu0 0
        %8195 = vmatpush1.bf16.msra.mxu0 0
        %8196 = vmatprep.subr.bf16.mxu0 0
        %8197 = vmatpush1.bf16.msra.mxu0 0
        %8198 = vmatprep.subr.bf16.mxu0 0
        %8199 = vmatpush1.bf16.msra.mxu0 0
        %8200 = vmatprep.subr.bf16.mxu0 0
        %8201 = vmatpush1.bf16.msra.mxu0 0
        %8202 = vmatprep.subr.bf16.mxu0 0
        %8203 = vmatpush1.bf16.msra.mxu0 0
        %8204 = vmatprep.subr.bf16.mxu0 0
        %8205 = vmatpush1.bf16.msra.mxu0 0
        %8206 = vmatprep.subr.bf16.mxu0 0
        %8207 = vmatpush1.bf16.msra.mxu0 0
        %8208 = vmatprep.subr.bf16.mxu0 0
        %8209 = vmatpush1.bf16.msra.mxu0 0
        %8210 = vmatprep.subr.bf16.mxu0 0
        %8211 = vmatpush1.bf16.msra.mxu0 0
        %8212 = vmatprep.subr.bf16.mxu0 0
        %8213 = vmatpush1.bf16.msra.mxu0 0
        %8214 = vmatprep.subr.bf16.mxu0 0
        %8215 = vmatpush1.bf16.msra.mxu0 0
        %8216 = vmatprep.subr.bf16.mxu0 0
        %8217 = vmatpush1.bf16.msra.mxu0 0
        %8218 = vmatprep.mubr.bf16.mxu0 0
        %8219 = vmatmul.mubr.bf16.gmra.mrb[0].mxu0 %v8181
        %v8220 = vpop.f32.mrb[0].mxu0
        %v8221 = vadd.f32 %v8153, %v8220
        %v8222 = vpop.f32.mrb[0].mxu0
        %v8223 = vpop.f32.mrb[0].mxu0
        %v8224 = vadd.f32 %v8158, %v8223
        %v8225 = vpop.f32.mrb[0].mxu0
        %8226 = vmatprep.mubr.bf16.mxu0 0
        %8227 = vmatmul.mubr.bf16.gmra.mrb[0].mxu0 %v8184
        %v8228 = vpop.f32.mrb[0].mxu0
        %v8229 = vadd.f32 %v8163, %v8228
        %v8230 = vpop.f32.mrb[0].mxu0
        %v8231 = vpop.f32.mrb[0].mxu0
        %v8232 = vadd.f32 %v8168, %v8231
        %v8233 = vpop.f32.mrb[0].mxu0
        %8234 = vdwg.mxu0
        %v8235 = vpack.c.bf16 %v8221, %v8221
        %v8236 = vpack.c.bf16 %v8126, %v8126
        %v8237 = vpack.c.bf16 %v8224, %v8224
        %v8238 = vpack.c.bf16 %v8129, %v8129
        %v8240 = vsel %vm1485, %v8237, 0
        %v8243 = vsel %vm1485, %v8238, 0
        %8245 = vmatprep.subr.bf16.mxu0 0
        %8246 = vmatpush1.bf16.xpose.msra.mxu0 %v8243
        %8247 = vmatprep.subr.bf16.mxu0 0
        %8248 = vmatpush1.bf16.xpose.msra.mxu0 0
        %8249 = vmatprep.subr.bf16.mxu0 0
        %8250 = vmatpush1.bf16.xpose.msra.mxu0 0
        %8251 = vmatprep.subr.bf16.mxu0 0
        %8252 = vmatpush1.bf16.xpose.msra.mxu0 0
        %8253 = vmatprep.subr.bf16.mxu0 0
        %8254 = vmatpush1.bf16.xpose.msra.mxu0 0
        %8255 = vmatprep.subr.bf16.mxu0 0
        %8256 = vmatpush1.bf16.xpose.msra.mxu0 0
        %8257 = vmatprep.subr.bf16.mxu0 0
        %8258 = vmatpush1.bf16.xpose.msra.mxu0 0
        %8259 = vmatprep.subr.bf16.mxu0 0
        %8260 = vmatpush1.bf16.xpose.msra.mxu0 0
        %8261 = vmatprep.subr.bf16.mxu0 0
        %8262 = vmatpush1.bf16.xpose.msra.mxu0 0
        %8263 = vmatprep.subr.bf16.mxu0 0
        %8264 = vmatpush1.bf16.xpose.msra.mxu0 0
        %8265 = vmatprep.subr.bf16.mxu0 0
        %8266 = vmatpush1.bf16.xpose.msra.mxu0 0
        %8267 = vmatprep.subr.bf16.mxu0 0
        %8268 = vmatpush1.bf16.xpose.msra.mxu0 0
        %8269 = vmatprep.subr.bf16.mxu0 0
        %8270 = vmatpush1.bf16.xpose.msra.mxu0 0
        %8271 = vmatprep.subr.bf16.mxu0 0
        %8272 = vmatpush1.bf16.xpose.msra.mxu0 0
        %8273 = vmatprep.subr.bf16.mxu0 0
        %8274 = vmatpush1.bf16.xpose.msra.mxu0 0
        %8275 = vmatprep.subr.bf16.mxu0 0
        %8276 = vmatpush1.bf16.xpose.msra.mxu0 0
        %8277 = vmatprep.mubr.bf16.mxu0 0
        %8278 = vmatmul.mubr.bf16.gmra.mrb[0].mxu0 %v8240
        %v8279 = vpop.f32.mrb[0].mxu0
        %v8280 = vadd.f32 0.0, %v8279
        %v8281 = vpop.f32.mrb[0].mxu0
        %v8282 = vpop.f32.mrb[0].mxu0
        %v8283 = vpop.f32.mrb[0].mxu0
        %8284 = vdwg.mxu0
        %v8286 = vsel %vm1485, %v8235, 0
        %v8289 = vsel %vm1485, %v8236, 0
        %8291 = vmatprep.subr.bf16.mxu0 0
        %8292 = vmatpush1.bf16.xpose.msra.mxu0 %v8289
        %8293 = vmatprep.subr.bf16.mxu0 0
        %8294 = vmatpush1.bf16.xpose.msra.mxu0 0
        %8295 = vmatprep.subr.bf16.mxu0 0
        %8296 = vmatpush1.bf16.xpose.msra.mxu0 0
        %8297 = vmatprep.subr.bf16.mxu0 0
        %8298 = vmatpush1.bf16.xpose.msra.mxu0 0
        %8299 = vmatprep.subr.bf16.mxu0 0
        %8300 = vmatpush1.bf16.xpose.msra.mxu0 0
        %8301 = vmatprep.subr.bf16.mxu0 0
        %8302 = vmatpush1.bf16.xpose.msra.mxu0 0
        %8303 = vmatprep.subr.bf16.mxu0 0
        %8304 = vmatpush1.bf16.xpose.msra.mxu0 0
        %8305 = vmatprep.subr.bf16.mxu0 0
        %8306 = vmatpush1.bf16.xpose.msra.mxu0 0
        %8307 = vmatprep.subr.bf16.mxu0 0
        %8308 = vmatpush1.bf16.xpose.msra.mxu0 0
        %8309 = vmatprep.subr.bf16.mxu0 0
        %8310 = vmatpush1.bf16.xpose.msra.mxu0 0
        %8311 = vmatprep.subr.bf16.mxu0 0
        %8312 = vmatpush1.bf16.xpose.msra.mxu0 0
        %8313 = vmatprep.subr.bf16.mxu0 0
        %8314 = vmatpush1.bf16.xpose.msra.mxu0 0
        %8315 = vmatprep.subr.bf16.mxu0 0
        %8316 = vmatpush1.bf16.xpose.msra.mxu0 0
        %8317 = vmatprep.subr.bf16.mxu0 0
        %8318 = vmatpush1.bf16.xpose.msra.mxu0 0
        %8319 = vmatprep.subr.bf16.mxu0 0
        %8320 = vmatpush1.bf16.xpose.msra.mxu0 0
        %8321 = vmatprep.subr.bf16.mxu0 0
        %8322 = vmatpush1.bf16.xpose.msra.mxu0 0
        %8323 = vmatprep.mubr.bf16.mxu0 0
        %8324 = vmatmul.mubr.bf16.gmra.mrb[0].mxu0 %v8286
        %v8325 = vpop.f32.mrb[0].mxu0
        %v8326 = vadd.f32 %v8280, %v8325
        %v8327 = vpop.f32.mrb[0].mxu0
        %v8328 = vpop.f32.mrb[0].mxu0
        %v8329 = vpop.f32.mrb[0].mxu0
        %8330 = vdwg.mxu0
        %v8331 = vpack.c.bf16 %v8229, %v8229
        %v8332 = vpack.c.bf16 %v8134, %v8134
        %v8334 = vsel %vm1485, %v8331, 0
        %v8337 = vsel %vm1485, %v8332, 0
        %8339 = vmatprep.subr.bf16.mxu0 0
        %8340 = vmatpush1.bf16.xpose.msra.mxu0 %v8337
        %8341 = vmatprep.subr.bf16.mxu0 0
        %8342 = vmatpush1.bf16.xpose.msra.mxu0 0
        %8343 = vmatprep.subr.bf16.mxu0 0
        %8344 = vmatpush1.bf16.xpose.msra.mxu0 0
        %8345 = vmatprep.subr.bf16.mxu0 0
        %8346 = vmatpush1.bf16.xpose.msra.mxu0 0
        %8347 = vmatprep.subr.bf16.mxu0 0
        %8348 = vmatpush1.bf16.xpose.msra.mxu0 0
        %8349 = vmatprep.subr.bf16.mxu0 0
        %8350 = vmatpush1.bf16.xpose.msra.mxu0 0
        %8351 = vmatprep.subr.bf16.mxu0 0
        %8352 = vmatpush1.bf16.xpose.msra.mxu0 0
        %8353 = vmatprep.subr.bf16.mxu0 0
        %8354 = vmatpush1.bf16.xpose.msra.mxu0 0
        %8355 = vmatprep.subr.bf16.mxu0 0
        %8356 = vmatpush1.bf16.xpose.msra.mxu0 0
        %8357 = vmatprep.subr.bf16.mxu0 0
        %8358 = vmatpush1.bf16.xpose.msra.mxu0 0
        %8359 = vmatprep.subr.bf16.mxu0 0
        %8360 = vmatpush1.bf16.xpose.msra.mxu0 0
        %8361 = vmatprep.subr.bf16.mxu0 0
        %8362 = vmatpush1.bf16.xpose.msra.mxu0 0
        %8363 = vmatprep.subr.bf16.mxu0 0
        %8364 = vmatpush1.bf16.xpose.msra.mxu0 0
        %8365 = vmatprep.subr.bf16.mxu0 0
        %8366 = vmatpush1.bf16.xpose.msra.mxu0 0
        %8367 = vmatprep.subr.bf16.mxu0 0
        %8368 = vmatpush1.bf16.xpose.msra.mxu0 0
        %8369 = vmatprep.subr.bf16.mxu0 0
        %8370 = vmatpush1.bf16.xpose.msra.mxu0 0
        %8371 = vmatprep.mubr.bf16.mxu0 0
        %8372 = vmatmul.mubr.bf16.gmra.mrb[0].mxu0 %v8334
        %v8373 = vpop.f32.mrb[0].mxu0
        %v8374 = vadd.f32 0.0, %v8373
        %v8375 = vpop.f32.mrb[0].mxu0
        %v8376 = vpop.f32.mrb[0].mxu0
        %v8377 = vpop.f32.mrb[0].mxu0
        %8378 = vdwg.mxu0
        %v8379 = vadd.f32 %v8326, %v8374
        %v8380 = vpack.c.bf16 %v8232, %v8232
        %v8381 = vpack.c.bf16 %v8137, %v8137
        %v8383 = vsel %vm1485, %v8380, 0
        %v8386 = vsel %vm1485, %v8381, 0
        %8388 = vmatprep.subr.bf16.mxu0 0
        %8389 = vmatpush1.bf16.xpose.msra.mxu0 %v8386
        %8390 = vmatprep.subr.bf16.mxu0 0
        %8391 = vmatpush1.bf16.xpose.msra.mxu0 0
        %8392 = vmatprep.subr.bf16.mxu0 0
        %8393 = vmatpush1.bf16.xpose.msra.mxu0 0
        %8394 = vmatprep.subr.bf16.mxu0 0
        %8395 = vmatpush1.bf16.xpose.msra.mxu0 0
        %8396 = vmatprep.subr.bf16.mxu0 0
        %8397 = vmatpush1.bf16.xpose.msra.mxu0 0
        %8398 = vmatprep.subr.bf16.mxu0 0
        %8399 = vmatpush1.bf16.xpose.msra.mxu0 0
        %8400 = vmatprep.subr.bf16.mxu0 0
        %8401 = vmatpush1.bf16.xpose.msra.mxu0 0
        %8402 = vmatprep.subr.bf16.mxu0 0
        %8403 = vmatpush1.bf16.xpose.msra.mxu0 0
        %8404 = vmatprep.subr.bf16.mxu0 0
        %8405 = vmatpush1.bf16.xpose.msra.mxu0 0
        %8406 = vmatprep.subr.bf16.mxu0 0
        %8407 = vmatpush1.bf16.xpose.msra.mxu0 0
        %8408 = vmatprep.subr.bf16.mxu0 0
        %8409 = vmatpush1.bf16.xpose.msra.mxu0 0
        %8410 = vmatprep.subr.bf16.mxu0 0
        %8411 = vmatpush1.bf16.xpose.msra.mxu0 0
        %8412 = vmatprep.subr.bf16.mxu0 0
        %8413 = vmatpush1.bf16.xpose.msra.mxu0 0
        %8414 = vmatprep.subr.bf16.mxu0 0
        %8415 = vmatpush1.bf16.xpose.msra.mxu0 0
        %8416 = vmatprep.subr.bf16.mxu0 0
        %8417 = vmatpush1.bf16.xpose.msra.mxu0 0
        %8418 = vmatprep.subr.bf16.mxu0 0
        %8419 = vmatpush1.bf16.xpose.msra.mxu0 0
        %8420 = vmatprep.mubr.bf16.mxu0 0
        %8421 = vmatmul.mubr.bf16.gmra.mrb[0].mxu0 %v8383
        %v8422 = vpop.f32.mrb[0].mxu0
        %v8423 = vadd.f32 0.0, %v8422
        %v8424 = vpop.f32.mrb[0].mxu0
        %v8425 = vpop.f32.mrb[0].mxu0
        %v8426 = vpop.f32.mrb[0].mxu0
        %8427 = vdwg.mxu0
        %v8428 = vadd.f32 %v8379, %v8423
        %s8429 = scalar_lea.vmem %s13, 64
        %v8430 = vld [vmem:[%s8429] sm:$0xff]
        %v8431 = vmul.f32 %v8428, %v8430
        %8432 = vmatprep.subr.mxu0 0.0
        %8433 = vmatpush1.msra.mxu0 %v8431
        %8434 = vmatprep.subr.mxu0 0.0
        %8435 = vmatpush1.msra.mxu0 0.0
        %8436 = vmatprep.subr.mxu0 0.0
        %8437 = vmatpush1.msra.mxu0 0.0
        %8438 = vmatprep.subr.mxu0 0.0
        %8439 = vmatpush1.msra.mxu0 0.0
        %8440 = vmatprep.subr.mxu0 0.0
        %8441 = vmatpush1.msra.mxu0 0.0
        %8442 = vmatprep.subr.mxu0 0.0
        %8443 = vmatpush1.msra.mxu0 0.0
        %8444 = vmatprep.subr.mxu0 0.0
        %8445 = vmatpush1.msra.mxu0 0.0
        %8446 = vmatprep.subr.mxu0 0.0
        %8447 = vmatpush1.msra.mxu0 0.0
        %8448 = vmatprep.subr.mxu0 0.0
        %8449 = vmatpush1.msra.mxu0 0.0
        %8450 = vmatprep.subr.mxu0 0.0
        %8451 = vmatpush1.msra.mxu0 0.0
        %8452 = vmatprep.subr.mxu0 0.0
        %8453 = vmatpush1.msra.mxu0 0.0
        %8454 = vmatprep.subr.mxu0 0.0
        %8455 = vmatpush1.msra.mxu0 0.0
        %8456 = vmatprep.subr.mxu0 0.0
        %8457 = vmatpush1.msra.mxu0 0.0
        %8458 = vmatprep.subr.mxu0 0.0
        %8459 = vmatpush1.msra.mxu0 0.0
        %8460 = vmatprep.subr.mxu0 0.0
        %8461 = vmatpush1.msra.mxu0 0.0
        %8462 = vmatprep.subr.mxu0 0.0
        %8463 = vmatpush1.msra.mxu0 0.0
        %8464 = vmatprep.subr.mxu0 0.0
        %8465 = vmatpush1.msra.mxu0 0.0
        %8466 = vmatprep.subr.mxu0 0.0
        %8467 = vmatpush1.msra.mxu0 0.0
        %8468 = vmatprep.subr.mxu0 0.0
        %8469 = vmatpush1.msra.mxu0 0.0
        %8470 = vmatprep.subr.mxu0 0.0
        %8471 = vmatpush1.msra.mxu0 0.0
        %8472 = vmatprep.subr.mxu0 0.0
        %8473 = vmatpush1.msra.mxu0 0.0
        %8474 = vmatprep.subr.mxu0 0.0
        %8475 = vmatpush1.msra.mxu0 0.0
        %8476 = vmatprep.subr.mxu0 0.0
        %8477 = vmatpush1.msra.mxu0 0.0
        %8478 = vmatprep.subr.mxu0 0.0
        %8479 = vmatpush1.msra.mxu0 0.0
        %8480 = vmatprep.subr.mxu0 0.0
        %8481 = vmatpush1.msra.mxu0 0.0
        %8482 = vmatprep.subr.mxu0 0.0
        %8483 = vmatpush1.msra.mxu0 0.0
        %8484 = vmatprep.subr.mxu0 0.0
        %8485 = vmatpush1.msra.mxu0 0.0
        %8486 = vmatprep.subr.mxu0 0.0
        %8487 = vmatpush1.msra.mxu0 0.0
        %8488 = vmatprep.subr.mxu0 0.0
        %8489 = vmatpush1.msra.mxu0 0.0
        %8490 = vmatprep.subr.mxu0 0.0
        %8491 = vmatpush1.msra.mxu0 0.0
        %8492 = vmatprep.subr.mxu0 0.0
        %8493 = vmatpush1.msra.mxu0 0.0
        %8494 = vmatprep.subr.mxu0 0.0
        %8495 = vmatpush1.msra.mxu0 0.0
        %8496 = vmatprep.mubr.f32.mxu0 0.0
        %8497 = vmatmul.mubr.f32.gmra.mrb[0].mxu0 %v2610
        %v8498 = vpop.f32.mrb[0].mxu0
        %v8499 = vadd.f32 0.0, %v8498
        %v8500 = vpop.f32.mrb[0].mxu0
        %8501 = vmatprep.mubr.f32.mxu0 0.0
        %8502 = vmatmul.mubr.f32.gmra.mrb[0].mxu0 %v2613
        %v8503 = vpop.f32.mrb[0].mxu0
        %v8504 = vadd.f32 0.0, %v8503
        %v8505 = vpop.f32.mrb[0].mxu0
        %8506 = vmatprep.mubr.f32.mxu0 0.0
        %8507 = vmatmul.mubr.f32.gmra.mrb[0].mxu0 %v2616
        %v8508 = vpop.f32.mrb[0].mxu0
        %v8509 = vadd.f32 0.0, %v8508
        %v8510 = vpop.f32.mrb[0].mxu0
        %8511 = vmatprep.mubr.f32.mxu0 0.0
        %8512 = vmatmul.mubr.f32.gmra.mrb[0].mxu0 %v2619
        %v8513 = vpop.f32.mrb[0].mxu0
        %v8514 = vadd.f32 0.0, %v8513
        %v8515 = vpop.f32.mrb[0].mxu0
        %8516 = vmatprep.mubr.f32.mxu0 0.0
        %8517 = vmatmul.mubr.f32.gmra.mrb[0].mxu0 %v2622
        %v8518 = vpop.f32.mrb[0].mxu0
        %v8519 = vadd.f32 0.0, %v8518
        %v8520 = vpop.f32.mrb[0].mxu0
        %8521 = vmatprep.mubr.f32.mxu0 0.0
        %8522 = vmatmul.mubr.f32.gmra.mrb[0].mxu0 %v2625
        %v8523 = vpop.f32.mrb[0].mxu0
        %v8524 = vadd.f32 0.0, %v8523
        %v8525 = vpop.f32.mrb[0].mxu0
        %8526 = vmatprep.mubr.f32.mxu0 0.0
        %8527 = vmatmul.mubr.f32.gmra.mrb[0].mxu0 %v2628
        %v8528 = vpop.f32.mrb[0].mxu0
        %v8529 = vadd.f32 0.0, %v8528
        %v8530 = vpop.f32.mrb[0].mxu0
        %8531 = vmatprep.mubr.f32.mxu0 0.0
        %8532 = vmatmul.mubr.f32.gmra.mrb[0].mxu0 %v2631
        %v8533 = vpop.f32.mrb[0].mxu0
        %v8534 = vadd.f32 0.0, %v8533
        %v8535 = vpop.f32.mrb[0].mxu0
        %8536 = vdwg.mxu0
        %v8538 = vsel %vm2608, %v8499, 0
        %v8541 = vsel %vm2608, %v8504, 0
        %v8544 = vsel %vm2608, %v8509, 0
        %v8547 = vsel %vm2608, %v8514, 0
        %v8550 = vsel %vm2608, %v8519, 0
        %v8553 = vsel %vm2608, %v8524, 0
        %v8556 = vsel %vm2608, %v8529, 0
        %v8559 = vsel %vm2608, %v8534, 0
        %8561 = vmatprep.subr.mxu0 0.0
        %8562 = vmatpush1.msra.mxu0 %v2223
        %8563 = vmatprep.subr.mxu0 0.0
        %8564 = vmatpush1.msra.mxu0 0.0
        %8565 = vmatprep.subr.mxu0 0.0
        %8566 = vmatpush1.msra.mxu0 0.0
        %8567 = vmatprep.subr.mxu0 0.0
        %8568 = vmatpush1.msra.mxu0 0.0
        %8569 = vmatprep.subr.mxu0 0.0
        %8570 = vmatpush1.msra.mxu0 0.0
        %8571 = vmatprep.subr.mxu0 0.0
        %8572 = vmatpush1.msra.mxu0 0.0
        %8573 = vmatprep.subr.mxu0 0.0
        %8574 = vmatpush1.msra.mxu0 0.0
        %8575 = vmatprep.subr.mxu0 0.0
        %8576 = vmatpush1.msra.mxu0 0.0
        %8577 = vmatprep.subr.mxu0 0.0
        %8578 = vmatpush1.msra.mxu0 0.0
        %8579 = vmatprep.subr.mxu0 0.0
        %8580 = vmatpush1.msra.mxu0 0.0
        %8581 = vmatprep.subr.mxu0 0.0
        %8582 = vmatpush1.msra.mxu0 0.0
        %8583 = vmatprep.subr.mxu0 0.0
        %8584 = vmatpush1.msra.mxu0 0.0
        %8585 = vmatprep.subr.mxu0 0.0
        %8586 = vmatpush1.msra.mxu0 0.0
        %8587 = vmatprep.subr.mxu0 0.0
        %8588 = vmatpush1.msra.mxu0 0.0
        %8589 = vmatprep.subr.mxu0 0.0
        %8590 = vmatpush1.msra.mxu0 0.0
        %8591 = vmatprep.subr.mxu0 0.0
        %8592 = vmatpush1.msra.mxu0 0.0
        %8593 = vmatprep.subr.mxu0 0.0
        %8594 = vmatpush1.msra.mxu0 0.0
        %8595 = vmatprep.subr.mxu0 0.0
        %8596 = vmatpush1.msra.mxu0 0.0
        %8597 = vmatprep.subr.mxu0 0.0
        %8598 = vmatpush1.msra.mxu0 0.0
        %8599 = vmatprep.subr.mxu0 0.0
        %8600 = vmatpush1.msra.mxu0 0.0
        %8601 = vmatprep.subr.mxu0 0.0
        %8602 = vmatpush1.msra.mxu0 0.0
        %8603 = vmatprep.subr.mxu0 0.0
        %8604 = vmatpush1.msra.mxu0 0.0
        %8605 = vmatprep.subr.mxu0 0.0
        %8606 = vmatpush1.msra.mxu0 0.0
        %8607 = vmatprep.subr.mxu0 0.0
        %8608 = vmatpush1.msra.mxu0 0.0
        %8609 = vmatprep.subr.mxu0 0.0
        %8610 = vmatpush1.msra.mxu0 0.0
        %8611 = vmatprep.subr.mxu0 0.0
        %8612 = vmatpush1.msra.mxu0 0.0
        %8613 = vmatprep.subr.mxu0 0.0
        %8614 = vmatpush1.msra.mxu0 0.0
        %8615 = vmatprep.subr.mxu0 0.0
        %8616 = vmatpush1.msra.mxu0 0.0
        %8617 = vmatprep.subr.mxu0 0.0
        %8618 = vmatpush1.msra.mxu0 0.0
        %8619 = vmatprep.subr.mxu0 0.0
        %8620 = vmatpush1.msra.mxu0 0.0
        %8621 = vmatprep.subr.mxu0 0.0
        %8622 = vmatpush1.msra.mxu0 0.0
        %8623 = vmatprep.subr.mxu0 0.0
        %8624 = vmatpush1.msra.mxu0 0.0
        %8625 = vmatprep.mubr.f32.mxu0 0.0
        %8626 = vmatmul.mubr.f32.gmra.mrb[0].mxu0 %v8538
        %v8627 = vpop.f32.mrb[0].mxu0
        %v8628 = vadd.f32 0.0, %v8627
        %v8629 = vpop.f32.mrb[0].mxu0
        %8630 = vmatprep.mubr.f32.mxu0 0.0
        %8631 = vmatmul.mubr.f32.gmra.mrb[0].mxu0 %v8541
        %v8632 = vpop.f32.mrb[0].mxu0
        %v8633 = vadd.f32 0.0, %v8632
        %v8634 = vpop.f32.mrb[0].mxu0
        %8635 = vmatprep.mubr.f32.mxu0 0.0
        %8636 = vmatmul.mubr.f32.gmra.mrb[0].mxu0 %v8544
        %v8637 = vpop.f32.mrb[0].mxu0
        %v8638 = vadd.f32 0.0, %v8637
        %v8639 = vpop.f32.mrb[0].mxu0
        %8640 = vmatprep.mubr.f32.mxu0 0.0
        %8641 = vmatmul.mubr.f32.gmra.mrb[0].mxu0 %v8547
        %v8642 = vpop.f32.mrb[0].mxu0
        %v8643 = vadd.f32 0.0, %v8642
        %v8644 = vpop.f32.mrb[0].mxu0
        %8645 = vmatprep.mubr.f32.mxu0 0.0
        %8646 = vmatmul.mubr.f32.gmra.mrb[0].mxu0 %v8550
        %v8647 = vpop.f32.mrb[0].mxu0
        %v8648 = vadd.f32 0.0, %v8647
        %v8649 = vpop.f32.mrb[0].mxu0
        %8650 = vmatprep.mubr.f32.mxu0 0.0
        %8651 = vmatmul.mubr.f32.gmra.mrb[0].mxu0 %v8553
        %v8652 = vpop.f32.mrb[0].mxu0
        %v8653 = vadd.f32 0.0, %v8652
        %v8654 = vpop.f32.mrb[0].mxu0
        %8655 = vmatprep.mubr.f32.mxu0 0.0
        %8656 = vmatmul.mubr.f32.gmra.mrb[0].mxu0 %v8556
        %v8657 = vpop.f32.mrb[0].mxu0
        %v8658 = vadd.f32 0.0, %v8657
        %v8659 = vpop.f32.mrb[0].mxu0
        %8660 = vmatprep.mubr.f32.mxu0 0.0
        %8661 = vmatmul.mubr.f32.gmra.mrb[0].mxu0 %v8559
        %v8662 = vpop.f32.mrb[0].mxu0
        %v8663 = vadd.f32 0.0, %v8662
        %v8664 = vpop.f32.mrb[0].mxu0
        %8665 = vdwg.mxu0
        %s8666 = scalar_lea.vmem %s14, 512
        %v8667 = vld [vmem:[%s8666] sm:$0xff]
        %v8668 = vld [vmem:[%s8666 + $0x8] sm:$0xff]
        %v8669 = vld [vmem:[%s8666 + $0x10] sm:$0xff]
        %v8670 = vld [vmem:[%s8666 + $0x18] sm:$0xff]
        %v8671 = vld [vmem:[%s8666 + $0x20] sm:$0xff]
        %v8672 = vld [vmem:[%s8666 + $0x28] sm:$0xff]
        %v8673 = vld [vmem:[%s8666 + $0x30] sm:$0xff]
        %v8674 = vld [vmem:[%s8666 + $0x38] sm:$0xff]
        %v8675 = vmul.f32 %v8667, %v8628
        %v8676 = vmul.f32 %v8668, %v8633
        %v8677 = vmul.f32 %v8669, %v8638
        %v8678 = vmul.f32 %v8670, %v8643
        %v8679 = vmul.f32 %v8671, %v8648
        %v8680 = vmul.f32 %v8672, %v8653
        %v8681 = vmul.f32 %v8673, %v8658
        %v8682 = vmul.f32 %v8674, %v8663
        %v8683 = vpack.c.bf16 %v8676, %v8675
        %v8684 = vpack.c.bf16 %v8678, %v8677
        %v8685 = vpack.c.bf16 %v8680, %v8679
        %v8686 = vpack.c.bf16 %v8682, %v8681
        %v8688 = vsel %vm943, %v8683, 0
        %v8691 = vsel %vm943, %v8684, 0
        %v8694 = vsel %vm943, %v8685, 0
        %v8697 = vsel %vm943, %v8686, 0
        %8699 = vmatprep.subr.bf16.mxu0 0
        %8700 = vmatpush1.bf16.msra.mxu0 %v2191
        %8701 = vmatprep.subr.bf16.mxu0 0
        %8702 = vmatpush1.bf16.msra.mxu0 %v2192
        %8703 = vmatprep.subr.bf16.mxu0 0
        %8704 = vmatpush1.bf16.msra.mxu0 %v2193
        %8705 = vmatprep.subr.bf16.mxu0 0
        %8706 = vmatpush1.bf16.msra.mxu0 %v2194
        %8707 = vmatprep.subr.bf16.mxu0 0
        %8708 = vmatpush1.bf16.msra.mxu0 0
        %8709 = vmatprep.subr.bf16.mxu0 0
        %8710 = vmatpush1.bf16.msra.mxu0 0
        %8711 = vmatprep.subr.bf16.mxu0 0
        %8712 = vmatpush1.bf16.msra.mxu0 0
        %8713 = vmatprep.subr.bf16.mxu0 0
        %8714 = vmatpush1.bf16.msra.mxu0 0
        %8715 = vmatprep.subr.bf16.mxu0 0
        %8716 = vmatpush1.bf16.msra.mxu0 0
        %8717 = vmatprep.subr.bf16.mxu0 0
        %8718 = vmatpush1.bf16.msra.mxu0 0
        %8719 = vmatprep.subr.bf16.mxu0 0
        %8720 = vmatpush1.bf16.msra.mxu0 0
        %8721 = vmatprep.subr.bf16.mxu0 0
        %8722 = vmatpush1.bf16.msra.mxu0 0
        %8723 = vmatprep.subr.bf16.mxu0 0
        %8724 = vmatpush1.bf16.msra.mxu0 0
        %8725 = vmatprep.subr.bf16.mxu0 0
        %8726 = vmatpush1.bf16.msra.mxu0 0
        %8727 = vmatprep.subr.bf16.mxu0 0
        %8728 = vmatpush1.bf16.msra.mxu0 0
        %8729 = vmatprep.subr.bf16.mxu0 0
        %8730 = vmatpush1.bf16.msra.mxu0 0
        %8731 = vmatprep.mubr.bf16.mxu0 0
        %8732 = vmatmul.mubr.bf16.gmra.mrb[0].mxu0 %v8688
        %v8733 = vpop.f32.mrb[0].mxu0
        %v8734 = vadd.f32 0.0, %v8733
        %v8735 = vpop.f32.mrb[0].mxu0
        %v8736 = vpop.f32.mrb[0].mxu0
        %v8737 = vadd.f32 0.0, %v8736
        %v8738 = vpop.f32.mrb[0].mxu0
        %8739 = vmatprep.mubr.bf16.mxu0 0
        %8740 = vmatmul.mubr.bf16.gmra.mrb[0].mxu0 %v8691
        %v8741 = vpop.f32.mrb[0].mxu0
        %v8742 = vadd.f32 0.0, %v8741
        %v8743 = vpop.f32.mrb[0].mxu0
        %v8744 = vpop.f32.mrb[0].mxu0
        %v8745 = vadd.f32 0.0, %v8744
        %v8746 = vpop.f32.mrb[0].mxu0
        %8747 = vmatprep.mubr.bf16.mxu0 0
        %8748 = vmatmul.mubr.bf16.gmra.mrb[0].mxu0 %v8694
        %v8749 = vpop.f32.mrb[0].mxu0
        %v8750 = vadd.f32 0.0, %v8749
        %v8751 = vpop.f32.mrb[0].mxu0
        %v8752 = vpop.f32.mrb[0].mxu0
        %v8753 = vadd.f32 0.0, %v8752
        %v8754 = vpop.f32.mrb[0].mxu0
        %8755 = vmatprep.mubr.bf16.mxu0 0
        %8756 = vmatmul.mubr.bf16.gmra.mrb[0].mxu0 %v8697
        %v8757 = vpop.f32.mrb[0].mxu0
        %v8758 = vadd.f32 0.0, %v8757
        %v8759 = vpop.f32.mrb[0].mxu0
        %v8760 = vpop.f32.mrb[0].mxu0
        %v8761 = vadd.f32 0.0, %v8760
        %v8762 = vpop.f32.mrb[0].mxu0
        %8763 = vdwg.mxu0
        %v8764 = vadd.f32 %v8037, %v8734
        %v8765 = vadd.f32 %v8038, %v8737
        %v8766 = vadd.f32 %v8039, %v8742
        %v8767 = vadd.f32 %v8040, %v8745
        %v8768 = vadd.f32 %v8041, %v8750
        %v8769 = vadd.f32 %v8042, %v8753
        %v8770 = vadd.f32 %v8043, %v8758
        %v8771 = vadd.f32 %v8044, %v8761
        %v8772 = vld [vmem:[%s17] sm:$0xff]
        %v8773 = vld [vmem:[%s17 + $0x8] sm:$0xff]
        %v8774 = vld [vmem:[%s17 + $0x10] sm:$0xff]
        %v8775 = vld [vmem:[%s17 + $0x18] sm:$0xff]
        %v8776 = vld [vmem:[%s17 + $0x20] sm:$0xff]
        %v8777 = vld [vmem:[%s17 + $0x28] sm:$0xff]
        %v8778 = vld [vmem:[%s17 + $0x30] sm:$0xff]
        %v8779 = vld [vmem:[%s17 + $0x38] sm:$0xff]
        %8781 = vset.pattern.permute.xlu0 0
        %8782 = vperm.xlu0 %8781, %v8772
        %v8783 = vpop.permute.xlu0 %8782
        %8786 = vset.pattern.permute.xlu0 0
        %8787 = vperm.xlu0 %8786, %v8773
        %v8788 = vpop.permute.xlu0 %8787
        %8791 = vset.pattern.permute.xlu0 0
        %8792 = vperm.xlu0 %8791, %v8774
        %v8793 = vpop.permute.xlu0 %8792
        %8796 = vset.pattern.permute.xlu0 0
        %8797 = vperm.xlu0 %8796, %v8775
        %v8798 = vpop.permute.xlu0 %8797
        %8801 = vset.pattern.permute.xlu0 0
        %8802 = vperm.xlu0 %8801, %v8776
        %v8803 = vpop.permute.xlu0 %8802
        %8806 = vset.pattern.permute.xlu0 0
        %8807 = vperm.xlu0 %8806, %v8777
        %v8808 = vpop.permute.xlu0 %8807
        %8811 = vset.pattern.permute.xlu0 0
        %8812 = vperm.xlu0 %8811, %v8778
        %v8813 = vpop.permute.xlu0 %8812
        %8816 = vset.pattern.permute.xlu0 0
        %8817 = vperm.xlu0 %8816, %v8779
        %v8818 = vpop.permute.xlu0 %8817
        %v8820 = vadd.f32 %v8764, %v8783
        %v8821 = vadd.f32 %v8765, %v8788
        %v8822 = vadd.f32 %v8766, %v8793
        %v8823 = vadd.f32 %v8767, %v8798
        %v8824 = vadd.f32 %v8768, %v8803
        %v8825 = vadd.f32 %v8769, %v8808
        %v8826 = vadd.f32 %v8770, %v8813
        %v8827 = vadd.f32 %v8771, %v8818
        %v8828 = vadd.f32 %v8820, %v2183
        %v8829 = vadd.f32 %v8821, %v2184
        %v8830 = vadd.f32 %v8822, %v2185
        %v8831 = vadd.f32 %v8823, %v2186
        %v8832 = vadd.f32 %v8824, %v2187
        %v8833 = vadd.f32 %v8825, %v2188
        %v8834 = vadd.f32 %v8826, %v2189
        %v8835 = vadd.f32 %v8827, %v2190
        %vm8836 = vcmp.gt.f32.partialorder %v8828, 0.0
        %vm8837 = vcmp.gt.f32.partialorder %v8829, 0.0
        %vm8838 = vcmp.gt.f32.partialorder %v8830, 0.0
        %vm8839 = vcmp.gt.f32.partialorder %v8831, 0.0
        %vm8840 = vcmp.gt.f32.partialorder %v8832, 0.0
        %vm8841 = vcmp.gt.f32.partialorder %v8833, 0.0
        %vm8842 = vcmp.gt.f32.partialorder %v8834, 0.0
        %vm8843 = vcmp.gt.f32.partialorder %v8835, 0.0
        %v8844 = vmul.f32 %v8828, 0.1
        %v8845 = vmul.f32 %v8829, 0.1
        %v8846 = vmul.f32 %v8830, 0.1
        %v8847 = vmul.f32 %v8831, 0.1
        %v8848 = vmul.f32 %v8832, 0.1
        %v8849 = vmul.f32 %v8833, 0.1
        %v8850 = vmul.f32 %v8834, 0.1
        %v8851 = vmul.f32 %v8835, 0.1
        %v8852 = vsel %vm8836, %v8828, %v8844
        %v8853 = vsel %vm8837, %v8829, %v8845
        %v8854 = vsel %vm8838, %v8830, %v8846
        %v8855 = vsel %vm8839, %v8831, %v8847
        %v8856 = vsel %vm8840, %v8832, %v8848
        %v8857 = vsel %vm8841, %v8833, %v8849
        %v8858 = vsel %vm8842, %v8834, %v8850
        %v8859 = vsel %vm8843, %v8835, %v8851
        %v8860 = vld [vmem:[%s18] sm:$0xf]
        %v8861 = vld [vmem:[%s18 + $0x4] sm:$0xf]
        %v8862 = vld [vmem:[%s18 + $0x8] sm:$0xf]
        %v8863 = vld [vmem:[%s18 + $0xc] sm:$0xf]
        %v8864 = vld [vmem:[%s18 + $0x10] sm:$0xf]
        %v8865 = vld [vmem:[%s18 + $0x14] sm:$0xf]
        %v8866 = vld [vmem:[%s18 + $0x18] sm:$0xf]
        %v8867 = vld [vmem:[%s18 + $0x1c] sm:$0xf]
        %v8868 = vpack.c.bf16 %v8853, %v8852
        %v8869 = vpack.c.bf16 %v8855, %v8854
        %v8870 = vpack.c.bf16 %v8857, %v8856
        %v8871 = vpack.c.bf16 %v8859, %v8858
        %v8872 = vld [vmem:[%s19] sm:$0xff]
        %v8873 = vld [vmem:[%s19 + $0x8] sm:$0xff]
        %v8874 = vld [vmem:[%s19 + $0x10] sm:$0xff]
        %v8875 = vld [vmem:[%s19 + $0x18] sm:$0xff]
        %v8876 = vld [vmem:[%s19 + $0x20] sm:$0xff]
        %v8877 = vld [vmem:[%s19 + $0x28] sm:$0xff]
        %v8878 = vld [vmem:[%s19 + $0x30] sm:$0xff]
        %v8879 = vld [vmem:[%s19 + $0x38] sm:$0xff]
        %8881 = vset.pattern.permute.xlu0 0
        %8882 = vperm.xlu0 %8881, %v8872
        %v8883 = vpop.permute.xlu0 %8882
        %8886 = vset.pattern.permute.xlu0 0
        %8887 = vperm.xlu0 %8886, %v8873
        %v8888 = vpop.permute.xlu0 %8887
        %8891 = vset.pattern.permute.xlu0 0
        %8892 = vperm.xlu0 %8891, %v8874
        %v8893 = vpop.permute.xlu0 %8892
        %8896 = vset.pattern.permute.xlu0 0
        %8897 = vperm.xlu0 %8896, %v8875
        %v8898 = vpop.permute.xlu0 %8897
        %8901 = vset.pattern.permute.xlu0 0
        %8902 = vperm.xlu0 %8901, %v8876
        %v8903 = vpop.permute.xlu0 %8902
        %8906 = vset.pattern.permute.xlu0 0
        %8907 = vperm.xlu0 %8906, %v8877
        %v8908 = vpop.permute.xlu0 %8907
        %8911 = vset.pattern.permute.xlu0 0
        %8912 = vperm.xlu0 %8911, %v8878
        %v8913 = vpop.permute.xlu0 %8912
        %8916 = vset.pattern.permute.xlu0 0
        %8917 = vperm.xlu0 %8916, %v8879
        %v8918 = vpop.permute.xlu0 %8917
        %v8928 = vunpack.c.l.b16 %v8860
        %v8929 = vunpack.c.l.b16 %v8861
        %v8930 = vunpack.c.l.b16 %v8862
        %v8931 = vunpack.c.l.b16 %v8863
        %v8932 = vunpack.c.l.b16 %v8864
        %v8933 = vunpack.c.l.b16 %v8865
        %v8934 = vunpack.c.l.b16 %v8866
        %v8935 = vunpack.c.l.b16 %v8867
        %v8936 = vpack.c.b16 %v8929, %v8928
        %v8937 = vpack.c.b16 %v8931, %v8930
        %v8938 = vpack.c.b16 %v8933, %v8932
        %v8939 = vpack.c.b16 %v8935, %v8934
        %v8941 = vsel %vm943, %v8936, 0
        %v8944 = vsel %vm943, %v8937, 0
        %v8947 = vsel %vm943, %v8938, 0
        %v8950 = vsel %vm943, %v8939, 0
        %8952 = vmatprep.subr.bf16.mxu0 0
        %8953 = vmatpush1.bf16.msra.mxu0 %v8868
        %8954 = vmatprep.subr.bf16.mxu0 0
        %8955 = vmatpush1.bf16.msra.mxu0 %v8869
        %8956 = vmatprep.subr.bf16.mxu0 0
        %8957 = vmatpush1.bf16.msra.mxu0 %v8870
        %8958 = vmatprep.subr.bf16.mxu0 0
        %8959 = vmatpush1.bf16.msra.mxu0 %v8871
        %8960 = vmatprep.subr.bf16.mxu0 0
        %8961 = vmatpush1.bf16.msra.mxu0 0
        %8962 = vmatprep.subr.bf16.mxu0 0
        %8963 = vmatpush1.bf16.msra.mxu0 0
        %8964 = vmatprep.subr.bf16.mxu0 0
        %8965 = vmatpush1.bf16.msra.mxu0 0
        %8966 = vmatprep.subr.bf16.mxu0 0
        %8967 = vmatpush1.bf16.msra.mxu0 0
        %8968 = vmatprep.subr.bf16.mxu0 0
        %8969 = vmatpush1.bf16.msra.mxu0 0
        %8970 = vmatprep.subr.bf16.mxu0 0
        %8971 = vmatpush1.bf16.msra.mxu0 0
        %8972 = vmatprep.subr.bf16.mxu0 0
        %8973 = vmatpush1.bf16.msra.mxu0 0
        %8974 = vmatprep.subr.bf16.mxu0 0
        %8975 = vmatpush1.bf16.msra.mxu0 0
        %8976 = vmatprep.subr.bf16.mxu0 0
        %8977 = vmatpush1.bf16.msra.mxu0 0
        %8978 = vmatprep.subr.bf16.mxu0 0
        %8979 = vmatpush1.bf16.msra.mxu0 0
        %8980 = vmatprep.subr.bf16.mxu0 0
        %8981 = vmatpush1.bf16.msra.mxu0 0
        %8982 = vmatprep.subr.bf16.mxu0 0
        %8983 = vmatpush1.bf16.msra.mxu0 0
        %8984 = vmatprep.mubr.bf16.mxu0 0
        %8985 = vmatmul.mubr.bf16.gmra.mrb[0].mxu0 %v8941
        %v8986 = vpop.f32.mrb[0].mxu0
        %v8987 = vadd.f32 %v8883, %v8986
        %v8988 = vpop.f32.mrb[0].mxu0
        %v8989 = vpop.f32.mrb[0].mxu0
        %v8990 = vadd.f32 %v8888, %v8989
        %v8991 = vpop.f32.mrb[0].mxu0
        %8992 = vmatprep.mubr.bf16.mxu0 0
        %8993 = vmatmul.mubr.bf16.gmra.mrb[0].mxu0 %v8944
        %v8994 = vpop.f32.mrb[0].mxu0
        %v8995 = vadd.f32 %v8893, %v8994
        %v8996 = vpop.f32.mrb[0].mxu0
        %v8997 = vpop.f32.mrb[0].mxu0
        %v8998 = vadd.f32 %v8898, %v8997
        %v8999 = vpop.f32.mrb[0].mxu0
        %9000 = vmatprep.mubr.bf16.mxu0 0
        %9001 = vmatmul.mubr.bf16.gmra.mrb[0].mxu0 %v8947
        %v9002 = vpop.f32.mrb[0].mxu0
        %v9003 = vadd.f32 %v8903, %v9002
        %v9004 = vpop.f32.mrb[0].mxu0
        %v9005 = vpop.f32.mrb[0].mxu0
        %v9006 = vadd.f32 %v8908, %v9005
        %v9007 = vpop.f32.mrb[0].mxu0
        %9008 = vmatprep.mubr.bf16.mxu0 0
        %9009 = vmatmul.mubr.bf16.gmra.mrb[0].mxu0 %v8950
        %v9010 = vpop.f32.mrb[0].mxu0
        %v9011 = vadd.f32 %v8913, %v9010
        %v9012 = vpop.f32.mrb[0].mxu0
        %v9013 = vpop.f32.mrb[0].mxu0
        %v9014 = vadd.f32 %v8918, %v9013
        %v9015 = vpop.f32.mrb[0].mxu0
        %9016 = vdwg.mxu0
        %v9017 = vadd.f32 %v8987, %v2183
        %v9018 = vadd.f32 %v8990, %v2184
        %v9019 = vadd.f32 %v8995, %v2185
        %v9020 = vadd.f32 %v8998, %v2186
        %v9021 = vadd.f32 %v9003, %v2187
        %v9022 = vadd.f32 %v9006, %v2188
        %v9023 = vadd.f32 %v9011, %v2189
        %v9024 = vadd.f32 %v9014, %v2190
        %vm9025 = vcmp.gt.f32.partialorder %v9017, 0.0
        %vm9026 = vcmp.gt.f32.partialorder %v9018, 0.0
        %vm9027 = vcmp.gt.f32.partialorder %v9019, 0.0
        %vm9028 = vcmp.gt.f32.partialorder %v9020, 0.0
        %vm9029 = vcmp.gt.f32.partialorder %v9021, 0.0
        %vm9030 = vcmp.gt.f32.partialorder %v9022, 0.0
        %vm9031 = vcmp.gt.f32.partialorder %v9023, 0.0
        %vm9032 = vcmp.gt.f32.partialorder %v9024, 0.0
        %v9033 = vmul.f32 %v9017, 0.1
        %v9034 = vmul.f32 %v9018, 0.1
        %v9035 = vmul.f32 %v9019, 0.1
        %v9036 = vmul.f32 %v9020, 0.1
        %v9037 = vmul.f32 %v9021, 0.1
        %v9038 = vmul.f32 %v9022, 0.1
        %v9039 = vmul.f32 %v9023, 0.1
        %v9040 = vmul.f32 %v9024, 0.1
        %v9041 = vsel %vm9025, %v9017, %v9033
        %v9042 = vsel %vm9026, %v9018, %v9034
        %v9043 = vsel %vm9027, %v9019, %v9035
        %v9044 = vsel %vm9028, %v9020, %v9036
        %v9045 = vsel %vm9029, %v9021, %v9037
        %v9046 = vsel %vm9030, %v9022, %v9038
        %v9047 = vsel %vm9031, %v9023, %v9039
        %v9048 = vsel %vm9032, %v9024, %v9040
        %v9049 = vld [vmem:[%s20] sm:$0xf]
        %v9050 = vld [vmem:[%s20 + $0x4] sm:$0xf]
        %v9051 = vld [vmem:[%s20 + $0x8] sm:$0xf]
        %v9052 = vld [vmem:[%s20 + $0xc] sm:$0xf]
        %v9053 = vld [vmem:[%s20 + $0x10] sm:$0xf]
        %v9054 = vld [vmem:[%s20 + $0x14] sm:$0xf]
        %v9055 = vld [vmem:[%s20 + $0x18] sm:$0xf]
        %v9056 = vld [vmem:[%s20 + $0x1c] sm:$0xf]
        %v9057 = vpack.c.bf16 %v9042, %v9041
        %v9058 = vpack.c.bf16 %v9044, %v9043
        %v9059 = vpack.c.bf16 %v9046, %v9045
        %v9060 = vpack.c.bf16 %v9048, %v9047
        %v9061 = vld [vmem:[%s21] sm:$0xff]
        %v9062 = vld [vmem:[%s21 + $0x8] sm:$0xff]
        %v9063 = vld [vmem:[%s21 + $0x10] sm:$0xff]
        %v9064 = vld [vmem:[%s21 + $0x18] sm:$0xff]
        %v9065 = vld [vmem:[%s21 + $0x20] sm:$0xff]
        %v9066 = vld [vmem:[%s21 + $0x28] sm:$0xff]
        %v9067 = vld [vmem:[%s21 + $0x30] sm:$0xff]
        %v9068 = vld [vmem:[%s21 + $0x38] sm:$0xff]
        %9070 = vset.pattern.permute.xlu0 0
        %9071 = vperm.xlu0 %9070, %v9061
        %v9072 = vpop.permute.xlu0 %9071
        %9075 = vset.pattern.permute.xlu0 0
        %9076 = vperm.xlu0 %9075, %v9062
        %v9077 = vpop.permute.xlu0 %9076
        %9080 = vset.pattern.permute.xlu0 0
        %9081 = vperm.xlu0 %9080, %v9063
        %v9082 = vpop.permute.xlu0 %9081
        %9085 = vset.pattern.permute.xlu0 0
        %9086 = vperm.xlu0 %9085, %v9064
        %v9087 = vpop.permute.xlu0 %9086
        %9090 = vset.pattern.permute.xlu0 0
        %9091 = vperm.xlu0 %9090, %v9065
        %v9092 = vpop.permute.xlu0 %9091
        %9095 = vset.pattern.permute.xlu0 0
        %9096 = vperm.xlu0 %9095, %v9066
        %v9097 = vpop.permute.xlu0 %9096
        %9100 = vset.pattern.permute.xlu0 0
        %9101 = vperm.xlu0 %9100, %v9067
        %v9102 = vpop.permute.xlu0 %9101
        %9105 = vset.pattern.permute.xlu0 0
        %9106 = vperm.xlu0 %9105, %v9068
        %v9107 = vpop.permute.xlu0 %9106
        %v9117 = vunpack.c.l.b16 %v9049
        %v9118 = vunpack.c.l.b16 %v9050
        %v9119 = vunpack.c.l.b16 %v9051
        %v9120 = vunpack.c.l.b16 %v9052
        %v9121 = vunpack.c.l.b16 %v9053
        %v9122 = vunpack.c.l.b16 %v9054
        %v9123 = vunpack.c.l.b16 %v9055
        %v9124 = vunpack.c.l.b16 %v9056
        %v9125 = vpack.c.b16 %v9118, %v9117
        %v9126 = vpack.c.b16 %v9120, %v9119
        %v9127 = vpack.c.b16 %v9122, %v9121
        %v9128 = vpack.c.b16 %v9124, %v9123
        %v9130 = vsel %vm943, %v9125, 0
        %v9133 = vsel %vm943, %v9126, 0
        %v9136 = vsel %vm943, %v9127, 0
        %v9139 = vsel %vm943, %v9128, 0
        %9141 = vmatprep.subr.bf16.mxu0 0
        %9142 = vmatpush1.bf16.msra.mxu0 %v9057
        %9143 = vmatprep.subr.bf16.mxu0 0
        %9144 = vmatpush1.bf16.msra.mxu0 %v9058
        %9145 = vmatprep.subr.bf16.mxu0 0
        %9146 = vmatpush1.bf16.msra.mxu0 %v9059
        %9147 = vmatprep.subr.bf16.mxu0 0
        %9148 = vmatpush1.bf16.msra.mxu0 %v9060
        %9149 = vmatprep.subr.bf16.mxu0 0
        %9150 = vmatpush1.bf16.msra.mxu0 0
        %9151 = vmatprep.subr.bf16.mxu0 0
        %9152 = vmatpush1.bf16.msra.mxu0 0
        %9153 = vmatprep.subr.bf16.mxu0 0
        %9154 = vmatpush1.bf16.msra.mxu0 0
        %9155 = vmatprep.subr.bf16.mxu0 0
        %9156 = vmatpush1.bf16.msra.mxu0 0
        %9157 = vmatprep.subr.bf16.mxu0 0
        %9158 = vmatpush1.bf16.msra.mxu0 0
        %9159 = vmatprep.subr.bf16.mxu0 0
        %9160 = vmatpush1.bf16.msra.mxu0 0
        %9161 = vmatprep.subr.bf16.mxu0 0
        %9162 = vmatpush1.bf16.msra.mxu0 0
        %9163 = vmatprep.subr.bf16.mxu0 0
        %9164 = vmatpush1.bf16.msra.mxu0 0
        %9165 = vmatprep.subr.bf16.mxu0 0
        %9166 = vmatpush1.bf16.msra.mxu0 0
        %9167 = vmatprep.subr.bf16.mxu0 0
        %9168 = vmatpush1.bf16.msra.mxu0 0
        %9169 = vmatprep.subr.bf16.mxu0 0
        %9170 = vmatpush1.bf16.msra.mxu0 0
        %9171 = vmatprep.subr.bf16.mxu0 0
        %9172 = vmatpush1.bf16.msra.mxu0 0
        %9173 = vmatprep.mubr.bf16.mxu0 0
        %9174 = vmatmul.mubr.bf16.gmra.mrb[0].mxu0 %v9130
        %v9175 = vpop.f32.mrb[0].mxu0
        %v9176 = vadd.f32 %v9072, %v9175
        %v9177 = vpop.f32.mrb[0].mxu0
        %v9178 = vpop.f32.mrb[0].mxu0
        %v9179 = vadd.f32 %v9077, %v9178
        %v9180 = vpop.f32.mrb[0].mxu0
        %9181 = vmatprep.mubr.bf16.mxu0 0
        %9182 = vmatmul.mubr.bf16.gmra.mrb[0].mxu0 %v9133
        %v9183 = vpop.f32.mrb[0].mxu0
        %v9184 = vadd.f32 %v9082, %v9183
        %v9185 = vpop.f32.mrb[0].mxu0
        %v9186 = vpop.f32.mrb[0].mxu0
        %v9187 = vadd.f32 %v9087, %v9186
        %v9188 = vpop.f32.mrb[0].mxu0
        %9189 = vmatprep.mubr.bf16.mxu0 0
        %9190 = vmatmul.mubr.bf16.gmra.mrb[0].mxu0 %v9136
        %v9191 = vpop.f32.mrb[0].mxu0
        %v9192 = vadd.f32 %v9092, %v9191
        %v9193 = vpop.f32.mrb[0].mxu0
        %v9194 = vpop.f32.mrb[0].mxu0
        %v9195 = vadd.f32 %v9097, %v9194
        %v9196 = vpop.f32.mrb[0].mxu0
        %9197 = vmatprep.mubr.bf16.mxu0 0
        %9198 = vmatmul.mubr.bf16.gmra.mrb[0].mxu0 %v9139
        %v9199 = vpop.f32.mrb[0].mxu0
        %v9200 = vadd.f32 %v9102, %v9199
        %v9201 = vpop.f32.mrb[0].mxu0
        %v9202 = vpop.f32.mrb[0].mxu0
        %v9203 = vadd.f32 %v9107, %v9202
        %v9204 = vpop.f32.mrb[0].mxu0
        %9205 = vdwg.mxu0
        %v9206 = vadd.f32 %v9041, %v9176
        %v9207 = vadd.f32 %v9042, %v9179
        %v9208 = vadd.f32 %v9043, %v9184
        %v9209 = vadd.f32 %v9044, %v9187
        %v9210 = vadd.f32 %v9045, %v9192
        %v9211 = vadd.f32 %v9046, %v9195
        %v9212 = vadd.f32 %v9047, %v9200
        %v9213 = vadd.f32 %v9048, %v9203
        %vm9214 = vcmp.gt.f32.partialorder %v9206, 0.0
        %vm9215 = vcmp.gt.f32.partialorder %v9207, 0.0
        %vm9216 = vcmp.gt.f32.partialorder %v9208, 0.0
        %vm9217 = vcmp.gt.f32.partialorder %v9209, 0.0
        %vm9218 = vcmp.gt.f32.partialorder %v9210, 0.0
        %vm9219 = vcmp.gt.f32.partialorder %v9211, 0.0
        %vm9220 = vcmp.gt.f32.partialorder %v9212, 0.0
        %vm9221 = vcmp.gt.f32.partialorder %v9213, 0.0
        %v9222 = vmul.f32 %v9206, 0.1
        %v9223 = vmul.f32 %v9207, 0.1
        %v9224 = vmul.f32 %v9208, 0.1
        %v9225 = vmul.f32 %v9209, 0.1
        %v9226 = vmul.f32 %v9210, 0.1
        %v9227 = vmul.f32 %v9211, 0.1
        %v9228 = vmul.f32 %v9212, 0.1
        %v9229 = vmul.f32 %v9213, 0.1
        %v9230 = vsel %vm9214, %v9206, %v9222
        %v9231 = vsel %vm9215, %v9207, %v9223
        %v9232 = vsel %vm9216, %v9208, %v9224
        %v9233 = vsel %vm9217, %v9209, %v9225
        %v9234 = vsel %vm9218, %v9210, %v9226
        %v9235 = vsel %vm9219, %v9211, %v9227
        %v9236 = vsel %vm9220, %v9212, %v9228
        %v9237 = vsel %vm9221, %v9213, %v9229
        %9238 = vst.msk [vmem:[%s676] sm:$0xff] %vm1485, %v9230
        %9239 = vst.msk [vmem:[%s676 + $0x8] sm:$0xff] %vm1485, %v9231
        %9240 = vst.msk [vmem:[%s676 + $0x10] sm:$0xff] %vm1485, %v9232
        %9241 = vst.msk [vmem:[%s676 + $0x18] sm:$0xff] %vm1485, %v9233
        %9242 = vst.msk [vmem:[%s676 + $0x20] sm:$0xff] %vm1485, %v9234
        %9243 = vst.msk [vmem:[%s676 + $0x28] sm:$0xff] %vm1485, %v9235
        %9244 = vst.msk [vmem:[%s676 + $0x30] sm:$0xff] %vm1485, %v9236
        %9245 = vst.msk [vmem:[%s676 + $0x38] sm:$0xff] %vm1485, %v9237
        %s9246 = sand.u32 %s511, 1
        %s9247 = scalar_lea.sflag [#allocation3], %s9246
        %s9248 = sand.u32 %s511, 1
        %s9249 = smul.addr %s9248, 64
        %s9250 = scalar_lea.vmem [#allocation2], %s9249
        // Predicated region
        $region109: #{st_attention_block_forward.1} parent=107 // pred_check
          %p9251 = pneg %p521
        $region110: #{st_attention_block_forward.1} parent=107 // pred_check_branch
          %9253 = sbr.rel (%p9251) target = $region112
        $region111: #{st_attention_block_forward.1} parent=107 // pred_region
          %s9255 = ssub.s32 1024, 1024
          %9256 = vsyncadd %s9247, %s9255
          %s9257 = smul.addr %s36, 8
          %s9258 = smul.addr %s9257, 128
          %s9259 = scalar_lea.hbm %s22, %s9258
          %s9260 = sshll.u32 %s9250, 4
          %s9261 = int_to_ptr.vmem [resolvable:$true] %s9260
          %9266 = dma.vmem_to_hbm [thread:$0]  %s9261, 1024, %s9259, %s9247, 128, 128, 8
        $region112: #{st_attention_block_forward.1} parent=107 // pred_fallthru
          _
      $region108: #{st_attention_block_forward.1} parent=5 // pred_fallthru
        _
      %p9267 = scmp.le.s32.totalorder 2, %s31
      // Predicated region
      $region113: #{st_attention_block_forward.1} parent=5 // pred_check
        %p9268 = pneg %p9267
      $region114: #{st_attention_block_forward.1} parent=5 // pred_check_branch
        %9270 = sbr.rel (%p9268) target = $region116
      $region115: #{st_attention_block_forward.1} parent=5 // pred_region
        %s9271 = ssub.s32 %s31, 2
        // Predicated region
        $region117: #{st_attention_block_forward.1} parent=115 // pred_check
          %p9272 = pneg %p527
        $region118: #{st_attention_block_forward.1} parent=115 // pred_check_branch
          %9274 = sbr.rel (%p9272) target = $region120
        $region119: #{st_attention_block_forward.1} parent=115 // pred_region
          %s9275 = sand.u32 %s512, 1
          %s9276 = scalar_lea.sflag [#allocation3], %s9275
          %s9277 = sand.u32 %s512, 1
          %s9278 = smul.addr %s9277, 64
          %s9279 = scalar_lea.vmem [#allocation2], %s9278
          %9280 = dma.done %s9276, 1024
        $region120: #{st_attention_block_forward.1} parent=115 // pred_fallthru
          _
      $region116: #{st_attention_block_forward.1} parent=5 // pred_fallthru
        _
    $region6: #{st_attention_block_forward.1} parent=1 // loop_footer
      %s35 = sadd.s32 1, %s31
    $region7: #{st_attention_block_forward.1} parent=1 // loop_footer_branch
      %30 = sbr.rel target = $region3
    $region8: #{st_attention_block_forward.1} parent=1 // loop_exit
      _
    %9281 = vsyncpa [#allocation3], 1
    %s9282 = scalar_lea.sflag [#allocation3], 1
    %9283 = vsyncpa %s9282, 1

</llo_original>
